<compile_context>
chip_gen: v7x
topology: tpu7x:2x2x1
jax: 0.10.0
libtpu: 0.0.40
codegen_flags: <defaults>
</compile_context>

<pallas_src>
import jax
import jax.numpy as jnp
import numpy as np
from jax import lax
from jax.experimental import pallas as pl
from jax.experimental.pallas import tpu as pltpu


# ----------------------------------------------------------------------------- #
# Stage 1: QKV projection (1x1 conv == channel matmul) fused with the head split.
# ----------------------------------------------------------------------------- #
def qkv_proj_kernel(x_ref, w_ref, q_ref, k_ref, v_ref):
    """x_ref: (1, tn, c) bf16 | w_ref: (c, 3*hidden) bf16 (softmax scale folded into q cols)
       q/k/v_ref: (1, heads, tn, d) bf16 -- head-major layout consumed directly by Stage 2."""
    heads = q_ref.shape[1]
    d = q_ref.shape[3]
    hidden = heads * d

    r = jnp.dot(x_ref[0], w_ref[...],
                preferred_element_type=jnp.float32).astype(q_ref.dtype)   # (tn, 3*hidden)

    # Head split done once here, overlapped with the Stage-1 pipeline, instead of an
    # XLA transpose between the two pallas_calls (saves an HBM read+write of qkv).
    for h in range(heads):
        q_ref[0, h] = r[:, h * d:(h + 1) * d]
        k_ref[0, h] = r[:, hidden + h * d: hidden + (h + 1) * d]
        v_ref[0, h] = r[:, 2 * hidden + h * d: 2 * hidden + (h + 1) * d]


# ----------------------------------------------------------------------------- #
# Stage 2: flash attention (online softmax) + fused, packed output projection.
# ----------------------------------------------------------------------------- #
def flash_attn_kernel(q_ref, k_ref, v_ref, wout_ref, bout_ref, o_ref,
                      m_scr, l_scr, acc_scr, pk_scr):
    """q_ref: (1, heads, tq, d) bf16    k_ref/v_ref: (1, heads, tkv, d) bf16
       wout_ref: (hidden, cp) bf16      bout_ref: (1, cp) f32      o_ref: (1, tq, cp)
       scratch: m/l (heads, tq, 1) f32, acc (heads, tq, d) f32, pk (tq, hidden) bf16."""
    ikv = pl.program_id(2)

    @pl.when(ikv == 0)
    def _init():
        m_scr[...] = jnp.full(m_scr.shape, -jnp.inf, dtype=m_scr.dtype)
        l_scr[...] = jnp.zeros(l_scr.shape, dtype=l_scr.dtype)
        acc_scr[...] = jnp.zeros(acc_scr.shape, dtype=acc_scr.dtype)

    q = q_ref[0]                                   # (heads, tq, d)  bf16 (scale folded in)
    k = k_ref[0]                                   # (heads, tkv, d) bf16
    v = v_ref[0]                                   # (heads, tkv, d) bf16

    # Batched over heads (leading batch dim), contraction on the last dims (no k.T).
    s = lax.dot_general(q, k,
                        dimension_numbers=(((2,), (2,)), ((0,), (0,))),
                        preferred_element_type=jnp.float32)      # (heads, tq, tkv) f32

    m_prev = m_scr[...]                                          # (heads, tq, 1)
    m_new = jnp.maximum(m_prev, jnp.max(s, axis=-1, keepdims=True))
    alpha = jnp.exp(m_prev - m_new)                              # f32 softmax math
    p = jnp.exp(s - m_new)                                       # (heads, tq, tkv) f32

    l_scr[...] = alpha * l_scr[...] + jnp.sum(p, axis=-1, keepdims=True)

    pv = lax.dot_general(p.astype(jnp.bfloat16), v,
                         dimension_numbers=(((2,), (1,)), ((0,), (0,))),
                         preferred_element_type=jnp.float32)     # (heads, tq, d) f32
    acc_scr[...] = alpha * acc_scr[...] + pv
    m_scr[...] = m_new

    @pl.when(ikv == pl.num_programs(2) - 1)
    def _finalize():
        n_heads, _, dh = acc_scr.shape
        inv_l = pl.reciprocal(l_scr[...], approx=True)           # EUP slot
        out_h = (acc_scr[...] * inv_l).astype(jnp.bfloat16)      # (heads, tq, d)
        # Pack heads into lanes via VMEM scratch -> fused 1x1 output conv becomes ONE
        # (tq, hidden) @ (hidden, cp) matmul with K = hidden (full MXU depth) instead of
        # heads separate K=d matmuls + a cross-head VPU sum.
        for h in range(n_heads):
            pk_scr[:, h * dh:(h + 1) * dh] = out_h[h]
        y = jnp.dot(pk_scr[...], wout_ref[...],
                    preferred_element_type=jnp.float32)          # (tq, cp) f32
        o_ref[0] = (y + bout_ref[...]).astype(o_ref.dtype)


# ----------------------------------------------------------------------------- #
# Wrapper
# ----------------------------------------------------------------------------- #
def _pick_tile(n, pref):
    """Largest tile <= pref that divides n and is a multiple of 8 (else full n)."""
    if n <= pref:
        return n
    for t in range(pref, 7, -1):
        if n % t == 0 and t % 8 == 0:
            return t
    return n


def attention_forward(x, w_qkv, w_out, b_out, *, heads, dim_head,
                      tq_pref=256, tkv_pref=256, tn_pref=512,
                      vmem_limit_bytes=48 * 1024 * 1024):
    """x: (b, c, h, w) NCHW.  w_qkv: (3*hidden, c, 1, 1).  w_out: (c, hidden, 1, 1).
       On v5e/v6e tq_pref/tkv_pref can be raised to 512 and vmem_limit_bytes to ~96 MiB."""
    b, c, hh, ww = x.shape
    n = hh * ww
    d = dim_head
    hidden = heads * d
    scale = float(d) ** -0.5

    tq = _pick_tile(n, tq_pref)
    tkv = _pick_tile(n, tkv_pref)
    tn = _pick_tile(n, tn_pref)

    # Lane-dense output channels: pad c up to a multiple of 128 (sliced back below).
    cp = max(128, ((c + 127) // 128) * 128)

    # ---- one-time parameter / layout preprocessing (tiny) ----
    x_nc = jnp.transpose(x.reshape(b, c, n), (0, 2, 1)).astype(jnp.bfloat16)   # (b, n, c)
    wqkv_t = jnp.transpose(w_qkv.reshape(3 * hidden, c))                       # (c, 3*hidden)
    # Fold the softmax scale into the q-columns of the projection weight.
    wqkv_t = jnp.concatenate([wqkv_t[:, :hidden] * scale, wqkv_t[:, hidden:]],
                             axis=1).astype(jnp.bfloat16)
    wout_p = jnp.zeros((hidden, cp), jnp.float32).at[:, :c].set(
        jnp.transpose(w_out.reshape(c, hidden))).astype(jnp.bfloat16)          # (hidden, cp)
    bout_p = jnp.zeros((1, cp), jnp.float32).at[:, :c].set(
        b_out.reshape(1, c).astype(jnp.float32))

    # ---- Stage 1: QKV projection + head split (q, k, v each (b, heads, n, d) bf16) ----
    qkv_shape = jax.ShapeDtypeStruct((b, heads, n, d), jnp.bfloat16)
    qkv_out_spec = pl.BlockSpec((1, heads, tn, d), lambda ib, it: (ib, 0, it, 0))
    q, k, v = pl.pallas_call(
        qkv_proj_kernel,
        out_shape=(qkv_shape, qkv_shape, qkv_shape),
        grid_spec=pltpu.PrefetchScalarGridSpec(
            num_scalar_prefetch=0,
            grid=(b, n // tn),
            in_specs=[
                pl.BlockSpec((1, tn, c), lambda ib, it: (ib, it, 0)),
                pl.BlockSpec((c, 3 * hidden), lambda ib, it: (0, 0)),
            ],
            out_specs=(qkv_out_spec, qkv_out_spec, qkv_out_spec),
        ),
        compiler_params=pltpu.CompilerParams(
            dimension_semantics=("parallel", "parallel"),
            vmem_limit_bytes=vmem_limit_bytes),
    )(x_nc, wqkv_t)

    # ---- Stage 2: flash attention + fused (packed) output projection ----
    # Parallel grid extent b * (n // tq) >= 2 so both v7x TensorCores get work.
    y_nc = pl.pallas_call(
        flash_attn_kernel,
        out_shape=jax.ShapeDtypeStruct((b, n, cp), x.dtype),
        grid_spec=pltpu.PrefetchScalarGridSpec(
            num_scalar_prefetch=0,
            grid=(b, n // tq, n // tkv),
            in_specs=[
                pl.BlockSpec((1, heads, tq, d), lambda ib, iq, ik: (ib, 0, iq, 0)),
                pl.BlockSpec((1, heads, tkv, d), lambda ib, iq, ik: (ib, 0, ik, 0)),
                pl.BlockSpec((1, heads, tkv, d), lambda ib, iq, ik: (ib, 0, ik, 0)),
                pl.BlockSpec((hidden, cp), lambda ib, iq, ik: (0, 0)),
                pl.BlockSpec((1, cp), lambda ib, iq, ik: (0, 0)),
            ],
            out_specs=pl.BlockSpec((1, tq, cp), lambda ib, iq, ik: (ib, iq, 0)),
            scratch_shapes=[
                pltpu.VMEM((heads, tq, 1), jnp.float32),   # running max m
                pltpu.VMEM((heads, tq, 1), jnp.float32),   # running denom l
                pltpu.VMEM((heads, tq, d), jnp.float32),   # running output acc
                pltpu.VMEM((tq, hidden), jnp.bfloat16),    # packed (tq, hidden) epilogue buf
            ],
        ),
        compiler_params=pltpu.CompilerParams(
            dimension_semantics=("parallel", "parallel", "arbitrary"),
            vmem_limit_bytes=vmem_limit_bytes),
    )(q, k, v, wout_p, bout_p)

    y = y_nc[:, :, :c]                                            # drop channel padding
    return jnp.transpose(y, (0, 2, 1)).reshape(b, c, hh, ww)      # back to NCHW


# ----------------------------------------------------------------------------- #
# Pure-JAX reference mirroring the PyTorch forward pass.
# ----------------------------------------------------------------------------- #
def attention_reference(x, w_qkv, w_out, b_out, *, heads, dim_head):
    b, c, hh, ww = x.shape
    n = hh * ww
    hidden = heads * dim_head
    scale = float(dim_head) ** -0.5

    qkv = jnp.einsum('bchw,oc->bohw', x, w_qkv.reshape(3 * hidden, c))
    q, k, v = jnp.split(qkv, 3, axis=1)
    reshape = lambda t: t.reshape(b, heads, dim_head, n)
    q, k, v = reshape(q) * scale, reshape(k), reshape(v)

    sim = jnp.einsum('bhdi,bhdj->bhij', q, k)
    sim = sim - jnp.max(sim, axis=-1, keepdims=True)
    attn = jax.nn.softmax(sim, axis=-1)
    out = jnp.einsum('bhij,bhdj->bhid', attn, v)
    out = jnp.transpose(out, (0, 1, 3, 2)).reshape(b, hidden, hh, ww)
    y = jnp.einsum('bchw,oc->bohw', out, w_out.reshape(c, hidden))
    return y + b_out.reshape(1, c, 1, 1)


if __name__ == "__main__":
    # dim=8, heads=4, dim_head=32 (module defaults), spatial 32x32 -> n=1024 so the
    # flash kernel runs a 4x4 (q-tile, kv-tile) grid with 256-wide tiles and exercises
    # the online softmax across multiple KV steps.
    dim, heads, dim_head = 8, 4, 32
    hidden = heads * dim_head
    batch, spatial = 2, 32

    key = jax.random.PRNGKey(0)
    kx, kq, kw, kb = jax.random.split(key, 4)

    x = jax.random.normal(kx, (batch, dim, spatial, spatial), dtype=jnp.float32)
    w_qkv = jax.random.normal(kq, (3 * hidden, dim, 1, 1), dtype=jnp.float32) * 0.05
    w_out = jax.random.normal(kw, (dim, hidden, 1, 1), dtype=jnp.float32) * 0.05
    b_out = jax.random.normal(kb, (dim,), dtype=jnp.float32) * 0.05

    y = attention_forward(x, w_qkv, w_out, b_out, heads=heads, dim_head=dim_head)
    y = jax.block_until_ready(y)

    y_ref = attention_reference(x, w_qkv, w_out, b_out, heads=heads, dim_head=dim_head)
    # bf16 MXU inputs (f32 accumulation) -> relaxed tolerance vs f32 reference.
    np.testing.assert_allclose(np.asarray(y), np.asarray(y_ref), rtol=2e-2, atol=2e-2)

    print("KERNEL_OK")
</pallas_src>

<mosaic_0001>
module attributes {stable_mosaic.version = 11 : i64} {
  func.func @qkv_proj_kernel(%arg0: i32, %arg1: i32, %arg2: memref<1x512x8xbf16, #tpu.memory_space<vmem>>, %arg3: memref<8x384xbf16, #tpu.memory_space<vmem>>, %arg4: memref<1x4x512x32xbf16, #tpu.memory_space<vmem>>, %arg5: memref<1x4x512x32xbf16, #tpu.memory_space<vmem>>, %arg6: memref<1x4x512x32xbf16, #tpu.memory_space<vmem>>) attributes {dimension_semantics = [#tpu.dimension_semantics<parallel>, #tpu.dimension_semantics<parallel>], iteration_bounds = array<i64: 2, 2>, scalar_prefetch = 0 : i64, scratch_operands = 0 : i64, tpu.core_type = #tpu.core_type<tc>, window_params = [{transform_indices = @transform_0, window_bounds = array<i64: 1, 512, 8>}, {pipeline_mode = #tpu.pipeline_mode<synchronous>, transform_indices = @transform_1, window_bounds = array<i64: 8, 384>}, {transform_indices = @transform_2, window_bounds = array<i64: 1, 4, 512, 32>}, {transform_indices = @transform_3, window_bounds = array<i64: 1, 4, 512, 32>}, {transform_indices = @transform_4, window_bounds = array<i64: 1, 4, 512, 32>}]} {
    %c0 = arith.constant 0 : index
    %c0_0 = arith.constant 0 : index
    %c0_1 = arith.constant 0 : index
    %0 = vector.load %arg2[%c0, %c0_0, %c0_1] : memref<1x512x8xbf16, #tpu.memory_space<vmem>>, vector<1x512x8xbf16>
    %1 = vector.shape_cast %0 : vector<1x512x8xbf16> to vector<512x8xbf16>
    %c0_2 = arith.constant 0 : index
    %c0_3 = arith.constant 0 : index
    %2 = vector.load %arg3[%c0_2, %c0_3] : memref<8x384xbf16, #tpu.memory_space<vmem>>, vector<8x384xbf16>
    %cst = arith.constant dense<0.000000e+00> : vector<512x384xf32>
    %3 = tpu.matmul %1, %2, %cst {dimension_numbers = #tpu.dot_dimension_numbers<[1], [0], [0], [1], [0, 0, 1, 1], [], []>} : vector<512x8xbf16>, vector<8x384xbf16>, vector<512x384xf32> -> vector<512x384xf32>
    %4 = arith.truncf %3 : vector<512x384xf32> to vector<512x384xbf16>
    %5 = vector.extract_strided_slice %4 {offsets = [0, 0], sizes = [512, 32], strides = [1, 1]} : vector<512x384xbf16> to vector<512x32xbf16>
    %c0_4 = arith.constant 0 : index
    %c0_5 = arith.constant 0 : index
    %c0_6 = arith.constant 0 : index
    %c0_7 = arith.constant 0 : index
    %6 = vector.load %arg4[%c0_4, %c0_5, %c0_6, %c0_7] : memref<1x4x512x32xbf16, #tpu.memory_space<vmem>>, vector<1x1x512x32xbf16>
    %7 = vector.shape_cast %6 : vector<1x1x512x32xbf16> to vector<512x32xbf16>
    %8 = vector.shape_cast %5 : vector<512x32xbf16> to vector<1x1x512x32xbf16>
    tpu.vector_store %arg4[%c0_4, %c0_5, %c0_6, %c0_7], %8 {strides = array<i32>} : memref<1x4x512x32xbf16, #tpu.memory_space<vmem>>, vector<1x1x512x32xbf16>,
    %9 = vector.extract_strided_slice %4 {offsets = [0, 128], sizes = [512, 32], strides = [1, 1]} : vector<512x384xbf16> to vector<512x32xbf16>
    %c0_8 = arith.constant 0 : index
    %c0_9 = arith.constant 0 : index
    %c0_10 = arith.constant 0 : index
    %c0_11 = arith.constant 0 : index
    %10 = vector.load %arg5[%c0_8, %c0_9, %c0_10, %c0_11] : memref<1x4x512x32xbf16, #tpu.memory_space<vmem>>, vector<1x1x512x32xbf16>
    %11 = vector.shape_cast %10 : vector<1x1x512x32xbf16> to vector<512x32xbf16>
    %12 = vector.shape_cast %9 : vector<512x32xbf16> to vector<1x1x512x32xbf16>
    tpu.vector_store %arg5[%c0_8, %c0_9, %c0_10, %c0_11], %12 {strides = array<i32>} : memref<1x4x512x32xbf16, #tpu.memory_space<vmem>>, vector<1x1x512x32xbf16>,
    %13 = vector.extract_strided_slice %4 {offsets = [0, 256], sizes = [512, 32], strides = [1, 1]} : vector<512x384xbf16> to vector<512x32xbf16>
    %c0_12 = arith.constant 0 : index
    %c0_13 = arith.constant 0 : index
    %c0_14 = arith.constant 0 : index
    %c0_15 = arith.constant 0 : index
    %14 = vector.load %arg6[%c0_12, %c0_13, %c0_14, %c0_15] : memref<1x4x512x32xbf16, #tpu.memory_space<vmem>>, vector<1x1x512x32xbf16>
    %15 = vector.shape_cast %14 : vector<1x1x512x32xbf16> to vector<512x32xbf16>
    %16 = vector.shape_cast %13 : vector<512x32xbf16> to vector<1x1x512x32xbf16>
    tpu.vector_store %arg6[%c0_12, %c0_13, %c0_14, %c0_15], %16 {strides = array<i32>} : memref<1x4x512x32xbf16, #tpu.memory_space<vmem>>, vector<1x1x512x32xbf16>,
    %17 = vector.extract_strided_slice %4 {offsets = [0, 32], sizes = [512, 32], strides = [1, 1]} : vector<512x384xbf16> to vector<512x32xbf16>
    %c0_16 = arith.constant 0 : index
    %c1 = arith.constant 1 : index
    %c0_17 = arith.constant 0 : index
    %c0_18 = arith.constant 0 : index
    %18 = vector.load %arg4[%c0_16, %c1, %c0_17, %c0_18] : memref<1x4x512x32xbf16, #tpu.memory_space<vmem>>, vector<1x1x512x32xbf16>
    %19 = vector.shape_cast %18 : vector<1x1x512x32xbf16> to vector<512x32xbf16>
    %20 = vector.shape_cast %17 : vector<512x32xbf16> to vector<1x1x512x32xbf16>
    tpu.vector_store %arg4[%c0_16, %c1, %c0_17, %c0_18], %20 {strides = array<i32>} : memref<1x4x512x32xbf16, #tpu.memory_space<vmem>>, vector<1x1x512x32xbf16>,
    %21 = vector.extract_strided_slice %4 {offsets = [0, 160], sizes = [512, 32], strides = [1, 1]} : vector<512x384xbf16> to vector<512x32xbf16>
    %c0_19 = arith.constant 0 : index
    %c1_20 = arith.constant 1 : index
    %c0_21 = arith.constant 0 : index
    %c0_22 = arith.constant 0 : index
    %22 = vector.load %arg5[%c0_19, %c1_20, %c0_21, %c0_22] : memref<1x4x512x32xbf16, #tpu.memory_space<vmem>>, vector<1x1x512x32xbf16>
    %23 = vector.shape_cast %22 : vector<1x1x512x32xbf16> to vector<512x32xbf16>
    %24 = vector.shape_cast %21 : vector<512x32xbf16> to vector<1x1x512x32xbf16>
    tpu.vector_store %arg5[%c0_19, %c1_20, %c0_21, %c0_22], %24 {strides = array<i32>} : memref<1x4x512x32xbf16, #tpu.memory_space<vmem>>, vector<1x1x512x32xbf16>,
    %25 = vector.extract_strided_slice %4 {offsets = [0, 288], sizes = [512, 32], strides = [1, 1]} : vector<512x384xbf16> to vector<512x32xbf16>
    %c0_23 = arith.constant 0 : index
    %c1_24 = arith.constant 1 : index
    %c0_25 = arith.constant 0 : index
    %c0_26 = arith.constant 0 : index
    %26 = vector.load %arg6[%c0_23, %c1_24, %c0_25, %c0_26] : memref<1x4x512x32xbf16, #tpu.memory_space<vmem>>, vector<1x1x512x32xbf16>
    %27 = vector.shape_cast %26 : vector<1x1x512x32xbf16> to vector<512x32xbf16>
    %28 = vector.shape_cast %25 : vector<512x32xbf16> to vector<1x1x512x32xbf16>
    tpu.vector_store %arg6[%c0_23, %c1_24, %c0_25, %c0_26], %28 {strides = array<i32>} : memref<1x4x512x32xbf16, #tpu.memory_space<vmem>>, vector<1x1x512x32xbf16>,
    %29 = vector.extract_strided_slice %4 {offsets = [0, 64], sizes = [512, 32], strides = [1, 1]} : vector<512x384xbf16> to vector<512x32xbf16>
    %c0_27 = arith.constant 0 : index
    %c2 = arith.constant 2 : index
    %c0_28 = arith.constant 0 : index
    %c0_29 = arith.constant 0 : index
    %30 = vector.load %arg4[%c0_27, %c2, %c0_28, %c0_29] : memref<1x4x512x32xbf16, #tpu.memory_space<vmem>>, vector<1x1x512x32xbf16>
    %31 = vector.shape_cast %30 : vector<1x1x512x32xbf16> to vector<512x32xbf16>
    %32 = vector.shape_cast %29 : vector<512x32xbf16> to vector<1x1x512x32xbf16>
    tpu.vector_store %arg4[%c0_27, %c2, %c0_28, %c0_29], %32 {strides = array<i32>} : memref<1x4x512x32xbf16, #tpu.memory_space<vmem>>, vector<1x1x512x32xbf16>,
    %33 = vector.extract_strided_slice %4 {offsets = [0, 192], sizes = [512, 32], strides = [1, 1]} : vector<512x384xbf16> to vector<512x32xbf16>
    %c0_30 = arith.constant 0 : index
    %c2_31 = arith.constant 2 : index
    %c0_32 = arith.constant 0 : index
    %c0_33 = arith.constant 0 : index
    %34 = vector.load %arg5[%c0_30, %c2_31, %c0_32, %c0_33] : memref<1x4x512x32xbf16, #tpu.memory_space<vmem>>, vector<1x1x512x32xbf16>
    %35 = vector.shape_cast %34 : vector<1x1x512x32xbf16> to vector<512x32xbf16>
    %36 = vector.shape_cast %33 : vector<512x32xbf16> to vector<1x1x512x32xbf16>
    tpu.vector_store %arg5[%c0_30, %c2_31, %c0_32, %c0_33], %36 {strides = array<i32>} : memref<1x4x512x32xbf16, #tpu.memory_space<vmem>>, vector<1x1x512x32xbf16>,
    %37 = vector.extract_strided_slice %4 {offsets = [0, 320], sizes = [512, 32], strides = [1, 1]} : vector<512x384xbf16> to vector<512x32xbf16>
    %c0_34 = arith.constant 0 : index
    %c2_35 = arith.constant 2 : index
    %c0_36 = arith.constant 0 : index
    %c0_37 = arith.constant 0 : index
    %38 = vector.load %arg6[%c0_34, %c2_35, %c0_36, %c0_37] : memref<1x4x512x32xbf16, #tpu.memory_space<vmem>>, vector<1x1x512x32xbf16>
    %39 = vector.shape_cast %38 : vector<1x1x512x32xbf16> to vector<512x32xbf16>
    %40 = vector.shape_cast %37 : vector<512x32xbf16> to vector<1x1x512x32xbf16>
    tpu.vector_store %arg6[%c0_34, %c2_35, %c0_36, %c0_37], %40 {strides = array<i32>} : memref<1x4x512x32xbf16, #tpu.memory_space<vmem>>, vector<1x1x512x32xbf16>,
    %41 = vector.extract_strided_slice %4 {offsets = [0, 96], sizes = [512, 32], strides = [1, 1]} : vector<512x384xbf16> to vector<512x32xbf16>
    %c0_38 = arith.constant 0 : index
    %c3 = arith.constant 3 : index
    %c0_39 = arith.constant 0 : index
    %c0_40 = arith.constant 0 : index
    %42 = vector.load %arg4[%c0_38, %c3, %c0_39, %c0_40] : memref<1x4x512x32xbf16, #tpu.memory_space<vmem>>, vector<1x1x512x32xbf16>
    %43 = vector.shape_cast %42 : vector<1x1x512x32xbf16> to vector<512x32xbf16>
    %44 = vector.shape_cast %41 : vector<512x32xbf16> to vector<1x1x512x32xbf16>
    tpu.vector_store %arg4[%c0_38, %c3, %c0_39, %c0_40], %44 {strides = array<i32>} : memref<1x4x512x32xbf16, #tpu.memory_space<vmem>>, vector<1x1x512x32xbf16>,
    %45 = vector.extract_strided_slice %4 {offsets = [0, 224], sizes = [512, 32], strides = [1, 1]} : vector<512x384xbf16> to vector<512x32xbf16>
    %c0_41 = arith.constant 0 : index
    %c3_42 = arith.constant 3 : index
    %c0_43 = arith.constant 0 : index
    %c0_44 = arith.constant 0 : index
    %46 = vector.load %arg5[%c0_41, %c3_42, %c0_43, %c0_44] : memref<1x4x512x32xbf16, #tpu.memory_space<vmem>>, vector<1x1x512x32xbf16>
    %47 = vector.shape_cast %46 : vector<1x1x512x32xbf16> to vector<512x32xbf16>
    %48 = vector.shape_cast %45 : vector<512x32xbf16> to vector<1x1x512x32xbf16>
    tpu.vector_store %arg5[%c0_41, %c3_42, %c0_43, %c0_44], %48 {strides = array<i32>} : memref<1x4x512x32xbf16, #tpu.memory_space<vmem>>, vector<1x1x512x32xbf16>,
    %49 = vector.extract_strided_slice %4 {offsets = [0, 352], sizes = [512, 32], strides = [1, 1]} : vector<512x384xbf16> to vector<512x32xbf16>
    %c0_45 = arith.constant 0 : index
    %c3_46 = arith.constant 3 : index
    %c0_47 = arith.constant 0 : index
    %c0_48 = arith.constant 0 : index
    %50 = vector.load %arg6[%c0_45, %c3_46, %c0_47, %c0_48] : memref<1x4x512x32xbf16, #tpu.memory_space<vmem>>, vector<1x1x512x32xbf16>
    %51 = vector.shape_cast %50 : vector<1x1x512x32xbf16> to vector<512x32xbf16>
    %52 = vector.shape_cast %49 : vector<512x32xbf16> to vector<1x1x512x32xbf16>
    tpu.vector_store %arg6[%c0_45, %c3_46, %c0_47, %c0_48], %52 {strides = array<i32>} : memref<1x4x512x32xbf16, #tpu.memory_space<vmem>>, vector<1x1x512x32xbf16>,
    return
  }
  func.func @transform_0(%arg0: i32, %arg1: i32) -> (i32, i32, i32) {
    %c0_i32 = arith.constant 0 : i32
    %c0_i32_0 = arith.constant 0 : i32
    return %arg0, %arg1, %c0_i32 : i32, i32, i32
  }
  func.func @transform_1(%arg0: i32, %arg1: i32) -> (i32, i32) {
    %c0_i32 = arith.constant 0 : i32
    %c0_i32_0 = arith.constant 0 : i32
    %c0_i32_1 = arith.constant 0 : i32
    return %c0_i32, %c0_i32_0 : i32, i32
  }
  func.func @transform_2(%arg0: i32, %arg1: i32) -> (i32, i32, i32, i32) {
    %c0_i32 = arith.constant 0 : i32
    %c0_i32_0 = arith.constant 0 : i32
    %c0_i32_1 = arith.constant 0 : i32
    return %arg0, %c0_i32, %arg1, %c0_i32_0 : i32, i32, i32, i32
  }
  func.func @transform_3(%arg0: i32, %arg1: i32) -> (i32, i32, i32, i32) {
    %c0_i32 = arith.constant 0 : i32
    %c0_i32_0 = arith.constant 0 : i32
    %c0_i32_1 = arith.constant 0 : i32
    return %arg0, %c0_i32, %arg1, %c0_i32_0 : i32, i32, i32, i32
  }
  func.func @transform_4(%arg0: i32, %arg1: i32) -> (i32, i32, i32, i32) {
    %c0_i32 = arith.constant 0 : i32
    %c0_i32_0 = arith.constant 0 : i32
    %c0_i32_1 = arith.constant 0 : i32
    return %arg0, %c0_i32, %arg1, %c0_i32_0 : i32, i32, i32, i32
  }
}

</mosaic_0001>

<llo_original>
// kernel: tpu_custom_call.1
$region0: #{tpu_custom_call.1}
  #allocation0 [shape = 'u32[]', space=smem, size = 0x4, offset = 0x4, fixed_abs, tag = 'smem constant byte address 0x4 - core index']
  #allocation1 [shape = 'u32[144,128]{1,0:T(1,128)}', space=vmem, size = 0x12000, scoped, tag = 'internal scratch']
  %s0 = inlined_call_operand.vmem [shape: bf16[2,1024,8], index: 0, kind: input, shape index: {}]
  %s1 = inlined_call_operand.hbm [shape: bf16[8,384], index: 1, kind: input, shape index: {}]
  %s2 = inlined_call_operand.vmem [shape: bf16[2,4,1024,32], index: 2, kind: output, shape index: {0}]
  %s3 = inlined_call_operand.vmem [shape: bf16[2,4,1024,32], index: 3, kind: output, shape index: {1}]
  %s4 = inlined_call_operand.vmem [shape: bf16[2,4,1024,32], index: 4, kind: output, shape index: {2}]
  %5 = xla_tuple %s2, %s3, %s4
  %s6 = sld [smem:[#allocation0]]
  $region172: #{tpu_custom_call.1} parent=0
    _
  %s8 = ssub.s32 1, %s6
  %s9 = scalar_select 0, %s8, %s6
  $region1: #{tpu_custom_call.1} parent=0
    #allocation2 [shape = 'u8[6144]{0}', space=vmem, size = 0x1800, scoped, tag = 'input window, operand 1, single buffered']
    #allocation3 [shape = 's32[2]{0}', space=sflag, size = 0x8, scoped, tag = 'scoped memory for tpu_custom_call.1']
    #allocation4 [shape = 'u8[1048576]{0}', space=vmem, size = 0x100000, scoped, tag = 'output window, operand 0']
    #allocation5 [shape = 'u8[1048576]{0}', space=vmem, size = 0x100000, scoped, tag = 'output window, operand 1']
    #allocation6 [shape = 'u8[1048576]{0}', space=vmem, size = 0x100000, scoped, tag = 'output window, operand 2']
    %10 = vsyncpa [#allocation3], 0
    loop: start=0, step=1, limit=6
    $region2: #{tpu_custom_call.1} parent=1 // loop_pre_header
      _
    $region3: #{tpu_custom_call.1} parent=1 // loop_header
      %s12 = sphi 0, %s16
      %p13 = scmp.ge.s32.totalorder %s12, 6
      %s19 = sphi 0, %s31
      %s20 = sphi 0, %s27
      %s21 = sphi 0, %s19
      %s22 = sphi 0, %s20
      %s23 = sphi 0, %s21
      %s24 = sphi 0, %s22
      %s36 = sphi 0, %s38
      %s39 = sphi 0, %s36
      %s40 = sphi 0, %s39
      %s56 = sphi 0, %s40
      %s60 = sphi 0, %s60
      %s62 = sphi 0, %s60
      %s63 = sphi 0, %s62
      %s77 = sphi 0, %s63
      %s85 = sphi 0, %s87
      %s88 = sphi 0, %s85
      %s89 = sphi 0, %s88
      %s105 = sphi 0, %s89
      %s113 = sphi 0, %s115
      %s116 = sphi 0, %s113
      %s117 = sphi 0, %s116
      %s133 = sphi 0, %s117
      %s141 = sphi 0, %s143
      %s144 = sphi 0, %s141
      %s145 = sphi 0, %s144
      %s161 = sphi 0, %s145
    $region4: #{tpu_custom_call.1} parent=1 // loop_header_branch
      %15 = sbr.rel (%p13) target = $region8
    $region5: #{tpu_custom_call.1} parent=1 // loop_body
      %s17 = ssub.s32 %s12, 1
      %s18 = ssub.s32 %s12, 2
      %s25 = sadd.s32 1, %s20
      %p26 = scmp.ge.s32.totalorder %s25, 2
      %s27 = scalar_select %p26, 0, %s25
      %s28 = sadd.s32 1, %s19
      %s29 = scalar_select %p26, %s28, %s19
      %p30 = scmp.ge.s32.totalorder %s29, 2
      %s31 = scalar_select %p30, 0, %s29
      %s32 = ssub.s32 %s19, %s31
      %s33 = ssub.s32 %s20, %s27
      %s34 = sor.u32 %s32, %s33
      %p35 = scmp.eq.s32.totalorder %s34, 0
      %s37 = sadd.s32 %s36, 1
      %s38 = scalar_select %p35, %s36, %s37
      %p41 = pneg %p35
      %p42 = scmp.eq.s32.totalorder %s12, 3
      %p43 = por %p41, %p42
      %p44 = scmp.ne.s32.totalorder %s36, %s39
      %p45 = scmp.eq.s32.totalorder %s12, 0
      %p46 = por %p44, %p45
      %p47 = scmp.ne.s32.totalorder %s36, %s39
      %p48 = scmp.eq.s32.totalorder %s17, 3
      %p49 = por %p47, %p48
      %p50 = scmp.ne.s32.totalorder %s39, %s40
      %p51 = scmp.eq.s32.totalorder %s17, 0
      %p52 = por %p50, %p51
      %p53 = scmp.ne.s32.totalorder %s39, %s40
      %p54 = scmp.eq.s32.totalorder %s18, 3
      %p55 = por %p53, %p54
      %p57 = scmp.ne.s32.totalorder %s40, %s56
      %p58 = scmp.eq.s32.totalorder %s18, 0
      %p59 = por %p57, %p58
      %s61 = sadd.s32 %s60, 1
      %p64 = scmp.eq.s32.totalorder %s12, 3
      %p65 = scmp.ne.s32.totalorder %s60, %s62
      %p66 = scmp.eq.s32.totalorder %s12, 0
      %p67 = por %p65, %p66
      %p68 = scmp.ne.s32.totalorder %s60, %s62
      %p69 = scmp.eq.s32.totalorder %s17, 3
      %p70 = por %p68, %p69
      %p71 = scmp.ne.s32.totalorder %s62, %s63
      %p72 = scmp.eq.s32.totalorder %s17, 0
      %p73 = por %p71, %p72
      %p74 = scmp.ne.s32.totalorder %s62, %s63
      %p75 = scmp.eq.s32.totalorder %s18, 3
      %p76 = por %p74, %p75
      %p78 = scmp.ne.s32.totalorder %s63, %s77
      %p79 = scmp.eq.s32.totalorder %s18, 0
      %p80 = por %p78, %p79
      %s81 = ssub.s32 %s19, %s31
      %s82 = ssub.s32 %s20, %s27
      %s83 = sor.u32 %s81, %s82
      %p84 = scmp.eq.s32.totalorder %s83, 0
      %s86 = sadd.s32 %s85, 1
      %s87 = scalar_select %p84, %s85, %s86
      %p90 = pneg %p84
      %p91 = scmp.eq.s32.totalorder %s12, 3
      %p92 = por %p90, %p91
      %p93 = scmp.ne.s32.totalorder %s85, %s88
      %p94 = scmp.eq.s32.totalorder %s12, 0
      %p95 = por %p93, %p94
      %p96 = scmp.ne.s32.totalorder %s85, %s88
      %p97 = scmp.eq.s32.totalorder %s17, 3
      %p98 = por %p96, %p97
      %p99 = scmp.ne.s32.totalorder %s88, %s89
      %p100 = scmp.eq.s32.totalorder %s17, 0
      %p101 = por %p99, %p100
      %p102 = scmp.ne.s32.totalorder %s88, %s89
      %p103 = scmp.eq.s32.totalorder %s18, 3
      %p104 = por %p102, %p103
      %p106 = scmp.ne.s32.totalorder %s89, %s105
      %p107 = scmp.eq.s32.totalorder %s18, 0
      %p108 = por %p106, %p107
      %s109 = ssub.s32 %s19, %s31
      %s110 = ssub.s32 %s20, %s27
      %s111 = sor.u32 %s109, %s110
      %p112 = scmp.eq.s32.totalorder %s111, 0
      %s114 = sadd.s32 %s113, 1
      %s115 = scalar_select %p112, %s113, %s114
      %p118 = pneg %p112
      %p119 = scmp.eq.s32.totalorder %s12, 3
      %p120 = por %p118, %p119
      %p121 = scmp.ne.s32.totalorder %s113, %s116
      %p122 = scmp.eq.s32.totalorder %s12, 0
      %p123 = por %p121, %p122
      %p124 = scmp.ne.s32.totalorder %s113, %s116
      %p125 = scmp.eq.s32.totalorder %s17, 3
      %p126 = por %p124, %p125
      %p127 = scmp.ne.s32.totalorder %s116, %s117
      %p128 = scmp.eq.s32.totalorder %s17, 0
      %p129 = por %p127, %p128
      %p130 = scmp.ne.s32.totalorder %s116, %s117
      %p131 = scmp.eq.s32.totalorder %s18, 3
      %p132 = por %p130, %p131
      %p134 = scmp.ne.s32.totalorder %s117, %s133
      %p135 = scmp.eq.s32.totalorder %s18, 0
      %p136 = por %p134, %p135
      %s137 = ssub.s32 %s19, %s31
      %s138 = ssub.s32 %s20, %s27
      %s139 = sor.u32 %s137, %s138
      %p140 = scmp.eq.s32.totalorder %s139, 0
      %s142 = sadd.s32 %s141, 1
      %s143 = scalar_select %p140, %s141, %s142
      %p146 = pneg %p140
      %p147 = scmp.eq.s32.totalorder %s12, 3
      %p148 = por %p146, %p147
      %p149 = scmp.ne.s32.totalorder %s141, %s144
      %p150 = scmp.eq.s32.totalorder %s12, 0
      %p151 = por %p149, %p150
      %p152 = scmp.ne.s32.totalorder %s141, %s144
      %p153 = scmp.eq.s32.totalorder %s17, 3
      %p154 = por %p152, %p153
      %p155 = scmp.ne.s32.totalorder %s144, %s145
      %p156 = scmp.eq.s32.totalorder %s17, 0
      %p157 = por %p155, %p156
      %p158 = scmp.ne.s32.totalorder %s144, %s145
      %p159 = scmp.eq.s32.totalorder %s18, 3
      %p160 = por %p158, %p159
      %p162 = scmp.ne.s32.totalorder %s145, %s161
      %p163 = scmp.eq.s32.totalorder %s18, 0
      %p164 = por %p162, %p163
      %p165 = scmp.le.s32.totalorder 1, %s12
      %p166 = scmp.lt.s32.totalorder %s12, 5
      %p167 = pnand %p165, %p166
      %p168 = pneg %p167
      // Predicated region
      $region9: #{tpu_custom_call.1} parent=5 // pred_check
        _
      $region10: #{tpu_custom_call.1} parent=5 // pred_check_branch
        %170 = sbr.rel (%p167) target = $region12
      $region11: #{tpu_custom_call.1} parent=5 // pred_region
        %s171 = ssub.s32 %s12, 1
        // Predicated region
        $region13: #{tpu_custom_call.1} parent=11 // pred_check
          %p172 = pneg %p73
        $region14: #{tpu_custom_call.1} parent=11 // pred_check_branch
          %174 = sbr.rel (%p172) target = $region16
        $region15: #{tpu_custom_call.1} parent=11 // pred_region
          %s176 = ssub.s32 192, 192
          %177 = vsyncadd [#allocation3], %s176
          %s179 = sshll.u32 [#allocation2], 4
          %s180 = int_to_ptr.vmem [resolvable:$true] %s179
          %182 = dma.hbm_to_vmem [thread:$0]  %s1, 192, %s180, [#allocation3]
        $region16: #{tpu_custom_call.1} parent=11 // pred_fallthru
          _
      $region12: #{tpu_custom_call.1} parent=5 // pred_fallthru
        _
      %p183 = scmp.lt.s32.totalorder %s12, 4
      // Predicated region
      $region17: #{tpu_custom_call.1} parent=5 // pred_check
        %p184 = pneg %p183
      $region18: #{tpu_custom_call.1} parent=5 // pred_check_branch
        %186 = sbr.rel (%p184) target = $region20
      $region19: #{tpu_custom_call.1} parent=5 // pred_region
        // Predicated region
        $region21: #{tpu_custom_call.1} parent=19 // pred_check
          %p187 = pneg %p46
        $region22: #{tpu_custom_call.1} parent=19 // pred_check_branch
          %189 = sbr.rel (%p187) target = $region24
        $region23: #{tpu_custom_call.1} parent=19 // pred_region
          %s190 = smul.u32 64, %s20
          %p191 = scmp.lt.s32.totalorder %s19, 1
          %s192 = scalar_select %p191, %s19, 1
          %p193 = scmp.lt.s32.totalorder %s190, 127
          %s194 = scalar_select %p193, %s190, 127
          %s195 = smul.addr %s192, 128
          %s196 = sadd.s32 %s194, %s195
          %s197 = smul.addr %s196, 4
          %s198 = scalar_lea.vmem %s0, %s197
          %s199 = smul.u32 64, %s20
        $region24: #{tpu_custom_call.1} parent=19 // pred_fallthru
          _
      $region20: #{tpu_custom_call.1} parent=5 // pred_fallthru
        _
      %p200 = scmp.le.s32.totalorder 1, %s12
      %p201 = scmp.lt.s32.totalorder %s12, 5
      %p202 = pnand %p200, %p201
      %p203 = pneg %p202
      // Predicated region
      $region25: #{tpu_custom_call.1} parent=5 // pred_check
        _
      $region26: #{tpu_custom_call.1} parent=5 // pred_check_branch
        %205 = sbr.rel (%p202) target = $region28
      $region27: #{tpu_custom_call.1} parent=5 // pred_region
        %s206 = ssub.s32 %s12, 1
        // Predicated region
        $region29: #{tpu_custom_call.1} parent=27 // pred_check
          %p207 = pneg %p73
        $region30: #{tpu_custom_call.1} parent=27 // pred_check_branch
          %209 = sbr.rel (%p207) target = $region32
        $region31: #{tpu_custom_call.1} parent=27 // pred_region
          %210 = dma.done [#allocation3], 192
        $region32: #{tpu_custom_call.1} parent=27 // pred_fallthru
          _
        %s211 = smul.u32 64, %s22
        %p212 = scmp.lt.s32.totalorder %s21, 1
        %s213 = scalar_select %p212, %s21, 1
        %p214 = scmp.lt.s32.totalorder %s211, 127
        %s215 = scalar_select %p214, %s211, 127
        %s216 = smul.addr %s213, 128
        %s217 = sadd.s32 %s215, %s216
        %s218 = smul.addr %s217, 4
        %s219 = scalar_lea.vmem %s0, %s218
        %p220 = pneg %p52
        %p221 = pneg %p49
        %p222 = pneg %p73
        %p223 = pneg %p70
        %p224 = pneg %p101
        %p225 = pneg %p98
        %s226 = sand.u32 %s88, 1
        %s227 = sand.u32 %s88, 1
        %s228 = smul.addr %s227, 1024
        %s229 = scalar_lea.vmem [#allocation4], %s228
        %p230 = pneg %p129
        %p231 = pneg %p126
        %s232 = sand.u32 %s116, 1
        %s233 = sand.u32 %s116, 1
        %s234 = smul.addr %s233, 1024
        %s235 = scalar_lea.vmem [#allocation5], %s234
        %p236 = pneg %p157
        %p237 = pneg %p154
        %s238 = sand.u32 %s144, 1
        %s239 = sand.u32 %s144, 1
        %s240 = smul.addr %s239, 1024
        %s241 = scalar_lea.vmem [#allocation6], %s240
        %s242 = smul.u32 64, %s22
        %p243 = scmp.lt.s32.totalorder %s21, 1
        %s244 = scalar_select %p243, %s21, 1
        %p245 = scmp.lt.s32.totalorder %s242, 127
        %s246 = scalar_select %p245, %s242, 127
        %s247 = smul.addr %s244, 128
        %s248 = sadd.s32 %s246, %s247
        %s249 = smul.addr %s248, 4
        %s250 = scalar_lea.vmem %s0, %s249
        %s251 = smul.u32 64, %s22
        %s252 = smul.u32 64, %s22
        %s253 = smul.u32 64, %s22
        %s254 = smul.u32 64, %s22
        %v256 = vld [vmem:[%s250] sm:$0xf]
        %v257 = vld [vmem:[%s250 + $0x4] sm:$0xf]
        %v258 = vld [vmem:[%s250 + $0x8] sm:$0xf]
        %v259 = vld [vmem:[%s250 + $0xc] sm:$0xf]
        %v260 = vld [vmem:[%s250 + $0x10] sm:$0xf]
        %v261 = vld [vmem:[%s250 + $0x14] sm:$0xf]
        %v262 = vld [vmem:[%s250 + $0x18] sm:$0xf]
        %v263 = vld [vmem:[%s250 + $0x1c] sm:$0xf]
        %v264 = vld [vmem:[%s250 + $0x20] sm:$0xf]
        %v265 = vld [vmem:[%s250 + $0x24] sm:$0xf]
        %v266 = vld [vmem:[%s250 + $0x28] sm:$0xf]
        %v267 = vld [vmem:[%s250 + $0x2c] sm:$0xf]
        %v268 = vld [vmem:[%s250 + $0x30] sm:$0xf]
        %v269 = vld [vmem:[%s250 + $0x34] sm:$0xf]
        %v270 = vld [vmem:[%s250 + $0x38] sm:$0xf]
        %v271 = vld [vmem:[%s250 + $0x3c] sm:$0xf]
        %v272 = vld [vmem:[%s250 + $0x40] sm:$0xf]
        %v273 = vld [vmem:[%s250 + $0x44] sm:$0xf]
        %v274 = vld [vmem:[%s250 + $0x48] sm:$0xf]
        %v275 = vld [vmem:[%s250 + $0x4c] sm:$0xf]
        %v276 = vld [vmem:[%s250 + $0x50] sm:$0xf]
        %v277 = vld [vmem:[%s250 + $0x54] sm:$0xf]
        %v278 = vld [vmem:[%s250 + $0x58] sm:$0xf]
        %v279 = vld [vmem:[%s250 + $0x5c] sm:$0xf]
        %v280 = vld [vmem:[%s250 + $0x60] sm:$0xf]
        %v281 = vld [vmem:[%s250 + $0x64] sm:$0xf]
        %v282 = vld [vmem:[%s250 + $0x68] sm:$0xf]
        %v283 = vld [vmem:[%s250 + $0x6c] sm:$0xf]
        %v284 = vld [vmem:[%s250 + $0x70] sm:$0xf]
        %v285 = vld [vmem:[%s250 + $0x74] sm:$0xf]
        %v286 = vld [vmem:[%s250 + $0x78] sm:$0xf]
        %v287 = vld [vmem:[%s250 + $0x7c] sm:$0xf]
        %v288 = vld [vmem:[%s250 + $0x80] sm:$0xf]
        %v289 = vld [vmem:[%s250 + $0x84] sm:$0xf]
        %v290 = vld [vmem:[%s250 + $0x88] sm:$0xf]
        %v291 = vld [vmem:[%s250 + $0x8c] sm:$0xf]
        %v292 = vld [vmem:[%s250 + $0x90] sm:$0xf]
        %v293 = vld [vmem:[%s250 + $0x94] sm:$0xf]
        %v294 = vld [vmem:[%s250 + $0x98] sm:$0xf]
        %v295 = vld [vmem:[%s250 + $0x9c] sm:$0xf]
        %v296 = vld [vmem:[%s250 + $0xa0] sm:$0xf]
        %v297 = vld [vmem:[%s250 + $0xa4] sm:$0xf]
        %v298 = vld [vmem:[%s250 + $0xa8] sm:$0xf]
        %v299 = vld [vmem:[%s250 + $0xac] sm:$0xf]
        %v300 = vld [vmem:[%s250 + $0xb0] sm:$0xf]
        %v301 = vld [vmem:[%s250 + $0xb4] sm:$0xf]
        %v302 = vld [vmem:[%s250 + $0xb8] sm:$0xf]
        %v303 = vld [vmem:[%s250 + $0xbc] sm:$0xf]
        %v304 = vld [vmem:[%s250 + $0xc0] sm:$0xf]
        %v305 = vld [vmem:[%s250 + $0xc4] sm:$0xf]
        %v306 = vld [vmem:[%s250 + $0xc8] sm:$0xf]
        %v307 = vld [vmem:[%s250 + $0xcc] sm:$0xf]
        %v308 = vld [vmem:[%s250 + $0xd0] sm:$0xf]
        %v309 = vld [vmem:[%s250 + $0xd4] sm:$0xf]
        %v310 = vld [vmem:[%s250 + $0xd8] sm:$0xf]
        %v311 = vld [vmem:[%s250 + $0xdc] sm:$0xf]
        %v312 = vld [vmem:[%s250 + $0xe0] sm:$0xf]
        %v313 = vld [vmem:[%s250 + $0xe4] sm:$0xf]
        %v314 = vld [vmem:[%s250 + $0xe8] sm:$0xf]
        %v315 = vld [vmem:[%s250 + $0xec] sm:$0xf]
        %v316 = vld [vmem:[%s250 + $0xf0] sm:$0xf]
        %v317 = vld [vmem:[%s250 + $0xf4] sm:$0xf]
        %v318 = vld [vmem:[%s250 + $0xf8] sm:$0xf]
        %v319 = vld [vmem:[%s250 + $0xfc] sm:$0xf]
        %v320 = vld [vmem:[#allocation2] sm:$0xff]
        %v321 = vld [vmem:[#allocation2 + $0x8] sm:$0xf]
        %v386 = vunpack.c.l.b16 %v256
        %v387 = vunpack.c.l.b16 %v257
        %v388 = vunpack.c.l.b16 %v258
        %v389 = vunpack.c.l.b16 %v259
        %v390 = vunpack.c.l.b16 %v260
        %v391 = vunpack.c.l.b16 %v261
        %v392 = vunpack.c.l.b16 %v262
        %v393 = vunpack.c.l.b16 %v263
        %v394 = vunpack.c.l.b16 %v264
        %v395 = vunpack.c.l.b16 %v265
        %v396 = vunpack.c.l.b16 %v266
        %v397 = vunpack.c.l.b16 %v267
        %v398 = vunpack.c.l.b16 %v268
        %v399 = vunpack.c.l.b16 %v269
        %v400 = vunpack.c.l.b16 %v270
        %v401 = vunpack.c.l.b16 %v271
        %v402 = vunpack.c.l.b16 %v272
        %v403 = vunpack.c.l.b16 %v273
        %v404 = vunpack.c.l.b16 %v274
        %v405 = vunpack.c.l.b16 %v275
        %v406 = vunpack.c.l.b16 %v276
        %v407 = vunpack.c.l.b16 %v277
        %v408 = vunpack.c.l.b16 %v278
        %v409 = vunpack.c.l.b16 %v279
        %v410 = vunpack.c.l.b16 %v280
        %v411 = vunpack.c.l.b16 %v281
        %v412 = vunpack.c.l.b16 %v282
        %v413 = vunpack.c.l.b16 %v283
        %v414 = vunpack.c.l.b16 %v284
        %v415 = vunpack.c.l.b16 %v285
        %v416 = vunpack.c.l.b16 %v286
        %v417 = vunpack.c.l.b16 %v287
        %v418 = vunpack.c.l.b16 %v288
        %v419 = vunpack.c.l.b16 %v289
        %v420 = vunpack.c.l.b16 %v290
        %v421 = vunpack.c.l.b16 %v291
        %v422 = vunpack.c.l.b16 %v292
        %v423 = vunpack.c.l.b16 %v293
        %v424 = vunpack.c.l.b16 %v294
        %v425 = vunpack.c.l.b16 %v295
        %v426 = vunpack.c.l.b16 %v296
        %v427 = vunpack.c.l.b16 %v297
        %v428 = vunpack.c.l.b16 %v298
        %v429 = vunpack.c.l.b16 %v299
        %v430 = vunpack.c.l.b16 %v300
        %v431 = vunpack.c.l.b16 %v301
        %v432 = vunpack.c.l.b16 %v302
        %v433 = vunpack.c.l.b16 %v303
        %v434 = vunpack.c.l.b16 %v304
        %v435 = vunpack.c.l.b16 %v305
        %v436 = vunpack.c.l.b16 %v306
        %v437 = vunpack.c.l.b16 %v307
        %v438 = vunpack.c.l.b16 %v308
        %v439 = vunpack.c.l.b16 %v309
        %v440 = vunpack.c.l.b16 %v310
        %v441 = vunpack.c.l.b16 %v311
        %v442 = vunpack.c.l.b16 %v312
        %v443 = vunpack.c.l.b16 %v313
        %v444 = vunpack.c.l.b16 %v314
        %v445 = vunpack.c.l.b16 %v315
        %v446 = vunpack.c.l.b16 %v316
        %v447 = vunpack.c.l.b16 %v317
        %v448 = vunpack.c.l.b16 %v318
        %v449 = vunpack.c.l.b16 %v319
        %v450 = vpack.c.b16 %v387, %v386
        %v451 = vpack.c.b16 %v389, %v388
        %v452 = vpack.c.b16 %v391, %v390
        %v453 = vpack.c.b16 %v393, %v392
        %v454 = vpack.c.b16 %v395, %v394
        %v455 = vpack.c.b16 %v397, %v396
        %v456 = vpack.c.b16 %v399, %v398
        %v457 = vpack.c.b16 %v401, %v400
        %v458 = vpack.c.b16 %v403, %v402
        %v459 = vpack.c.b16 %v405, %v404
        %v460 = vpack.c.b16 %v407, %v406
        %v461 = vpack.c.b16 %v409, %v408
        %v462 = vpack.c.b16 %v411, %v410
        %v463 = vpack.c.b16 %v413, %v412
        %v464 = vpack.c.b16 %v415, %v414
        %v465 = vpack.c.b16 %v417, %v416
        %v466 = vpack.c.b16 %v419, %v418
        %v467 = vpack.c.b16 %v421, %v420
        %v468 = vpack.c.b16 %v423, %v422
        %v469 = vpack.c.b16 %v425, %v424
        %v470 = vpack.c.b16 %v427, %v426
        %v471 = vpack.c.b16 %v429, %v428
        %v472 = vpack.c.b16 %v431, %v430
        %v473 = vpack.c.b16 %v433, %v432
        %v474 = vpack.c.b16 %v435, %v434
        %v475 = vpack.c.b16 %v437, %v436
        %v476 = vpack.c.b16 %v439, %v438
        %v477 = vpack.c.b16 %v441, %v440
        %v478 = vpack.c.b16 %v443, %v442
        %v479 = vpack.c.b16 %v445, %v444
        %v480 = vpack.c.b16 %v447, %v446
        %v481 = vpack.c.b16 %v449, %v448
        %v484 = vunpack.c.l.b16 %v320
        %v485 = vunpack.c.h.b16 %v320
        %v486 = vunpack.c.l.b16 %v321
        %v487 = vpack.c.b16 %v484, %v484
        %v488 = vpack.c.b16 %v485, %v485
        %v489 = vpack.c.b16 %v486, %v486
        %vm490 = vcmask 64512
        %v492 = vsel %vm490, %v450, 0
        %v495 = vsel %vm490, %v451, 0
        %v498 = vsel %vm490, %v452, 0
        %v501 = vsel %vm490, %v453, 0
        %v504 = vsel %vm490, %v454, 0
        %v507 = vsel %vm490, %v455, 0
        %v510 = vsel %vm490, %v456, 0
        %v513 = vsel %vm490, %v457, 0
        %v516 = vsel %vm490, %v458, 0
        %v519 = vsel %vm490, %v459, 0
        %v522 = vsel %vm490, %v460, 0
        %v525 = vsel %vm490, %v461, 0
        %v528 = vsel %vm490, %v462, 0
        %v531 = vsel %vm490, %v463, 0
        %v534 = vsel %vm490, %v464, 0
        %v537 = vsel %vm490, %v465, 0
        %v540 = vsel %vm490, %v466, 0
        %v543 = vsel %vm490, %v467, 0
        %v546 = vsel %vm490, %v468, 0
        %v549 = vsel %vm490, %v469, 0
        %v552 = vsel %vm490, %v470, 0
        %v555 = vsel %vm490, %v471, 0
        %v558 = vsel %vm490, %v472, 0
        %v561 = vsel %vm490, %v473, 0
        %v564 = vsel %vm490, %v474, 0
        %v567 = vsel %vm490, %v475, 0
        %v570 = vsel %vm490, %v476, 0
        %v573 = vsel %vm490, %v477, 0
        %v576 = vsel %vm490, %v478, 0
        %v579 = vsel %vm490, %v479, 0
        %v582 = vsel %vm490, %v480, 0
        %v585 = vsel %vm490, %v481, 0
        %vm587 = vcmask 1043456
        %v589 = vsel %vm587, %v487, 0
        %v592 = vsel %vm587, %v488, 0
        %v595 = vsel %vm587, %v489, 0
        %597 = vmatprep.subr.bf16.mxu0 %v592
        %598 = vmatpush1.bf16.msra.mxu0 %v589
        %599 = vmatprep.subr.bf16.mxu0 0
        %600 = vmatpush1.bf16.msra.mxu0 0
        %601 = vmatprep.subr.bf16.mxu0 0
        %602 = vmatpush1.bf16.msra.mxu0 0
        %603 = vmatprep.subr.bf16.mxu0 0
        %604 = vmatpush1.bf16.msra.mxu0 0
        %605 = vmatprep.subr.bf16.mxu0 0
        %606 = vmatpush1.bf16.msra.mxu0 0
        %607 = vmatprep.subr.bf16.mxu0 0
        %608 = vmatpush1.bf16.msra.mxu0 0
        %609 = vmatprep.subr.bf16.mxu0 0
        %610 = vmatpush1.bf16.msra.mxu0 0
        %611 = vmatprep.subr.bf16.mxu0 0
        %612 = vmatpush1.bf16.msra.mxu0 0
        %613 = vmatprep.subr.bf16.mxu0 0
        %614 = vmatpush1.bf16.msra.mxu0 0
        %615 = vmatprep.subr.bf16.mxu0 0
        %616 = vmatpush1.bf16.msra.mxu0 0
        %617 = vmatprep.subr.bf16.mxu0 0
        %618 = vmatpush1.bf16.msra.mxu0 0
        %619 = vmatprep.subr.bf16.mxu0 0
        %620 = vmatpush1.bf16.msra.mxu0 0
        %621 = vmatprep.subr.bf16.mxu0 0
        %622 = vmatpush1.bf16.msra.mxu0 0
        %623 = vmatprep.subr.bf16.mxu0 0
        %624 = vmatpush1.bf16.msra.mxu0 0
        %625 = vmatprep.subr.bf16.mxu0 0
        %626 = vmatpush1.bf16.msra.mxu0 0
        %627 = vmatprep.subr.bf16.mxu0 0
        %628 = vmatpush1.bf16.msra.mxu0 0
        %629 = vmatprep.mubr.bf16.mxu0 0
        %630 = vmatmul.mubr.bf16.gmra.mrb[0].mxu0 %v492
        %v631 = vpop.f32.mrb[0].mxu0
        %v632 = vadd.f32 0.0, %v631
        %v633 = vpop.f32.mrb[0].mxu0
        %v634 = vadd.f32 0.0, %v633
        %v635 = vpop.f32.mrb[0].mxu0
        %v636 = vadd.f32 0.0, %v635
        %v637 = vpop.f32.mrb[0].mxu0
        %v638 = vadd.f32 0.0, %v637
        %639 = vmatprep.mubr.bf16.mxu0 0
        %640 = vmatmul.mubr.bf16.gmra.mrb[0].mxu0 %v495
        %v641 = vpop.f32.mrb[0].mxu0
        %v642 = vadd.f32 0.0, %v641
        %v643 = vpop.f32.mrb[0].mxu0
        %v644 = vadd.f32 0.0, %v643
        %v645 = vpop.f32.mrb[0].mxu0
        %v646 = vadd.f32 0.0, %v645
        %v647 = vpop.f32.mrb[0].mxu0
        %v648 = vadd.f32 0.0, %v647
        %649 = vmatprep.mubr.bf16.mxu0 0
        %650 = vmatmul.mubr.bf16.gmra.mrb[0].mxu0 %v498
        %v651 = vpop.f32.mrb[0].mxu0
        %v652 = vadd.f32 0.0, %v651
        %v653 = vpop.f32.mrb[0].mxu0
        %v654 = vadd.f32 0.0, %v653
        %v655 = vpop.f32.mrb[0].mxu0
        %v656 = vadd.f32 0.0, %v655
        %v657 = vpop.f32.mrb[0].mxu0
        %v658 = vadd.f32 0.0, %v657
        %659 = vmatprep.mubr.bf16.mxu0 0
        %660 = vmatmul.mubr.bf16.gmra.mrb[0].mxu0 %v501
        %v661 = vpop.f32.mrb[0].mxu0
        %v662 = vadd.f32 0.0, %v661
        %v663 = vpop.f32.mrb[0].mxu0
        %v664 = vadd.f32 0.0, %v663
        %v665 = vpop.f32.mrb[0].mxu0
        %v666 = vadd.f32 0.0, %v665
        %v667 = vpop.f32.mrb[0].mxu0
        %v668 = vadd.f32 0.0, %v667
        %669 = vmatprep.mubr.bf16.mxu0 0
        %670 = vmatmul.mubr.bf16.gmra.mrb[0].mxu0 %v504
        %v671 = vpop.f32.mrb[0].mxu0
        %v672 = vadd.f32 0.0, %v671
        %v673 = vpop.f32.mrb[0].mxu0
        %v674 = vadd.f32 0.0, %v673
        %v675 = vpop.f32.mrb[0].mxu0
        %v676 = vadd.f32 0.0, %v675
        %v677 = vpop.f32.mrb[0].mxu0
        %v678 = vadd.f32 0.0, %v677
        %679 = vmatprep.mubr.bf16.mxu0 0
        %680 = vmatmul.mubr.bf16.gmra.mrb[0].mxu0 %v507
        %v681 = vpop.f32.mrb[0].mxu0
        %v682 = vadd.f32 0.0, %v681
        %v683 = vpop.f32.mrb[0].mxu0
        %v684 = vadd.f32 0.0, %v683
        %v685 = vpop.f32.mrb[0].mxu0
        %v686 = vadd.f32 0.0, %v685
        %v687 = vpop.f32.mrb[0].mxu0
        %v688 = vadd.f32 0.0, %v687
        %689 = vmatprep.mubr.bf16.mxu0 0
        %690 = vmatmul.mubr.bf16.gmra.mrb[0].mxu0 %v510
        %v691 = vpop.f32.mrb[0].mxu0
        %v692 = vadd.f32 0.0, %v691
        %v693 = vpop.f32.mrb[0].mxu0
        %v694 = vadd.f32 0.0, %v693
        %v695 = vpop.f32.mrb[0].mxu0
        %v696 = vadd.f32 0.0, %v695
        %v697 = vpop.f32.mrb[0].mxu0
        %v698 = vadd.f32 0.0, %v697
        %699 = vmatprep.mubr.bf16.mxu0 0
        %700 = vmatmul.mubr.bf16.gmra.mrb[0].mxu0 %v513
        %v701 = vpop.f32.mrb[0].mxu0
        %v702 = vadd.f32 0.0, %v701
        %v703 = vpop.f32.mrb[0].mxu0
        %v704 = vadd.f32 0.0, %v703
        %v705 = vpop.f32.mrb[0].mxu0
        %v706 = vadd.f32 0.0, %v705
        %v707 = vpop.f32.mrb[0].mxu0
        %v708 = vadd.f32 0.0, %v707
        %709 = vmatprep.mubr.bf16.mxu0 0
        %710 = vmatmul.mubr.bf16.gmra.mrb[0].mxu0 %v516
        %v711 = vpop.f32.mrb[0].mxu0
        %v712 = vadd.f32 0.0, %v711
        %v713 = vpop.f32.mrb[0].mxu0
        %v714 = vadd.f32 0.0, %v713
        %v715 = vpop.f32.mrb[0].mxu0
        %v716 = vadd.f32 0.0, %v715
        %v717 = vpop.f32.mrb[0].mxu0
        %v718 = vadd.f32 0.0, %v717
        %719 = vmatprep.mubr.bf16.mxu0 0
        %720 = vmatmul.mubr.bf16.gmra.mrb[0].mxu0 %v519
        %v721 = vpop.f32.mrb[0].mxu0
        %v722 = vadd.f32 0.0, %v721
        %v723 = vpop.f32.mrb[0].mxu0
        %v724 = vadd.f32 0.0, %v723
        %v725 = vpop.f32.mrb[0].mxu0
        %v726 = vadd.f32 0.0, %v725
        %v727 = vpop.f32.mrb[0].mxu0
        %v728 = vadd.f32 0.0, %v727
        %729 = vmatprep.mubr.bf16.mxu0 0
        %730 = vmatmul.mubr.bf16.gmra.mrb[0].mxu0 %v522
        %v731 = vpop.f32.mrb[0].mxu0
        %v732 = vadd.f32 0.0, %v731
        %v733 = vpop.f32.mrb[0].mxu0
        %v734 = vadd.f32 0.0, %v733
        %v735 = vpop.f32.mrb[0].mxu0
        %v736 = vadd.f32 0.0, %v735
        %v737 = vpop.f32.mrb[0].mxu0
        %v738 = vadd.f32 0.0, %v737
        %739 = vmatprep.mubr.bf16.mxu0 0
        %740 = vmatmul.mubr.bf16.gmra.mrb[0].mxu0 %v525
        %v741 = vpop.f32.mrb[0].mxu0
        %v742 = vadd.f32 0.0, %v741
        %v743 = vpop.f32.mrb[0].mxu0
        %v744 = vadd.f32 0.0, %v743
        %v745 = vpop.f32.mrb[0].mxu0
        %v746 = vadd.f32 0.0, %v745
        %v747 = vpop.f32.mrb[0].mxu0
        %v748 = vadd.f32 0.0, %v747
        %749 = vmatprep.mubr.bf16.mxu0 0
        %750 = vmatmul.mubr.bf16.gmra.mrb[0].mxu0 %v528
        %v751 = vpop.f32.mrb[0].mxu0
        %v752 = vadd.f32 0.0, %v751
        %v753 = vpop.f32.mrb[0].mxu0
        %v754 = vadd.f32 0.0, %v753
        %v755 = vpop.f32.mrb[0].mxu0
        %v756 = vadd.f32 0.0, %v755
        %v757 = vpop.f32.mrb[0].mxu0
        %v758 = vadd.f32 0.0, %v757
        %759 = vmatprep.mubr.bf16.mxu0 0
        %760 = vmatmul.mubr.bf16.gmra.mrb[0].mxu0 %v531
        %v761 = vpop.f32.mrb[0].mxu0
        %v762 = vadd.f32 0.0, %v761
        %v763 = vpop.f32.mrb[0].mxu0
        %v764 = vadd.f32 0.0, %v763
        %v765 = vpop.f32.mrb[0].mxu0
        %v766 = vadd.f32 0.0, %v765
        %v767 = vpop.f32.mrb[0].mxu0
        %v768 = vadd.f32 0.0, %v767
        %769 = vmatprep.mubr.bf16.mxu0 0
        %770 = vmatmul.mubr.bf16.gmra.mrb[0].mxu0 %v534
        %v771 = vpop.f32.mrb[0].mxu0
        %v772 = vadd.f32 0.0, %v771
        %v773 = vpop.f32.mrb[0].mxu0
        %v774 = vadd.f32 0.0, %v773
        %v775 = vpop.f32.mrb[0].mxu0
        %v776 = vadd.f32 0.0, %v775
        %v777 = vpop.f32.mrb[0].mxu0
        %v778 = vadd.f32 0.0, %v777
        %779 = vmatprep.mubr.bf16.mxu0 0
        %780 = vmatmul.mubr.bf16.gmra.mrb[0].mxu0 %v537
        %v781 = vpop.f32.mrb[0].mxu0
        %v782 = vadd.f32 0.0, %v781
        %v783 = vpop.f32.mrb[0].mxu0
        %v784 = vadd.f32 0.0, %v783
        %v785 = vpop.f32.mrb[0].mxu0
        %v786 = vadd.f32 0.0, %v785
        %v787 = vpop.f32.mrb[0].mxu0
        %v788 = vadd.f32 0.0, %v787
        %789 = vmatprep.mubr.bf16.mxu0 0
        %790 = vmatmul.mubr.bf16.gmra.mrb[0].mxu0 %v540
        %v791 = vpop.f32.mrb[0].mxu0
        %v792 = vadd.f32 0.0, %v791
        %v793 = vpop.f32.mrb[0].mxu0
        %v794 = vadd.f32 0.0, %v793
        %v795 = vpop.f32.mrb[0].mxu0
        %v796 = vadd.f32 0.0, %v795
        %v797 = vpop.f32.mrb[0].mxu0
        %v798 = vadd.f32 0.0, %v797
        %799 = vmatprep.mubr.bf16.mxu0 0
        %800 = vmatmul.mubr.bf16.gmra.mrb[0].mxu0 %v543
        %v801 = vpop.f32.mrb[0].mxu0
        %v802 = vadd.f32 0.0, %v801
        %v803 = vpop.f32.mrb[0].mxu0
        %v804 = vadd.f32 0.0, %v803
        %v805 = vpop.f32.mrb[0].mxu0
        %v806 = vadd.f32 0.0, %v805
        %v807 = vpop.f32.mrb[0].mxu0
        %v808 = vadd.f32 0.0, %v807
        %809 = vmatprep.mubr.bf16.mxu0 0
        %810 = vmatmul.mubr.bf16.gmra.mrb[0].mxu0 %v546
        %v811 = vpop.f32.mrb[0].mxu0
        %v812 = vadd.f32 0.0, %v811
        %v813 = vpop.f32.mrb[0].mxu0
        %v814 = vadd.f32 0.0, %v813
        %v815 = vpop.f32.mrb[0].mxu0
        %v816 = vadd.f32 0.0, %v815
        %v817 = vpop.f32.mrb[0].mxu0
        %v818 = vadd.f32 0.0, %v817
        %819 = vmatprep.mubr.bf16.mxu0 0
        %820 = vmatmul.mubr.bf16.gmra.mrb[0].mxu0 %v549
        %v821 = vpop.f32.mrb[0].mxu0
        %v822 = vadd.f32 0.0, %v821
        %v823 = vpop.f32.mrb[0].mxu0
        %v824 = vadd.f32 0.0, %v823
        %v825 = vpop.f32.mrb[0].mxu0
        %v826 = vadd.f32 0.0, %v825
        %v827 = vpop.f32.mrb[0].mxu0
        %v828 = vadd.f32 0.0, %v827
        %829 = vmatprep.mubr.bf16.mxu0 0
        %830 = vmatmul.mubr.bf16.gmra.mrb[0].mxu0 %v552
        %v831 = vpop.f32.mrb[0].mxu0
        %v832 = vadd.f32 0.0, %v831
        %v833 = vpop.f32.mrb[0].mxu0
        %v834 = vadd.f32 0.0, %v833
        %v835 = vpop.f32.mrb[0].mxu0
        %v836 = vadd.f32 0.0, %v835
        %v837 = vpop.f32.mrb[0].mxu0
        %v838 = vadd.f32 0.0, %v837
        %839 = vmatprep.mubr.bf16.mxu0 0
        %840 = vmatmul.mubr.bf16.gmra.mrb[0].mxu0 %v555
        %v841 = vpop.f32.mrb[0].mxu0
        %v842 = vadd.f32 0.0, %v841
        %v843 = vpop.f32.mrb[0].mxu0
        %v844 = vadd.f32 0.0, %v843
        %v845 = vpop.f32.mrb[0].mxu0
        %v846 = vadd.f32 0.0, %v845
        %v847 = vpop.f32.mrb[0].mxu0
        %v848 = vadd.f32 0.0, %v847
        %849 = vmatprep.mubr.bf16.mxu0 0
        %850 = vmatmul.mubr.bf16.gmra.mrb[0].mxu0 %v558
        %v851 = vpop.f32.mrb[0].mxu0
        %v852 = vadd.f32 0.0, %v851
        %v853 = vpop.f32.mrb[0].mxu0
        %v854 = vadd.f32 0.0, %v853
        %v855 = vpop.f32.mrb[0].mxu0
        %v856 = vadd.f32 0.0, %v855
        %v857 = vpop.f32.mrb[0].mxu0
        %v858 = vadd.f32 0.0, %v857
        %859 = vmatprep.mubr.bf16.mxu0 0
        %860 = vmatmul.mubr.bf16.gmra.mrb[0].mxu0 %v561
        %v861 = vpop.f32.mrb[0].mxu0
        %v862 = vadd.f32 0.0, %v861
        %v863 = vpop.f32.mrb[0].mxu0
        %v864 = vadd.f32 0.0, %v863
        %v865 = vpop.f32.mrb[0].mxu0
        %v866 = vadd.f32 0.0, %v865
        %v867 = vpop.f32.mrb[0].mxu0
        %v868 = vadd.f32 0.0, %v867
        %869 = vmatprep.mubr.bf16.mxu0 0
        %870 = vmatmul.mubr.bf16.gmra.mrb[0].mxu0 %v564
        %v871 = vpop.f32.mrb[0].mxu0
        %v872 = vadd.f32 0.0, %v871
        %v873 = vpop.f32.mrb[0].mxu0
        %v874 = vadd.f32 0.0, %v873
        %v875 = vpop.f32.mrb[0].mxu0
        %v876 = vadd.f32 0.0, %v875
        %v877 = vpop.f32.mrb[0].mxu0
        %v878 = vadd.f32 0.0, %v877
        %879 = vmatprep.mubr.bf16.mxu0 0
        %880 = vmatmul.mubr.bf16.gmra.mrb[0].mxu0 %v567
        %v881 = vpop.f32.mrb[0].mxu0
        %v882 = vadd.f32 0.0, %v881
        %v883 = vpop.f32.mrb[0].mxu0
        %v884 = vadd.f32 0.0, %v883
        %v885 = vpop.f32.mrb[0].mxu0
        %v886 = vadd.f32 0.0, %v885
        %v887 = vpop.f32.mrb[0].mxu0
        %v888 = vadd.f32 0.0, %v887
        %889 = vmatprep.mubr.bf16.mxu0 0
        %890 = vmatmul.mubr.bf16.gmra.mrb[0].mxu0 %v570
        %v891 = vpop.f32.mrb[0].mxu0
        %v892 = vadd.f32 0.0, %v891
        %v893 = vpop.f32.mrb[0].mxu0
        %v894 = vadd.f32 0.0, %v893
        %v895 = vpop.f32.mrb[0].mxu0
        %v896 = vadd.f32 0.0, %v895
        %v897 = vpop.f32.mrb[0].mxu0
        %v898 = vadd.f32 0.0, %v897
        %899 = vmatprep.mubr.bf16.mxu0 0
        %900 = vmatmul.mubr.bf16.gmra.mrb[0].mxu0 %v573
        %v901 = vpop.f32.mrb[0].mxu0
        %v902 = vadd.f32 0.0, %v901
        %v903 = vpop.f32.mrb[0].mxu0
        %v904 = vadd.f32 0.0, %v903
        %v905 = vpop.f32.mrb[0].mxu0
        %v906 = vadd.f32 0.0, %v905
        %v907 = vpop.f32.mrb[0].mxu0
        %v908 = vadd.f32 0.0, %v907
        %909 = vmatprep.mubr.bf16.mxu0 0
        %910 = vmatmul.mubr.bf16.gmra.mrb[0].mxu0 %v576
        %v911 = vpop.f32.mrb[0].mxu0
        %v912 = vadd.f32 0.0, %v911
        %v913 = vpop.f32.mrb[0].mxu0
        %v914 = vadd.f32 0.0, %v913
        %v915 = vpop.f32.mrb[0].mxu0
        %v916 = vadd.f32 0.0, %v915
        %v917 = vpop.f32.mrb[0].mxu0
        %v918 = vadd.f32 0.0, %v917
        %919 = vmatprep.mubr.bf16.mxu0 0
        %920 = vmatmul.mubr.bf16.gmra.mrb[0].mxu0 %v579
        %v921 = vpop.f32.mrb[0].mxu0
        %v922 = vadd.f32 0.0, %v921
        %v923 = vpop.f32.mrb[0].mxu0
        %v924 = vadd.f32 0.0, %v923
        %v925 = vpop.f32.mrb[0].mxu0
        %v926 = vadd.f32 0.0, %v925
        %v927 = vpop.f32.mrb[0].mxu0
        %v928 = vadd.f32 0.0, %v927
        %929 = vmatprep.mubr.bf16.mxu0 0
        %930 = vmatmul.mubr.bf16.gmra.mrb[0].mxu0 %v582
        %v931 = vpop.f32.mrb[0].mxu0
        %v932 = vadd.f32 0.0, %v931
        %v933 = vpop.f32.mrb[0].mxu0
        %v934 = vadd.f32 0.0, %v933
        %v935 = vpop.f32.mrb[0].mxu0
        %v936 = vadd.f32 0.0, %v935
        %v937 = vpop.f32.mrb[0].mxu0
        %v938 = vadd.f32 0.0, %v937
        %939 = vmatprep.mubr.bf16.mxu0 0
        %940 = vmatmul.mubr.bf16.gmra.mrb[0].mxu0 %v585
        %v941 = vpop.f32.mrb[0].mxu0
        %v942 = vadd.f32 0.0, %v941
        %v943 = vpop.f32.mrb[0].mxu0
        %v944 = vadd.f32 0.0, %v943
        %v945 = vpop.f32.mrb[0].mxu0
        %v946 = vadd.f32 0.0, %v945
        %v947 = vpop.f32.mrb[0].mxu0
        %v948 = vadd.f32 0.0, %v947
        %949 = vdwg.mxu0
        %950 = vmatprep.subr.bf16.mxu0 0
        %951 = vmatpush1.bf16.msra.mxu0 %v595
        %952 = vmatprep.subr.bf16.mxu0 0
        %953 = vmatpush1.bf16.msra.mxu0 0
        %954 = vmatprep.subr.bf16.mxu0 0
        %955 = vmatpush1.bf16.msra.mxu0 0
        %956 = vmatprep.subr.bf16.mxu0 0
        %957 = vmatpush1.bf16.msra.mxu0 0
        %958 = vmatprep.subr.bf16.mxu0 0
        %959 = vmatpush1.bf16.msra.mxu0 0
        %960 = vmatprep.subr.bf16.mxu0 0
        %961 = vmatpush1.bf16.msra.mxu0 0
        %962 = vmatprep.subr.bf16.mxu0 0
        %963 = vmatpush1.bf16.msra.mxu0 0
        %964 = vmatprep.subr.bf16.mxu0 0
        %965 = vmatpush1.bf16.msra.mxu0 0
        %966 = vmatprep.subr.bf16.mxu0 0
        %967 = vmatpush1.bf16.msra.mxu0 0
        %968 = vmatprep.subr.bf16.mxu0 0
        %969 = vmatpush1.bf16.msra.mxu0 0
        %970 = vmatprep.subr.bf16.mxu0 0
        %971 = vmatpush1.bf16.msra.mxu0 0
        %972 = vmatprep.subr.bf16.mxu0 0
        %973 = vmatpush1.bf16.msra.mxu0 0
        %974 = vmatprep.subr.bf16.mxu0 0
        %975 = vmatpush1.bf16.msra.mxu0 0
        %976 = vmatprep.subr.bf16.mxu0 0
        %977 = vmatpush1.bf16.msra.mxu0 0
        %978 = vmatprep.subr.bf16.mxu0 0
        %979 = vmatpush1.bf16.msra.mxu0 0
        %980 = vmatprep.subr.bf16.mxu0 0
        %981 = vmatpush1.bf16.msra.mxu0 0
        %982 = vmatprep.mubr.bf16.mxu0 0
        %983 = vmatmul.mubr.bf16.gmra.mrb[0].mxu0 %v492
        %v984 = vpop.f32.mrb[0].mxu0
        %v985 = vadd.f32 0.0, %v984
        %v986 = vpop.f32.mrb[0].mxu0
        %v987 = vpop.f32.mrb[0].mxu0
        %v988 = vadd.f32 0.0, %v987
        %v989 = vpop.f32.mrb[0].mxu0
        %990 = vmatprep.mubr.bf16.mxu0 0
        %991 = vmatmul.mubr.bf16.gmra.mrb[0].mxu0 %v495
        %v992 = vpop.f32.mrb[0].mxu0
        %v993 = vadd.f32 0.0, %v992
        %v994 = vpop.f32.mrb[0].mxu0
        %v995 = vpop.f32.mrb[0].mxu0
        %v996 = vadd.f32 0.0, %v995
        %v997 = vpop.f32.mrb[0].mxu0
        %998 = vmatprep.mubr.bf16.mxu0 0
        %999 = vmatmul.mubr.bf16.gmra.mrb[0].mxu0 %v498
        %v1000 = vpop.f32.mrb[0].mxu0
        %v1001 = vadd.f32 0.0, %v1000
        %v1002 = vpop.f32.mrb[0].mxu0
        %v1003 = vpop.f32.mrb[0].mxu0
        %v1004 = vadd.f32 0.0, %v1003
        %v1005 = vpop.f32.mrb[0].mxu0
        %1006 = vmatprep.mubr.bf16.mxu0 0
        %1007 = vmatmul.mubr.bf16.gmra.mrb[0].mxu0 %v501
        %v1008 = vpop.f32.mrb[0].mxu0
        %v1009 = vadd.f32 0.0, %v1008
        %v1010 = vpop.f32.mrb[0].mxu0
        %v1011 = vpop.f32.mrb[0].mxu0
        %v1012 = vadd.f32 0.0, %v1011
        %v1013 = vpop.f32.mrb[0].mxu0
        %1014 = vmatprep.mubr.bf16.mxu0 0
        %1015 = vmatmul.mubr.bf16.gmra.mrb[0].mxu0 %v504
        %v1016 = vpop.f32.mrb[0].mxu0
        %v1017 = vadd.f32 0.0, %v1016
        %v1018 = vpop.f32.mrb[0].mxu0
        %v1019 = vpop.f32.mrb[0].mxu0
        %v1020 = vadd.f32 0.0, %v1019
        %v1021 = vpop.f32.mrb[0].mxu0
        %1022 = vmatprep.mubr.bf16.mxu0 0
        %1023 = vmatmul.mubr.bf16.gmra.mrb[0].mxu0 %v507
        %v1024 = vpop.f32.mrb[0].mxu0
        %v1025 = vadd.f32 0.0, %v1024
        %v1026 = vpop.f32.mrb[0].mxu0
        %v1027 = vpop.f32.mrb[0].mxu0
        %v1028 = vadd.f32 0.0, %v1027
        %v1029 = vpop.f32.mrb[0].mxu0
        %1030 = vmatprep.mubr.bf16.mxu0 0
        %1031 = vmatmul.mubr.bf16.gmra.mrb[0].mxu0 %v510
        %v1032 = vpop.f32.mrb[0].mxu0
        %v1033 = vadd.f32 0.0, %v1032
        %v1034 = vpop.f32.mrb[0].mxu0
        %v1035 = vpop.f32.mrb[0].mxu0
        %v1036 = vadd.f32 0.0, %v1035
        %v1037 = vpop.f32.mrb[0].mxu0
        %1038 = vmatprep.mubr.bf16.mxu0 0
        %1039 = vmatmul.mubr.bf16.gmra.mrb[0].mxu0 %v513
        %v1040 = vpop.f32.mrb[0].mxu0
        %v1041 = vadd.f32 0.0, %v1040
        %v1042 = vpop.f32.mrb[0].mxu0
        %v1043 = vpop.f32.mrb[0].mxu0
        %v1044 = vadd.f32 0.0, %v1043
        %v1045 = vpop.f32.mrb[0].mxu0
        %1046 = vmatprep.mubr.bf16.mxu0 0
        %1047 = vmatmul.mubr.bf16.gmra.mrb[0].mxu0 %v516
        %v1048 = vpop.f32.mrb[0].mxu0
        %v1049 = vadd.f32 0.0, %v1048
        %v1050 = vpop.f32.mrb[0].mxu0
        %v1051 = vpop.f32.mrb[0].mxu0
        %v1052 = vadd.f32 0.0, %v1051
        %v1053 = vpop.f32.mrb[0].mxu0
        %1054 = vmatprep.mubr.bf16.mxu0 0
        %1055 = vmatmul.mubr.bf16.gmra.mrb[0].mxu0 %v519
        %v1056 = vpop.f32.mrb[0].mxu0
        %v1057 = vadd.f32 0.0, %v1056
        %v1058 = vpop.f32.mrb[0].mxu0
        %v1059 = vpop.f32.mrb[0].mxu0
        %v1060 = vadd.f32 0.0, %v1059
        %v1061 = vpop.f32.mrb[0].mxu0
        %1062 = vmatprep.mubr.bf16.mxu0 0
        %1063 = vmatmul.mubr.bf16.gmra.mrb[0].mxu0 %v522
        %v1064 = vpop.f32.mrb[0].mxu0
        %v1065 = vadd.f32 0.0, %v1064
        %v1066 = vpop.f32.mrb[0].mxu0
        %v1067 = vpop.f32.mrb[0].mxu0
        %v1068 = vadd.f32 0.0, %v1067
        %v1069 = vpop.f32.mrb[0].mxu0
        %1070 = vmatprep.mubr.bf16.mxu0 0
        %1071 = vmatmul.mubr.bf16.gmra.mrb[0].mxu0 %v525
        %v1072 = vpop.f32.mrb[0].mxu0
        %v1073 = vadd.f32 0.0, %v1072
        %v1074 = vpop.f32.mrb[0].mxu0
        %v1075 = vpop.f32.mrb[0].mxu0
        %v1076 = vadd.f32 0.0, %v1075
        %v1077 = vpop.f32.mrb[0].mxu0
        %1078 = vmatprep.mubr.bf16.mxu0 0
        %1079 = vmatmul.mubr.bf16.gmra.mrb[0].mxu0 %v528
        %v1080 = vpop.f32.mrb[0].mxu0
        %v1081 = vadd.f32 0.0, %v1080
        %v1082 = vpop.f32.mrb[0].mxu0
        %v1083 = vpop.f32.mrb[0].mxu0
        %v1084 = vadd.f32 0.0, %v1083
        %v1085 = vpop.f32.mrb[0].mxu0
        %1086 = vmatprep.mubr.bf16.mxu0 0
        %1087 = vmatmul.mubr.bf16.gmra.mrb[0].mxu0 %v531
        %v1088 = vpop.f32.mrb[0].mxu0
        %v1089 = vadd.f32 0.0, %v1088
        %v1090 = vpop.f32.mrb[0].mxu0
        %v1091 = vpop.f32.mrb[0].mxu0
        %v1092 = vadd.f32 0.0, %v1091
        %v1093 = vpop.f32.mrb[0].mxu0
        %1094 = vmatprep.mubr.bf16.mxu0 0
        %1095 = vmatmul.mubr.bf16.gmra.mrb[0].mxu0 %v534
        %v1096 = vpop.f32.mrb[0].mxu0
        %v1097 = vadd.f32 0.0, %v1096
        %v1098 = vpop.f32.mrb[0].mxu0
        %v1099 = vpop.f32.mrb[0].mxu0
        %v1100 = vadd.f32 0.0, %v1099
        %v1101 = vpop.f32.mrb[0].mxu0
        %1102 = vmatprep.mubr.bf16.mxu0 0
        %1103 = vmatmul.mubr.bf16.gmra.mrb[0].mxu0 %v537
        %v1104 = vpop.f32.mrb[0].mxu0
        %v1105 = vadd.f32 0.0, %v1104
        %v1106 = vpop.f32.mrb[0].mxu0
        %v1107 = vpop.f32.mrb[0].mxu0
        %v1108 = vadd.f32 0.0, %v1107
        %v1109 = vpop.f32.mrb[0].mxu0
        %1110 = vmatprep.mubr.bf16.mxu0 0
        %1111 = vmatmul.mubr.bf16.gmra.mrb[0].mxu0 %v540
        %v1112 = vpop.f32.mrb[0].mxu0
        %v1113 = vadd.f32 0.0, %v1112
        %v1114 = vpop.f32.mrb[0].mxu0
        %v1115 = vpop.f32.mrb[0].mxu0
        %v1116 = vadd.f32 0.0, %v1115
        %v1117 = vpop.f32.mrb[0].mxu0
        %1118 = vmatprep.mubr.bf16.mxu0 0
        %1119 = vmatmul.mubr.bf16.gmra.mrb[0].mxu0 %v543
        %v1120 = vpop.f32.mrb[0].mxu0
        %v1121 = vadd.f32 0.0, %v1120
        %v1122 = vpop.f32.mrb[0].mxu0
        %v1123 = vpop.f32.mrb[0].mxu0
        %v1124 = vadd.f32 0.0, %v1123
        %v1125 = vpop.f32.mrb[0].mxu0
        %1126 = vmatprep.mubr.bf16.mxu0 0
        %1127 = vmatmul.mubr.bf16.gmra.mrb[0].mxu0 %v546
        %v1128 = vpop.f32.mrb[0].mxu0
        %v1129 = vadd.f32 0.0, %v1128
        %v1130 = vpop.f32.mrb[0].mxu0
        %v1131 = vpop.f32.mrb[0].mxu0
        %v1132 = vadd.f32 0.0, %v1131
        %v1133 = vpop.f32.mrb[0].mxu0
        %1134 = vmatprep.mubr.bf16.mxu0 0
        %1135 = vmatmul.mubr.bf16.gmra.mrb[0].mxu0 %v549
        %v1136 = vpop.f32.mrb[0].mxu0
        %v1137 = vadd.f32 0.0, %v1136
        %v1138 = vpop.f32.mrb[0].mxu0
        %v1139 = vpop.f32.mrb[0].mxu0
        %v1140 = vadd.f32 0.0, %v1139
        %v1141 = vpop.f32.mrb[0].mxu0
        %1142 = vmatprep.mubr.bf16.mxu0 0
        %1143 = vmatmul.mubr.bf16.gmra.mrb[0].mxu0 %v552
        %v1144 = vpop.f32.mrb[0].mxu0
        %v1145 = vadd.f32 0.0, %v1144
        %v1146 = vpop.f32.mrb[0].mxu0
        %v1147 = vpop.f32.mrb[0].mxu0
        %v1148 = vadd.f32 0.0, %v1147
        %v1149 = vpop.f32.mrb[0].mxu0
        %1150 = vmatprep.mubr.bf16.mxu0 0
        %1151 = vmatmul.mubr.bf16.gmra.mrb[0].mxu0 %v555
        %v1152 = vpop.f32.mrb[0].mxu0
        %v1153 = vadd.f32 0.0, %v1152
        %v1154 = vpop.f32.mrb[0].mxu0
        %v1155 = vpop.f32.mrb[0].mxu0
        %v1156 = vadd.f32 0.0, %v1155
        %v1157 = vpop.f32.mrb[0].mxu0
        %1158 = vmatprep.mubr.bf16.mxu0 0
        %1159 = vmatmul.mubr.bf16.gmra.mrb[0].mxu0 %v558
        %v1160 = vpop.f32.mrb[0].mxu0
        %v1161 = vadd.f32 0.0, %v1160
        %v1162 = vpop.f32.mrb[0].mxu0
        %v1163 = vpop.f32.mrb[0].mxu0
        %v1164 = vadd.f32 0.0, %v1163
        %v1165 = vpop.f32.mrb[0].mxu0
        %1166 = vmatprep.mubr.bf16.mxu0 0
        %1167 = vmatmul.mubr.bf16.gmra.mrb[0].mxu0 %v561
        %v1168 = vpop.f32.mrb[0].mxu0
        %v1169 = vadd.f32 0.0, %v1168
        %v1170 = vpop.f32.mrb[0].mxu0
        %v1171 = vpop.f32.mrb[0].mxu0
        %v1172 = vadd.f32 0.0, %v1171
        %v1173 = vpop.f32.mrb[0].mxu0
        %1174 = vmatprep.mubr.bf16.mxu0 0
        %1175 = vmatmul.mubr.bf16.gmra.mrb[0].mxu0 %v564
        %v1176 = vpop.f32.mrb[0].mxu0
        %v1177 = vadd.f32 0.0, %v1176
        %v1178 = vpop.f32.mrb[0].mxu0
        %v1179 = vpop.f32.mrb[0].mxu0
        %v1180 = vadd.f32 0.0, %v1179
        %v1181 = vpop.f32.mrb[0].mxu0
        %1182 = vmatprep.mubr.bf16.mxu0 0
        %1183 = vmatmul.mubr.bf16.gmra.mrb[0].mxu0 %v567
        %v1184 = vpop.f32.mrb[0].mxu0
        %v1185 = vadd.f32 0.0, %v1184
        %v1186 = vpop.f32.mrb[0].mxu0
        %v1187 = vpop.f32.mrb[0].mxu0
        %v1188 = vadd.f32 0.0, %v1187
        %v1189 = vpop.f32.mrb[0].mxu0
        %1190 = vmatprep.mubr.bf16.mxu0 0
        %1191 = vmatmul.mubr.bf16.gmra.mrb[0].mxu0 %v570
        %v1192 = vpop.f32.mrb[0].mxu0
        %v1193 = vadd.f32 0.0, %v1192
        %v1194 = vpop.f32.mrb[0].mxu0
        %v1195 = vpop.f32.mrb[0].mxu0
        %v1196 = vadd.f32 0.0, %v1195
        %v1197 = vpop.f32.mrb[0].mxu0
        %1198 = vmatprep.mubr.bf16.mxu0 0
        %1199 = vmatmul.mubr.bf16.gmra.mrb[0].mxu0 %v573
        %v1200 = vpop.f32.mrb[0].mxu0
        %v1201 = vadd.f32 0.0, %v1200
        %v1202 = vpop.f32.mrb[0].mxu0
        %v1203 = vpop.f32.mrb[0].mxu0
        %v1204 = vadd.f32 0.0, %v1203
        %v1205 = vpop.f32.mrb[0].mxu0
        %1206 = vmatprep.mubr.bf16.mxu0 0
        %1207 = vmatmul.mubr.bf16.gmra.mrb[0].mxu0 %v576
        %v1208 = vpop.f32.mrb[0].mxu0
        %v1209 = vadd.f32 0.0, %v1208
        %v1210 = vpop.f32.mrb[0].mxu0
        %v1211 = vpop.f32.mrb[0].mxu0
        %v1212 = vadd.f32 0.0, %v1211
        %v1213 = vpop.f32.mrb[0].mxu0
        %1214 = vmatprep.mubr.bf16.mxu0 0
        %1215 = vmatmul.mubr.bf16.gmra.mrb[0].mxu0 %v579
        %v1216 = vpop.f32.mrb[0].mxu0
        %v1217 = vadd.f32 0.0, %v1216
        %v1218 = vpop.f32.mrb[0].mxu0
        %v1219 = vpop.f32.mrb[0].mxu0
        %v1220 = vadd.f32 0.0, %v1219
        %v1221 = vpop.f32.mrb[0].mxu0
        %1222 = vmatprep.mubr.bf16.mxu0 0
        %1223 = vmatmul.mubr.bf16.gmra.mrb[0].mxu0 %v582
        %v1224 = vpop.f32.mrb[0].mxu0
        %v1225 = vadd.f32 0.0, %v1224
        %v1226 = vpop.f32.mrb[0].mxu0
        %v1227 = vpop.f32.mrb[0].mxu0
        %v1228 = vadd.f32 0.0, %v1227
        %v1229 = vpop.f32.mrb[0].mxu0
        %1230 = vmatprep.mubr.bf16.mxu0 0
        %1231 = vmatmul.mubr.bf16.gmra.mrb[0].mxu0 %v585
        %v1232 = vpop.f32.mrb[0].mxu0
        %v1233 = vadd.f32 0.0, %v1232
        %v1234 = vpop.f32.mrb[0].mxu0
        %v1235 = vpop.f32.mrb[0].mxu0
        %v1236 = vadd.f32 0.0, %v1235
        %v1237 = vpop.f32.mrb[0].mxu0
        %1238 = vdwg.mxu0
        %v1239 = vpack.c.bf16 %v636, %v632
        %v1240 = vpack.c.bf16 %v638, %v634
        %v1241 = vpack.c.bf16 %v988, %v985
        %v1242 = vpack.c.bf16 %v646, %v642
        %v1243 = vpack.c.bf16 %v648, %v644
        %v1244 = vpack.c.bf16 %v996, %v993
        %v1245 = vpack.c.bf16 %v656, %v652
        %v1246 = vpack.c.bf16 %v658, %v654
        %v1247 = vpack.c.bf16 %v1004, %v1001
        %v1248 = vpack.c.bf16 %v666, %v662
        %v1249 = vpack.c.bf16 %v668, %v664
        %v1250 = vpack.c.bf16 %v1012, %v1009
        %v1251 = vpack.c.bf16 %v676, %v672
        %v1252 = vpack.c.bf16 %v678, %v674
        %v1253 = vpack.c.bf16 %v1020, %v1017
        %v1254 = vpack.c.bf16 %v686, %v682
        %v1255 = vpack.c.bf16 %v688, %v684
        %v1256 = vpack.c.bf16 %v1028, %v1025
        %v1257 = vpack.c.bf16 %v696, %v692
        %v1258 = vpack.c.bf16 %v698, %v694
        %v1259 = vpack.c.bf16 %v1036, %v1033
        %v1260 = vpack.c.bf16 %v706, %v702
        %v1261 = vpack.c.bf16 %v708, %v704
        %v1262 = vpack.c.bf16 %v1044, %v1041
        %v1263 = vpack.c.bf16 %v716, %v712
        %v1264 = vpack.c.bf16 %v718, %v714
        %v1265 = vpack.c.bf16 %v1052, %v1049
        %v1266 = vpack.c.bf16 %v726, %v722
        %v1267 = vpack.c.bf16 %v728, %v724
        %v1268 = vpack.c.bf16 %v1060, %v1057
        %v1269 = vpack.c.bf16 %v736, %v732
        %v1270 = vpack.c.bf16 %v738, %v734
        %v1271 = vpack.c.bf16 %v1068, %v1065
        %v1272 = vpack.c.bf16 %v746, %v742
        %v1273 = vpack.c.bf16 %v748, %v744
        %v1274 = vpack.c.bf16 %v1076, %v1073
        %v1275 = vpack.c.bf16 %v756, %v752
        %v1276 = vpack.c.bf16 %v758, %v754
        %v1277 = vpack.c.bf16 %v1084, %v1081
        %v1278 = vpack.c.bf16 %v766, %v762
        %v1279 = vpack.c.bf16 %v768, %v764
        %v1280 = vpack.c.bf16 %v1092, %v1089
        %v1281 = vpack.c.bf16 %v776, %v772
        %v1282 = vpack.c.bf16 %v778, %v774
        %v1283 = vpack.c.bf16 %v1100, %v1097
        %v1284 = vpack.c.bf16 %v786, %v782
        %v1285 = vpack.c.bf16 %v788, %v784
        %v1286 = vpack.c.bf16 %v1108, %v1105
        %v1287 = vpack.c.bf16 %v796, %v792
        %v1288 = vpack.c.bf16 %v798, %v794
        %v1289 = vpack.c.bf16 %v1116, %v1113
        %v1290 = vpack.c.bf16 %v806, %v802
        %v1291 = vpack.c.bf16 %v808, %v804
        %v1292 = vpack.c.bf16 %v1124, %v1121
        %v1293 = vpack.c.bf16 %v816, %v812
        %v1294 = vpack.c.bf16 %v818, %v814
        %v1295 = vpack.c.bf16 %v1132, %v1129
        %v1296 = vpack.c.bf16 %v826, %v822
        %v1297 = vpack.c.bf16 %v828, %v824
        %v1298 = vpack.c.bf16 %v1140, %v1137
        %v1299 = vpack.c.bf16 %v836, %v832
        %v1300 = vpack.c.bf16 %v838, %v834
        %v1301 = vpack.c.bf16 %v1148, %v1145
        %v1302 = vpack.c.bf16 %v846, %v842
        %v1303 = vpack.c.bf16 %v848, %v844
        %v1304 = vpack.c.bf16 %v1156, %v1153
        %v1305 = vpack.c.bf16 %v856, %v852
        %v1306 = vpack.c.bf16 %v858, %v854
        %v1307 = vpack.c.bf16 %v1164, %v1161
        %v1308 = vpack.c.bf16 %v866, %v862
        %v1309 = vpack.c.bf16 %v868, %v864
        %v1310 = vpack.c.bf16 %v1172, %v1169
        %v1311 = vpack.c.bf16 %v876, %v872
        %v1312 = vpack.c.bf16 %v878, %v874
        %v1313 = vpack.c.bf16 %v1180, %v1177
        %v1314 = vpack.c.bf16 %v886, %v882
        %v1315 = vpack.c.bf16 %v888, %v884
        %v1316 = vpack.c.bf16 %v1188, %v1185
        %v1317 = vpack.c.bf16 %v896, %v892
        %v1318 = vpack.c.bf16 %v898, %v894
        %v1319 = vpack.c.bf16 %v1196, %v1193
        %v1320 = vpack.c.bf16 %v906, %v902
        %v1321 = vpack.c.bf16 %v908, %v904
        %v1322 = vpack.c.bf16 %v1204, %v1201
        %v1323 = vpack.c.bf16 %v916, %v912
        %v1324 = vpack.c.bf16 %v918, %v914
        %v1325 = vpack.c.bf16 %v1212, %v1209
        %v1326 = vpack.c.bf16 %v926, %v922
        %v1327 = vpack.c.bf16 %v928, %v924
        %v1328 = vpack.c.bf16 %v1220, %v1217
        %v1329 = vpack.c.bf16 %v936, %v932
        %v1330 = vpack.c.bf16 %v938, %v934
        %v1331 = vpack.c.bf16 %v1228, %v1225
        %v1332 = vpack.c.bf16 %v946, %v942
        %v1333 = vpack.c.bf16 %v948, %v944
        %v1334 = vpack.c.bf16 %v1236, %v1233
        %v1367 = vunpack.c.l.b16 %v1239
        %v1368 = vunpack.c.h.b16 %v1239
        %v1369 = vunpack.c.l.b16 %v1242
        %v1370 = vunpack.c.h.b16 %v1242
        %v1371 = vunpack.c.l.b16 %v1245
        %v1372 = vunpack.c.h.b16 %v1245
        %v1373 = vunpack.c.l.b16 %v1248
        %v1374 = vunpack.c.h.b16 %v1248
        %v1375 = vunpack.c.l.b16 %v1251
        %v1376 = vunpack.c.h.b16 %v1251
        %v1377 = vunpack.c.l.b16 %v1254
        %v1378 = vunpack.c.h.b16 %v1254
        %v1379 = vunpack.c.l.b16 %v1257
        %v1380 = vunpack.c.h.b16 %v1257
        %v1381 = vunpack.c.l.b16 %v1260
        %v1382 = vunpack.c.h.b16 %v1260
        %v1383 = vunpack.c.l.b16 %v1263
        %v1384 = vunpack.c.h.b16 %v1263
        %v1385 = vunpack.c.l.b16 %v1266
        %v1386 = vunpack.c.h.b16 %v1266
        %v1387 = vunpack.c.l.b16 %v1269
        %v1388 = vunpack.c.h.b16 %v1269
        %v1389 = vunpack.c.l.b16 %v1272
        %v1390 = vunpack.c.h.b16 %v1272
        %v1391 = vunpack.c.l.b16 %v1275
        %v1392 = vunpack.c.h.b16 %v1275
        %v1393 = vunpack.c.l.b16 %v1278
        %v1394 = vunpack.c.h.b16 %v1278
        %v1395 = vunpack.c.l.b16 %v1281
        %v1396 = vunpack.c.h.b16 %v1281
        %v1397 = vunpack.c.l.b16 %v1284
        %v1398 = vunpack.c.h.b16 %v1284
        %v1399 = vunpack.c.l.b16 %v1287
        %v1400 = vunpack.c.h.b16 %v1287
        %v1401 = vunpack.c.l.b16 %v1290
        %v1402 = vunpack.c.h.b16 %v1290
        %v1403 = vunpack.c.l.b16 %v1293
        %v1404 = vunpack.c.h.b16 %v1293
        %v1405 = vunpack.c.l.b16 %v1296
        %v1406 = vunpack.c.h.b16 %v1296
        %v1407 = vunpack.c.l.b16 %v1299
        %v1408 = vunpack.c.h.b16 %v1299
        %v1409 = vunpack.c.l.b16 %v1302
        %v1410 = vunpack.c.h.b16 %v1302
        %v1411 = vunpack.c.l.b16 %v1305
        %v1412 = vunpack.c.h.b16 %v1305
        %v1413 = vunpack.c.l.b16 %v1308
        %v1414 = vunpack.c.h.b16 %v1308
        %v1415 = vunpack.c.l.b16 %v1311
        %v1416 = vunpack.c.h.b16 %v1311
        %v1417 = vunpack.c.l.b16 %v1314
        %v1418 = vunpack.c.h.b16 %v1314
        %v1419 = vunpack.c.l.b16 %v1317
        %v1420 = vunpack.c.h.b16 %v1317
        %v1421 = vunpack.c.l.b16 %v1320
        %v1422 = vunpack.c.h.b16 %v1320
        %v1423 = vunpack.c.l.b16 %v1323
        %v1424 = vunpack.c.h.b16 %v1323
        %v1425 = vunpack.c.l.b16 %v1326
        %v1426 = vunpack.c.h.b16 %v1326
        %v1427 = vunpack.c.l.b16 %v1329
        %v1428 = vunpack.c.h.b16 %v1329
        %v1429 = vunpack.c.l.b16 %v1332
        %v1430 = vunpack.c.h.b16 %v1332
        %v1431 = vpack.c.b16 %v1367, %v1367
        %v1432 = vpack.c.b16 %v1368, %v1368
        %v1433 = vpack.c.b16 %v1369, %v1369
        %v1434 = vpack.c.b16 %v1370, %v1370
        %v1435 = vpack.c.b16 %v1371, %v1371
        %v1436 = vpack.c.b16 %v1372, %v1372
        %v1437 = vpack.c.b16 %v1373, %v1373
        %v1438 = vpack.c.b16 %v1374, %v1374
        %v1439 = vpack.c.b16 %v1375, %v1375
        %v1440 = vpack.c.b16 %v1376, %v1376
        %v1441 = vpack.c.b16 %v1377, %v1377
        %v1442 = vpack.c.b16 %v1378, %v1378
        %v1443 = vpack.c.b16 %v1379, %v1379
        %v1444 = vpack.c.b16 %v1380, %v1380
        %v1445 = vpack.c.b16 %v1381, %v1381
        %v1446 = vpack.c.b16 %v1382, %v1382
        %v1447 = vpack.c.b16 %v1383, %v1383
        %v1448 = vpack.c.b16 %v1384, %v1384
        %v1449 = vpack.c.b16 %v1385, %v1385
        %v1450 = vpack.c.b16 %v1386, %v1386
        %v1451 = vpack.c.b16 %v1387, %v1387
        %v1452 = vpack.c.b16 %v1388, %v1388
        %v1453 = vpack.c.b16 %v1389, %v1389
        %v1454 = vpack.c.b16 %v1390, %v1390
        %v1455 = vpack.c.b16 %v1391, %v1391
        %v1456 = vpack.c.b16 %v1392, %v1392
        %v1457 = vpack.c.b16 %v1393, %v1393
        %v1458 = vpack.c.b16 %v1394, %v1394
        %v1459 = vpack.c.b16 %v1395, %v1395
        %v1460 = vpack.c.b16 %v1396, %v1396
        %v1461 = vpack.c.b16 %v1397, %v1397
        %v1462 = vpack.c.b16 %v1398, %v1398
        %v1463 = vpack.c.b16 %v1399, %v1399
        %v1464 = vpack.c.b16 %v1400, %v1400
        %v1465 = vpack.c.b16 %v1401, %v1401
        %v1466 = vpack.c.b16 %v1402, %v1402
        %v1467 = vpack.c.b16 %v1403, %v1403
        %v1468 = vpack.c.b16 %v1404, %v1404
        %v1469 = vpack.c.b16 %v1405, %v1405
        %v1470 = vpack.c.b16 %v1406, %v1406
        %v1471 = vpack.c.b16 %v1407, %v1407
        %v1472 = vpack.c.b16 %v1408, %v1408
        %v1473 = vpack.c.b16 %v1409, %v1409
        %v1474 = vpack.c.b16 %v1410, %v1410
        %v1475 = vpack.c.b16 %v1411, %v1411
        %v1476 = vpack.c.b16 %v1412, %v1412
        %v1477 = vpack.c.b16 %v1413, %v1413
        %v1478 = vpack.c.b16 %v1414, %v1414
        %v1479 = vpack.c.b16 %v1415, %v1415
        %v1480 = vpack.c.b16 %v1416, %v1416
        %v1481 = vpack.c.b16 %v1417, %v1417
        %v1482 = vpack.c.b16 %v1418, %v1418
        %v1483 = vpack.c.b16 %v1419, %v1419
        %v1484 = vpack.c.b16 %v1420, %v1420
        %v1485 = vpack.c.b16 %v1421, %v1421
        %v1486 = vpack.c.b16 %v1422, %v1422
        %v1487 = vpack.c.b16 %v1423, %v1423
        %v1488 = vpack.c.b16 %v1424, %v1424
        %v1489 = vpack.c.b16 %v1425, %v1425
        %v1490 = vpack.c.b16 %v1426, %v1426
        %v1491 = vpack.c.b16 %v1427, %v1427
        %v1492 = vpack.c.b16 %v1428, %v1428
        %v1493 = vpack.c.b16 %v1429, %v1429
        %v1494 = vpack.c.b16 %v1430, %v1430
        %vm1559 = vcmask 257024
        %1560 = vst.msk [vmem:[%s229] sm:$0xf] %vm1559, %v1431
        %1561 = vst.msk [vmem:[%s229 + $0x4] sm:$0xf] %vm1559, %v1432
        %1562 = vst.msk [vmem:[%s229 + $0x8] sm:$0xf] %vm1559, %v1433
        %1563 = vst.msk [vmem:[%s229 + $0xc] sm:$0xf] %vm1559, %v1434
        %1564 = vst.msk [vmem:[%s229 + $0x10] sm:$0xf] %vm1559, %v1435
        %1565 = vst.msk [vmem:[%s229 + $0x14] sm:$0xf] %vm1559, %v1436
        %1566 = vst.msk [vmem:[%s229 + $0x18] sm:$0xf] %vm1559, %v1437
        %1567 = vst.msk [vmem:[%s229 + $0x1c] sm:$0xf] %vm1559, %v1438
        %1568 = vst.msk [vmem:[%s229 + $0x20] sm:$0xf] %vm1559, %v1439
        %1569 = vst.msk [vmem:[%s229 + $0x24] sm:$0xf] %vm1559, %v1440
        %1570 = vst.msk [vmem:[%s229 + $0x28] sm:$0xf] %vm1559, %v1441
        %1571 = vst.msk [vmem:[%s229 + $0x2c] sm:$0xf] %vm1559, %v1442
        %1572 = vst.msk [vmem:[%s229 + $0x30] sm:$0xf] %vm1559, %v1443
        %1573 = vst.msk [vmem:[%s229 + $0x34] sm:$0xf] %vm1559, %v1444
        %1574 = vst.msk [vmem:[%s229 + $0x38] sm:$0xf] %vm1559, %v1445
        %1575 = vst.msk [vmem:[%s229 + $0x3c] sm:$0xf] %vm1559, %v1446
        %1576 = vst.msk [vmem:[%s229 + $0x40] sm:$0xf] %vm1559, %v1447
        %1577 = vst.msk [vmem:[%s229 + $0x44] sm:$0xf] %vm1559, %v1448
        %1578 = vst.msk [vmem:[%s229 + $0x48] sm:$0xf] %vm1559, %v1449
        %1579 = vst.msk [vmem:[%s229 + $0x4c] sm:$0xf] %vm1559, %v1450
        %1580 = vst.msk [vmem:[%s229 + $0x50] sm:$0xf] %vm1559, %v1451
        %1581 = vst.msk [vmem:[%s229 + $0x54] sm:$0xf] %vm1559, %v1452
        %1582 = vst.msk [vmem:[%s229 + $0x58] sm:$0xf] %vm1559, %v1453
        %1583 = vst.msk [vmem:[%s229 + $0x5c] sm:$0xf] %vm1559, %v1454
        %1584 = vst.msk [vmem:[%s229 + $0x60] sm:$0xf] %vm1559, %v1455
        %1585 = vst.msk [vmem:[%s229 + $0x64] sm:$0xf] %vm1559, %v1456
        %1586 = vst.msk [vmem:[%s229 + $0x68] sm:$0xf] %vm1559, %v1457
        %1587 = vst.msk [vmem:[%s229 + $0x6c] sm:$0xf] %vm1559, %v1458
        %1588 = vst.msk [vmem:[%s229 + $0x70] sm:$0xf] %vm1559, %v1459
        %1589 = vst.msk [vmem:[%s229 + $0x74] sm:$0xf] %vm1559, %v1460
        %1590 = vst.msk [vmem:[%s229 + $0x78] sm:$0xf] %vm1559, %v1461
        %1591 = vst.msk [vmem:[%s229 + $0x7c] sm:$0xf] %vm1559, %v1462
        %1592 = vst.msk [vmem:[%s229 + $0x80] sm:$0xf] %vm1559, %v1463
        %1593 = vst.msk [vmem:[%s229 + $0x84] sm:$0xf] %vm1559, %v1464
        %1594 = vst.msk [vmem:[%s229 + $0x88] sm:$0xf] %vm1559, %v1465
        %1595 = vst.msk [vmem:[%s229 + $0x8c] sm:$0xf] %vm1559, %v1466
        %1596 = vst.msk [vmem:[%s229 + $0x90] sm:$0xf] %vm1559, %v1467
        %1597 = vst.msk [vmem:[%s229 + $0x94] sm:$0xf] %vm1559, %v1468
        %1598 = vst.msk [vmem:[%s229 + $0x98] sm:$0xf] %vm1559, %v1469
        %1599 = vst.msk [vmem:[%s229 + $0x9c] sm:$0xf] %vm1559, %v1470
        %1600 = vst.msk [vmem:[%s229 + $0xa0] sm:$0xf] %vm1559, %v1471
        %1601 = vst.msk [vmem:[%s229 + $0xa4] sm:$0xf] %vm1559, %v1472
        %1602 = vst.msk [vmem:[%s229 + $0xa8] sm:$0xf] %vm1559, %v1473
        %1603 = vst.msk [vmem:[%s229 + $0xac] sm:$0xf] %vm1559, %v1474
        %1604 = vst.msk [vmem:[%s229 + $0xb0] sm:$0xf] %vm1559, %v1475
        %1605 = vst.msk [vmem:[%s229 + $0xb4] sm:$0xf] %vm1559, %v1476
        %1606 = vst.msk [vmem:[%s229 + $0xb8] sm:$0xf] %vm1559, %v1477
        %1607 = vst.msk [vmem:[%s229 + $0xbc] sm:$0xf] %vm1559, %v1478
        %1608 = vst.msk [vmem:[%s229 + $0xc0] sm:$0xf] %vm1559, %v1479
        %1609 = vst.msk [vmem:[%s229 + $0xc4] sm:$0xf] %vm1559, %v1480
        %1610 = vst.msk [vmem:[%s229 + $0xc8] sm:$0xf] %vm1559, %v1481
        %1611 = vst.msk [vmem:[%s229 + $0xcc] sm:$0xf] %vm1559, %v1482
        %1612 = vst.msk [vmem:[%s229 + $0xd0] sm:$0xf] %vm1559, %v1483
        %1613 = vst.msk [vmem:[%s229 + $0xd4] sm:$0xf] %vm1559, %v1484
        %1614 = vst.msk [vmem:[%s229 + $0xd8] sm:$0xf] %vm1559, %v1485
        %1615 = vst.msk [vmem:[%s229 + $0xdc] sm:$0xf] %vm1559, %v1486
        %1616 = vst.msk [vmem:[%s229 + $0xe0] sm:$0xf] %vm1559, %v1487
        %1617 = vst.msk [vmem:[%s229 + $0xe4] sm:$0xf] %vm1559, %v1488
        %1618 = vst.msk [vmem:[%s229 + $0xe8] sm:$0xf] %vm1559, %v1489
        %1619 = vst.msk [vmem:[%s229 + $0xec] sm:$0xf] %vm1559, %v1490
        %1620 = vst.msk [vmem:[%s229 + $0xf0] sm:$0xf] %vm1559, %v1491
        %1621 = vst.msk [vmem:[%s229 + $0xf4] sm:$0xf] %vm1559, %v1492
        %1622 = vst.msk [vmem:[%s229 + $0xf8] sm:$0xf] %vm1559, %v1493
        %1623 = vst.msk [vmem:[%s229 + $0xfc] sm:$0xf] %vm1559, %v1494
        %v1656 = vunpack.c.l.b16 %v1240
        %v1657 = vunpack.c.h.b16 %v1240
        %v1658 = vunpack.c.l.b16 %v1243
        %v1659 = vunpack.c.h.b16 %v1243
        %v1660 = vunpack.c.l.b16 %v1246
        %v1661 = vunpack.c.h.b16 %v1246
        %v1662 = vunpack.c.l.b16 %v1249
        %v1663 = vunpack.c.h.b16 %v1249
        %v1664 = vunpack.c.l.b16 %v1252
        %v1665 = vunpack.c.h.b16 %v1252
        %v1666 = vunpack.c.l.b16 %v1255
        %v1667 = vunpack.c.h.b16 %v1255
        %v1668 = vunpack.c.l.b16 %v1258
        %v1669 = vunpack.c.h.b16 %v1258
        %v1670 = vunpack.c.l.b16 %v1261
        %v1671 = vunpack.c.h.b16 %v1261
        %v1672 = vunpack.c.l.b16 %v1264
        %v1673 = vunpack.c.h.b16 %v1264
        %v1674 = vunpack.c.l.b16 %v1267
        %v1675 = vunpack.c.h.b16 %v1267
        %v1676 = vunpack.c.l.b16 %v1270
        %v1677 = vunpack.c.h.b16 %v1270
        %v1678 = vunpack.c.l.b16 %v1273
        %v1679 = vunpack.c.h.b16 %v1273
        %v1680 = vunpack.c.l.b16 %v1276
        %v1681 = vunpack.c.h.b16 %v1276
        %v1682 = vunpack.c.l.b16 %v1279
        %v1683 = vunpack.c.h.b16 %v1279
        %v1684 = vunpack.c.l.b16 %v1282
        %v1685 = vunpack.c.h.b16 %v1282
        %v1686 = vunpack.c.l.b16 %v1285
        %v1687 = vunpack.c.h.b16 %v1285
        %v1688 = vunpack.c.l.b16 %v1288
        %v1689 = vunpack.c.h.b16 %v1288
        %v1690 = vunpack.c.l.b16 %v1291
        %v1691 = vunpack.c.h.b16 %v1291
        %v1692 = vunpack.c.l.b16 %v1294
        %v1693 = vunpack.c.h.b16 %v1294
        %v1694 = vunpack.c.l.b16 %v1297
        %v1695 = vunpack.c.h.b16 %v1297
        %v1696 = vunpack.c.l.b16 %v1300
        %v1697 = vunpack.c.h.b16 %v1300
        %v1698 = vunpack.c.l.b16 %v1303
        %v1699 = vunpack.c.h.b16 %v1303
        %v1700 = vunpack.c.l.b16 %v1306
        %v1701 = vunpack.c.h.b16 %v1306
        %v1702 = vunpack.c.l.b16 %v1309
        %v1703 = vunpack.c.h.b16 %v1309
        %v1704 = vunpack.c.l.b16 %v1312
        %v1705 = vunpack.c.h.b16 %v1312
        %v1706 = vunpack.c.l.b16 %v1315
        %v1707 = vunpack.c.h.b16 %v1315
        %v1708 = vunpack.c.l.b16 %v1318
        %v1709 = vunpack.c.h.b16 %v1318
        %v1710 = vunpack.c.l.b16 %v1321
        %v1711 = vunpack.c.h.b16 %v1321
        %v1712 = vunpack.c.l.b16 %v1324
        %v1713 = vunpack.c.h.b16 %v1324
        %v1714 = vunpack.c.l.b16 %v1327
        %v1715 = vunpack.c.h.b16 %v1327
        %v1716 = vunpack.c.l.b16 %v1330
        %v1717 = vunpack.c.h.b16 %v1330
        %v1718 = vunpack.c.l.b16 %v1333
        %v1719 = vunpack.c.h.b16 %v1333
        %v1720 = vpack.c.b16 %v1656, %v1656
        %v1721 = vpack.c.b16 %v1657, %v1657
        %v1722 = vpack.c.b16 %v1658, %v1658
        %v1723 = vpack.c.b16 %v1659, %v1659
        %v1724 = vpack.c.b16 %v1660, %v1660
        %v1725 = vpack.c.b16 %v1661, %v1661
        %v1726 = vpack.c.b16 %v1662, %v1662
        %v1727 = vpack.c.b16 %v1663, %v1663
        %v1728 = vpack.c.b16 %v1664, %v1664
        %v1729 = vpack.c.b16 %v1665, %v1665
        %v1730 = vpack.c.b16 %v1666, %v1666
        %v1731 = vpack.c.b16 %v1667, %v1667
        %v1732 = vpack.c.b16 %v1668, %v1668
        %v1733 = vpack.c.b16 %v1669, %v1669
        %v1734 = vpack.c.b16 %v1670, %v1670
        %v1735 = vpack.c.b16 %v1671, %v1671
        %v1736 = vpack.c.b16 %v1672, %v1672
        %v1737 = vpack.c.b16 %v1673, %v1673
        %v1738 = vpack.c.b16 %v1674, %v1674
        %v1739 = vpack.c.b16 %v1675, %v1675
        %v1740 = vpack.c.b16 %v1676, %v1676
        %v1741 = vpack.c.b16 %v1677, %v1677
        %v1742 = vpack.c.b16 %v1678, %v1678
        %v1743 = vpack.c.b16 %v1679, %v1679
        %v1744 = vpack.c.b16 %v1680, %v1680
        %v1745 = vpack.c.b16 %v1681, %v1681
        %v1746 = vpack.c.b16 %v1682, %v1682
        %v1747 = vpack.c.b16 %v1683, %v1683
        %v1748 = vpack.c.b16 %v1684, %v1684
        %v1749 = vpack.c.b16 %v1685, %v1685
        %v1750 = vpack.c.b16 %v1686, %v1686
        %v1751 = vpack.c.b16 %v1687, %v1687
        %v1752 = vpack.c.b16 %v1688, %v1688
        %v1753 = vpack.c.b16 %v1689, %v1689
        %v1754 = vpack.c.b16 %v1690, %v1690
        %v1755 = vpack.c.b16 %v1691, %v1691
        %v1756 = vpack.c.b16 %v1692, %v1692
        %v1757 = vpack.c.b16 %v1693, %v1693
        %v1758 = vpack.c.b16 %v1694, %v1694
        %v1759 = vpack.c.b16 %v1695, %v1695
        %v1760 = vpack.c.b16 %v1696, %v1696
        %v1761 = vpack.c.b16 %v1697, %v1697
        %v1762 = vpack.c.b16 %v1698, %v1698
        %v1763 = vpack.c.b16 %v1699, %v1699
        %v1764 = vpack.c.b16 %v1700, %v1700
        %v1765 = vpack.c.b16 %v1701, %v1701
        %v1766 = vpack.c.b16 %v1702, %v1702
        %v1767 = vpack.c.b16 %v1703, %v1703
        %v1768 = vpack.c.b16 %v1704, %v1704
        %v1769 = vpack.c.b16 %v1705, %v1705
        %v1770 = vpack.c.b16 %v1706, %v1706
        %v1771 = vpack.c.b16 %v1707, %v1707
        %v1772 = vpack.c.b16 %v1708, %v1708
        %v1773 = vpack.c.b16 %v1709, %v1709
        %v1774 = vpack.c.b16 %v1710, %v1710
        %v1775 = vpack.c.b16 %v1711, %v1711
        %v1776 = vpack.c.b16 %v1712, %v1712
        %v1777 = vpack.c.b16 %v1713, %v1713
        %v1778 = vpack.c.b16 %v1714, %v1714
        %v1779 = vpack.c.b16 %v1715, %v1715
        %v1780 = vpack.c.b16 %v1716, %v1716
        %v1781 = vpack.c.b16 %v1717, %v1717
        %v1782 = vpack.c.b16 %v1718, %v1718
        %v1783 = vpack.c.b16 %v1719, %v1719
        %1848 = vst.msk [vmem:[%s235] sm:$0xf] %vm1559, %v1720
        %1849 = vst.msk [vmem:[%s235 + $0x4] sm:$0xf] %vm1559, %v1721
        %1850 = vst.msk [vmem:[%s235 + $0x8] sm:$0xf] %vm1559, %v1722
        %1851 = vst.msk [vmem:[%s235 + $0xc] sm:$0xf] %vm1559, %v1723
        %1852 = vst.msk [vmem:[%s235 + $0x10] sm:$0xf] %vm1559, %v1724
        %1853 = vst.msk [vmem:[%s235 + $0x14] sm:$0xf] %vm1559, %v1725
        %1854 = vst.msk [vmem:[%s235 + $0x18] sm:$0xf] %vm1559, %v1726
        %1855 = vst.msk [vmem:[%s235 + $0x1c] sm:$0xf] %vm1559, %v1727
        %1856 = vst.msk [vmem:[%s235 + $0x20] sm:$0xf] %vm1559, %v1728
        %1857 = vst.msk [vmem:[%s235 + $0x24] sm:$0xf] %vm1559, %v1729
        %1858 = vst.msk [vmem:[%s235 + $0x28] sm:$0xf] %vm1559, %v1730
        %1859 = vst.msk [vmem:[%s235 + $0x2c] sm:$0xf] %vm1559, %v1731
        %1860 = vst.msk [vmem:[%s235 + $0x30] sm:$0xf] %vm1559, %v1732
        %1861 = vst.msk [vmem:[%s235 + $0x34] sm:$0xf] %vm1559, %v1733
        %1862 = vst.msk [vmem:[%s235 + $0x38] sm:$0xf] %vm1559, %v1734
        %1863 = vst.msk [vmem:[%s235 + $0x3c] sm:$0xf] %vm1559, %v1735
        %1864 = vst.msk [vmem:[%s235 + $0x40] sm:$0xf] %vm1559, %v1736
        %1865 = vst.msk [vmem:[%s235 + $0x44] sm:$0xf] %vm1559, %v1737
        %1866 = vst.msk [vmem:[%s235 + $0x48] sm:$0xf] %vm1559, %v1738
        %1867 = vst.msk [vmem:[%s235 + $0x4c] sm:$0xf] %vm1559, %v1739
        %1868 = vst.msk [vmem:[%s235 + $0x50] sm:$0xf] %vm1559, %v1740
        %1869 = vst.msk [vmem:[%s235 + $0x54] sm:$0xf] %vm1559, %v1741
        %1870 = vst.msk [vmem:[%s235 + $0x58] sm:$0xf] %vm1559, %v1742
        %1871 = vst.msk [vmem:[%s235 + $0x5c] sm:$0xf] %vm1559, %v1743
        %1872 = vst.msk [vmem:[%s235 + $0x60] sm:$0xf] %vm1559, %v1744
        %1873 = vst.msk [vmem:[%s235 + $0x64] sm:$0xf] %vm1559, %v1745
        %1874 = vst.msk [vmem:[%s235 + $0x68] sm:$0xf] %vm1559, %v1746
        %1875 = vst.msk [vmem:[%s235 + $0x6c] sm:$0xf] %vm1559, %v1747
        %1876 = vst.msk [vmem:[%s235 + $0x70] sm:$0xf] %vm1559, %v1748
        %1877 = vst.msk [vmem:[%s235 + $0x74] sm:$0xf] %vm1559, %v1749
        %1878 = vst.msk [vmem:[%s235 + $0x78] sm:$0xf] %vm1559, %v1750
        %1879 = vst.msk [vmem:[%s235 + $0x7c] sm:$0xf] %vm1559, %v1751
        %1880 = vst.msk [vmem:[%s235 + $0x80] sm:$0xf] %vm1559, %v1752
        %1881 = vst.msk [vmem:[%s235 + $0x84] sm:$0xf] %vm1559, %v1753
        %1882 = vst.msk [vmem:[%s235 + $0x88] sm:$0xf] %vm1559, %v1754
        %1883 = vst.msk [vmem:[%s235 + $0x8c] sm:$0xf] %vm1559, %v1755
        %1884 = vst.msk [vmem:[%s235 + $0x90] sm:$0xf] %vm1559, %v1756
        %1885 = vst.msk [vmem:[%s235 + $0x94] sm:$0xf] %vm1559, %v1757
        %1886 = vst.msk [vmem:[%s235 + $0x98] sm:$0xf] %vm1559, %v1758
        %1887 = vst.msk [vmem:[%s235 + $0x9c] sm:$0xf] %vm1559, %v1759
        %1888 = vst.msk [vmem:[%s235 + $0xa0] sm:$0xf] %vm1559, %v1760
        %1889 = vst.msk [vmem:[%s235 + $0xa4] sm:$0xf] %vm1559, %v1761
        %1890 = vst.msk [vmem:[%s235 + $0xa8] sm:$0xf] %vm1559, %v1762
        %1891 = vst.msk [vmem:[%s235 + $0xac] sm:$0xf] %vm1559, %v1763
        %1892 = vst.msk [vmem:[%s235 + $0xb0] sm:$0xf] %vm1559, %v1764
        %1893 = vst.msk [vmem:[%s235 + $0xb4] sm:$0xf] %vm1559, %v1765
        %1894 = vst.msk [vmem:[%s235 + $0xb8] sm:$0xf] %vm1559, %v1766
        %1895 = vst.msk [vmem:[%s235 + $0xbc] sm:$0xf] %vm1559, %v1767
        %1896 = vst.msk [vmem:[%s235 + $0xc0] sm:$0xf] %vm1559, %v1768
        %1897 = vst.msk [vmem:[%s235 + $0xc4] sm:$0xf] %vm1559, %v1769
        %1898 = vst.msk [vmem:[%s235 + $0xc8] sm:$0xf] %vm1559, %v1770
        %1899 = vst.msk [vmem:[%s235 + $0xcc] sm:$0xf] %vm1559, %v1771
        %1900 = vst.msk [vmem:[%s235 + $0xd0] sm:$0xf] %vm1559, %v1772
        %1901 = vst.msk [vmem:[%s235 + $0xd4] sm:$0xf] %vm1559, %v1773
        %1902 = vst.msk [vmem:[%s235 + $0xd8] sm:$0xf] %vm1559, %v1774
        %1903 = vst.msk [vmem:[%s235 + $0xdc] sm:$0xf] %vm1559, %v1775
        %1904 = vst.msk [vmem:[%s235 + $0xe0] sm:$0xf] %vm1559, %v1776
        %1905 = vst.msk [vmem:[%s235 + $0xe4] sm:$0xf] %vm1559, %v1777
        %1906 = vst.msk [vmem:[%s235 + $0xe8] sm:$0xf] %vm1559, %v1778
        %1907 = vst.msk [vmem:[%s235 + $0xec] sm:$0xf] %vm1559, %v1779
        %1908 = vst.msk [vmem:[%s235 + $0xf0] sm:$0xf] %vm1559, %v1780
        %1909 = vst.msk [vmem:[%s235 + $0xf4] sm:$0xf] %vm1559, %v1781
        %1910 = vst.msk [vmem:[%s235 + $0xf8] sm:$0xf] %vm1559, %v1782
        %1911 = vst.msk [vmem:[%s235 + $0xfc] sm:$0xf] %vm1559, %v1783
        %v1944 = vunpack.c.l.b16 %v1241
        %v1945 = vunpack.c.h.b16 %v1241
        %v1946 = vunpack.c.l.b16 %v1244
        %v1947 = vunpack.c.h.b16 %v1244
        %v1948 = vunpack.c.l.b16 %v1247
        %v1949 = vunpack.c.h.b16 %v1247
        %v1950 = vunpack.c.l.b16 %v1250
        %v1951 = vunpack.c.h.b16 %v1250
        %v1952 = vunpack.c.l.b16 %v1253
        %v1953 = vunpack.c.h.b16 %v1253
        %v1954 = vunpack.c.l.b16 %v1256
        %v1955 = vunpack.c.h.b16 %v1256
        %v1956 = vunpack.c.l.b16 %v1259
        %v1957 = vunpack.c.h.b16 %v1259
        %v1958 = vunpack.c.l.b16 %v1262
        %v1959 = vunpack.c.h.b16 %v1262
        %v1960 = vunpack.c.l.b16 %v1265
        %v1961 = vunpack.c.h.b16 %v1265
        %v1962 = vunpack.c.l.b16 %v1268
        %v1963 = vunpack.c.h.b16 %v1268
        %v1964 = vunpack.c.l.b16 %v1271
        %v1965 = vunpack.c.h.b16 %v1271
        %v1966 = vunpack.c.l.b16 %v1274
        %v1967 = vunpack.c.h.b16 %v1274
        %v1968 = vunpack.c.l.b16 %v1277
        %v1969 = vunpack.c.h.b16 %v1277
        %v1970 = vunpack.c.l.b16 %v1280
        %v1971 = vunpack.c.h.b16 %v1280
        %v1972 = vunpack.c.l.b16 %v1283
        %v1973 = vunpack.c.h.b16 %v1283
        %v1974 = vunpack.c.l.b16 %v1286
        %v1975 = vunpack.c.h.b16 %v1286
        %v1976 = vunpack.c.l.b16 %v1289
        %v1977 = vunpack.c.h.b16 %v1289
        %v1978 = vunpack.c.l.b16 %v1292
        %v1979 = vunpack.c.h.b16 %v1292
        %v1980 = vunpack.c.l.b16 %v1295
        %v1981 = vunpack.c.h.b16 %v1295
        %v1982 = vunpack.c.l.b16 %v1298
        %v1983 = vunpack.c.h.b16 %v1298
        %v1984 = vunpack.c.l.b16 %v1301
        %v1985 = vunpack.c.h.b16 %v1301
        %v1986 = vunpack.c.l.b16 %v1304
        %v1987 = vunpack.c.h.b16 %v1304
        %v1988 = vunpack.c.l.b16 %v1307
        %v1989 = vunpack.c.h.b16 %v1307
        %v1990 = vunpack.c.l.b16 %v1310
        %v1991 = vunpack.c.h.b16 %v1310
        %v1992 = vunpack.c.l.b16 %v1313
        %v1993 = vunpack.c.h.b16 %v1313
        %v1994 = vunpack.c.l.b16 %v1316
        %v1995 = vunpack.c.h.b16 %v1316
        %v1996 = vunpack.c.l.b16 %v1319
        %v1997 = vunpack.c.h.b16 %v1319
        %v1998 = vunpack.c.l.b16 %v1322
        %v1999 = vunpack.c.h.b16 %v1322
        %v2000 = vunpack.c.l.b16 %v1325
        %v2001 = vunpack.c.h.b16 %v1325
        %v2002 = vunpack.c.l.b16 %v1328
        %v2003 = vunpack.c.h.b16 %v1328
        %v2004 = vunpack.c.l.b16 %v1331
        %v2005 = vunpack.c.h.b16 %v1331
        %v2006 = vunpack.c.l.b16 %v1334
        %v2007 = vunpack.c.h.b16 %v1334
        %v2008 = vpack.c.b16 %v1944, %v1944
        %v2009 = vpack.c.b16 %v1945, %v1945
        %v2010 = vpack.c.b16 %v1946, %v1946
        %v2011 = vpack.c.b16 %v1947, %v1947
        %v2012 = vpack.c.b16 %v1948, %v1948
        %v2013 = vpack.c.b16 %v1949, %v1949
        %v2014 = vpack.c.b16 %v1950, %v1950
        %v2015 = vpack.c.b16 %v1951, %v1951
        %v2016 = vpack.c.b16 %v1952, %v1952
        %v2017 = vpack.c.b16 %v1953, %v1953
        %v2018 = vpack.c.b16 %v1954, %v1954
        %v2019 = vpack.c.b16 %v1955, %v1955
        %v2020 = vpack.c.b16 %v1956, %v1956
        %v2021 = vpack.c.b16 %v1957, %v1957
        %v2022 = vpack.c.b16 %v1958, %v1958
        %v2023 = vpack.c.b16 %v1959, %v1959
        %v2024 = vpack.c.b16 %v1960, %v1960
        %v2025 = vpack.c.b16 %v1961, %v1961
        %v2026 = vpack.c.b16 %v1962, %v1962
        %v2027 = vpack.c.b16 %v1963, %v1963
        %v2028 = vpack.c.b16 %v1964, %v1964
        %v2029 = vpack.c.b16 %v1965, %v1965
        %v2030 = vpack.c.b16 %v1966, %v1966
        %v2031 = vpack.c.b16 %v1967, %v1967
        %v2032 = vpack.c.b16 %v1968, %v1968
        %v2033 = vpack.c.b16 %v1969, %v1969
        %v2034 = vpack.c.b16 %v1970, %v1970
        %v2035 = vpack.c.b16 %v1971, %v1971
        %v2036 = vpack.c.b16 %v1972, %v1972
        %v2037 = vpack.c.b16 %v1973, %v1973
        %v2038 = vpack.c.b16 %v1974, %v1974
        %v2039 = vpack.c.b16 %v1975, %v1975
        %v2040 = vpack.c.b16 %v1976, %v1976
        %v2041 = vpack.c.b16 %v1977, %v1977
        %v2042 = vpack.c.b16 %v1978, %v1978
        %v2043 = vpack.c.b16 %v1979, %v1979
        %v2044 = vpack.c.b16 %v1980, %v1980
        %v2045 = vpack.c.b16 %v1981, %v1981
        %v2046 = vpack.c.b16 %v1982, %v1982
        %v2047 = vpack.c.b16 %v1983, %v1983
        %v2048 = vpack.c.b16 %v1984, %v1984
        %v2049 = vpack.c.b16 %v1985, %v1985
        %v2050 = vpack.c.b16 %v1986, %v1986
        %v2051 = vpack.c.b16 %v1987, %v1987
        %v2052 = vpack.c.b16 %v1988, %v1988
        %v2053 = vpack.c.b16 %v1989, %v1989
        %v2054 = vpack.c.b16 %v1990, %v1990
        %v2055 = vpack.c.b16 %v1991, %v1991
        %v2056 = vpack.c.b16 %v1992, %v1992
        %v2057 = vpack.c.b16 %v1993, %v1993
        %v2058 = vpack.c.b16 %v1994, %v1994
        %v2059 = vpack.c.b16 %v1995, %v1995
        %v2060 = vpack.c.b16 %v1996, %v1996
        %v2061 = vpack.c.b16 %v1997, %v1997
        %v2062 = vpack.c.b16 %v1998, %v1998
        %v2063 = vpack.c.b16 %v1999, %v1999
        %v2064 = vpack.c.b16 %v2000, %v2000
        %v2065 = vpack.c.b16 %v2001, %v2001
        %v2066 = vpack.c.b16 %v2002, %v2002
        %v2067 = vpack.c.b16 %v2003, %v2003
        %v2068 = vpack.c.b16 %v2004, %v2004
        %v2069 = vpack.c.b16 %v2005, %v2005
        %v2070 = vpack.c.b16 %v2006, %v2006
        %v2071 = vpack.c.b16 %v2007, %v2007
        %2136 = vst.msk [vmem:[%s241] sm:$0xf] %vm1559, %v2008
        %2137 = vst.msk [vmem:[%s241 + $0x4] sm:$0xf] %vm1559, %v2009
        %2138 = vst.msk [vmem:[%s241 + $0x8] sm:$0xf] %vm1559, %v2010
        %2139 = vst.msk [vmem:[%s241 + $0xc] sm:$0xf] %vm1559, %v2011
        %2140 = vst.msk [vmem:[%s241 + $0x10] sm:$0xf] %vm1559, %v2012
        %2141 = vst.msk [vmem:[%s241 + $0x14] sm:$0xf] %vm1559, %v2013
        %2142 = vst.msk [vmem:[%s241 + $0x18] sm:$0xf] %vm1559, %v2014
        %2143 = vst.msk [vmem:[%s241 + $0x1c] sm:$0xf] %vm1559, %v2015
        %2144 = vst.msk [vmem:[%s241 + $0x20] sm:$0xf] %vm1559, %v2016
        %2145 = vst.msk [vmem:[%s241 + $0x24] sm:$0xf] %vm1559, %v2017
        %2146 = vst.msk [vmem:[%s241 + $0x28] sm:$0xf] %vm1559, %v2018
        %2147 = vst.msk [vmem:[%s241 + $0x2c] sm:$0xf] %vm1559, %v2019
        %2148 = vst.msk [vmem:[%s241 + $0x30] sm:$0xf] %vm1559, %v2020
        %2149 = vst.msk [vmem:[%s241 + $0x34] sm:$0xf] %vm1559, %v2021
        %2150 = vst.msk [vmem:[%s241 + $0x38] sm:$0xf] %vm1559, %v2022
        %2151 = vst.msk [vmem:[%s241 + $0x3c] sm:$0xf] %vm1559, %v2023
        %2152 = vst.msk [vmem:[%s241 + $0x40] sm:$0xf] %vm1559, %v2024
        %2153 = vst.msk [vmem:[%s241 + $0x44] sm:$0xf] %vm1559, %v2025
        %2154 = vst.msk [vmem:[%s241 + $0x48] sm:$0xf] %vm1559, %v2026
        %2155 = vst.msk [vmem:[%s241 + $0x4c] sm:$0xf] %vm1559, %v2027
        %2156 = vst.msk [vmem:[%s241 + $0x50] sm:$0xf] %vm1559, %v2028
        %2157 = vst.msk [vmem:[%s241 + $0x54] sm:$0xf] %vm1559, %v2029
        %2158 = vst.msk [vmem:[%s241 + $0x58] sm:$0xf] %vm1559, %v2030
        %2159 = vst.msk [vmem:[%s241 + $0x5c] sm:$0xf] %vm1559, %v2031
        %2160 = vst.msk [vmem:[%s241 + $0x60] sm:$0xf] %vm1559, %v2032
        %2161 = vst.msk [vmem:[%s241 + $0x64] sm:$0xf] %vm1559, %v2033
        %2162 = vst.msk [vmem:[%s241 + $0x68] sm:$0xf] %vm1559, %v2034
        %2163 = vst.msk [vmem:[%s241 + $0x6c] sm:$0xf] %vm1559, %v2035
        %2164 = vst.msk [vmem:[%s241 + $0x70] sm:$0xf] %vm1559, %v2036
        %2165 = vst.msk [vmem:[%s241 + $0x74] sm:$0xf] %vm1559, %v2037
        %2166 = vst.msk [vmem:[%s241 + $0x78] sm:$0xf] %vm1559, %v2038
        %2167 = vst.msk [vmem:[%s241 + $0x7c] sm:$0xf] %vm1559, %v2039
        %2168 = vst.msk [vmem:[%s241 + $0x80] sm:$0xf] %vm1559, %v2040
        %2169 = vst.msk [vmem:[%s241 + $0x84] sm:$0xf] %vm1559, %v2041
        %2170 = vst.msk [vmem:[%s241 + $0x88] sm:$0xf] %vm1559, %v2042
        %2171 = vst.msk [vmem:[%s241 + $0x8c] sm:$0xf] %vm1559, %v2043
        %2172 = vst.msk [vmem:[%s241 + $0x90] sm:$0xf] %vm1559, %v2044
        %2173 = vst.msk [vmem:[%s241 + $0x94] sm:$0xf] %vm1559, %v2045
        %2174 = vst.msk [vmem:[%s241 + $0x98] sm:$0xf] %vm1559, %v2046
        %2175 = vst.msk [vmem:[%s241 + $0x9c] sm:$0xf] %vm1559, %v2047
        %2176 = vst.msk [vmem:[%s241 + $0xa0] sm:$0xf] %vm1559, %v2048
        %2177 = vst.msk [vmem:[%s241 + $0xa4] sm:$0xf] %vm1559, %v2049
        %2178 = vst.msk [vmem:[%s241 + $0xa8] sm:$0xf] %vm1559, %v2050
        %2179 = vst.msk [vmem:[%s241 + $0xac] sm:$0xf] %vm1559, %v2051
        %2180 = vst.msk [vmem:[%s241 + $0xb0] sm:$0xf] %vm1559, %v2052
        %2181 = vst.msk [vmem:[%s241 + $0xb4] sm:$0xf] %vm1559, %v2053
        %2182 = vst.msk [vmem:[%s241 + $0xb8] sm:$0xf] %vm1559, %v2054
        %2183 = vst.msk [vmem:[%s241 + $0xbc] sm:$0xf] %vm1559, %v2055
        %2184 = vst.msk [vmem:[%s241 + $0xc0] sm:$0xf] %vm1559, %v2056
        %2185 = vst.msk [vmem:[%s241 + $0xc4] sm:$0xf] %vm1559, %v2057
        %2186 = vst.msk [vmem:[%s241 + $0xc8] sm:$0xf] %vm1559, %v2058
        %2187 = vst.msk [vmem:[%s241 + $0xcc] sm:$0xf] %vm1559, %v2059
        %2188 = vst.msk [vmem:[%s241 + $0xd0] sm:$0xf] %vm1559, %v2060
        %2189 = vst.msk [vmem:[%s241 + $0xd4] sm:$0xf] %vm1559, %v2061
        %2190 = vst.msk [vmem:[%s241 + $0xd8] sm:$0xf] %vm1559, %v2062
        %2191 = vst.msk [vmem:[%s241 + $0xdc] sm:$0xf] %vm1559, %v2063
        %2192 = vst.msk [vmem:[%s241 + $0xe0] sm:$0xf] %vm1559, %v2064
        %2193 = vst.msk [vmem:[%s241 + $0xe4] sm:$0xf] %vm1559, %v2065
        %2194 = vst.msk [vmem:[%s241 + $0xe8] sm:$0xf] %vm1559, %v2066
        %2195 = vst.msk [vmem:[%s241 + $0xec] sm:$0xf] %vm1559, %v2067
        %2196 = vst.msk [vmem:[%s241 + $0xf0] sm:$0xf] %vm1559, %v2068
        %2197 = vst.msk [vmem:[%s241 + $0xf4] sm:$0xf] %vm1559, %v2069
        %2198 = vst.msk [vmem:[%s241 + $0xf8] sm:$0xf] %vm1559, %v2070
        %2199 = vst.msk [vmem:[%s241 + $0xfc] sm:$0xf] %vm1559, %v2071
        %2200 = vrot.lane.b32.xlu0 %v1431, 96
        %v2201 = vpop.permute.xlu0 %2200
        %2202 = vrot.lane.b32.xlu0 %v1432, 96
        %v2203 = vpop.permute.xlu0 %2202
        %2204 = vrot.lane.b32.xlu0 %v1433, 96
        %v2205 = vpop.permute.xlu0 %2204
        %2206 = vrot.lane.b32.xlu0 %v1434, 96
        %v2207 = vpop.permute.xlu0 %2206
        %2208 = vrot.lane.b32.xlu0 %v1435, 96
        %v2209 = vpop.permute.xlu0 %2208
        %2210 = vrot.lane.b32.xlu0 %v1436, 96
        %v2211 = vpop.permute.xlu0 %2210
        %2212 = vrot.lane.b32.xlu0 %v1437, 96
        %v2213 = vpop.permute.xlu0 %2212
        %2214 = vrot.lane.b32.xlu0 %v1438, 96
        %v2215 = vpop.permute.xlu0 %2214
        %2216 = vrot.lane.b32.xlu0 %v1439, 96
        %v2217 = vpop.permute.xlu0 %2216
        %2218 = vrot.lane.b32.xlu0 %v1440, 96
        %v2219 = vpop.permute.xlu0 %2218
        %2220 = vrot.lane.b32.xlu0 %v1441, 96
        %v2221 = vpop.permute.xlu0 %2220
        %2222 = vrot.lane.b32.xlu0 %v1442, 96
        %v2223 = vpop.permute.xlu0 %2222
        %2224 = vrot.lane.b32.xlu0 %v1443, 96
        %v2225 = vpop.permute.xlu0 %2224
        %2226 = vrot.lane.b32.xlu0 %v1444, 96
        %v2227 = vpop.permute.xlu0 %2226
        %2228 = vrot.lane.b32.xlu0 %v1445, 96
        %v2229 = vpop.permute.xlu0 %2228
        %2230 = vrot.lane.b32.xlu0 %v1446, 96
        %v2231 = vpop.permute.xlu0 %2230
        %2232 = vrot.lane.b32.xlu0 %v1447, 96
        %v2233 = vpop.permute.xlu0 %2232
        %2234 = vrot.lane.b32.xlu0 %v1448, 96
        %v2235 = vpop.permute.xlu0 %2234
        %2236 = vrot.lane.b32.xlu0 %v1449, 96
        %v2237 = vpop.permute.xlu0 %2236
        %2238 = vrot.lane.b32.xlu0 %v1450, 96
        %v2239 = vpop.permute.xlu0 %2238
        %2240 = vrot.lane.b32.xlu0 %v1451, 96
        %v2241 = vpop.permute.xlu0 %2240
        %2242 = vrot.lane.b32.xlu0 %v1452, 96
        %v2243 = vpop.permute.xlu0 %2242
        %2244 = vrot.lane.b32.xlu0 %v1453, 96
        %v2245 = vpop.permute.xlu0 %2244
        %2246 = vrot.lane.b32.xlu0 %v1454, 96
        %v2247 = vpop.permute.xlu0 %2246
        %2248 = vrot.lane.b32.xlu0 %v1455, 96
        %v2249 = vpop.permute.xlu0 %2248
        %2250 = vrot.lane.b32.xlu0 %v1456, 96
        %v2251 = vpop.permute.xlu0 %2250
        %2252 = vrot.lane.b32.xlu0 %v1457, 96
        %v2253 = vpop.permute.xlu0 %2252
        %2254 = vrot.lane.b32.xlu0 %v1458, 96
        %v2255 = vpop.permute.xlu0 %2254
        %2256 = vrot.lane.b32.xlu0 %v1459, 96
        %v2257 = vpop.permute.xlu0 %2256
        %2258 = vrot.lane.b32.xlu0 %v1460, 96
        %v2259 = vpop.permute.xlu0 %2258
        %2260 = vrot.lane.b32.xlu0 %v1461, 96
        %v2261 = vpop.permute.xlu0 %2260
        %2262 = vrot.lane.b32.xlu0 %v1462, 96
        %v2263 = vpop.permute.xlu0 %2262
        %2264 = vrot.lane.b32.xlu0 %v1463, 96
        %v2265 = vpop.permute.xlu0 %2264
        %2266 = vrot.lane.b32.xlu0 %v1464, 96
        %v2267 = vpop.permute.xlu0 %2266
        %2268 = vrot.lane.b32.xlu0 %v1465, 96
        %v2269 = vpop.permute.xlu0 %2268
        %2270 = vrot.lane.b32.xlu0 %v1466, 96
        %v2271 = vpop.permute.xlu0 %2270
        %2272 = vrot.lane.b32.xlu0 %v1467, 96
        %v2273 = vpop.permute.xlu0 %2272
        %2274 = vrot.lane.b32.xlu0 %v1468, 96
        %v2275 = vpop.permute.xlu0 %2274
        %2276 = vrot.lane.b32.xlu0 %v1469, 96
        %v2277 = vpop.permute.xlu0 %2276
        %2278 = vrot.lane.b32.xlu0 %v1470, 96
        %v2279 = vpop.permute.xlu0 %2278
        %2280 = vrot.lane.b32.xlu0 %v1471, 96
        %v2281 = vpop.permute.xlu0 %2280
        %2282 = vrot.lane.b32.xlu0 %v1472, 96
        %v2283 = vpop.permute.xlu0 %2282
        %2284 = vrot.lane.b32.xlu0 %v1473, 96
        %v2285 = vpop.permute.xlu0 %2284
        %2286 = vrot.lane.b32.xlu0 %v1474, 96
        %v2287 = vpop.permute.xlu0 %2286
        %2288 = vrot.lane.b32.xlu0 %v1475, 96
        %v2289 = vpop.permute.xlu0 %2288
        %2290 = vrot.lane.b32.xlu0 %v1476, 96
        %v2291 = vpop.permute.xlu0 %2290
        %2292 = vrot.lane.b32.xlu0 %v1477, 96
        %v2293 = vpop.permute.xlu0 %2292
        %2294 = vrot.lane.b32.xlu0 %v1478, 96
        %v2295 = vpop.permute.xlu0 %2294
        %2296 = vrot.lane.b32.xlu0 %v1479, 96
        %v2297 = vpop.permute.xlu0 %2296
        %2298 = vrot.lane.b32.xlu0 %v1480, 96
        %v2299 = vpop.permute.xlu0 %2298
        %2300 = vrot.lane.b32.xlu0 %v1481, 96
        %v2301 = vpop.permute.xlu0 %2300
        %2302 = vrot.lane.b32.xlu0 %v1482, 96
        %v2303 = vpop.permute.xlu0 %2302
        %2304 = vrot.lane.b32.xlu0 %v1483, 96
        %v2305 = vpop.permute.xlu0 %2304
        %2306 = vrot.lane.b32.xlu0 %v1484, 96
        %v2307 = vpop.permute.xlu0 %2306
        %2308 = vrot.lane.b32.xlu0 %v1485, 96
        %v2309 = vpop.permute.xlu0 %2308
        %2310 = vrot.lane.b32.xlu0 %v1486, 96
        %v2311 = vpop.permute.xlu0 %2310
        %2312 = vrot.lane.b32.xlu0 %v1487, 96
        %v2313 = vpop.permute.xlu0 %2312
        %2314 = vrot.lane.b32.xlu0 %v1488, 96
        %v2315 = vpop.permute.xlu0 %2314
        %2316 = vrot.lane.b32.xlu0 %v1489, 96
        %v2317 = vpop.permute.xlu0 %2316
        %2318 = vrot.lane.b32.xlu0 %v1490, 96
        %v2319 = vpop.permute.xlu0 %2318
        %2320 = vrot.lane.b32.xlu0 %v1491, 96
        %v2321 = vpop.permute.xlu0 %2320
        %2322 = vrot.lane.b32.xlu0 %v1492, 96
        %v2323 = vpop.permute.xlu0 %2322
        %2324 = vrot.lane.b32.xlu0 %v1493, 96
        %v2325 = vpop.permute.xlu0 %2324
        %2326 = vrot.lane.b32.xlu0 %v1494, 96
        %v2327 = vpop.permute.xlu0 %2326
        %s2392 = scalar_lea.vmem %s229, 256 [#allocation4]
        %2393 = vst.msk [vmem:[%s2392] sm:$0xf] %vm1559, %v2201
        %2394 = vst.msk [vmem:[%s2392 + $0x4] sm:$0xf] %vm1559, %v2203
        %2395 = vst.msk [vmem:[%s2392 + $0x8] sm:$0xf] %vm1559, %v2205
        %2396 = vst.msk [vmem:[%s2392 + $0xc] sm:$0xf] %vm1559, %v2207
        %2397 = vst.msk [vmem:[%s2392 + $0x10] sm:$0xf] %vm1559, %v2209
        %2398 = vst.msk [vmem:[%s2392 + $0x14] sm:$0xf] %vm1559, %v2211
        %2399 = vst.msk [vmem:[%s2392 + $0x18] sm:$0xf] %vm1559, %v2213
        %2400 = vst.msk [vmem:[%s2392 + $0x1c] sm:$0xf] %vm1559, %v2215
        %2401 = vst.msk [vmem:[%s2392 + $0x20] sm:$0xf] %vm1559, %v2217
        %2402 = vst.msk [vmem:[%s2392 + $0x24] sm:$0xf] %vm1559, %v2219
        %2403 = vst.msk [vmem:[%s2392 + $0x28] sm:$0xf] %vm1559, %v2221
        %2404 = vst.msk [vmem:[%s2392 + $0x2c] sm:$0xf] %vm1559, %v2223
        %2405 = vst.msk [vmem:[%s2392 + $0x30] sm:$0xf] %vm1559, %v2225
        %2406 = vst.msk [vmem:[%s2392 + $0x34] sm:$0xf] %vm1559, %v2227
        %2407 = vst.msk [vmem:[%s2392 + $0x38] sm:$0xf] %vm1559, %v2229
        %2408 = vst.msk [vmem:[%s2392 + $0x3c] sm:$0xf] %vm1559, %v2231
        %2409 = vst.msk [vmem:[%s2392 + $0x40] sm:$0xf] %vm1559, %v2233
        %2410 = vst.msk [vmem:[%s2392 + $0x44] sm:$0xf] %vm1559, %v2235
        %2411 = vst.msk [vmem:[%s2392 + $0x48] sm:$0xf] %vm1559, %v2237
        %2412 = vst.msk [vmem:[%s2392 + $0x4c] sm:$0xf] %vm1559, %v2239
        %2413 = vst.msk [vmem:[%s2392 + $0x50] sm:$0xf] %vm1559, %v2241
        %2414 = vst.msk [vmem:[%s2392 + $0x54] sm:$0xf] %vm1559, %v2243
        %2415 = vst.msk [vmem:[%s2392 + $0x58] sm:$0xf] %vm1559, %v2245
        %2416 = vst.msk [vmem:[%s2392 + $0x5c] sm:$0xf] %vm1559, %v2247
        %2417 = vst.msk [vmem:[%s2392 + $0x60] sm:$0xf] %vm1559, %v2249
        %2418 = vst.msk [vmem:[%s2392 + $0x64] sm:$0xf] %vm1559, %v2251
        %2419 = vst.msk [vmem:[%s2392 + $0x68] sm:$0xf] %vm1559, %v2253
        %2420 = vst.msk [vmem:[%s2392 + $0x6c] sm:$0xf] %vm1559, %v2255
        %2421 = vst.msk [vmem:[%s2392 + $0x70] sm:$0xf] %vm1559, %v2257
        %2422 = vst.msk [vmem:[%s2392 + $0x74] sm:$0xf] %vm1559, %v2259
        %2423 = vst.msk [vmem:[%s2392 + $0x78] sm:$0xf] %vm1559, %v2261
        %2424 = vst.msk [vmem:[%s2392 + $0x7c] sm:$0xf] %vm1559, %v2263
        %2425 = vst.msk [vmem:[%s2392 + $0x80] sm:$0xf] %vm1559, %v2265
        %2426 = vst.msk [vmem:[%s2392 + $0x84] sm:$0xf] %vm1559, %v2267
        %2427 = vst.msk [vmem:[%s2392 + $0x88] sm:$0xf] %vm1559, %v2269
        %2428 = vst.msk [vmem:[%s2392 + $0x8c] sm:$0xf] %vm1559, %v2271
        %2429 = vst.msk [vmem:[%s2392 + $0x90] sm:$0xf] %vm1559, %v2273
        %2430 = vst.msk [vmem:[%s2392 + $0x94] sm:$0xf] %vm1559, %v2275
        %2431 = vst.msk [vmem:[%s2392 + $0x98] sm:$0xf] %vm1559, %v2277
        %2432 = vst.msk [vmem:[%s2392 + $0x9c] sm:$0xf] %vm1559, %v2279
        %2433 = vst.msk [vmem:[%s2392 + $0xa0] sm:$0xf] %vm1559, %v2281
        %2434 = vst.msk [vmem:[%s2392 + $0xa4] sm:$0xf] %vm1559, %v2283
        %2435 = vst.msk [vmem:[%s2392 + $0xa8] sm:$0xf] %vm1559, %v2285
        %2436 = vst.msk [vmem:[%s2392 + $0xac] sm:$0xf] %vm1559, %v2287
        %2437 = vst.msk [vmem:[%s2392 + $0xb0] sm:$0xf] %vm1559, %v2289
        %2438 = vst.msk [vmem:[%s2392 + $0xb4] sm:$0xf] %vm1559, %v2291
        %2439 = vst.msk [vmem:[%s2392 + $0xb8] sm:$0xf] %vm1559, %v2293
        %2440 = vst.msk [vmem:[%s2392 + $0xbc] sm:$0xf] %vm1559, %v2295
        %2441 = vst.msk [vmem:[%s2392 + $0xc0] sm:$0xf] %vm1559, %v2297
        %2442 = vst.msk [vmem:[%s2392 + $0xc4] sm:$0xf] %vm1559, %v2299
        %2443 = vst.msk [vmem:[%s2392 + $0xc8] sm:$0xf] %vm1559, %v2301
        %2444 = vst.msk [vmem:[%s2392 + $0xcc] sm:$0xf] %vm1559, %v2303
        %2445 = vst.msk [vmem:[%s2392 + $0xd0] sm:$0xf] %vm1559, %v2305
        %2446 = vst.msk [vmem:[%s2392 + $0xd4] sm:$0xf] %vm1559, %v2307
        %2447 = vst.msk [vmem:[%s2392 + $0xd8] sm:$0xf] %vm1559, %v2309
        %2448 = vst.msk [vmem:[%s2392 + $0xdc] sm:$0xf] %vm1559, %v2311
        %2449 = vst.msk [vmem:[%s2392 + $0xe0] sm:$0xf] %vm1559, %v2313
        %2450 = vst.msk [vmem:[%s2392 + $0xe4] sm:$0xf] %vm1559, %v2315
        %2451 = vst.msk [vmem:[%s2392 + $0xe8] sm:$0xf] %vm1559, %v2317
        %2452 = vst.msk [vmem:[%s2392 + $0xec] sm:$0xf] %vm1559, %v2319
        %2453 = vst.msk [vmem:[%s2392 + $0xf0] sm:$0xf] %vm1559, %v2321
        %2454 = vst.msk [vmem:[%s2392 + $0xf4] sm:$0xf] %vm1559, %v2323
        %2455 = vst.msk [vmem:[%s2392 + $0xf8] sm:$0xf] %vm1559, %v2325
        %2456 = vst.msk [vmem:[%s2392 + $0xfc] sm:$0xf] %vm1559, %v2327
        %2457 = vrot.lane.b32.xlu0 %v1720, 96
        %v2458 = vpop.permute.xlu0 %2457
        %2459 = vrot.lane.b32.xlu0 %v1721, 96
        %v2460 = vpop.permute.xlu0 %2459
        %2461 = vrot.lane.b32.xlu0 %v1722, 96
        %v2462 = vpop.permute.xlu0 %2461
        %2463 = vrot.lane.b32.xlu0 %v1723, 96
        %v2464 = vpop.permute.xlu0 %2463
        %2465 = vrot.lane.b32.xlu0 %v1724, 96
        %v2466 = vpop.permute.xlu0 %2465
        %2467 = vrot.lane.b32.xlu0 %v1725, 96
        %v2468 = vpop.permute.xlu0 %2467
        %2469 = vrot.lane.b32.xlu0 %v1726, 96
        %v2470 = vpop.permute.xlu0 %2469
        %2471 = vrot.lane.b32.xlu0 %v1727, 96
        %v2472 = vpop.permute.xlu0 %2471
        %2473 = vrot.lane.b32.xlu0 %v1728, 96
        %v2474 = vpop.permute.xlu0 %2473
        %2475 = vrot.lane.b32.xlu0 %v1729, 96
        %v2476 = vpop.permute.xlu0 %2475
        %2477 = vrot.lane.b32.xlu0 %v1730, 96
        %v2478 = vpop.permute.xlu0 %2477
        %2479 = vrot.lane.b32.xlu0 %v1731, 96
        %v2480 = vpop.permute.xlu0 %2479
        %2481 = vrot.lane.b32.xlu0 %v1732, 96
        %v2482 = vpop.permute.xlu0 %2481
        %2483 = vrot.lane.b32.xlu0 %v1733, 96
        %v2484 = vpop.permute.xlu0 %2483
        %2485 = vrot.lane.b32.xlu0 %v1734, 96
        %v2486 = vpop.permute.xlu0 %2485
        %2487 = vrot.lane.b32.xlu0 %v1735, 96
        %v2488 = vpop.permute.xlu0 %2487
        %2489 = vrot.lane.b32.xlu0 %v1736, 96
        %v2490 = vpop.permute.xlu0 %2489
        %2491 = vrot.lane.b32.xlu0 %v1737, 96
        %v2492 = vpop.permute.xlu0 %2491
        %2493 = vrot.lane.b32.xlu0 %v1738, 96
        %v2494 = vpop.permute.xlu0 %2493
        %2495 = vrot.lane.b32.xlu0 %v1739, 96
        %v2496 = vpop.permute.xlu0 %2495
        %2497 = vrot.lane.b32.xlu0 %v1740, 96
        %v2498 = vpop.permute.xlu0 %2497
        %2499 = vrot.lane.b32.xlu0 %v1741, 96
        %v2500 = vpop.permute.xlu0 %2499
        %2501 = vrot.lane.b32.xlu0 %v1742, 96
        %v2502 = vpop.permute.xlu0 %2501
        %2503 = vrot.lane.b32.xlu0 %v1743, 96
        %v2504 = vpop.permute.xlu0 %2503
        %2505 = vrot.lane.b32.xlu0 %v1744, 96
        %v2506 = vpop.permute.xlu0 %2505
        %2507 = vrot.lane.b32.xlu0 %v1745, 96
        %v2508 = vpop.permute.xlu0 %2507
        %2509 = vrot.lane.b32.xlu0 %v1746, 96
        %v2510 = vpop.permute.xlu0 %2509
        %2511 = vrot.lane.b32.xlu0 %v1747, 96
        %v2512 = vpop.permute.xlu0 %2511
        %2513 = vrot.lane.b32.xlu0 %v1748, 96
        %v2514 = vpop.permute.xlu0 %2513
        %2515 = vrot.lane.b32.xlu0 %v1749, 96
        %v2516 = vpop.permute.xlu0 %2515
        %2517 = vrot.lane.b32.xlu0 %v1750, 96
        %v2518 = vpop.permute.xlu0 %2517
        %2519 = vrot.lane.b32.xlu0 %v1751, 96
        %v2520 = vpop.permute.xlu0 %2519
        %2521 = vrot.lane.b32.xlu0 %v1752, 96
        %v2522 = vpop.permute.xlu0 %2521
        %2523 = vrot.lane.b32.xlu0 %v1753, 96
        %v2524 = vpop.permute.xlu0 %2523
        %2525 = vrot.lane.b32.xlu0 %v1754, 96
        %v2526 = vpop.permute.xlu0 %2525
        %2527 = vrot.lane.b32.xlu0 %v1755, 96
        %v2528 = vpop.permute.xlu0 %2527
        %2529 = vrot.lane.b32.xlu0 %v1756, 96
        %v2530 = vpop.permute.xlu0 %2529
        %2531 = vrot.lane.b32.xlu0 %v1757, 96
        %v2532 = vpop.permute.xlu0 %2531
        %2533 = vrot.lane.b32.xlu0 %v1758, 96
        %v2534 = vpop.permute.xlu0 %2533
        %2535 = vrot.lane.b32.xlu0 %v1759, 96
        %v2536 = vpop.permute.xlu0 %2535
        %2537 = vrot.lane.b32.xlu0 %v1760, 96
        %v2538 = vpop.permute.xlu0 %2537
        %2539 = vrot.lane.b32.xlu0 %v1761, 96
        %v2540 = vpop.permute.xlu0 %2539
        %2541 = vrot.lane.b32.xlu0 %v1762, 96
        %v2542 = vpop.permute.xlu0 %2541
        %2543 = vrot.lane.b32.xlu0 %v1763, 96
        %v2544 = vpop.permute.xlu0 %2543
        %2545 = vrot.lane.b32.xlu0 %v1764, 96
        %v2546 = vpop.permute.xlu0 %2545
        %2547 = vrot.lane.b32.xlu0 %v1765, 96
        %v2548 = vpop.permute.xlu0 %2547
        %2549 = vrot.lane.b32.xlu0 %v1766, 96
        %v2550 = vpop.permute.xlu0 %2549
        %2551 = vrot.lane.b32.xlu0 %v1767, 96
        %v2552 = vpop.permute.xlu0 %2551
        %2553 = vrot.lane.b32.xlu0 %v1768, 96
        %v2554 = vpop.permute.xlu0 %2553
        %2555 = vrot.lane.b32.xlu0 %v1769, 96
        %v2556 = vpop.permute.xlu0 %2555
        %2557 = vrot.lane.b32.xlu0 %v1770, 96
        %v2558 = vpop.permute.xlu0 %2557
        %2559 = vrot.lane.b32.xlu0 %v1771, 96
        %v2560 = vpop.permute.xlu0 %2559
        %2561 = vrot.lane.b32.xlu0 %v1772, 96
        %v2562 = vpop.permute.xlu0 %2561
        %2563 = vrot.lane.b32.xlu0 %v1773, 96
        %v2564 = vpop.permute.xlu0 %2563
        %2565 = vrot.lane.b32.xlu0 %v1774, 96
        %v2566 = vpop.permute.xlu0 %2565
        %2567 = vrot.lane.b32.xlu0 %v1775, 96
        %v2568 = vpop.permute.xlu0 %2567
        %2569 = vrot.lane.b32.xlu0 %v1776, 96
        %v2570 = vpop.permute.xlu0 %2569
        %2571 = vrot.lane.b32.xlu0 %v1777, 96
        %v2572 = vpop.permute.xlu0 %2571
        %2573 = vrot.lane.b32.xlu0 %v1778, 96
        %v2574 = vpop.permute.xlu0 %2573
        %2575 = vrot.lane.b32.xlu0 %v1779, 96
        %v2576 = vpop.permute.xlu0 %2575
        %2577 = vrot.lane.b32.xlu0 %v1780, 96
        %v2578 = vpop.permute.xlu0 %2577
        %2579 = vrot.lane.b32.xlu0 %v1781, 96
        %v2580 = vpop.permute.xlu0 %2579
        %2581 = vrot.lane.b32.xlu0 %v1782, 96
        %v2582 = vpop.permute.xlu0 %2581
        %2583 = vrot.lane.b32.xlu0 %v1783, 96
        %v2584 = vpop.permute.xlu0 %2583
        %s2649 = scalar_lea.vmem %s235, 256 [#allocation5]
        %2650 = vst.msk [vmem:[%s2649] sm:$0xf] %vm1559, %v2458
        %2651 = vst.msk [vmem:[%s2649 + $0x4] sm:$0xf] %vm1559, %v2460
        %2652 = vst.msk [vmem:[%s2649 + $0x8] sm:$0xf] %vm1559, %v2462
        %2653 = vst.msk [vmem:[%s2649 + $0xc] sm:$0xf] %vm1559, %v2464
        %2654 = vst.msk [vmem:[%s2649 + $0x10] sm:$0xf] %vm1559, %v2466
        %2655 = vst.msk [vmem:[%s2649 + $0x14] sm:$0xf] %vm1559, %v2468
        %2656 = vst.msk [vmem:[%s2649 + $0x18] sm:$0xf] %vm1559, %v2470
        %2657 = vst.msk [vmem:[%s2649 + $0x1c] sm:$0xf] %vm1559, %v2472
        %2658 = vst.msk [vmem:[%s2649 + $0x20] sm:$0xf] %vm1559, %v2474
        %2659 = vst.msk [vmem:[%s2649 + $0x24] sm:$0xf] %vm1559, %v2476
        %2660 = vst.msk [vmem:[%s2649 + $0x28] sm:$0xf] %vm1559, %v2478
        %2661 = vst.msk [vmem:[%s2649 + $0x2c] sm:$0xf] %vm1559, %v2480
        %2662 = vst.msk [vmem:[%s2649 + $0x30] sm:$0xf] %vm1559, %v2482
        %2663 = vst.msk [vmem:[%s2649 + $0x34] sm:$0xf] %vm1559, %v2484
        %2664 = vst.msk [vmem:[%s2649 + $0x38] sm:$0xf] %vm1559, %v2486
        %2665 = vst.msk [vmem:[%s2649 + $0x3c] sm:$0xf] %vm1559, %v2488
        %2666 = vst.msk [vmem:[%s2649 + $0x40] sm:$0xf] %vm1559, %v2490
        %2667 = vst.msk [vmem:[%s2649 + $0x44] sm:$0xf] %vm1559, %v2492
        %2668 = vst.msk [vmem:[%s2649 + $0x48] sm:$0xf] %vm1559, %v2494
        %2669 = vst.msk [vmem:[%s2649 + $0x4c] sm:$0xf] %vm1559, %v2496
        %2670 = vst.msk [vmem:[%s2649 + $0x50] sm:$0xf] %vm1559, %v2498
        %2671 = vst.msk [vmem:[%s2649 + $0x54] sm:$0xf] %vm1559, %v2500
        %2672 = vst.msk [vmem:[%s2649 + $0x58] sm:$0xf] %vm1559, %v2502
        %2673 = vst.msk [vmem:[%s2649 + $0x5c] sm:$0xf] %vm1559, %v2504
        %2674 = vst.msk [vmem:[%s2649 + $0x60] sm:$0xf] %vm1559, %v2506
        %2675 = vst.msk [vmem:[%s2649 + $0x64] sm:$0xf] %vm1559, %v2508
        %2676 = vst.msk [vmem:[%s2649 + $0x68] sm:$0xf] %vm1559, %v2510
        %2677 = vst.msk [vmem:[%s2649 + $0x6c] sm:$0xf] %vm1559, %v2512
        %2678 = vst.msk [vmem:[%s2649 + $0x70] sm:$0xf] %vm1559, %v2514
        %2679 = vst.msk [vmem:[%s2649 + $0x74] sm:$0xf] %vm1559, %v2516
        %2680 = vst.msk [vmem:[%s2649 + $0x78] sm:$0xf] %vm1559, %v2518
        %2681 = vst.msk [vmem:[%s2649 + $0x7c] sm:$0xf] %vm1559, %v2520
        %2682 = vst.msk [vmem:[%s2649 + $0x80] sm:$0xf] %vm1559, %v2522
        %2683 = vst.msk [vmem:[%s2649 + $0x84] sm:$0xf] %vm1559, %v2524
        %2684 = vst.msk [vmem:[%s2649 + $0x88] sm:$0xf] %vm1559, %v2526
        %2685 = vst.msk [vmem:[%s2649 + $0x8c] sm:$0xf] %vm1559, %v2528
        %2686 = vst.msk [vmem:[%s2649 + $0x90] sm:$0xf] %vm1559, %v2530
        %2687 = vst.msk [vmem:[%s2649 + $0x94] sm:$0xf] %vm1559, %v2532
        %2688 = vst.msk [vmem:[%s2649 + $0x98] sm:$0xf] %vm1559, %v2534
        %2689 = vst.msk [vmem:[%s2649 + $0x9c] sm:$0xf] %vm1559, %v2536
        %2690 = vst.msk [vmem:[%s2649 + $0xa0] sm:$0xf] %vm1559, %v2538
        %2691 = vst.msk [vmem:[%s2649 + $0xa4] sm:$0xf] %vm1559, %v2540
        %2692 = vst.msk [vmem:[%s2649 + $0xa8] sm:$0xf] %vm1559, %v2542
        %2693 = vst.msk [vmem:[%s2649 + $0xac] sm:$0xf] %vm1559, %v2544
        %2694 = vst.msk [vmem:[%s2649 + $0xb0] sm:$0xf] %vm1559, %v2546
        %2695 = vst.msk [vmem:[%s2649 + $0xb4] sm:$0xf] %vm1559, %v2548
        %2696 = vst.msk [vmem:[%s2649 + $0xb8] sm:$0xf] %vm1559, %v2550
        %2697 = vst.msk [vmem:[%s2649 + $0xbc] sm:$0xf] %vm1559, %v2552
        %2698 = vst.msk [vmem:[%s2649 + $0xc0] sm:$0xf] %vm1559, %v2554
        %2699 = vst.msk [vmem:[%s2649 + $0xc4] sm:$0xf] %vm1559, %v2556
        %2700 = vst.msk [vmem:[%s2649 + $0xc8] sm:$0xf] %vm1559, %v2558
        %2701 = vst.msk [vmem:[%s2649 + $0xcc] sm:$0xf] %vm1559, %v2560
        %2702 = vst.msk [vmem:[%s2649 + $0xd0] sm:$0xf] %vm1559, %v2562
        %2703 = vst.msk [vmem:[%s2649 + $0xd4] sm:$0xf] %vm1559, %v2564
        %2704 = vst.msk [vmem:[%s2649 + $0xd8] sm:$0xf] %vm1559, %v2566
        %2705 = vst.msk [vmem:[%s2649 + $0xdc] sm:$0xf] %vm1559, %v2568
        %2706 = vst.msk [vmem:[%s2649 + $0xe0] sm:$0xf] %vm1559, %v2570
        %2707 = vst.msk [vmem:[%s2649 + $0xe4] sm:$0xf] %vm1559, %v2572
        %2708 = vst.msk [vmem:[%s2649 + $0xe8] sm:$0xf] %vm1559, %v2574
        %2709 = vst.msk [vmem:[%s2649 + $0xec] sm:$0xf] %vm1559, %v2576
        %2710 = vst.msk [vmem:[%s2649 + $0xf0] sm:$0xf] %vm1559, %v2578
        %2711 = vst.msk [vmem:[%s2649 + $0xf4] sm:$0xf] %vm1559, %v2580
        %2712 = vst.msk [vmem:[%s2649 + $0xf8] sm:$0xf] %vm1559, %v2582
        %2713 = vst.msk [vmem:[%s2649 + $0xfc] sm:$0xf] %vm1559, %v2584
        %2714 = vrot.lane.b32.xlu0 %v2008, 96
        %v2715 = vpop.permute.xlu0 %2714
        %2716 = vrot.lane.b32.xlu0 %v2009, 96
        %v2717 = vpop.permute.xlu0 %2716
        %2718 = vrot.lane.b32.xlu0 %v2010, 96
        %v2719 = vpop.permute.xlu0 %2718
        %2720 = vrot.lane.b32.xlu0 %v2011, 96
        %v2721 = vpop.permute.xlu0 %2720
        %2722 = vrot.lane.b32.xlu0 %v2012, 96
        %v2723 = vpop.permute.xlu0 %2722
        %2724 = vrot.lane.b32.xlu0 %v2013, 96
        %v2725 = vpop.permute.xlu0 %2724
        %2726 = vrot.lane.b32.xlu0 %v2014, 96
        %v2727 = vpop.permute.xlu0 %2726
        %2728 = vrot.lane.b32.xlu0 %v2015, 96
        %v2729 = vpop.permute.xlu0 %2728
        %2730 = vrot.lane.b32.xlu0 %v2016, 96
        %v2731 = vpop.permute.xlu0 %2730
        %2732 = vrot.lane.b32.xlu0 %v2017, 96
        %v2733 = vpop.permute.xlu0 %2732
        %2734 = vrot.lane.b32.xlu0 %v2018, 96
        %v2735 = vpop.permute.xlu0 %2734
        %2736 = vrot.lane.b32.xlu0 %v2019, 96
        %v2737 = vpop.permute.xlu0 %2736
        %2738 = vrot.lane.b32.xlu0 %v2020, 96
        %v2739 = vpop.permute.xlu0 %2738
        %2740 = vrot.lane.b32.xlu0 %v2021, 96
        %v2741 = vpop.permute.xlu0 %2740
        %2742 = vrot.lane.b32.xlu0 %v2022, 96
        %v2743 = vpop.permute.xlu0 %2742
        %2744 = vrot.lane.b32.xlu0 %v2023, 96
        %v2745 = vpop.permute.xlu0 %2744
        %2746 = vrot.lane.b32.xlu0 %v2024, 96
        %v2747 = vpop.permute.xlu0 %2746
        %2748 = vrot.lane.b32.xlu0 %v2025, 96
        %v2749 = vpop.permute.xlu0 %2748
        %2750 = vrot.lane.b32.xlu0 %v2026, 96
        %v2751 = vpop.permute.xlu0 %2750
        %2752 = vrot.lane.b32.xlu0 %v2027, 96
        %v2753 = vpop.permute.xlu0 %2752
        %2754 = vrot.lane.b32.xlu0 %v2028, 96
        %v2755 = vpop.permute.xlu0 %2754
        %2756 = vrot.lane.b32.xlu0 %v2029, 96
        %v2757 = vpop.permute.xlu0 %2756
        %2758 = vrot.lane.b32.xlu0 %v2030, 96
        %v2759 = vpop.permute.xlu0 %2758
        %2760 = vrot.lane.b32.xlu0 %v2031, 96
        %v2761 = vpop.permute.xlu0 %2760
        %2762 = vrot.lane.b32.xlu0 %v2032, 96
        %v2763 = vpop.permute.xlu0 %2762
        %2764 = vrot.lane.b32.xlu0 %v2033, 96
        %v2765 = vpop.permute.xlu0 %2764
        %2766 = vrot.lane.b32.xlu0 %v2034, 96
        %v2767 = vpop.permute.xlu0 %2766
        %2768 = vrot.lane.b32.xlu0 %v2035, 96
        %v2769 = vpop.permute.xlu0 %2768
        %2770 = vrot.lane.b32.xlu0 %v2036, 96
        %v2771 = vpop.permute.xlu0 %2770
        %2772 = vrot.lane.b32.xlu0 %v2037, 96
        %v2773 = vpop.permute.xlu0 %2772
        %2774 = vrot.lane.b32.xlu0 %v2038, 96
        %v2775 = vpop.permute.xlu0 %2774
        %2776 = vrot.lane.b32.xlu0 %v2039, 96
        %v2777 = vpop.permute.xlu0 %2776
        %2778 = vrot.lane.b32.xlu0 %v2040, 96
        %v2779 = vpop.permute.xlu0 %2778
        %2780 = vrot.lane.b32.xlu0 %v2041, 96
        %v2781 = vpop.permute.xlu0 %2780
        %2782 = vrot.lane.b32.xlu0 %v2042, 96
        %v2783 = vpop.permute.xlu0 %2782
        %2784 = vrot.lane.b32.xlu0 %v2043, 96
        %v2785 = vpop.permute.xlu0 %2784
        %2786 = vrot.lane.b32.xlu0 %v2044, 96
        %v2787 = vpop.permute.xlu0 %2786
        %2788 = vrot.lane.b32.xlu0 %v2045, 96
        %v2789 = vpop.permute.xlu0 %2788
        %2790 = vrot.lane.b32.xlu0 %v2046, 96
        %v2791 = vpop.permute.xlu0 %2790
        %2792 = vrot.lane.b32.xlu0 %v2047, 96
        %v2793 = vpop.permute.xlu0 %2792
        %2794 = vrot.lane.b32.xlu0 %v2048, 96
        %v2795 = vpop.permute.xlu0 %2794
        %2796 = vrot.lane.b32.xlu0 %v2049, 96
        %v2797 = vpop.permute.xlu0 %2796
        %2798 = vrot.lane.b32.xlu0 %v2050, 96
        %v2799 = vpop.permute.xlu0 %2798
        %2800 = vrot.lane.b32.xlu0 %v2051, 96
        %v2801 = vpop.permute.xlu0 %2800
        %2802 = vrot.lane.b32.xlu0 %v2052, 96
        %v2803 = vpop.permute.xlu0 %2802
        %2804 = vrot.lane.b32.xlu0 %v2053, 96
        %v2805 = vpop.permute.xlu0 %2804
        %2806 = vrot.lane.b32.xlu0 %v2054, 96
        %v2807 = vpop.permute.xlu0 %2806
        %2808 = vrot.lane.b32.xlu0 %v2055, 96
        %v2809 = vpop.permute.xlu0 %2808
        %2810 = vrot.lane.b32.xlu0 %v2056, 96
        %v2811 = vpop.permute.xlu0 %2810
        %2812 = vrot.lane.b32.xlu0 %v2057, 96
        %v2813 = vpop.permute.xlu0 %2812
        %2814 = vrot.lane.b32.xlu0 %v2058, 96
        %v2815 = vpop.permute.xlu0 %2814
        %2816 = vrot.lane.b32.xlu0 %v2059, 96
        %v2817 = vpop.permute.xlu0 %2816
        %2818 = vrot.lane.b32.xlu0 %v2060, 96
        %v2819 = vpop.permute.xlu0 %2818
        %2820 = vrot.lane.b32.xlu0 %v2061, 96
        %v2821 = vpop.permute.xlu0 %2820
        %2822 = vrot.lane.b32.xlu0 %v2062, 96
        %v2823 = vpop.permute.xlu0 %2822
        %2824 = vrot.lane.b32.xlu0 %v2063, 96
        %v2825 = vpop.permute.xlu0 %2824
        %2826 = vrot.lane.b32.xlu0 %v2064, 96
        %v2827 = vpop.permute.xlu0 %2826
        %2828 = vrot.lane.b32.xlu0 %v2065, 96
        %v2829 = vpop.permute.xlu0 %2828
        %2830 = vrot.lane.b32.xlu0 %v2066, 96
        %v2831 = vpop.permute.xlu0 %2830
        %2832 = vrot.lane.b32.xlu0 %v2067, 96
        %v2833 = vpop.permute.xlu0 %2832
        %2834 = vrot.lane.b32.xlu0 %v2068, 96
        %v2835 = vpop.permute.xlu0 %2834
        %2836 = vrot.lane.b32.xlu0 %v2069, 96
        %v2837 = vpop.permute.xlu0 %2836
        %2838 = vrot.lane.b32.xlu0 %v2070, 96
        %v2839 = vpop.permute.xlu0 %2838
        %2840 = vrot.lane.b32.xlu0 %v2071, 96
        %v2841 = vpop.permute.xlu0 %2840
        %s2906 = scalar_lea.vmem %s241, 256 [#allocation6]
        %2907 = vst.msk [vmem:[%s2906] sm:$0xf] %vm1559, %v2715
        %2908 = vst.msk [vmem:[%s2906 + $0x4] sm:$0xf] %vm1559, %v2717
        %2909 = vst.msk [vmem:[%s2906 + $0x8] sm:$0xf] %vm1559, %v2719
        %2910 = vst.msk [vmem:[%s2906 + $0xc] sm:$0xf] %vm1559, %v2721
        %2911 = vst.msk [vmem:[%s2906 + $0x10] sm:$0xf] %vm1559, %v2723
        %2912 = vst.msk [vmem:[%s2906 + $0x14] sm:$0xf] %vm1559, %v2725
        %2913 = vst.msk [vmem:[%s2906 + $0x18] sm:$0xf] %vm1559, %v2727
        %2914 = vst.msk [vmem:[%s2906 + $0x1c] sm:$0xf] %vm1559, %v2729
        %2915 = vst.msk [vmem:[%s2906 + $0x20] sm:$0xf] %vm1559, %v2731
        %2916 = vst.msk [vmem:[%s2906 + $0x24] sm:$0xf] %vm1559, %v2733
        %2917 = vst.msk [vmem:[%s2906 + $0x28] sm:$0xf] %vm1559, %v2735
        %2918 = vst.msk [vmem:[%s2906 + $0x2c] sm:$0xf] %vm1559, %v2737
        %2919 = vst.msk [vmem:[%s2906 + $0x30] sm:$0xf] %vm1559, %v2739
        %2920 = vst.msk [vmem:[%s2906 + $0x34] sm:$0xf] %vm1559, %v2741
        %2921 = vst.msk [vmem:[%s2906 + $0x38] sm:$0xf] %vm1559, %v2743
        %2922 = vst.msk [vmem:[%s2906 + $0x3c] sm:$0xf] %vm1559, %v2745
        %2923 = vst.msk [vmem:[%s2906 + $0x40] sm:$0xf] %vm1559, %v2747
        %2924 = vst.msk [vmem:[%s2906 + $0x44] sm:$0xf] %vm1559, %v2749
        %2925 = vst.msk [vmem:[%s2906 + $0x48] sm:$0xf] %vm1559, %v2751
        %2926 = vst.msk [vmem:[%s2906 + $0x4c] sm:$0xf] %vm1559, %v2753
        %2927 = vst.msk [vmem:[%s2906 + $0x50] sm:$0xf] %vm1559, %v2755
        %2928 = vst.msk [vmem:[%s2906 + $0x54] sm:$0xf] %vm1559, %v2757
        %2929 = vst.msk [vmem:[%s2906 + $0x58] sm:$0xf] %vm1559, %v2759
        %2930 = vst.msk [vmem:[%s2906 + $0x5c] sm:$0xf] %vm1559, %v2761
        %2931 = vst.msk [vmem:[%s2906 + $0x60] sm:$0xf] %vm1559, %v2763
        %2932 = vst.msk [vmem:[%s2906 + $0x64] sm:$0xf] %vm1559, %v2765
        %2933 = vst.msk [vmem:[%s2906 + $0x68] sm:$0xf] %vm1559, %v2767
        %2934 = vst.msk [vmem:[%s2906 + $0x6c] sm:$0xf] %vm1559, %v2769
        %2935 = vst.msk [vmem:[%s2906 + $0x70] sm:$0xf] %vm1559, %v2771
        %2936 = vst.msk [vmem:[%s2906 + $0x74] sm:$0xf] %vm1559, %v2773
        %2937 = vst.msk [vmem:[%s2906 + $0x78] sm:$0xf] %vm1559, %v2775
        %2938 = vst.msk [vmem:[%s2906 + $0x7c] sm:$0xf] %vm1559, %v2777
        %2939 = vst.msk [vmem:[%s2906 + $0x80] sm:$0xf] %vm1559, %v2779
        %2940 = vst.msk [vmem:[%s2906 + $0x84] sm:$0xf] %vm1559, %v2781
        %2941 = vst.msk [vmem:[%s2906 + $0x88] sm:$0xf] %vm1559, %v2783
        %2942 = vst.msk [vmem:[%s2906 + $0x8c] sm:$0xf] %vm1559, %v2785
        %2943 = vst.msk [vmem:[%s2906 + $0x90] sm:$0xf] %vm1559, %v2787
        %2944 = vst.msk [vmem:[%s2906 + $0x94] sm:$0xf] %vm1559, %v2789
        %2945 = vst.msk [vmem:[%s2906 + $0x98] sm:$0xf] %vm1559, %v2791
        %2946 = vst.msk [vmem:[%s2906 + $0x9c] sm:$0xf] %vm1559, %v2793
        %2947 = vst.msk [vmem:[%s2906 + $0xa0] sm:$0xf] %vm1559, %v2795
        %2948 = vst.msk [vmem:[%s2906 + $0xa4] sm:$0xf] %vm1559, %v2797
        %2949 = vst.msk [vmem:[%s2906 + $0xa8] sm:$0xf] %vm1559, %v2799
        %2950 = vst.msk [vmem:[%s2906 + $0xac] sm:$0xf] %vm1559, %v2801
        %2951 = vst.msk [vmem:[%s2906 + $0xb0] sm:$0xf] %vm1559, %v2803
        %2952 = vst.msk [vmem:[%s2906 + $0xb4] sm:$0xf] %vm1559, %v2805
        %2953 = vst.msk [vmem:[%s2906 + $0xb8] sm:$0xf] %vm1559, %v2807
        %2954 = vst.msk [vmem:[%s2906 + $0xbc] sm:$0xf] %vm1559, %v2809
        %2955 = vst.msk [vmem:[%s2906 + $0xc0] sm:$0xf] %vm1559, %v2811
        %2956 = vst.msk [vmem:[%s2906 + $0xc4] sm:$0xf] %vm1559, %v2813
        %2957 = vst.msk [vmem:[%s2906 + $0xc8] sm:$0xf] %vm1559, %v2815
        %2958 = vst.msk [vmem:[%s2906 + $0xcc] sm:$0xf] %vm1559, %v2817
        %2959 = vst.msk [vmem:[%s2906 + $0xd0] sm:$0xf] %vm1559, %v2819
        %2960 = vst.msk [vmem:[%s2906 + $0xd4] sm:$0xf] %vm1559, %v2821
        %2961 = vst.msk [vmem:[%s2906 + $0xd8] sm:$0xf] %vm1559, %v2823
        %2962 = vst.msk [vmem:[%s2906 + $0xdc] sm:$0xf] %vm1559, %v2825
        %2963 = vst.msk [vmem:[%s2906 + $0xe0] sm:$0xf] %vm1559, %v2827
        %2964 = vst.msk [vmem:[%s2906 + $0xe4] sm:$0xf] %vm1559, %v2829
        %2965 = vst.msk [vmem:[%s2906 + $0xe8] sm:$0xf] %vm1559, %v2831
        %2966 = vst.msk [vmem:[%s2906 + $0xec] sm:$0xf] %vm1559, %v2833
        %2967 = vst.msk [vmem:[%s2906 + $0xf0] sm:$0xf] %vm1559, %v2835
        %2968 = vst.msk [vmem:[%s2906 + $0xf4] sm:$0xf] %vm1559, %v2837
        %2969 = vst.msk [vmem:[%s2906 + $0xf8] sm:$0xf] %vm1559, %v2839
        %2970 = vst.msk [vmem:[%s2906 + $0xfc] sm:$0xf] %vm1559, %v2841
        %2971 = vrot.lane.b32.xlu0 %v1431, 64
        %v2972 = vpop.permute.xlu0 %2971
        %2973 = vrot.lane.b32.xlu0 %v1432, 64
        %v2974 = vpop.permute.xlu0 %2973
        %2975 = vrot.lane.b32.xlu0 %v1433, 64
        %v2976 = vpop.permute.xlu0 %2975
        %2977 = vrot.lane.b32.xlu0 %v1434, 64
        %v2978 = vpop.permute.xlu0 %2977
        %2979 = vrot.lane.b32.xlu0 %v1435, 64
        %v2980 = vpop.permute.xlu0 %2979
        %2981 = vrot.lane.b32.xlu0 %v1436, 64
        %v2982 = vpop.permute.xlu0 %2981
        %2983 = vrot.lane.b32.xlu0 %v1437, 64
        %v2984 = vpop.permute.xlu0 %2983
        %2985 = vrot.lane.b32.xlu0 %v1438, 64
        %v2986 = vpop.permute.xlu0 %2985
        %2987 = vrot.lane.b32.xlu0 %v1439, 64
        %v2988 = vpop.permute.xlu0 %2987
        %2989 = vrot.lane.b32.xlu0 %v1440, 64
        %v2990 = vpop.permute.xlu0 %2989
        %2991 = vrot.lane.b32.xlu0 %v1441, 64
        %v2992 = vpop.permute.xlu0 %2991
        %2993 = vrot.lane.b32.xlu0 %v1442, 64
        %v2994 = vpop.permute.xlu0 %2993
        %2995 = vrot.lane.b32.xlu0 %v1443, 64
        %v2996 = vpop.permute.xlu0 %2995
        %2997 = vrot.lane.b32.xlu0 %v1444, 64
        %v2998 = vpop.permute.xlu0 %2997
        %2999 = vrot.lane.b32.xlu0 %v1445, 64
        %v3000 = vpop.permute.xlu0 %2999
        %3001 = vrot.lane.b32.xlu0 %v1446, 64
        %v3002 = vpop.permute.xlu0 %3001
        %3003 = vrot.lane.b32.xlu0 %v1447, 64
        %v3004 = vpop.permute.xlu0 %3003
        %3005 = vrot.lane.b32.xlu0 %v1448, 64
        %v3006 = vpop.permute.xlu0 %3005
        %3007 = vrot.lane.b32.xlu0 %v1449, 64
        %v3008 = vpop.permute.xlu0 %3007
        %3009 = vrot.lane.b32.xlu0 %v1450, 64
        %v3010 = vpop.permute.xlu0 %3009
        %3011 = vrot.lane.b32.xlu0 %v1451, 64
        %v3012 = vpop.permute.xlu0 %3011
        %3013 = vrot.lane.b32.xlu0 %v1452, 64
        %v3014 = vpop.permute.xlu0 %3013
        %3015 = vrot.lane.b32.xlu0 %v1453, 64
        %v3016 = vpop.permute.xlu0 %3015
        %3017 = vrot.lane.b32.xlu0 %v1454, 64
        %v3018 = vpop.permute.xlu0 %3017
        %3019 = vrot.lane.b32.xlu0 %v1455, 64
        %v3020 = vpop.permute.xlu0 %3019
        %3021 = vrot.lane.b32.xlu0 %v1456, 64
        %v3022 = vpop.permute.xlu0 %3021
        %3023 = vrot.lane.b32.xlu0 %v1457, 64
        %v3024 = vpop.permute.xlu0 %3023
        %3025 = vrot.lane.b32.xlu0 %v1458, 64
        %v3026 = vpop.permute.xlu0 %3025
        %3027 = vrot.lane.b32.xlu0 %v1459, 64
        %v3028 = vpop.permute.xlu0 %3027
        %3029 = vrot.lane.b32.xlu0 %v1460, 64
        %v3030 = vpop.permute.xlu0 %3029
        %3031 = vrot.lane.b32.xlu0 %v1461, 64
        %v3032 = vpop.permute.xlu0 %3031
        %3033 = vrot.lane.b32.xlu0 %v1462, 64
        %v3034 = vpop.permute.xlu0 %3033
        %3035 = vrot.lane.b32.xlu0 %v1463, 64
        %v3036 = vpop.permute.xlu0 %3035
        %3037 = vrot.lane.b32.xlu0 %v1464, 64
        %v3038 = vpop.permute.xlu0 %3037
        %3039 = vrot.lane.b32.xlu0 %v1465, 64
        %v3040 = vpop.permute.xlu0 %3039
        %3041 = vrot.lane.b32.xlu0 %v1466, 64
        %v3042 = vpop.permute.xlu0 %3041
        %3043 = vrot.lane.b32.xlu0 %v1467, 64
        %v3044 = vpop.permute.xlu0 %3043
        %3045 = vrot.lane.b32.xlu0 %v1468, 64
        %v3046 = vpop.permute.xlu0 %3045
        %3047 = vrot.lane.b32.xlu0 %v1469, 64
        %v3048 = vpop.permute.xlu0 %3047
        %3049 = vrot.lane.b32.xlu0 %v1470, 64
        %v3050 = vpop.permute.xlu0 %3049
        %3051 = vrot.lane.b32.xlu0 %v1471, 64
        %v3052 = vpop.permute.xlu0 %3051
        %3053 = vrot.lane.b32.xlu0 %v1472, 64
        %v3054 = vpop.permute.xlu0 %3053
        %3055 = vrot.lane.b32.xlu0 %v1473, 64
        %v3056 = vpop.permute.xlu0 %3055
        %3057 = vrot.lane.b32.xlu0 %v1474, 64
        %v3058 = vpop.permute.xlu0 %3057
        %3059 = vrot.lane.b32.xlu0 %v1475, 64
        %v3060 = vpop.permute.xlu0 %3059
        %3061 = vrot.lane.b32.xlu0 %v1476, 64
        %v3062 = vpop.permute.xlu0 %3061
        %3063 = vrot.lane.b32.xlu0 %v1477, 64
        %v3064 = vpop.permute.xlu0 %3063
        %3065 = vrot.lane.b32.xlu0 %v1478, 64
        %v3066 = vpop.permute.xlu0 %3065
        %3067 = vrot.lane.b32.xlu0 %v1479, 64
        %v3068 = vpop.permute.xlu0 %3067
        %3069 = vrot.lane.b32.xlu0 %v1480, 64
        %v3070 = vpop.permute.xlu0 %3069
        %3071 = vrot.lane.b32.xlu0 %v1481, 64
        %v3072 = vpop.permute.xlu0 %3071
        %3073 = vrot.lane.b32.xlu0 %v1482, 64
        %v3074 = vpop.permute.xlu0 %3073
        %3075 = vrot.lane.b32.xlu0 %v1483, 64
        %v3076 = vpop.permute.xlu0 %3075
        %3077 = vrot.lane.b32.xlu0 %v1484, 64
        %v3078 = vpop.permute.xlu0 %3077
        %3079 = vrot.lane.b32.xlu0 %v1485, 64
        %v3080 = vpop.permute.xlu0 %3079
        %3081 = vrot.lane.b32.xlu0 %v1486, 64
        %v3082 = vpop.permute.xlu0 %3081
        %3083 = vrot.lane.b32.xlu0 %v1487, 64
        %v3084 = vpop.permute.xlu0 %3083
        %3085 = vrot.lane.b32.xlu0 %v1488, 64
        %v3086 = vpop.permute.xlu0 %3085
        %3087 = vrot.lane.b32.xlu0 %v1489, 64
        %v3088 = vpop.permute.xlu0 %3087
        %3089 = vrot.lane.b32.xlu0 %v1490, 64
        %v3090 = vpop.permute.xlu0 %3089
        %3091 = vrot.lane.b32.xlu0 %v1491, 64
        %v3092 = vpop.permute.xlu0 %3091
        %3093 = vrot.lane.b32.xlu0 %v1492, 64
        %v3094 = vpop.permute.xlu0 %3093
        %3095 = vrot.lane.b32.xlu0 %v1493, 64
        %v3096 = vpop.permute.xlu0 %3095
        %3097 = vrot.lane.b32.xlu0 %v1494, 64
        %v3098 = vpop.permute.xlu0 %3097
        %s3163 = scalar_lea.vmem %s229, 512 [#allocation4]
        %3164 = vst.msk [vmem:[%s3163] sm:$0xf] %vm1559, %v2972
        %3165 = vst.msk [vmem:[%s3163 + $0x4] sm:$0xf] %vm1559, %v2974
        %3166 = vst.msk [vmem:[%s3163 + $0x8] sm:$0xf] %vm1559, %v2976
        %3167 = vst.msk [vmem:[%s3163 + $0xc] sm:$0xf] %vm1559, %v2978
        %3168 = vst.msk [vmem:[%s3163 + $0x10] sm:$0xf] %vm1559, %v2980
        %3169 = vst.msk [vmem:[%s3163 + $0x14] sm:$0xf] %vm1559, %v2982
        %3170 = vst.msk [vmem:[%s3163 + $0x18] sm:$0xf] %vm1559, %v2984
        %3171 = vst.msk [vmem:[%s3163 + $0x1c] sm:$0xf] %vm1559, %v2986
        %3172 = vst.msk [vmem:[%s3163 + $0x20] sm:$0xf] %vm1559, %v2988
        %3173 = vst.msk [vmem:[%s3163 + $0x24] sm:$0xf] %vm1559, %v2990
        %3174 = vst.msk [vmem:[%s3163 + $0x28] sm:$0xf] %vm1559, %v2992
        %3175 = vst.msk [vmem:[%s3163 + $0x2c] sm:$0xf] %vm1559, %v2994
        %3176 = vst.msk [vmem:[%s3163 + $0x30] sm:$0xf] %vm1559, %v2996
        %3177 = vst.msk [vmem:[%s3163 + $0x34] sm:$0xf] %vm1559, %v2998
        %3178 = vst.msk [vmem:[%s3163 + $0x38] sm:$0xf] %vm1559, %v3000
        %3179 = vst.msk [vmem:[%s3163 + $0x3c] sm:$0xf] %vm1559, %v3002
        %3180 = vst.msk [vmem:[%s3163 + $0x40] sm:$0xf] %vm1559, %v3004
        %3181 = vst.msk [vmem:[%s3163 + $0x44] sm:$0xf] %vm1559, %v3006
        %3182 = vst.msk [vmem:[%s3163 + $0x48] sm:$0xf] %vm1559, %v3008
        %3183 = vst.msk [vmem:[%s3163 + $0x4c] sm:$0xf] %vm1559, %v3010
        %3184 = vst.msk [vmem:[%s3163 + $0x50] sm:$0xf] %vm1559, %v3012
        %3185 = vst.msk [vmem:[%s3163 + $0x54] sm:$0xf] %vm1559, %v3014
        %3186 = vst.msk [vmem:[%s3163 + $0x58] sm:$0xf] %vm1559, %v3016
        %3187 = vst.msk [vmem:[%s3163 + $0x5c] sm:$0xf] %vm1559, %v3018
        %3188 = vst.msk [vmem:[%s3163 + $0x60] sm:$0xf] %vm1559, %v3020
        %3189 = vst.msk [vmem:[%s3163 + $0x64] sm:$0xf] %vm1559, %v3022
        %3190 = vst.msk [vmem:[%s3163 + $0x68] sm:$0xf] %vm1559, %v3024
        %3191 = vst.msk [vmem:[%s3163 + $0x6c] sm:$0xf] %vm1559, %v3026
        %3192 = vst.msk [vmem:[%s3163 + $0x70] sm:$0xf] %vm1559, %v3028
        %3193 = vst.msk [vmem:[%s3163 + $0x74] sm:$0xf] %vm1559, %v3030
        %3194 = vst.msk [vmem:[%s3163 + $0x78] sm:$0xf] %vm1559, %v3032
        %3195 = vst.msk [vmem:[%s3163 + $0x7c] sm:$0xf] %vm1559, %v3034
        %3196 = vst.msk [vmem:[%s3163 + $0x80] sm:$0xf] %vm1559, %v3036
        %3197 = vst.msk [vmem:[%s3163 + $0x84] sm:$0xf] %vm1559, %v3038
        %3198 = vst.msk [vmem:[%s3163 + $0x88] sm:$0xf] %vm1559, %v3040
        %3199 = vst.msk [vmem:[%s3163 + $0x8c] sm:$0xf] %vm1559, %v3042
        %3200 = vst.msk [vmem:[%s3163 + $0x90] sm:$0xf] %vm1559, %v3044
        %3201 = vst.msk [vmem:[%s3163 + $0x94] sm:$0xf] %vm1559, %v3046
        %3202 = vst.msk [vmem:[%s3163 + $0x98] sm:$0xf] %vm1559, %v3048
        %3203 = vst.msk [vmem:[%s3163 + $0x9c] sm:$0xf] %vm1559, %v3050
        %3204 = vst.msk [vmem:[%s3163 + $0xa0] sm:$0xf] %vm1559, %v3052
        %3205 = vst.msk [vmem:[%s3163 + $0xa4] sm:$0xf] %vm1559, %v3054
        %3206 = vst.msk [vmem:[%s3163 + $0xa8] sm:$0xf] %vm1559, %v3056
        %3207 = vst.msk [vmem:[%s3163 + $0xac] sm:$0xf] %vm1559, %v3058
        %3208 = vst.msk [vmem:[%s3163 + $0xb0] sm:$0xf] %vm1559, %v3060
        %3209 = vst.msk [vmem:[%s3163 + $0xb4] sm:$0xf] %vm1559, %v3062
        %3210 = vst.msk [vmem:[%s3163 + $0xb8] sm:$0xf] %vm1559, %v3064
        %3211 = vst.msk [vmem:[%s3163 + $0xbc] sm:$0xf] %vm1559, %v3066
        %3212 = vst.msk [vmem:[%s3163 + $0xc0] sm:$0xf] %vm1559, %v3068
        %3213 = vst.msk [vmem:[%s3163 + $0xc4] sm:$0xf] %vm1559, %v3070
        %3214 = vst.msk [vmem:[%s3163 + $0xc8] sm:$0xf] %vm1559, %v3072
        %3215 = vst.msk [vmem:[%s3163 + $0xcc] sm:$0xf] %vm1559, %v3074
        %3216 = vst.msk [vmem:[%s3163 + $0xd0] sm:$0xf] %vm1559, %v3076
        %3217 = vst.msk [vmem:[%s3163 + $0xd4] sm:$0xf] %vm1559, %v3078
        %3218 = vst.msk [vmem:[%s3163 + $0xd8] sm:$0xf] %vm1559, %v3080
        %3219 = vst.msk [vmem:[%s3163 + $0xdc] sm:$0xf] %vm1559, %v3082
        %3220 = vst.msk [vmem:[%s3163 + $0xe0] sm:$0xf] %vm1559, %v3084
        %3221 = vst.msk [vmem:[%s3163 + $0xe4] sm:$0xf] %vm1559, %v3086
        %3222 = vst.msk [vmem:[%s3163 + $0xe8] sm:$0xf] %vm1559, %v3088
        %3223 = vst.msk [vmem:[%s3163 + $0xec] sm:$0xf] %vm1559, %v3090
        %3224 = vst.msk [vmem:[%s3163 + $0xf0] sm:$0xf] %vm1559, %v3092
        %3225 = vst.msk [vmem:[%s3163 + $0xf4] sm:$0xf] %vm1559, %v3094
        %3226 = vst.msk [vmem:[%s3163 + $0xf8] sm:$0xf] %vm1559, %v3096
        %3227 = vst.msk [vmem:[%s3163 + $0xfc] sm:$0xf] %vm1559, %v3098
        %3228 = vrot.lane.b32.xlu0 %v1720, 64
        %v3229 = vpop.permute.xlu0 %3228
        %3230 = vrot.lane.b32.xlu0 %v1721, 64
        %v3231 = vpop.permute.xlu0 %3230
        %3232 = vrot.lane.b32.xlu0 %v1722, 64
        %v3233 = vpop.permute.xlu0 %3232
        %3234 = vrot.lane.b32.xlu0 %v1723, 64
        %v3235 = vpop.permute.xlu0 %3234
        %3236 = vrot.lane.b32.xlu0 %v1724, 64
        %v3237 = vpop.permute.xlu0 %3236
        %3238 = vrot.lane.b32.xlu0 %v1725, 64
        %v3239 = vpop.permute.xlu0 %3238
        %3240 = vrot.lane.b32.xlu0 %v1726, 64
        %v3241 = vpop.permute.xlu0 %3240
        %3242 = vrot.lane.b32.xlu0 %v1727, 64
        %v3243 = vpop.permute.xlu0 %3242
        %3244 = vrot.lane.b32.xlu0 %v1728, 64
        %v3245 = vpop.permute.xlu0 %3244
        %3246 = vrot.lane.b32.xlu0 %v1729, 64
        %v3247 = vpop.permute.xlu0 %3246
        %3248 = vrot.lane.b32.xlu0 %v1730, 64
        %v3249 = vpop.permute.xlu0 %3248
        %3250 = vrot.lane.b32.xlu0 %v1731, 64
        %v3251 = vpop.permute.xlu0 %3250
        %3252 = vrot.lane.b32.xlu0 %v1732, 64
        %v3253 = vpop.permute.xlu0 %3252
        %3254 = vrot.lane.b32.xlu0 %v1733, 64
        %v3255 = vpop.permute.xlu0 %3254
        %3256 = vrot.lane.b32.xlu0 %v1734, 64
        %v3257 = vpop.permute.xlu0 %3256
        %3258 = vrot.lane.b32.xlu0 %v1735, 64
        %v3259 = vpop.permute.xlu0 %3258
        %3260 = vrot.lane.b32.xlu0 %v1736, 64
        %v3261 = vpop.permute.xlu0 %3260
        %3262 = vrot.lane.b32.xlu0 %v1737, 64
        %v3263 = vpop.permute.xlu0 %3262
        %3264 = vrot.lane.b32.xlu0 %v1738, 64
        %v3265 = vpop.permute.xlu0 %3264
        %3266 = vrot.lane.b32.xlu0 %v1739, 64
        %v3267 = vpop.permute.xlu0 %3266
        %3268 = vrot.lane.b32.xlu0 %v1740, 64
        %v3269 = vpop.permute.xlu0 %3268
        %3270 = vrot.lane.b32.xlu0 %v1741, 64
        %v3271 = vpop.permute.xlu0 %3270
        %3272 = vrot.lane.b32.xlu0 %v1742, 64
        %v3273 = vpop.permute.xlu0 %3272
        %3274 = vrot.lane.b32.xlu0 %v1743, 64
        %v3275 = vpop.permute.xlu0 %3274
        %3276 = vrot.lane.b32.xlu0 %v1744, 64
        %v3277 = vpop.permute.xlu0 %3276
        %3278 = vrot.lane.b32.xlu0 %v1745, 64
        %v3279 = vpop.permute.xlu0 %3278
        %3280 = vrot.lane.b32.xlu0 %v1746, 64
        %v3281 = vpop.permute.xlu0 %3280
        %3282 = vrot.lane.b32.xlu0 %v1747, 64
        %v3283 = vpop.permute.xlu0 %3282
        %3284 = vrot.lane.b32.xlu0 %v1748, 64
        %v3285 = vpop.permute.xlu0 %3284
        %3286 = vrot.lane.b32.xlu0 %v1749, 64
        %v3287 = vpop.permute.xlu0 %3286
        %3288 = vrot.lane.b32.xlu0 %v1750, 64
        %v3289 = vpop.permute.xlu0 %3288
        %3290 = vrot.lane.b32.xlu0 %v1751, 64
        %v3291 = vpop.permute.xlu0 %3290
        %3292 = vrot.lane.b32.xlu0 %v1752, 64
        %v3293 = vpop.permute.xlu0 %3292
        %3294 = vrot.lane.b32.xlu0 %v1753, 64
        %v3295 = vpop.permute.xlu0 %3294
        %3296 = vrot.lane.b32.xlu0 %v1754, 64
        %v3297 = vpop.permute.xlu0 %3296
        %3298 = vrot.lane.b32.xlu0 %v1755, 64
        %v3299 = vpop.permute.xlu0 %3298
        %3300 = vrot.lane.b32.xlu0 %v1756, 64
        %v3301 = vpop.permute.xlu0 %3300
        %3302 = vrot.lane.b32.xlu0 %v1757, 64
        %v3303 = vpop.permute.xlu0 %3302
        %3304 = vrot.lane.b32.xlu0 %v1758, 64
        %v3305 = vpop.permute.xlu0 %3304
        %3306 = vrot.lane.b32.xlu0 %v1759, 64
        %v3307 = vpop.permute.xlu0 %3306
        %3308 = vrot.lane.b32.xlu0 %v1760, 64
        %v3309 = vpop.permute.xlu0 %3308
        %3310 = vrot.lane.b32.xlu0 %v1761, 64
        %v3311 = vpop.permute.xlu0 %3310
        %3312 = vrot.lane.b32.xlu0 %v1762, 64
        %v3313 = vpop.permute.xlu0 %3312
        %3314 = vrot.lane.b32.xlu0 %v1763, 64
        %v3315 = vpop.permute.xlu0 %3314
        %3316 = vrot.lane.b32.xlu0 %v1764, 64
        %v3317 = vpop.permute.xlu0 %3316
        %3318 = vrot.lane.b32.xlu0 %v1765, 64
        %v3319 = vpop.permute.xlu0 %3318
        %3320 = vrot.lane.b32.xlu0 %v1766, 64
        %v3321 = vpop.permute.xlu0 %3320
        %3322 = vrot.lane.b32.xlu0 %v1767, 64
        %v3323 = vpop.permute.xlu0 %3322
        %3324 = vrot.lane.b32.xlu0 %v1768, 64
        %v3325 = vpop.permute.xlu0 %3324
        %3326 = vrot.lane.b32.xlu0 %v1769, 64
        %v3327 = vpop.permute.xlu0 %3326
        %3328 = vrot.lane.b32.xlu0 %v1770, 64
        %v3329 = vpop.permute.xlu0 %3328
        %3330 = vrot.lane.b32.xlu0 %v1771, 64
        %v3331 = vpop.permute.xlu0 %3330
        %3332 = vrot.lane.b32.xlu0 %v1772, 64
        %v3333 = vpop.permute.xlu0 %3332
        %3334 = vrot.lane.b32.xlu0 %v1773, 64
        %v3335 = vpop.permute.xlu0 %3334
        %3336 = vrot.lane.b32.xlu0 %v1774, 64
        %v3337 = vpop.permute.xlu0 %3336
        %3338 = vrot.lane.b32.xlu0 %v1775, 64
        %v3339 = vpop.permute.xlu0 %3338
        %3340 = vrot.lane.b32.xlu0 %v1776, 64
        %v3341 = vpop.permute.xlu0 %3340
        %3342 = vrot.lane.b32.xlu0 %v1777, 64
        %v3343 = vpop.permute.xlu0 %3342
        %3344 = vrot.lane.b32.xlu0 %v1778, 64
        %v3345 = vpop.permute.xlu0 %3344
        %3346 = vrot.lane.b32.xlu0 %v1779, 64
        %v3347 = vpop.permute.xlu0 %3346
        %3348 = vrot.lane.b32.xlu0 %v1780, 64
        %v3349 = vpop.permute.xlu0 %3348
        %3350 = vrot.lane.b32.xlu0 %v1781, 64
        %v3351 = vpop.permute.xlu0 %3350
        %3352 = vrot.lane.b32.xlu0 %v1782, 64
        %v3353 = vpop.permute.xlu0 %3352
        %3354 = vrot.lane.b32.xlu0 %v1783, 64
        %v3355 = vpop.permute.xlu0 %3354
        %s3420 = scalar_lea.vmem %s235, 512 [#allocation5]
        %3421 = vst.msk [vmem:[%s3420] sm:$0xf] %vm1559, %v3229
        %3422 = vst.msk [vmem:[%s3420 + $0x4] sm:$0xf] %vm1559, %v3231
        %3423 = vst.msk [vmem:[%s3420 + $0x8] sm:$0xf] %vm1559, %v3233
        %3424 = vst.msk [vmem:[%s3420 + $0xc] sm:$0xf] %vm1559, %v3235
        %3425 = vst.msk [vmem:[%s3420 + $0x10] sm:$0xf] %vm1559, %v3237
        %3426 = vst.msk [vmem:[%s3420 + $0x14] sm:$0xf] %vm1559, %v3239
        %3427 = vst.msk [vmem:[%s3420 + $0x18] sm:$0xf] %vm1559, %v3241
        %3428 = vst.msk [vmem:[%s3420 + $0x1c] sm:$0xf] %vm1559, %v3243
        %3429 = vst.msk [vmem:[%s3420 + $0x20] sm:$0xf] %vm1559, %v3245
        %3430 = vst.msk [vmem:[%s3420 + $0x24] sm:$0xf] %vm1559, %v3247
        %3431 = vst.msk [vmem:[%s3420 + $0x28] sm:$0xf] %vm1559, %v3249
        %3432 = vst.msk [vmem:[%s3420 + $0x2c] sm:$0xf] %vm1559, %v3251
        %3433 = vst.msk [vmem:[%s3420 + $0x30] sm:$0xf] %vm1559, %v3253
        %3434 = vst.msk [vmem:[%s3420 + $0x34] sm:$0xf] %vm1559, %v3255
        %3435 = vst.msk [vmem:[%s3420 + $0x38] sm:$0xf] %vm1559, %v3257
        %3436 = vst.msk [vmem:[%s3420 + $0x3c] sm:$0xf] %vm1559, %v3259
        %3437 = vst.msk [vmem:[%s3420 + $0x40] sm:$0xf] %vm1559, %v3261
        %3438 = vst.msk [vmem:[%s3420 + $0x44] sm:$0xf] %vm1559, %v3263
        %3439 = vst.msk [vmem:[%s3420 + $0x48] sm:$0xf] %vm1559, %v3265
        %3440 = vst.msk [vmem:[%s3420 + $0x4c] sm:$0xf] %vm1559, %v3267
        %3441 = vst.msk [vmem:[%s3420 + $0x50] sm:$0xf] %vm1559, %v3269
        %3442 = vst.msk [vmem:[%s3420 + $0x54] sm:$0xf] %vm1559, %v3271
        %3443 = vst.msk [vmem:[%s3420 + $0x58] sm:$0xf] %vm1559, %v3273
        %3444 = vst.msk [vmem:[%s3420 + $0x5c] sm:$0xf] %vm1559, %v3275
        %3445 = vst.msk [vmem:[%s3420 + $0x60] sm:$0xf] %vm1559, %v3277
        %3446 = vst.msk [vmem:[%s3420 + $0x64] sm:$0xf] %vm1559, %v3279
        %3447 = vst.msk [vmem:[%s3420 + $0x68] sm:$0xf] %vm1559, %v3281
        %3448 = vst.msk [vmem:[%s3420 + $0x6c] sm:$0xf] %vm1559, %v3283
        %3449 = vst.msk [vmem:[%s3420 + $0x70] sm:$0xf] %vm1559, %v3285
        %3450 = vst.msk [vmem:[%s3420 + $0x74] sm:$0xf] %vm1559, %v3287
        %3451 = vst.msk [vmem:[%s3420 + $0x78] sm:$0xf] %vm1559, %v3289
        %3452 = vst.msk [vmem:[%s3420 + $0x7c] sm:$0xf] %vm1559, %v3291
        %3453 = vst.msk [vmem:[%s3420 + $0x80] sm:$0xf] %vm1559, %v3293
        %3454 = vst.msk [vmem:[%s3420 + $0x84] sm:$0xf] %vm1559, %v3295
        %3455 = vst.msk [vmem:[%s3420 + $0x88] sm:$0xf] %vm1559, %v3297
        %3456 = vst.msk [vmem:[%s3420 + $0x8c] sm:$0xf] %vm1559, %v3299
        %3457 = vst.msk [vmem:[%s3420 + $0x90] sm:$0xf] %vm1559, %v3301
        %3458 = vst.msk [vmem:[%s3420 + $0x94] sm:$0xf] %vm1559, %v3303
        %3459 = vst.msk [vmem:[%s3420 + $0x98] sm:$0xf] %vm1559, %v3305
        %3460 = vst.msk [vmem:[%s3420 + $0x9c] sm:$0xf] %vm1559, %v3307
        %3461 = vst.msk [vmem:[%s3420 + $0xa0] sm:$0xf] %vm1559, %v3309
        %3462 = vst.msk [vmem:[%s3420 + $0xa4] sm:$0xf] %vm1559, %v3311
        %3463 = vst.msk [vmem:[%s3420 + $0xa8] sm:$0xf] %vm1559, %v3313
        %3464 = vst.msk [vmem:[%s3420 + $0xac] sm:$0xf] %vm1559, %v3315
        %3465 = vst.msk [vmem:[%s3420 + $0xb0] sm:$0xf] %vm1559, %v3317
        %3466 = vst.msk [vmem:[%s3420 + $0xb4] sm:$0xf] %vm1559, %v3319
        %3467 = vst.msk [vmem:[%s3420 + $0xb8] sm:$0xf] %vm1559, %v3321
        %3468 = vst.msk [vmem:[%s3420 + $0xbc] sm:$0xf] %vm1559, %v3323
        %3469 = vst.msk [vmem:[%s3420 + $0xc0] sm:$0xf] %vm1559, %v3325
        %3470 = vst.msk [vmem:[%s3420 + $0xc4] sm:$0xf] %vm1559, %v3327
        %3471 = vst.msk [vmem:[%s3420 + $0xc8] sm:$0xf] %vm1559, %v3329
        %3472 = vst.msk [vmem:[%s3420 + $0xcc] sm:$0xf] %vm1559, %v3331
        %3473 = vst.msk [vmem:[%s3420 + $0xd0] sm:$0xf] %vm1559, %v3333
        %3474 = vst.msk [vmem:[%s3420 + $0xd4] sm:$0xf] %vm1559, %v3335
        %3475 = vst.msk [vmem:[%s3420 + $0xd8] sm:$0xf] %vm1559, %v3337
        %3476 = vst.msk [vmem:[%s3420 + $0xdc] sm:$0xf] %vm1559, %v3339
        %3477 = vst.msk [vmem:[%s3420 + $0xe0] sm:$0xf] %vm1559, %v3341
        %3478 = vst.msk [vmem:[%s3420 + $0xe4] sm:$0xf] %vm1559, %v3343
        %3479 = vst.msk [vmem:[%s3420 + $0xe8] sm:$0xf] %vm1559, %v3345
        %3480 = vst.msk [vmem:[%s3420 + $0xec] sm:$0xf] %vm1559, %v3347
        %3481 = vst.msk [vmem:[%s3420 + $0xf0] sm:$0xf] %vm1559, %v3349
        %3482 = vst.msk [vmem:[%s3420 + $0xf4] sm:$0xf] %vm1559, %v3351
        %3483 = vst.msk [vmem:[%s3420 + $0xf8] sm:$0xf] %vm1559, %v3353
        %3484 = vst.msk [vmem:[%s3420 + $0xfc] sm:$0xf] %vm1559, %v3355
        %3485 = vrot.lane.b32.xlu0 %v2008, 64
        %v3486 = vpop.permute.xlu0 %3485
        %3487 = vrot.lane.b32.xlu0 %v2009, 64
        %v3488 = vpop.permute.xlu0 %3487
        %3489 = vrot.lane.b32.xlu0 %v2010, 64
        %v3490 = vpop.permute.xlu0 %3489
        %3491 = vrot.lane.b32.xlu0 %v2011, 64
        %v3492 = vpop.permute.xlu0 %3491
        %3493 = vrot.lane.b32.xlu0 %v2012, 64
        %v3494 = vpop.permute.xlu0 %3493
        %3495 = vrot.lane.b32.xlu0 %v2013, 64
        %v3496 = vpop.permute.xlu0 %3495
        %3497 = vrot.lane.b32.xlu0 %v2014, 64
        %v3498 = vpop.permute.xlu0 %3497
        %3499 = vrot.lane.b32.xlu0 %v2015, 64
        %v3500 = vpop.permute.xlu0 %3499
        %3501 = vrot.lane.b32.xlu0 %v2016, 64
        %v3502 = vpop.permute.xlu0 %3501
        %3503 = vrot.lane.b32.xlu0 %v2017, 64
        %v3504 = vpop.permute.xlu0 %3503
        %3505 = vrot.lane.b32.xlu0 %v2018, 64
        %v3506 = vpop.permute.xlu0 %3505
        %3507 = vrot.lane.b32.xlu0 %v2019, 64
        %v3508 = vpop.permute.xlu0 %3507
        %3509 = vrot.lane.b32.xlu0 %v2020, 64
        %v3510 = vpop.permute.xlu0 %3509
        %3511 = vrot.lane.b32.xlu0 %v2021, 64
        %v3512 = vpop.permute.xlu0 %3511
        %3513 = vrot.lane.b32.xlu0 %v2022, 64
        %v3514 = vpop.permute.xlu0 %3513
        %3515 = vrot.lane.b32.xlu0 %v2023, 64
        %v3516 = vpop.permute.xlu0 %3515
        %3517 = vrot.lane.b32.xlu0 %v2024, 64
        %v3518 = vpop.permute.xlu0 %3517
        %3519 = vrot.lane.b32.xlu0 %v2025, 64
        %v3520 = vpop.permute.xlu0 %3519
        %3521 = vrot.lane.b32.xlu0 %v2026, 64
        %v3522 = vpop.permute.xlu0 %3521
        %3523 = vrot.lane.b32.xlu0 %v2027, 64
        %v3524 = vpop.permute.xlu0 %3523
        %3525 = vrot.lane.b32.xlu0 %v2028, 64
        %v3526 = vpop.permute.xlu0 %3525
        %3527 = vrot.lane.b32.xlu0 %v2029, 64
        %v3528 = vpop.permute.xlu0 %3527
        %3529 = vrot.lane.b32.xlu0 %v2030, 64
        %v3530 = vpop.permute.xlu0 %3529
        %3531 = vrot.lane.b32.xlu0 %v2031, 64
        %v3532 = vpop.permute.xlu0 %3531
        %3533 = vrot.lane.b32.xlu0 %v2032, 64
        %v3534 = vpop.permute.xlu0 %3533
        %3535 = vrot.lane.b32.xlu0 %v2033, 64
        %v3536 = vpop.permute.xlu0 %3535
        %3537 = vrot.lane.b32.xlu0 %v2034, 64
        %v3538 = vpop.permute.xlu0 %3537
        %3539 = vrot.lane.b32.xlu0 %v2035, 64
        %v3540 = vpop.permute.xlu0 %3539
        %3541 = vrot.lane.b32.xlu0 %v2036, 64
        %v3542 = vpop.permute.xlu0 %3541
        %3543 = vrot.lane.b32.xlu0 %v2037, 64
        %v3544 = vpop.permute.xlu0 %3543
        %3545 = vrot.lane.b32.xlu0 %v2038, 64
        %v3546 = vpop.permute.xlu0 %3545
        %3547 = vrot.lane.b32.xlu0 %v2039, 64
        %v3548 = vpop.permute.xlu0 %3547
        %3549 = vrot.lane.b32.xlu0 %v2040, 64
        %v3550 = vpop.permute.xlu0 %3549
        %3551 = vrot.lane.b32.xlu0 %v2041, 64
        %v3552 = vpop.permute.xlu0 %3551
        %3553 = vrot.lane.b32.xlu0 %v2042, 64
        %v3554 = vpop.permute.xlu0 %3553
        %3555 = vrot.lane.b32.xlu0 %v2043, 64
        %v3556 = vpop.permute.xlu0 %3555
        %3557 = vrot.lane.b32.xlu0 %v2044, 64
        %v3558 = vpop.permute.xlu0 %3557
        %3559 = vrot.lane.b32.xlu0 %v2045, 64
        %v3560 = vpop.permute.xlu0 %3559
        %3561 = vrot.lane.b32.xlu0 %v2046, 64
        %v3562 = vpop.permute.xlu0 %3561
        %3563 = vrot.lane.b32.xlu0 %v2047, 64
        %v3564 = vpop.permute.xlu0 %3563
        %3565 = vrot.lane.b32.xlu0 %v2048, 64
        %v3566 = vpop.permute.xlu0 %3565
        %3567 = vrot.lane.b32.xlu0 %v2049, 64
        %v3568 = vpop.permute.xlu0 %3567
        %3569 = vrot.lane.b32.xlu0 %v2050, 64
        %v3570 = vpop.permute.xlu0 %3569
        %3571 = vrot.lane.b32.xlu0 %v2051, 64
        %v3572 = vpop.permute.xlu0 %3571
        %3573 = vrot.lane.b32.xlu0 %v2052, 64
        %v3574 = vpop.permute.xlu0 %3573
        %3575 = vrot.lane.b32.xlu0 %v2053, 64
        %v3576 = vpop.permute.xlu0 %3575
        %3577 = vrot.lane.b32.xlu0 %v2054, 64
        %v3578 = vpop.permute.xlu0 %3577
        %3579 = vrot.lane.b32.xlu0 %v2055, 64
        %v3580 = vpop.permute.xlu0 %3579
        %3581 = vrot.lane.b32.xlu0 %v2056, 64
        %v3582 = vpop.permute.xlu0 %3581
        %3583 = vrot.lane.b32.xlu0 %v2057, 64
        %v3584 = vpop.permute.xlu0 %3583
        %3585 = vrot.lane.b32.xlu0 %v2058, 64
        %v3586 = vpop.permute.xlu0 %3585
        %3587 = vrot.lane.b32.xlu0 %v2059, 64
        %v3588 = vpop.permute.xlu0 %3587
        %3589 = vrot.lane.b32.xlu0 %v2060, 64
        %v3590 = vpop.permute.xlu0 %3589
        %3591 = vrot.lane.b32.xlu0 %v2061, 64
        %v3592 = vpop.permute.xlu0 %3591
        %3593 = vrot.lane.b32.xlu0 %v2062, 64
        %v3594 = vpop.permute.xlu0 %3593
        %3595 = vrot.lane.b32.xlu0 %v2063, 64
        %v3596 = vpop.permute.xlu0 %3595
        %3597 = vrot.lane.b32.xlu0 %v2064, 64
        %v3598 = vpop.permute.xlu0 %3597
        %3599 = vrot.lane.b32.xlu0 %v2065, 64
        %v3600 = vpop.permute.xlu0 %3599
        %3601 = vrot.lane.b32.xlu0 %v2066, 64
        %v3602 = vpop.permute.xlu0 %3601
        %3603 = vrot.lane.b32.xlu0 %v2067, 64
        %v3604 = vpop.permute.xlu0 %3603
        %3605 = vrot.lane.b32.xlu0 %v2068, 64
        %v3606 = vpop.permute.xlu0 %3605
        %3607 = vrot.lane.b32.xlu0 %v2069, 64
        %v3608 = vpop.permute.xlu0 %3607
        %3609 = vrot.lane.b32.xlu0 %v2070, 64
        %v3610 = vpop.permute.xlu0 %3609
        %3611 = vrot.lane.b32.xlu0 %v2071, 64
        %v3612 = vpop.permute.xlu0 %3611
        %s3677 = scalar_lea.vmem %s241, 512 [#allocation6]
        %3678 = vst.msk [vmem:[%s3677] sm:$0xf] %vm1559, %v3486
        %3679 = vst.msk [vmem:[%s3677 + $0x4] sm:$0xf] %vm1559, %v3488
        %3680 = vst.msk [vmem:[%s3677 + $0x8] sm:$0xf] %vm1559, %v3490
        %3681 = vst.msk [vmem:[%s3677 + $0xc] sm:$0xf] %vm1559, %v3492
        %3682 = vst.msk [vmem:[%s3677 + $0x10] sm:$0xf] %vm1559, %v3494
        %3683 = vst.msk [vmem:[%s3677 + $0x14] sm:$0xf] %vm1559, %v3496
        %3684 = vst.msk [vmem:[%s3677 + $0x18] sm:$0xf] %vm1559, %v3498
        %3685 = vst.msk [vmem:[%s3677 + $0x1c] sm:$0xf] %vm1559, %v3500
        %3686 = vst.msk [vmem:[%s3677 + $0x20] sm:$0xf] %vm1559, %v3502
        %3687 = vst.msk [vmem:[%s3677 + $0x24] sm:$0xf] %vm1559, %v3504
        %3688 = vst.msk [vmem:[%s3677 + $0x28] sm:$0xf] %vm1559, %v3506
        %3689 = vst.msk [vmem:[%s3677 + $0x2c] sm:$0xf] %vm1559, %v3508
        %3690 = vst.msk [vmem:[%s3677 + $0x30] sm:$0xf] %vm1559, %v3510
        %3691 = vst.msk [vmem:[%s3677 + $0x34] sm:$0xf] %vm1559, %v3512
        %3692 = vst.msk [vmem:[%s3677 + $0x38] sm:$0xf] %vm1559, %v3514
        %3693 = vst.msk [vmem:[%s3677 + $0x3c] sm:$0xf] %vm1559, %v3516
        %3694 = vst.msk [vmem:[%s3677 + $0x40] sm:$0xf] %vm1559, %v3518
        %3695 = vst.msk [vmem:[%s3677 + $0x44] sm:$0xf] %vm1559, %v3520
        %3696 = vst.msk [vmem:[%s3677 + $0x48] sm:$0xf] %vm1559, %v3522
        %3697 = vst.msk [vmem:[%s3677 + $0x4c] sm:$0xf] %vm1559, %v3524
        %3698 = vst.msk [vmem:[%s3677 + $0x50] sm:$0xf] %vm1559, %v3526
        %3699 = vst.msk [vmem:[%s3677 + $0x54] sm:$0xf] %vm1559, %v3528
        %3700 = vst.msk [vmem:[%s3677 + $0x58] sm:$0xf] %vm1559, %v3530
        %3701 = vst.msk [vmem:[%s3677 + $0x5c] sm:$0xf] %vm1559, %v3532
        %3702 = vst.msk [vmem:[%s3677 + $0x60] sm:$0xf] %vm1559, %v3534
        %3703 = vst.msk [vmem:[%s3677 + $0x64] sm:$0xf] %vm1559, %v3536
        %3704 = vst.msk [vmem:[%s3677 + $0x68] sm:$0xf] %vm1559, %v3538
        %3705 = vst.msk [vmem:[%s3677 + $0x6c] sm:$0xf] %vm1559, %v3540
        %3706 = vst.msk [vmem:[%s3677 + $0x70] sm:$0xf] %vm1559, %v3542
        %3707 = vst.msk [vmem:[%s3677 + $0x74] sm:$0xf] %vm1559, %v3544
        %3708 = vst.msk [vmem:[%s3677 + $0x78] sm:$0xf] %vm1559, %v3546
        %3709 = vst.msk [vmem:[%s3677 + $0x7c] sm:$0xf] %vm1559, %v3548
        %3710 = vst.msk [vmem:[%s3677 + $0x80] sm:$0xf] %vm1559, %v3550
        %3711 = vst.msk [vmem:[%s3677 + $0x84] sm:$0xf] %vm1559, %v3552
        %3712 = vst.msk [vmem:[%s3677 + $0x88] sm:$0xf] %vm1559, %v3554
        %3713 = vst.msk [vmem:[%s3677 + $0x8c] sm:$0xf] %vm1559, %v3556
        %3714 = vst.msk [vmem:[%s3677 + $0x90] sm:$0xf] %vm1559, %v3558
        %3715 = vst.msk [vmem:[%s3677 + $0x94] sm:$0xf] %vm1559, %v3560
        %3716 = vst.msk [vmem:[%s3677 + $0x98] sm:$0xf] %vm1559, %v3562
        %3717 = vst.msk [vmem:[%s3677 + $0x9c] sm:$0xf] %vm1559, %v3564
        %3718 = vst.msk [vmem:[%s3677 + $0xa0] sm:$0xf] %vm1559, %v3566
        %3719 = vst.msk [vmem:[%s3677 + $0xa4] sm:$0xf] %vm1559, %v3568
        %3720 = vst.msk [vmem:[%s3677 + $0xa8] sm:$0xf] %vm1559, %v3570
        %3721 = vst.msk [vmem:[%s3677 + $0xac] sm:$0xf] %vm1559, %v3572
        %3722 = vst.msk [vmem:[%s3677 + $0xb0] sm:$0xf] %vm1559, %v3574
        %3723 = vst.msk [vmem:[%s3677 + $0xb4] sm:$0xf] %vm1559, %v3576
        %3724 = vst.msk [vmem:[%s3677 + $0xb8] sm:$0xf] %vm1559, %v3578
        %3725 = vst.msk [vmem:[%s3677 + $0xbc] sm:$0xf] %vm1559, %v3580
        %3726 = vst.msk [vmem:[%s3677 + $0xc0] sm:$0xf] %vm1559, %v3582
        %3727 = vst.msk [vmem:[%s3677 + $0xc4] sm:$0xf] %vm1559, %v3584
        %3728 = vst.msk [vmem:[%s3677 + $0xc8] sm:$0xf] %vm1559, %v3586
        %3729 = vst.msk [vmem:[%s3677 + $0xcc] sm:$0xf] %vm1559, %v3588
        %3730 = vst.msk [vmem:[%s3677 + $0xd0] sm:$0xf] %vm1559, %v3590
        %3731 = vst.msk [vmem:[%s3677 + $0xd4] sm:$0xf] %vm1559, %v3592
        %3732 = vst.msk [vmem:[%s3677 + $0xd8] sm:$0xf] %vm1559, %v3594
        %3733 = vst.msk [vmem:[%s3677 + $0xdc] sm:$0xf] %vm1559, %v3596
        %3734 = vst.msk [vmem:[%s3677 + $0xe0] sm:$0xf] %vm1559, %v3598
        %3735 = vst.msk [vmem:[%s3677 + $0xe4] sm:$0xf] %vm1559, %v3600
        %3736 = vst.msk [vmem:[%s3677 + $0xe8] sm:$0xf] %vm1559, %v3602
        %3737 = vst.msk [vmem:[%s3677 + $0xec] sm:$0xf] %vm1559, %v3604
        %3738 = vst.msk [vmem:[%s3677 + $0xf0] sm:$0xf] %vm1559, %v3606
        %3739 = vst.msk [vmem:[%s3677 + $0xf4] sm:$0xf] %vm1559, %v3608
        %3740 = vst.msk [vmem:[%s3677 + $0xf8] sm:$0xf] %vm1559, %v3610
        %3741 = vst.msk [vmem:[%s3677 + $0xfc] sm:$0xf] %vm1559, %v3612
        %3742 = vrot.lane.b32.xlu0 %v1431, 32
        %v3743 = vpop.permute.xlu0 %3742
        %3744 = vrot.lane.b32.xlu0 %v1432, 32
        %v3745 = vpop.permute.xlu0 %3744
        %3746 = vrot.lane.b32.xlu0 %v1433, 32
        %v3747 = vpop.permute.xlu0 %3746
        %3748 = vrot.lane.b32.xlu0 %v1434, 32
        %v3749 = vpop.permute.xlu0 %3748
        %3750 = vrot.lane.b32.xlu0 %v1435, 32
        %v3751 = vpop.permute.xlu0 %3750
        %3752 = vrot.lane.b32.xlu0 %v1436, 32
        %v3753 = vpop.permute.xlu0 %3752
        %3754 = vrot.lane.b32.xlu0 %v1437, 32
        %v3755 = vpop.permute.xlu0 %3754
        %3756 = vrot.lane.b32.xlu0 %v1438, 32
        %v3757 = vpop.permute.xlu0 %3756
        %3758 = vrot.lane.b32.xlu0 %v1439, 32
        %v3759 = vpop.permute.xlu0 %3758
        %3760 = vrot.lane.b32.xlu0 %v1440, 32
        %v3761 = vpop.permute.xlu0 %3760
        %3762 = vrot.lane.b32.xlu0 %v1441, 32
        %v3763 = vpop.permute.xlu0 %3762
        %3764 = vrot.lane.b32.xlu0 %v1442, 32
        %v3765 = vpop.permute.xlu0 %3764
        %3766 = vrot.lane.b32.xlu0 %v1443, 32
        %v3767 = vpop.permute.xlu0 %3766
        %3768 = vrot.lane.b32.xlu0 %v1444, 32
        %v3769 = vpop.permute.xlu0 %3768
        %3770 = vrot.lane.b32.xlu0 %v1445, 32
        %v3771 = vpop.permute.xlu0 %3770
        %3772 = vrot.lane.b32.xlu0 %v1446, 32
        %v3773 = vpop.permute.xlu0 %3772
        %3774 = vrot.lane.b32.xlu0 %v1447, 32
        %v3775 = vpop.permute.xlu0 %3774
        %3776 = vrot.lane.b32.xlu0 %v1448, 32
        %v3777 = vpop.permute.xlu0 %3776
        %3778 = vrot.lane.b32.xlu0 %v1449, 32
        %v3779 = vpop.permute.xlu0 %3778
        %3780 = vrot.lane.b32.xlu0 %v1450, 32
        %v3781 = vpop.permute.xlu0 %3780
        %3782 = vrot.lane.b32.xlu0 %v1451, 32
        %v3783 = vpop.permute.xlu0 %3782
        %3784 = vrot.lane.b32.xlu0 %v1452, 32
        %v3785 = vpop.permute.xlu0 %3784
        %3786 = vrot.lane.b32.xlu0 %v1453, 32
        %v3787 = vpop.permute.xlu0 %3786
        %3788 = vrot.lane.b32.xlu0 %v1454, 32
        %v3789 = vpop.permute.xlu0 %3788
        %3790 = vrot.lane.b32.xlu0 %v1455, 32
        %v3791 = vpop.permute.xlu0 %3790
        %3792 = vrot.lane.b32.xlu0 %v1456, 32
        %v3793 = vpop.permute.xlu0 %3792
        %3794 = vrot.lane.b32.xlu0 %v1457, 32
        %v3795 = vpop.permute.xlu0 %3794
        %3796 = vrot.lane.b32.xlu0 %v1458, 32
        %v3797 = vpop.permute.xlu0 %3796
        %3798 = vrot.lane.b32.xlu0 %v1459, 32
        %v3799 = vpop.permute.xlu0 %3798
        %3800 = vrot.lane.b32.xlu0 %v1460, 32
        %v3801 = vpop.permute.xlu0 %3800
        %3802 = vrot.lane.b32.xlu0 %v1461, 32
        %v3803 = vpop.permute.xlu0 %3802
        %3804 = vrot.lane.b32.xlu0 %v1462, 32
        %v3805 = vpop.permute.xlu0 %3804
        %3806 = vrot.lane.b32.xlu0 %v1463, 32
        %v3807 = vpop.permute.xlu0 %3806
        %3808 = vrot.lane.b32.xlu0 %v1464, 32
        %v3809 = vpop.permute.xlu0 %3808
        %3810 = vrot.lane.b32.xlu0 %v1465, 32
        %v3811 = vpop.permute.xlu0 %3810
        %3812 = vrot.lane.b32.xlu0 %v1466, 32
        %v3813 = vpop.permute.xlu0 %3812
        %3814 = vrot.lane.b32.xlu0 %v1467, 32
        %v3815 = vpop.permute.xlu0 %3814
        %3816 = vrot.lane.b32.xlu0 %v1468, 32
        %v3817 = vpop.permute.xlu0 %3816
        %3818 = vrot.lane.b32.xlu0 %v1469, 32
        %v3819 = vpop.permute.xlu0 %3818
        %3820 = vrot.lane.b32.xlu0 %v1470, 32
        %v3821 = vpop.permute.xlu0 %3820
        %3822 = vrot.lane.b32.xlu0 %v1471, 32
        %v3823 = vpop.permute.xlu0 %3822
        %3824 = vrot.lane.b32.xlu0 %v1472, 32
        %v3825 = vpop.permute.xlu0 %3824
        %3826 = vrot.lane.b32.xlu0 %v1473, 32
        %v3827 = vpop.permute.xlu0 %3826
        %3828 = vrot.lane.b32.xlu0 %v1474, 32
        %v3829 = vpop.permute.xlu0 %3828
        %3830 = vrot.lane.b32.xlu0 %v1475, 32
        %v3831 = vpop.permute.xlu0 %3830
        %3832 = vrot.lane.b32.xlu0 %v1476, 32
        %v3833 = vpop.permute.xlu0 %3832
        %3834 = vrot.lane.b32.xlu0 %v1477, 32
        %v3835 = vpop.permute.xlu0 %3834
        %3836 = vrot.lane.b32.xlu0 %v1478, 32
        %v3837 = vpop.permute.xlu0 %3836
        %3838 = vrot.lane.b32.xlu0 %v1479, 32
        %v3839 = vpop.permute.xlu0 %3838
        %3840 = vrot.lane.b32.xlu0 %v1480, 32
        %v3841 = vpop.permute.xlu0 %3840
        %3842 = vrot.lane.b32.xlu0 %v1481, 32
        %v3843 = vpop.permute.xlu0 %3842
        %3844 = vrot.lane.b32.xlu0 %v1482, 32
        %v3845 = vpop.permute.xlu0 %3844
        %3846 = vrot.lane.b32.xlu0 %v1483, 32
        %v3847 = vpop.permute.xlu0 %3846
        %3848 = vrot.lane.b32.xlu0 %v1484, 32
        %v3849 = vpop.permute.xlu0 %3848
        %3850 = vrot.lane.b32.xlu0 %v1485, 32
        %v3851 = vpop.permute.xlu0 %3850
        %3852 = vrot.lane.b32.xlu0 %v1486, 32
        %v3853 = vpop.permute.xlu0 %3852
        %3854 = vrot.lane.b32.xlu0 %v1487, 32
        %v3855 = vpop.permute.xlu0 %3854
        %3856 = vrot.lane.b32.xlu0 %v1488, 32
        %v3857 = vpop.permute.xlu0 %3856
        %3858 = vrot.lane.b32.xlu0 %v1489, 32
        %v3859 = vpop.permute.xlu0 %3858
        %3860 = vrot.lane.b32.xlu0 %v1490, 32
        %v3861 = vpop.permute.xlu0 %3860
        %3862 = vrot.lane.b32.xlu0 %v1491, 32
        %v3863 = vpop.permute.xlu0 %3862
        %3864 = vrot.lane.b32.xlu0 %v1492, 32
        %v3865 = vpop.permute.xlu0 %3864
        %3866 = vrot.lane.b32.xlu0 %v1493, 32
        %v3867 = vpop.permute.xlu0 %3866
        %3868 = vrot.lane.b32.xlu0 %v1494, 32
        %v3869 = vpop.permute.xlu0 %3868
        %s3934 = scalar_lea.vmem %s229, 768 [#allocation4]
        %3935 = vst.msk [vmem:[%s3934] sm:$0xf] %vm1559, %v3743
        %3936 = vst.msk [vmem:[%s3934 + $0x4] sm:$0xf] %vm1559, %v3745
        %3937 = vst.msk [vmem:[%s3934 + $0x8] sm:$0xf] %vm1559, %v3747
        %3938 = vst.msk [vmem:[%s3934 + $0xc] sm:$0xf] %vm1559, %v3749
        %3939 = vst.msk [vmem:[%s3934 + $0x10] sm:$0xf] %vm1559, %v3751
        %3940 = vst.msk [vmem:[%s3934 + $0x14] sm:$0xf] %vm1559, %v3753
        %3941 = vst.msk [vmem:[%s3934 + $0x18] sm:$0xf] %vm1559, %v3755
        %3942 = vst.msk [vmem:[%s3934 + $0x1c] sm:$0xf] %vm1559, %v3757
        %3943 = vst.msk [vmem:[%s3934 + $0x20] sm:$0xf] %vm1559, %v3759
        %3944 = vst.msk [vmem:[%s3934 + $0x24] sm:$0xf] %vm1559, %v3761
        %3945 = vst.msk [vmem:[%s3934 + $0x28] sm:$0xf] %vm1559, %v3763
        %3946 = vst.msk [vmem:[%s3934 + $0x2c] sm:$0xf] %vm1559, %v3765
        %3947 = vst.msk [vmem:[%s3934 + $0x30] sm:$0xf] %vm1559, %v3767
        %3948 = vst.msk [vmem:[%s3934 + $0x34] sm:$0xf] %vm1559, %v3769
        %3949 = vst.msk [vmem:[%s3934 + $0x38] sm:$0xf] %vm1559, %v3771
        %3950 = vst.msk [vmem:[%s3934 + $0x3c] sm:$0xf] %vm1559, %v3773
        %3951 = vst.msk [vmem:[%s3934 + $0x40] sm:$0xf] %vm1559, %v3775
        %3952 = vst.msk [vmem:[%s3934 + $0x44] sm:$0xf] %vm1559, %v3777
        %3953 = vst.msk [vmem:[%s3934 + $0x48] sm:$0xf] %vm1559, %v3779
        %3954 = vst.msk [vmem:[%s3934 + $0x4c] sm:$0xf] %vm1559, %v3781
        %3955 = vst.msk [vmem:[%s3934 + $0x50] sm:$0xf] %vm1559, %v3783
        %3956 = vst.msk [vmem:[%s3934 + $0x54] sm:$0xf] %vm1559, %v3785
        %3957 = vst.msk [vmem:[%s3934 + $0x58] sm:$0xf] %vm1559, %v3787
        %3958 = vst.msk [vmem:[%s3934 + $0x5c] sm:$0xf] %vm1559, %v3789
        %3959 = vst.msk [vmem:[%s3934 + $0x60] sm:$0xf] %vm1559, %v3791
        %3960 = vst.msk [vmem:[%s3934 + $0x64] sm:$0xf] %vm1559, %v3793
        %3961 = vst.msk [vmem:[%s3934 + $0x68] sm:$0xf] %vm1559, %v3795
        %3962 = vst.msk [vmem:[%s3934 + $0x6c] sm:$0xf] %vm1559, %v3797
        %3963 = vst.msk [vmem:[%s3934 + $0x70] sm:$0xf] %vm1559, %v3799
        %3964 = vst.msk [vmem:[%s3934 + $0x74] sm:$0xf] %vm1559, %v3801
        %3965 = vst.msk [vmem:[%s3934 + $0x78] sm:$0xf] %vm1559, %v3803
        %3966 = vst.msk [vmem:[%s3934 + $0x7c] sm:$0xf] %vm1559, %v3805
        %3967 = vst.msk [vmem:[%s3934 + $0x80] sm:$0xf] %vm1559, %v3807
        %3968 = vst.msk [vmem:[%s3934 + $0x84] sm:$0xf] %vm1559, %v3809
        %3969 = vst.msk [vmem:[%s3934 + $0x88] sm:$0xf] %vm1559, %v3811
        %3970 = vst.msk [vmem:[%s3934 + $0x8c] sm:$0xf] %vm1559, %v3813
        %3971 = vst.msk [vmem:[%s3934 + $0x90] sm:$0xf] %vm1559, %v3815
        %3972 = vst.msk [vmem:[%s3934 + $0x94] sm:$0xf] %vm1559, %v3817
        %3973 = vst.msk [vmem:[%s3934 + $0x98] sm:$0xf] %vm1559, %v3819
        %3974 = vst.msk [vmem:[%s3934 + $0x9c] sm:$0xf] %vm1559, %v3821
        %3975 = vst.msk [vmem:[%s3934 + $0xa0] sm:$0xf] %vm1559, %v3823
        %3976 = vst.msk [vmem:[%s3934 + $0xa4] sm:$0xf] %vm1559, %v3825
        %3977 = vst.msk [vmem:[%s3934 + $0xa8] sm:$0xf] %vm1559, %v3827
        %3978 = vst.msk [vmem:[%s3934 + $0xac] sm:$0xf] %vm1559, %v3829
        %3979 = vst.msk [vmem:[%s3934 + $0xb0] sm:$0xf] %vm1559, %v3831
        %3980 = vst.msk [vmem:[%s3934 + $0xb4] sm:$0xf] %vm1559, %v3833
        %3981 = vst.msk [vmem:[%s3934 + $0xb8] sm:$0xf] %vm1559, %v3835
        %3982 = vst.msk [vmem:[%s3934 + $0xbc] sm:$0xf] %vm1559, %v3837
        %3983 = vst.msk [vmem:[%s3934 + $0xc0] sm:$0xf] %vm1559, %v3839
        %3984 = vst.msk [vmem:[%s3934 + $0xc4] sm:$0xf] %vm1559, %v3841
        %3985 = vst.msk [vmem:[%s3934 + $0xc8] sm:$0xf] %vm1559, %v3843
        %3986 = vst.msk [vmem:[%s3934 + $0xcc] sm:$0xf] %vm1559, %v3845
        %3987 = vst.msk [vmem:[%s3934 + $0xd0] sm:$0xf] %vm1559, %v3847
        %3988 = vst.msk [vmem:[%s3934 + $0xd4] sm:$0xf] %vm1559, %v3849
        %3989 = vst.msk [vmem:[%s3934 + $0xd8] sm:$0xf] %vm1559, %v3851
        %3990 = vst.msk [vmem:[%s3934 + $0xdc] sm:$0xf] %vm1559, %v3853
        %3991 = vst.msk [vmem:[%s3934 + $0xe0] sm:$0xf] %vm1559, %v3855
        %3992 = vst.msk [vmem:[%s3934 + $0xe4] sm:$0xf] %vm1559, %v3857
        %3993 = vst.msk [vmem:[%s3934 + $0xe8] sm:$0xf] %vm1559, %v3859
        %3994 = vst.msk [vmem:[%s3934 + $0xec] sm:$0xf] %vm1559, %v3861
        %3995 = vst.msk [vmem:[%s3934 + $0xf0] sm:$0xf] %vm1559, %v3863
        %3996 = vst.msk [vmem:[%s3934 + $0xf4] sm:$0xf] %vm1559, %v3865
        %3997 = vst.msk [vmem:[%s3934 + $0xf8] sm:$0xf] %vm1559, %v3867
        %3998 = vst.msk [vmem:[%s3934 + $0xfc] sm:$0xf] %vm1559, %v3869
        %3999 = vrot.lane.b32.xlu0 %v1720, 32
        %v4000 = vpop.permute.xlu0 %3999
        %4001 = vrot.lane.b32.xlu0 %v1721, 32
        %v4002 = vpop.permute.xlu0 %4001
        %4003 = vrot.lane.b32.xlu0 %v1722, 32
        %v4004 = vpop.permute.xlu0 %4003
        %4005 = vrot.lane.b32.xlu0 %v1723, 32
        %v4006 = vpop.permute.xlu0 %4005
        %4007 = vrot.lane.b32.xlu0 %v1724, 32
        %v4008 = vpop.permute.xlu0 %4007
        %4009 = vrot.lane.b32.xlu0 %v1725, 32
        %v4010 = vpop.permute.xlu0 %4009
        %4011 = vrot.lane.b32.xlu0 %v1726, 32
        %v4012 = vpop.permute.xlu0 %4011
        %4013 = vrot.lane.b32.xlu0 %v1727, 32
        %v4014 = vpop.permute.xlu0 %4013
        %4015 = vrot.lane.b32.xlu0 %v1728, 32
        %v4016 = vpop.permute.xlu0 %4015
        %4017 = vrot.lane.b32.xlu0 %v1729, 32
        %v4018 = vpop.permute.xlu0 %4017
        %4019 = vrot.lane.b32.xlu0 %v1730, 32
        %v4020 = vpop.permute.xlu0 %4019
        %4021 = vrot.lane.b32.xlu0 %v1731, 32
        %v4022 = vpop.permute.xlu0 %4021
        %4023 = vrot.lane.b32.xlu0 %v1732, 32
        %v4024 = vpop.permute.xlu0 %4023
        %4025 = vrot.lane.b32.xlu0 %v1733, 32
        %v4026 = vpop.permute.xlu0 %4025
        %4027 = vrot.lane.b32.xlu0 %v1734, 32
        %v4028 = vpop.permute.xlu0 %4027
        %4029 = vrot.lane.b32.xlu0 %v1735, 32
        %v4030 = vpop.permute.xlu0 %4029
        %4031 = vrot.lane.b32.xlu0 %v1736, 32
        %v4032 = vpop.permute.xlu0 %4031
        %4033 = vrot.lane.b32.xlu0 %v1737, 32
        %v4034 = vpop.permute.xlu0 %4033
        %4035 = vrot.lane.b32.xlu0 %v1738, 32
        %v4036 = vpop.permute.xlu0 %4035
        %4037 = vrot.lane.b32.xlu0 %v1739, 32
        %v4038 = vpop.permute.xlu0 %4037
        %4039 = vrot.lane.b32.xlu0 %v1740, 32
        %v4040 = vpop.permute.xlu0 %4039
        %4041 = vrot.lane.b32.xlu0 %v1741, 32
        %v4042 = vpop.permute.xlu0 %4041
        %4043 = vrot.lane.b32.xlu0 %v1742, 32
        %v4044 = vpop.permute.xlu0 %4043
        %4045 = vrot.lane.b32.xlu0 %v1743, 32
        %v4046 = vpop.permute.xlu0 %4045
        %4047 = vrot.lane.b32.xlu0 %v1744, 32
        %v4048 = vpop.permute.xlu0 %4047
        %4049 = vrot.lane.b32.xlu0 %v1745, 32
        %v4050 = vpop.permute.xlu0 %4049
        %4051 = vrot.lane.b32.xlu0 %v1746, 32
        %v4052 = vpop.permute.xlu0 %4051
        %4053 = vrot.lane.b32.xlu0 %v1747, 32
        %v4054 = vpop.permute.xlu0 %4053
        %4055 = vrot.lane.b32.xlu0 %v1748, 32
        %v4056 = vpop.permute.xlu0 %4055
        %4057 = vrot.lane.b32.xlu0 %v1749, 32
        %v4058 = vpop.permute.xlu0 %4057
        %4059 = vrot.lane.b32.xlu0 %v1750, 32
        %v4060 = vpop.permute.xlu0 %4059
        %4061 = vrot.lane.b32.xlu0 %v1751, 32
        %v4062 = vpop.permute.xlu0 %4061
        %4063 = vrot.lane.b32.xlu0 %v1752, 32
        %v4064 = vpop.permute.xlu0 %4063
        %4065 = vrot.lane.b32.xlu0 %v1753, 32
        %v4066 = vpop.permute.xlu0 %4065
        %4067 = vrot.lane.b32.xlu0 %v1754, 32
        %v4068 = vpop.permute.xlu0 %4067
        %4069 = vrot.lane.b32.xlu0 %v1755, 32
        %v4070 = vpop.permute.xlu0 %4069
        %4071 = vrot.lane.b32.xlu0 %v1756, 32
        %v4072 = vpop.permute.xlu0 %4071
        %4073 = vrot.lane.b32.xlu0 %v1757, 32
        %v4074 = vpop.permute.xlu0 %4073
        %4075 = vrot.lane.b32.xlu0 %v1758, 32
        %v4076 = vpop.permute.xlu0 %4075
        %4077 = vrot.lane.b32.xlu0 %v1759, 32
        %v4078 = vpop.permute.xlu0 %4077
        %4079 = vrot.lane.b32.xlu0 %v1760, 32
        %v4080 = vpop.permute.xlu0 %4079
        %4081 = vrot.lane.b32.xlu0 %v1761, 32
        %v4082 = vpop.permute.xlu0 %4081
        %4083 = vrot.lane.b32.xlu0 %v1762, 32
        %v4084 = vpop.permute.xlu0 %4083
        %4085 = vrot.lane.b32.xlu0 %v1763, 32
        %v4086 = vpop.permute.xlu0 %4085
        %4087 = vrot.lane.b32.xlu0 %v1764, 32
        %v4088 = vpop.permute.xlu0 %4087
        %4089 = vrot.lane.b32.xlu0 %v1765, 32
        %v4090 = vpop.permute.xlu0 %4089
        %4091 = vrot.lane.b32.xlu0 %v1766, 32
        %v4092 = vpop.permute.xlu0 %4091
        %4093 = vrot.lane.b32.xlu0 %v1767, 32
        %v4094 = vpop.permute.xlu0 %4093
        %4095 = vrot.lane.b32.xlu0 %v1768, 32
        %v4096 = vpop.permute.xlu0 %4095
        %4097 = vrot.lane.b32.xlu0 %v1769, 32
        %v4098 = vpop.permute.xlu0 %4097
        %4099 = vrot.lane.b32.xlu0 %v1770, 32
        %v4100 = vpop.permute.xlu0 %4099
        %4101 = vrot.lane.b32.xlu0 %v1771, 32
        %v4102 = vpop.permute.xlu0 %4101
        %4103 = vrot.lane.b32.xlu0 %v1772, 32
        %v4104 = vpop.permute.xlu0 %4103
        %4105 = vrot.lane.b32.xlu0 %v1773, 32
        %v4106 = vpop.permute.xlu0 %4105
        %4107 = vrot.lane.b32.xlu0 %v1774, 32
        %v4108 = vpop.permute.xlu0 %4107
        %4109 = vrot.lane.b32.xlu0 %v1775, 32
        %v4110 = vpop.permute.xlu0 %4109
        %4111 = vrot.lane.b32.xlu0 %v1776, 32
        %v4112 = vpop.permute.xlu0 %4111
        %4113 = vrot.lane.b32.xlu0 %v1777, 32
        %v4114 = vpop.permute.xlu0 %4113
        %4115 = vrot.lane.b32.xlu0 %v1778, 32
        %v4116 = vpop.permute.xlu0 %4115
        %4117 = vrot.lane.b32.xlu0 %v1779, 32
        %v4118 = vpop.permute.xlu0 %4117
        %4119 = vrot.lane.b32.xlu0 %v1780, 32
        %v4120 = vpop.permute.xlu0 %4119
        %4121 = vrot.lane.b32.xlu0 %v1781, 32
        %v4122 = vpop.permute.xlu0 %4121
        %4123 = vrot.lane.b32.xlu0 %v1782, 32
        %v4124 = vpop.permute.xlu0 %4123
        %4125 = vrot.lane.b32.xlu0 %v1783, 32
        %v4126 = vpop.permute.xlu0 %4125
        %s4191 = scalar_lea.vmem %s235, 768 [#allocation5]
        %4192 = vst.msk [vmem:[%s4191] sm:$0xf] %vm1559, %v4000
        %4193 = vst.msk [vmem:[%s4191 + $0x4] sm:$0xf] %vm1559, %v4002
        %4194 = vst.msk [vmem:[%s4191 + $0x8] sm:$0xf] %vm1559, %v4004
        %4195 = vst.msk [vmem:[%s4191 + $0xc] sm:$0xf] %vm1559, %v4006
        %4196 = vst.msk [vmem:[%s4191 + $0x10] sm:$0xf] %vm1559, %v4008
        %4197 = vst.msk [vmem:[%s4191 + $0x14] sm:$0xf] %vm1559, %v4010
        %4198 = vst.msk [vmem:[%s4191 + $0x18] sm:$0xf] %vm1559, %v4012
        %4199 = vst.msk [vmem:[%s4191 + $0x1c] sm:$0xf] %vm1559, %v4014
        %4200 = vst.msk [vmem:[%s4191 + $0x20] sm:$0xf] %vm1559, %v4016
        %4201 = vst.msk [vmem:[%s4191 + $0x24] sm:$0xf] %vm1559, %v4018
        %4202 = vst.msk [vmem:[%s4191 + $0x28] sm:$0xf] %vm1559, %v4020
        %4203 = vst.msk [vmem:[%s4191 + $0x2c] sm:$0xf] %vm1559, %v4022
        %4204 = vst.msk [vmem:[%s4191 + $0x30] sm:$0xf] %vm1559, %v4024
        %4205 = vst.msk [vmem:[%s4191 + $0x34] sm:$0xf] %vm1559, %v4026
        %4206 = vst.msk [vmem:[%s4191 + $0x38] sm:$0xf] %vm1559, %v4028
        %4207 = vst.msk [vmem:[%s4191 + $0x3c] sm:$0xf] %vm1559, %v4030
        %4208 = vst.msk [vmem:[%s4191 + $0x40] sm:$0xf] %vm1559, %v4032
        %4209 = vst.msk [vmem:[%s4191 + $0x44] sm:$0xf] %vm1559, %v4034
        %4210 = vst.msk [vmem:[%s4191 + $0x48] sm:$0xf] %vm1559, %v4036
        %4211 = vst.msk [vmem:[%s4191 + $0x4c] sm:$0xf] %vm1559, %v4038
        %4212 = vst.msk [vmem:[%s4191 + $0x50] sm:$0xf] %vm1559, %v4040
        %4213 = vst.msk [vmem:[%s4191 + $0x54] sm:$0xf] %vm1559, %v4042
        %4214 = vst.msk [vmem:[%s4191 + $0x58] sm:$0xf] %vm1559, %v4044
        %4215 = vst.msk [vmem:[%s4191 + $0x5c] sm:$0xf] %vm1559, %v4046
        %4216 = vst.msk [vmem:[%s4191 + $0x60] sm:$0xf] %vm1559, %v4048
        %4217 = vst.msk [vmem:[%s4191 + $0x64] sm:$0xf] %vm1559, %v4050
        %4218 = vst.msk [vmem:[%s4191 + $0x68] sm:$0xf] %vm1559, %v4052
        %4219 = vst.msk [vmem:[%s4191 + $0x6c] sm:$0xf] %vm1559, %v4054
        %4220 = vst.msk [vmem:[%s4191 + $0x70] sm:$0xf] %vm1559, %v4056
        %4221 = vst.msk [vmem:[%s4191 + $0x74] sm:$0xf] %vm1559, %v4058
        %4222 = vst.msk [vmem:[%s4191 + $0x78] sm:$0xf] %vm1559, %v4060
        %4223 = vst.msk [vmem:[%s4191 + $0x7c] sm:$0xf] %vm1559, %v4062
        %4224 = vst.msk [vmem:[%s4191 + $0x80] sm:$0xf] %vm1559, %v4064
        %4225 = vst.msk [vmem:[%s4191 + $0x84] sm:$0xf] %vm1559, %v4066
        %4226 = vst.msk [vmem:[%s4191 + $0x88] sm:$0xf] %vm1559, %v4068
        %4227 = vst.msk [vmem:[%s4191 + $0x8c] sm:$0xf] %vm1559, %v4070
        %4228 = vst.msk [vmem:[%s4191 + $0x90] sm:$0xf] %vm1559, %v4072
        %4229 = vst.msk [vmem:[%s4191 + $0x94] sm:$0xf] %vm1559, %v4074
        %4230 = vst.msk [vmem:[%s4191 + $0x98] sm:$0xf] %vm1559, %v4076
        %4231 = vst.msk [vmem:[%s4191 + $0x9c] sm:$0xf] %vm1559, %v4078
        %4232 = vst.msk [vmem:[%s4191 + $0xa0] sm:$0xf] %vm1559, %v4080
        %4233 = vst.msk [vmem:[%s4191 + $0xa4] sm:$0xf] %vm1559, %v4082
        %4234 = vst.msk [vmem:[%s4191 + $0xa8] sm:$0xf] %vm1559, %v4084
        %4235 = vst.msk [vmem:[%s4191 + $0xac] sm:$0xf] %vm1559, %v4086
        %4236 = vst.msk [vmem:[%s4191 + $0xb0] sm:$0xf] %vm1559, %v4088
        %4237 = vst.msk [vmem:[%s4191 + $0xb4] sm:$0xf] %vm1559, %v4090
        %4238 = vst.msk [vmem:[%s4191 + $0xb8] sm:$0xf] %vm1559, %v4092
        %4239 = vst.msk [vmem:[%s4191 + $0xbc] sm:$0xf] %vm1559, %v4094
        %4240 = vst.msk [vmem:[%s4191 + $0xc0] sm:$0xf] %vm1559, %v4096
        %4241 = vst.msk [vmem:[%s4191 + $0xc4] sm:$0xf] %vm1559, %v4098
        %4242 = vst.msk [vmem:[%s4191 + $0xc8] sm:$0xf] %vm1559, %v4100
        %4243 = vst.msk [vmem:[%s4191 + $0xcc] sm:$0xf] %vm1559, %v4102
        %4244 = vst.msk [vmem:[%s4191 + $0xd0] sm:$0xf] %vm1559, %v4104
        %4245 = vst.msk [vmem:[%s4191 + $0xd4] sm:$0xf] %vm1559, %v4106
        %4246 = vst.msk [vmem:[%s4191 + $0xd8] sm:$0xf] %vm1559, %v4108
        %4247 = vst.msk [vmem:[%s4191 + $0xdc] sm:$0xf] %vm1559, %v4110
        %4248 = vst.msk [vmem:[%s4191 + $0xe0] sm:$0xf] %vm1559, %v4112
        %4249 = vst.msk [vmem:[%s4191 + $0xe4] sm:$0xf] %vm1559, %v4114
        %4250 = vst.msk [vmem:[%s4191 + $0xe8] sm:$0xf] %vm1559, %v4116
        %4251 = vst.msk [vmem:[%s4191 + $0xec] sm:$0xf] %vm1559, %v4118
        %4252 = vst.msk [vmem:[%s4191 + $0xf0] sm:$0xf] %vm1559, %v4120
        %4253 = vst.msk [vmem:[%s4191 + $0xf4] sm:$0xf] %vm1559, %v4122
        %4254 = vst.msk [vmem:[%s4191 + $0xf8] sm:$0xf] %vm1559, %v4124
        %4255 = vst.msk [vmem:[%s4191 + $0xfc] sm:$0xf] %vm1559, %v4126
        %4256 = vrot.lane.b32.xlu0 %v2008, 32
        %v4257 = vpop.permute.xlu0 %4256
        %4258 = vrot.lane.b32.xlu0 %v2009, 32
        %v4259 = vpop.permute.xlu0 %4258
        %4260 = vrot.lane.b32.xlu0 %v2010, 32
        %v4261 = vpop.permute.xlu0 %4260
        %4262 = vrot.lane.b32.xlu0 %v2011, 32
        %v4263 = vpop.permute.xlu0 %4262
        %4264 = vrot.lane.b32.xlu0 %v2012, 32
        %v4265 = vpop.permute.xlu0 %4264
        %4266 = vrot.lane.b32.xlu0 %v2013, 32
        %v4267 = vpop.permute.xlu0 %4266
        %4268 = vrot.lane.b32.xlu0 %v2014, 32
        %v4269 = vpop.permute.xlu0 %4268
        %4270 = vrot.lane.b32.xlu0 %v2015, 32
        %v4271 = vpop.permute.xlu0 %4270
        %4272 = vrot.lane.b32.xlu0 %v2016, 32
        %v4273 = vpop.permute.xlu0 %4272
        %4274 = vrot.lane.b32.xlu0 %v2017, 32
        %v4275 = vpop.permute.xlu0 %4274
        %4276 = vrot.lane.b32.xlu0 %v2018, 32
        %v4277 = vpop.permute.xlu0 %4276
        %4278 = vrot.lane.b32.xlu0 %v2019, 32
        %v4279 = vpop.permute.xlu0 %4278
        %4280 = vrot.lane.b32.xlu0 %v2020, 32
        %v4281 = vpop.permute.xlu0 %4280
        %4282 = vrot.lane.b32.xlu0 %v2021, 32
        %v4283 = vpop.permute.xlu0 %4282
        %4284 = vrot.lane.b32.xlu0 %v2022, 32
        %v4285 = vpop.permute.xlu0 %4284
        %4286 = vrot.lane.b32.xlu0 %v2023, 32
        %v4287 = vpop.permute.xlu0 %4286
        %4288 = vrot.lane.b32.xlu0 %v2024, 32
        %v4289 = vpop.permute.xlu0 %4288
        %4290 = vrot.lane.b32.xlu0 %v2025, 32
        %v4291 = vpop.permute.xlu0 %4290
        %4292 = vrot.lane.b32.xlu0 %v2026, 32
        %v4293 = vpop.permute.xlu0 %4292
        %4294 = vrot.lane.b32.xlu0 %v2027, 32
        %v4295 = vpop.permute.xlu0 %4294
        %4296 = vrot.lane.b32.xlu0 %v2028, 32
        %v4297 = vpop.permute.xlu0 %4296
        %4298 = vrot.lane.b32.xlu0 %v2029, 32
        %v4299 = vpop.permute.xlu0 %4298
        %4300 = vrot.lane.b32.xlu0 %v2030, 32
        %v4301 = vpop.permute.xlu0 %4300
        %4302 = vrot.lane.b32.xlu0 %v2031, 32
        %v4303 = vpop.permute.xlu0 %4302
        %4304 = vrot.lane.b32.xlu0 %v2032, 32
        %v4305 = vpop.permute.xlu0 %4304
        %4306 = vrot.lane.b32.xlu0 %v2033, 32
        %v4307 = vpop.permute.xlu0 %4306
        %4308 = vrot.lane.b32.xlu0 %v2034, 32
        %v4309 = vpop.permute.xlu0 %4308
        %4310 = vrot.lane.b32.xlu0 %v2035, 32
        %v4311 = vpop.permute.xlu0 %4310
        %4312 = vrot.lane.b32.xlu0 %v2036, 32
        %v4313 = vpop.permute.xlu0 %4312
        %4314 = vrot.lane.b32.xlu0 %v2037, 32
        %v4315 = vpop.permute.xlu0 %4314
        %4316 = vrot.lane.b32.xlu0 %v2038, 32
        %v4317 = vpop.permute.xlu0 %4316
        %4318 = vrot.lane.b32.xlu0 %v2039, 32
        %v4319 = vpop.permute.xlu0 %4318
        %4320 = vrot.lane.b32.xlu0 %v2040, 32
        %v4321 = vpop.permute.xlu0 %4320
        %4322 = vrot.lane.b32.xlu0 %v2041, 32
        %v4323 = vpop.permute.xlu0 %4322
        %4324 = vrot.lane.b32.xlu0 %v2042, 32
        %v4325 = vpop.permute.xlu0 %4324
        %4326 = vrot.lane.b32.xlu0 %v2043, 32
        %v4327 = vpop.permute.xlu0 %4326
        %4328 = vrot.lane.b32.xlu0 %v2044, 32
        %v4329 = vpop.permute.xlu0 %4328
        %4330 = vrot.lane.b32.xlu0 %v2045, 32
        %v4331 = vpop.permute.xlu0 %4330
        %4332 = vrot.lane.b32.xlu0 %v2046, 32
        %v4333 = vpop.permute.xlu0 %4332
        %4334 = vrot.lane.b32.xlu0 %v2047, 32
        %v4335 = vpop.permute.xlu0 %4334
        %4336 = vrot.lane.b32.xlu0 %v2048, 32
        %v4337 = vpop.permute.xlu0 %4336
        %4338 = vrot.lane.b32.xlu0 %v2049, 32
        %v4339 = vpop.permute.xlu0 %4338
        %4340 = vrot.lane.b32.xlu0 %v2050, 32
        %v4341 = vpop.permute.xlu0 %4340
        %4342 = vrot.lane.b32.xlu0 %v2051, 32
        %v4343 = vpop.permute.xlu0 %4342
        %4344 = vrot.lane.b32.xlu0 %v2052, 32
        %v4345 = vpop.permute.xlu0 %4344
        %4346 = vrot.lane.b32.xlu0 %v2053, 32
        %v4347 = vpop.permute.xlu0 %4346
        %4348 = vrot.lane.b32.xlu0 %v2054, 32
        %v4349 = vpop.permute.xlu0 %4348
        %4350 = vrot.lane.b32.xlu0 %v2055, 32
        %v4351 = vpop.permute.xlu0 %4350
        %4352 = vrot.lane.b32.xlu0 %v2056, 32
        %v4353 = vpop.permute.xlu0 %4352
        %4354 = vrot.lane.b32.xlu0 %v2057, 32
        %v4355 = vpop.permute.xlu0 %4354
        %4356 = vrot.lane.b32.xlu0 %v2058, 32
        %v4357 = vpop.permute.xlu0 %4356
        %4358 = vrot.lane.b32.xlu0 %v2059, 32
        %v4359 = vpop.permute.xlu0 %4358
        %4360 = vrot.lane.b32.xlu0 %v2060, 32
        %v4361 = vpop.permute.xlu0 %4360
        %4362 = vrot.lane.b32.xlu0 %v2061, 32
        %v4363 = vpop.permute.xlu0 %4362
        %4364 = vrot.lane.b32.xlu0 %v2062, 32
        %v4365 = vpop.permute.xlu0 %4364
        %4366 = vrot.lane.b32.xlu0 %v2063, 32
        %v4367 = vpop.permute.xlu0 %4366
        %4368 = vrot.lane.b32.xlu0 %v2064, 32
        %v4369 = vpop.permute.xlu0 %4368
        %4370 = vrot.lane.b32.xlu0 %v2065, 32
        %v4371 = vpop.permute.xlu0 %4370
        %4372 = vrot.lane.b32.xlu0 %v2066, 32
        %v4373 = vpop.permute.xlu0 %4372
        %4374 = vrot.lane.b32.xlu0 %v2067, 32
        %v4375 = vpop.permute.xlu0 %4374
        %4376 = vrot.lane.b32.xlu0 %v2068, 32
        %v4377 = vpop.permute.xlu0 %4376
        %4378 = vrot.lane.b32.xlu0 %v2069, 32
        %v4379 = vpop.permute.xlu0 %4378
        %4380 = vrot.lane.b32.xlu0 %v2070, 32
        %v4381 = vpop.permute.xlu0 %4380
        %4382 = vrot.lane.b32.xlu0 %v2071, 32
        %v4383 = vpop.permute.xlu0 %4382
        %s4448 = scalar_lea.vmem %s241, 768 [#allocation6]
        %4449 = vst.msk [vmem:[%s4448] sm:$0xf] %vm1559, %v4257
        %4450 = vst.msk [vmem:[%s4448 + $0x4] sm:$0xf] %vm1559, %v4259
        %4451 = vst.msk [vmem:[%s4448 + $0x8] sm:$0xf] %vm1559, %v4261
        %4452 = vst.msk [vmem:[%s4448 + $0xc] sm:$0xf] %vm1559, %v4263
        %4453 = vst.msk [vmem:[%s4448 + $0x10] sm:$0xf] %vm1559, %v4265
        %4454 = vst.msk [vmem:[%s4448 + $0x14] sm:$0xf] %vm1559, %v4267
        %4455 = vst.msk [vmem:[%s4448 + $0x18] sm:$0xf] %vm1559, %v4269
        %4456 = vst.msk [vmem:[%s4448 + $0x1c] sm:$0xf] %vm1559, %v4271
        %4457 = vst.msk [vmem:[%s4448 + $0x20] sm:$0xf] %vm1559, %v4273
        %4458 = vst.msk [vmem:[%s4448 + $0x24] sm:$0xf] %vm1559, %v4275
        %4459 = vst.msk [vmem:[%s4448 + $0x28] sm:$0xf] %vm1559, %v4277
        %4460 = vst.msk [vmem:[%s4448 + $0x2c] sm:$0xf] %vm1559, %v4279
        %4461 = vst.msk [vmem:[%s4448 + $0x30] sm:$0xf] %vm1559, %v4281
        %4462 = vst.msk [vmem:[%s4448 + $0x34] sm:$0xf] %vm1559, %v4283
        %4463 = vst.msk [vmem:[%s4448 + $0x38] sm:$0xf] %vm1559, %v4285
        %4464 = vst.msk [vmem:[%s4448 + $0x3c] sm:$0xf] %vm1559, %v4287
        %4465 = vst.msk [vmem:[%s4448 + $0x40] sm:$0xf] %vm1559, %v4289
        %4466 = vst.msk [vmem:[%s4448 + $0x44] sm:$0xf] %vm1559, %v4291
        %4467 = vst.msk [vmem:[%s4448 + $0x48] sm:$0xf] %vm1559, %v4293
        %4468 = vst.msk [vmem:[%s4448 + $0x4c] sm:$0xf] %vm1559, %v4295
        %4469 = vst.msk [vmem:[%s4448 + $0x50] sm:$0xf] %vm1559, %v4297
        %4470 = vst.msk [vmem:[%s4448 + $0x54] sm:$0xf] %vm1559, %v4299
        %4471 = vst.msk [vmem:[%s4448 + $0x58] sm:$0xf] %vm1559, %v4301
        %4472 = vst.msk [vmem:[%s4448 + $0x5c] sm:$0xf] %vm1559, %v4303
        %4473 = vst.msk [vmem:[%s4448 + $0x60] sm:$0xf] %vm1559, %v4305
        %4474 = vst.msk [vmem:[%s4448 + $0x64] sm:$0xf] %vm1559, %v4307
        %4475 = vst.msk [vmem:[%s4448 + $0x68] sm:$0xf] %vm1559, %v4309
        %4476 = vst.msk [vmem:[%s4448 + $0x6c] sm:$0xf] %vm1559, %v4311
        %4477 = vst.msk [vmem:[%s4448 + $0x70] sm:$0xf] %vm1559, %v4313
        %4478 = vst.msk [vmem:[%s4448 + $0x74] sm:$0xf] %vm1559, %v4315
        %4479 = vst.msk [vmem:[%s4448 + $0x78] sm:$0xf] %vm1559, %v4317
        %4480 = vst.msk [vmem:[%s4448 + $0x7c] sm:$0xf] %vm1559, %v4319
        %4481 = vst.msk [vmem:[%s4448 + $0x80] sm:$0xf] %vm1559, %v4321
        %4482 = vst.msk [vmem:[%s4448 + $0x84] sm:$0xf] %vm1559, %v4323
        %4483 = vst.msk [vmem:[%s4448 + $0x88] sm:$0xf] %vm1559, %v4325
        %4484 = vst.msk [vmem:[%s4448 + $0x8c] sm:$0xf] %vm1559, %v4327
        %4485 = vst.msk [vmem:[%s4448 + $0x90] sm:$0xf] %vm1559, %v4329
        %4486 = vst.msk [vmem:[%s4448 + $0x94] sm:$0xf] %vm1559, %v4331
        %4487 = vst.msk [vmem:[%s4448 + $0x98] sm:$0xf] %vm1559, %v4333
        %4488 = vst.msk [vmem:[%s4448 + $0x9c] sm:$0xf] %vm1559, %v4335
        %4489 = vst.msk [vmem:[%s4448 + $0xa0] sm:$0xf] %vm1559, %v4337
        %4490 = vst.msk [vmem:[%s4448 + $0xa4] sm:$0xf] %vm1559, %v4339
        %4491 = vst.msk [vmem:[%s4448 + $0xa8] sm:$0xf] %vm1559, %v4341
        %4492 = vst.msk [vmem:[%s4448 + $0xac] sm:$0xf] %vm1559, %v4343
        %4493 = vst.msk [vmem:[%s4448 + $0xb0] sm:$0xf] %vm1559, %v4345
        %4494 = vst.msk [vmem:[%s4448 + $0xb4] sm:$0xf] %vm1559, %v4347
        %4495 = vst.msk [vmem:[%s4448 + $0xb8] sm:$0xf] %vm1559, %v4349
        %4496 = vst.msk [vmem:[%s4448 + $0xbc] sm:$0xf] %vm1559, %v4351
        %4497 = vst.msk [vmem:[%s4448 + $0xc0] sm:$0xf] %vm1559, %v4353
        %4498 = vst.msk [vmem:[%s4448 + $0xc4] sm:$0xf] %vm1559, %v4355
        %4499 = vst.msk [vmem:[%s4448 + $0xc8] sm:$0xf] %vm1559, %v4357
        %4500 = vst.msk [vmem:[%s4448 + $0xcc] sm:$0xf] %vm1559, %v4359
        %4501 = vst.msk [vmem:[%s4448 + $0xd0] sm:$0xf] %vm1559, %v4361
        %4502 = vst.msk [vmem:[%s4448 + $0xd4] sm:$0xf] %vm1559, %v4363
        %4503 = vst.msk [vmem:[%s4448 + $0xd8] sm:$0xf] %vm1559, %v4365
        %4504 = vst.msk [vmem:[%s4448 + $0xdc] sm:$0xf] %vm1559, %v4367
        %4505 = vst.msk [vmem:[%s4448 + $0xe0] sm:$0xf] %vm1559, %v4369
        %4506 = vst.msk [vmem:[%s4448 + $0xe4] sm:$0xf] %vm1559, %v4371
        %4507 = vst.msk [vmem:[%s4448 + $0xe8] sm:$0xf] %vm1559, %v4373
        %4508 = vst.msk [vmem:[%s4448 + $0xec] sm:$0xf] %vm1559, %v4375
        %4509 = vst.msk [vmem:[%s4448 + $0xf0] sm:$0xf] %vm1559, %v4377
        %4510 = vst.msk [vmem:[%s4448 + $0xf4] sm:$0xf] %vm1559, %v4379
        %4511 = vst.msk [vmem:[%s4448 + $0xf8] sm:$0xf] %vm1559, %v4381
        %4512 = vst.msk [vmem:[%s4448 + $0xfc] sm:$0xf] %vm1559, %v4383
        %s4513 = sand.u32 %s88, 1
        %s4514 = sand.u32 %s88, 1
        %s4515 = smul.addr %s4514, 1024
        %s4516 = scalar_lea.vmem [#allocation4], %s4515
        %s4517 = sand.u32 %s116, 1
        %s4518 = sand.u32 %s116, 1
        %s4519 = smul.addr %s4518, 1024
        %s4520 = scalar_lea.vmem [#allocation5], %s4519
        %s4521 = sand.u32 %s144, 1
        %s4522 = sand.u32 %s144, 1
        %s4523 = smul.addr %s4522, 1024
        %s4524 = scalar_lea.vmem [#allocation6], %s4523
        // Predicated region
        $region33: #{tpu_custom_call.1} parent=27 // pred_check
          %p4525 = pneg %p98
        $region34: #{tpu_custom_call.1} parent=27 // pred_check_branch
          %4527 = sbr.rel (%p4525) target = $region36
        $region35: #{tpu_custom_call.1} parent=27 // pred_region
          %s4528 = smul.u32 64, %s22
          %s4529 = smul.addr %s21, 512
          %s4530 = sadd.s32 %s4528, %s4529
          %s4531 = smul.addr %s4530, 4
          %s4532 = scalar_lea.vmem %s2, %s4531
          // Predicated region
          $region37: #{tpu_custom_call.1} parent=35 // pred_check
            _
          $region38: #{tpu_custom_call.1} parent=35 // pred_check_branch
            %4534 = sbr.rel (0) target = $region40
          $region39: #{tpu_custom_call.1} parent=35 // pred_region
            // Predicated region
            $region41: #{tpu_custom_call.1} parent=39 // pred_check
              _
            $region42: #{tpu_custom_call.1} parent=39 // pred_check_branch
              %4536 = sbr.rel target = $region44
            $region43: #{tpu_custom_call.1} parent=39 // pred_region
              // Predicated region
              $region56: #{tpu_custom_call.1} parent=43 // pred_check
                _
              $region57: #{tpu_custom_call.1} parent=43 // pred_check_branch
                %5061 = sbr.rel (0) target = $region59
              $region58: #{tpu_custom_call.1} parent=43 // pred_region
                loop: start=0, step=1, limit=1
                $region60: #{tpu_custom_call.1} parent=58 // loop_pre_header
                  _
                $region61: #{tpu_custom_call.1} parent=58 // loop_header
                  %s5063 = sphi 0, %s5067
                  %p5064 = scmp.ge.s32.totalorder %s5063, 1
                  %s5068 = sphi %s4516, %s4516
                  %s5069 = sphi %s4532, %s4532
                $region62: #{tpu_custom_call.1} parent=58 // loop_header_branch
                  %5066 = sbr.rel (%p5064) target = $region66
                $region63: #{tpu_custom_call.1} parent=58 // loop_body
                  _
                $region64: #{tpu_custom_call.1} parent=58 // loop_footer
                  %s5067 = sadd.s32 1, %s5063
                $region65: #{tpu_custom_call.1} parent=58 // loop_footer_branch
                  %5062 = sbr.rel target = $region61
                $region66: #{tpu_custom_call.1} parent=58 // loop_exit
                  _
                loop: start=0, step=1, limit=1
                $region67: #{tpu_custom_call.1} parent=58 // loop_pre_header
                  _
                $region68: #{tpu_custom_call.1} parent=58 // loop_header
                  %s5072 = sphi 0, %s5076
                  %p5073 = scmp.ge.s32.totalorder %s5072, 1
                  %s5077 = sphi %s4516, %s4516
                  %s5078 = sphi %s4532, %s4532
                $region69: #{tpu_custom_call.1} parent=58 // loop_header_branch
                  %5075 = sbr.rel (%p5073) target = $region73
                $region70: #{tpu_custom_call.1} parent=58 // loop_body
                  %v5079 = vld [vmem:[%s5077] sm:$0xf]
                  %5080 = vst [vmem:[%s5078] sm:$0xf] %v5079
                  %v5081 = vld [vmem:[%s5077 + $0x4] sm:$0xf]
                  %5082 = vst [vmem:[%s5078 + $0x4] sm:$0xf] %v5081
                  %v5083 = vld [vmem:[%s5077 + $0x8] sm:$0xf]
                  %5084 = vst [vmem:[%s5078 + $0x8] sm:$0xf] %v5083
                  %v5085 = vld [vmem:[%s5077 + $0xc] sm:$0xf]
                  %5086 = vst [vmem:[%s5078 + $0xc] sm:$0xf] %v5085
                  %v5087 = vld [vmem:[%s5077 + $0x10] sm:$0xf]
                  %5088 = vst [vmem:[%s5078 + $0x10] sm:$0xf] %v5087
                  %v5089 = vld [vmem:[%s5077 + $0x14] sm:$0xf]
                  %5090 = vst [vmem:[%s5078 + $0x14] sm:$0xf] %v5089
                  %v5091 = vld [vmem:[%s5077 + $0x18] sm:$0xf]
                  %5092 = vst [vmem:[%s5078 + $0x18] sm:$0xf] %v5091
                  %v5093 = vld [vmem:[%s5077 + $0x1c] sm:$0xf]
                  %5094 = vst [vmem:[%s5078 + $0x1c] sm:$0xf] %v5093
                  %v5095 = vld [vmem:[%s5077 + $0x20] sm:$0xf]
                  %5096 = vst [vmem:[%s5078 + $0x20] sm:$0xf] %v5095
                  %v5097 = vld [vmem:[%s5077 + $0x24] sm:$0xf]
                  %5098 = vst [vmem:[%s5078 + $0x24] sm:$0xf] %v5097
                  %v5099 = vld [vmem:[%s5077 + $0x28] sm:$0xf]
                  %5100 = vst [vmem:[%s5078 + $0x28] sm:$0xf] %v5099
                  %v5101 = vld [vmem:[%s5077 + $0x2c] sm:$0xf]
                  %5102 = vst [vmem:[%s5078 + $0x2c] sm:$0xf] %v5101
                  %v5103 = vld [vmem:[%s5077 + $0x30] sm:$0xf]
                  %5104 = vst [vmem:[%s5078 + $0x30] sm:$0xf] %v5103
                  %v5105 = vld [vmem:[%s5077 + $0x34] sm:$0xf]
                  %5106 = vst [vmem:[%s5078 + $0x34] sm:$0xf] %v5105
                  %v5107 = vld [vmem:[%s5077 + $0x38] sm:$0xf]
                  %5108 = vst [vmem:[%s5078 + $0x38] sm:$0xf] %v5107
                  %v5109 = vld [vmem:[%s5077 + $0x3c] sm:$0xf]
                  %5110 = vst [vmem:[%s5078 + $0x3c] sm:$0xf] %v5109
                  %v5111 = vld [vmem:[%s5077 + $0x40] sm:$0xf]
                  %5112 = vst [vmem:[%s5078 + $0x40] sm:$0xf] %v5111
                  %v5113 = vld [vmem:[%s5077 + $0x44] sm:$0xf]
                  %5114 = vst [vmem:[%s5078 + $0x44] sm:$0xf] %v5113
                  %v5115 = vld [vmem:[%s5077 + $0x48] sm:$0xf]
                  %5116 = vst [vmem:[%s5078 + $0x48] sm:$0xf] %v5115
                  %v5117 = vld [vmem:[%s5077 + $0x4c] sm:$0xf]
                  %5118 = vst [vmem:[%s5078 + $0x4c] sm:$0xf] %v5117
                  %v5119 = vld [vmem:[%s5077 + $0x50] sm:$0xf]
                  %5120 = vst [vmem:[%s5078 + $0x50] sm:$0xf] %v5119
                  %v5121 = vld [vmem:[%s5077 + $0x54] sm:$0xf]
                  %5122 = vst [vmem:[%s5078 + $0x54] sm:$0xf] %v5121
                  %v5123 = vld [vmem:[%s5077 + $0x58] sm:$0xf]
                  %5124 = vst [vmem:[%s5078 + $0x58] sm:$0xf] %v5123
                  %v5125 = vld [vmem:[%s5077 + $0x5c] sm:$0xf]
                  %5126 = vst [vmem:[%s5078 + $0x5c] sm:$0xf] %v5125
                  %v5127 = vld [vmem:[%s5077 + $0x60] sm:$0xf]
                  %5128 = vst [vmem:[%s5078 + $0x60] sm:$0xf] %v5127
                  %v5129 = vld [vmem:[%s5077 + $0x64] sm:$0xf]
                  %5130 = vst [vmem:[%s5078 + $0x64] sm:$0xf] %v5129
                  %v5131 = vld [vmem:[%s5077 + $0x68] sm:$0xf]
                  %5132 = vst [vmem:[%s5078 + $0x68] sm:$0xf] %v5131
                  %v5133 = vld [vmem:[%s5077 + $0x6c] sm:$0xf]
                  %5134 = vst [vmem:[%s5078 + $0x6c] sm:$0xf] %v5133
                  %v5135 = vld [vmem:[%s5077 + $0x70] sm:$0xf]
                  %5136 = vst [vmem:[%s5078 + $0x70] sm:$0xf] %v5135
                  %v5137 = vld [vmem:[%s5077 + $0x74] sm:$0xf]
                  %5138 = vst [vmem:[%s5078 + $0x74] sm:$0xf] %v5137
                  %v5139 = vld [vmem:[%s5077 + $0x78] sm:$0xf]
                  %5140 = vst [vmem:[%s5078 + $0x78] sm:$0xf] %v5139
                  %v5141 = vld [vmem:[%s5077 + $0x7c] sm:$0xf]
                  %5142 = vst [vmem:[%s5078 + $0x7c] sm:$0xf] %v5141
                  %v5143 = vld [vmem:[%s5077 + $0x80] sm:$0xf]
                  %5144 = vst [vmem:[%s5078 + $0x80] sm:$0xf] %v5143
                  %v5145 = vld [vmem:[%s5077 + $0x84] sm:$0xf]
                  %5146 = vst [vmem:[%s5078 + $0x84] sm:$0xf] %v5145
                  %v5147 = vld [vmem:[%s5077 + $0x88] sm:$0xf]
                  %5148 = vst [vmem:[%s5078 + $0x88] sm:$0xf] %v5147
                  %v5149 = vld [vmem:[%s5077 + $0x8c] sm:$0xf]
                  %5150 = vst [vmem:[%s5078 + $0x8c] sm:$0xf] %v5149
                  %v5151 = vld [vmem:[%s5077 + $0x90] sm:$0xf]
                  %5152 = vst [vmem:[%s5078 + $0x90] sm:$0xf] %v5151
                  %v5153 = vld [vmem:[%s5077 + $0x94] sm:$0xf]
                  %5154 = vst [vmem:[%s5078 + $0x94] sm:$0xf] %v5153
                  %v5155 = vld [vmem:[%s5077 + $0x98] sm:$0xf]
                  %5156 = vst [vmem:[%s5078 + $0x98] sm:$0xf] %v5155
                  %v5157 = vld [vmem:[%s5077 + $0x9c] sm:$0xf]
                  %5158 = vst [vmem:[%s5078 + $0x9c] sm:$0xf] %v5157
                  %v5159 = vld [vmem:[%s5077 + $0xa0] sm:$0xf]
                  %5160 = vst [vmem:[%s5078 + $0xa0] sm:$0xf] %v5159
                  %v5161 = vld [vmem:[%s5077 + $0xa4] sm:$0xf]
                  %5162 = vst [vmem:[%s5078 + $0xa4] sm:$0xf] %v5161
                  %v5163 = vld [vmem:[%s5077 + $0xa8] sm:$0xf]
                  %5164 = vst [vmem:[%s5078 + $0xa8] sm:$0xf] %v5163
                  %v5165 = vld [vmem:[%s5077 + $0xac] sm:$0xf]
                  %5166 = vst [vmem:[%s5078 + $0xac] sm:$0xf] %v5165
                  %v5167 = vld [vmem:[%s5077 + $0xb0] sm:$0xf]
                  %5168 = vst [vmem:[%s5078 + $0xb0] sm:$0xf] %v5167
                  %v5169 = vld [vmem:[%s5077 + $0xb4] sm:$0xf]
                  %5170 = vst [vmem:[%s5078 + $0xb4] sm:$0xf] %v5169
                  %v5171 = vld [vmem:[%s5077 + $0xb8] sm:$0xf]
                  %5172 = vst [vmem:[%s5078 + $0xb8] sm:$0xf] %v5171
                  %v5173 = vld [vmem:[%s5077 + $0xbc] sm:$0xf]
                  %5174 = vst [vmem:[%s5078 + $0xbc] sm:$0xf] %v5173
                  %v5175 = vld [vmem:[%s5077 + $0xc0] sm:$0xf]
                  %5176 = vst [vmem:[%s5078 + $0xc0] sm:$0xf] %v5175
                  %v5177 = vld [vmem:[%s5077 + $0xc4] sm:$0xf]
                  %5178 = vst [vmem:[%s5078 + $0xc4] sm:$0xf] %v5177
                  %v5179 = vld [vmem:[%s5077 + $0xc8] sm:$0xf]
                  %5180 = vst [vmem:[%s5078 + $0xc8] sm:$0xf] %v5179
                  %v5181 = vld [vmem:[%s5077 + $0xcc] sm:$0xf]
                  %5182 = vst [vmem:[%s5078 + $0xcc] sm:$0xf] %v5181
                  %v5183 = vld [vmem:[%s5077 + $0xd0] sm:$0xf]
                  %5184 = vst [vmem:[%s5078 + $0xd0] sm:$0xf] %v5183
                  %v5185 = vld [vmem:[%s5077 + $0xd4] sm:$0xf]
                  %5186 = vst [vmem:[%s5078 + $0xd4] sm:$0xf] %v5185
                  %v5187 = vld [vmem:[%s5077 + $0xd8] sm:$0xf]
                  %5188 = vst [vmem:[%s5078 + $0xd8] sm:$0xf] %v5187
                  %v5189 = vld [vmem:[%s5077 + $0xdc] sm:$0xf]
                  %5190 = vst [vmem:[%s5078 + $0xdc] sm:$0xf] %v5189
                  %v5191 = vld [vmem:[%s5077 + $0xe0] sm:$0xf]
                  %5192 = vst [vmem:[%s5078 + $0xe0] sm:$0xf] %v5191
                  %v5193 = vld [vmem:[%s5077 + $0xe4] sm:$0xf]
                  %5194 = vst [vmem:[%s5078 + $0xe4] sm:$0xf] %v5193
                  %v5195 = vld [vmem:[%s5077 + $0xe8] sm:$0xf]
                  %5196 = vst [vmem:[%s5078 + $0xe8] sm:$0xf] %v5195
                  %v5197 = vld [vmem:[%s5077 + $0xec] sm:$0xf]
                  %5198 = vst [vmem:[%s5078 + $0xec] sm:$0xf] %v5197
                  %v5199 = vld [vmem:[%s5077 + $0xf0] sm:$0xf]
                  %5200 = vst [vmem:[%s5078 + $0xf0] sm:$0xf] %v5199
                  %v5201 = vld [vmem:[%s5077 + $0xf4] sm:$0xf]
                  %5202 = vst [vmem:[%s5078 + $0xf4] sm:$0xf] %v5201
                  %v5203 = vld [vmem:[%s5077 + $0xf8] sm:$0xf]
                  %5204 = vst [vmem:[%s5078 + $0xf8] sm:$0xf] %v5203
                  %v5205 = vld [vmem:[%s5077 + $0xfc] sm:$0xf]
                  %5206 = vst [vmem:[%s5078 + $0xfc] sm:$0xf] %v5205
                  %v5207 = vld [vmem:[%s5077 + $0x100] sm:$0xf]
                  %5208 = vst [vmem:[%s5078 + $0x200] sm:$0xf] %v5207
                  %v5209 = vld [vmem:[%s5077 + $0x104] sm:$0xf]
                  %5210 = vst [vmem:[%s5078 + $0x204] sm:$0xf] %v5209
                  %v5211 = vld [vmem:[%s5077 + $0x108] sm:$0xf]
                  %5212 = vst [vmem:[%s5078 + $0x208] sm:$0xf] %v5211
                  %v5213 = vld [vmem:[%s5077 + $0x10c] sm:$0xf]
                  %5214 = vst [vmem:[%s5078 + $0x20c] sm:$0xf] %v5213
                  %v5215 = vld [vmem:[%s5077 + $0x110] sm:$0xf]
                  %5216 = vst [vmem:[%s5078 + $0x210] sm:$0xf] %v5215
                  %v5217 = vld [vmem:[%s5077 + $0x114] sm:$0xf]
                  %5218 = vst [vmem:[%s5078 + $0x214] sm:$0xf] %v5217
                  %v5219 = vld [vmem:[%s5077 + $0x118] sm:$0xf]
                  %5220 = vst [vmem:[%s5078 + $0x218] sm:$0xf] %v5219
                  %v5221 = vld [vmem:[%s5077 + $0x11c] sm:$0xf]
                  %5222 = vst [vmem:[%s5078 + $0x21c] sm:$0xf] %v5221
                  %v5223 = vld [vmem:[%s5077 + $0x120] sm:$0xf]
                  %5224 = vst [vmem:[%s5078 + $0x220] sm:$0xf] %v5223
                  %v5225 = vld [vmem:[%s5077 + $0x124] sm:$0xf]
                  %5226 = vst [vmem:[%s5078 + $0x224] sm:$0xf] %v5225
                  %v5227 = vld [vmem:[%s5077 + $0x128] sm:$0xf]
                  %5228 = vst [vmem:[%s5078 + $0x228] sm:$0xf] %v5227
                  %v5229 = vld [vmem:[%s5077 + $0x12c] sm:$0xf]
                  %5230 = vst [vmem:[%s5078 + $0x22c] sm:$0xf] %v5229
                  %v5231 = vld [vmem:[%s5077 + $0x130] sm:$0xf]
                  %5232 = vst [vmem:[%s5078 + $0x230] sm:$0xf] %v5231
                  %v5233 = vld [vmem:[%s5077 + $0x134] sm:$0xf]
                  %5234 = vst [vmem:[%s5078 + $0x234] sm:$0xf] %v5233
                  %v5235 = vld [vmem:[%s5077 + $0x138] sm:$0xf]
                  %5236 = vst [vmem:[%s5078 + $0x238] sm:$0xf] %v5235
                  %v5237 = vld [vmem:[%s5077 + $0x13c] sm:$0xf]
                  %5238 = vst [vmem:[%s5078 + $0x23c] sm:$0xf] %v5237
                  %v5239 = vld [vmem:[%s5077 + $0x140] sm:$0xf]
                  %5240 = vst [vmem:[%s5078 + $0x240] sm:$0xf] %v5239
                  %v5241 = vld [vmem:[%s5077 + $0x144] sm:$0xf]
                  %5242 = vst [vmem:[%s5078 + $0x244] sm:$0xf] %v5241
                  %v5243 = vld [vmem:[%s5077 + $0x148] sm:$0xf]
                  %5244 = vst [vmem:[%s5078 + $0x248] sm:$0xf] %v5243
                  %v5245 = vld [vmem:[%s5077 + $0x14c] sm:$0xf]
                  %5246 = vst [vmem:[%s5078 + $0x24c] sm:$0xf] %v5245
                  %v5247 = vld [vmem:[%s5077 + $0x150] sm:$0xf]
                  %5248 = vst [vmem:[%s5078 + $0x250] sm:$0xf] %v5247
                  %v5249 = vld [vmem:[%s5077 + $0x154] sm:$0xf]
                  %5250 = vst [vmem:[%s5078 + $0x254] sm:$0xf] %v5249
                  %v5251 = vld [vmem:[%s5077 + $0x158] sm:$0xf]
                  %5252 = vst [vmem:[%s5078 + $0x258] sm:$0xf] %v5251
                  %v5253 = vld [vmem:[%s5077 + $0x15c] sm:$0xf]
                  %5254 = vst [vmem:[%s5078 + $0x25c] sm:$0xf] %v5253
                  %v5255 = vld [vmem:[%s5077 + $0x160] sm:$0xf]
                  %5256 = vst [vmem:[%s5078 + $0x260] sm:$0xf] %v5255
                  %v5257 = vld [vmem:[%s5077 + $0x164] sm:$0xf]
                  %5258 = vst [vmem:[%s5078 + $0x264] sm:$0xf] %v5257
                  %v5259 = vld [vmem:[%s5077 + $0x168] sm:$0xf]
                  %5260 = vst [vmem:[%s5078 + $0x268] sm:$0xf] %v5259
                  %v5261 = vld [vmem:[%s5077 + $0x16c] sm:$0xf]
                  %5262 = vst [vmem:[%s5078 + $0x26c] sm:$0xf] %v5261
                  %v5263 = vld [vmem:[%s5077 + $0x170] sm:$0xf]
                  %5264 = vst [vmem:[%s5078 + $0x270] sm:$0xf] %v5263
                  %v5265 = vld [vmem:[%s5077 + $0x174] sm:$0xf]
                  %5266 = vst [vmem:[%s5078 + $0x274] sm:$0xf] %v5265
                  %v5267 = vld [vmem:[%s5077 + $0x178] sm:$0xf]
                  %5268 = vst [vmem:[%s5078 + $0x278] sm:$0xf] %v5267
                  %v5269 = vld [vmem:[%s5077 + $0x17c] sm:$0xf]
                  %5270 = vst [vmem:[%s5078 + $0x27c] sm:$0xf] %v5269
                  %v5271 = vld [vmem:[%s5077 + $0x180] sm:$0xf]
                  %5272 = vst [vmem:[%s5078 + $0x280] sm:$0xf] %v5271
                  %v5273 = vld [vmem:[%s5077 + $0x184] sm:$0xf]
                  %5274 = vst [vmem:[%s5078 + $0x284] sm:$0xf] %v5273
                  %v5275 = vld [vmem:[%s5077 + $0x188] sm:$0xf]
                  %5276 = vst [vmem:[%s5078 + $0x288] sm:$0xf] %v5275
                  %v5277 = vld [vmem:[%s5077 + $0x18c] sm:$0xf]
                  %5278 = vst [vmem:[%s5078 + $0x28c] sm:$0xf] %v5277
                  %v5279 = vld [vmem:[%s5077 + $0x190] sm:$0xf]
                  %5280 = vst [vmem:[%s5078 + $0x290] sm:$0xf] %v5279
                  %v5281 = vld [vmem:[%s5077 + $0x194] sm:$0xf]
                  %5282 = vst [vmem:[%s5078 + $0x294] sm:$0xf] %v5281
                  %v5283 = vld [vmem:[%s5077 + $0x198] sm:$0xf]
                  %5284 = vst [vmem:[%s5078 + $0x298] sm:$0xf] %v5283
                  %v5285 = vld [vmem:[%s5077 + $0x19c] sm:$0xf]
                  %5286 = vst [vmem:[%s5078 + $0x29c] sm:$0xf] %v5285
                  %v5287 = vld [vmem:[%s5077 + $0x1a0] sm:$0xf]
                  %5288 = vst [vmem:[%s5078 + $0x2a0] sm:$0xf] %v5287
                  %v5289 = vld [vmem:[%s5077 + $0x1a4] sm:$0xf]
                  %5290 = vst [vmem:[%s5078 + $0x2a4] sm:$0xf] %v5289
                  %v5291 = vld [vmem:[%s5077 + $0x1a8] sm:$0xf]
                  %5292 = vst [vmem:[%s5078 + $0x2a8] sm:$0xf] %v5291
                  %v5293 = vld [vmem:[%s5077 + $0x1ac] sm:$0xf]
                  %5294 = vst [vmem:[%s5078 + $0x2ac] sm:$0xf] %v5293
                  %v5295 = vld [vmem:[%s5077 + $0x1b0] sm:$0xf]
                  %5296 = vst [vmem:[%s5078 + $0x2b0] sm:$0xf] %v5295
                  %v5297 = vld [vmem:[%s5077 + $0x1b4] sm:$0xf]
                  %5298 = vst [vmem:[%s5078 + $0x2b4] sm:$0xf] %v5297
                  %v5299 = vld [vmem:[%s5077 + $0x1b8] sm:$0xf]
                  %5300 = vst [vmem:[%s5078 + $0x2b8] sm:$0xf] %v5299
                  %v5301 = vld [vmem:[%s5077 + $0x1bc] sm:$0xf]
                  %5302 = vst [vmem:[%s5078 + $0x2bc] sm:$0xf] %v5301
                  %v5303 = vld [vmem:[%s5077 + $0x1c0] sm:$0xf]
                  %5304 = vst [vmem:[%s5078 + $0x2c0] sm:$0xf] %v5303
                  %v5305 = vld [vmem:[%s5077 + $0x1c4] sm:$0xf]
                  %5306 = vst [vmem:[%s5078 + $0x2c4] sm:$0xf] %v5305
                  %v5307 = vld [vmem:[%s5077 + $0x1c8] sm:$0xf]
                  %5308 = vst [vmem:[%s5078 + $0x2c8] sm:$0xf] %v5307
                  %v5309 = vld [vmem:[%s5077 + $0x1cc] sm:$0xf]
                  %5310 = vst [vmem:[%s5078 + $0x2cc] sm:$0xf] %v5309
                  %v5311 = vld [vmem:[%s5077 + $0x1d0] sm:$0xf]
                  %5312 = vst [vmem:[%s5078 + $0x2d0] sm:$0xf] %v5311
                  %v5313 = vld [vmem:[%s5077 + $0x1d4] sm:$0xf]
                  %5314 = vst [vmem:[%s5078 + $0x2d4] sm:$0xf] %v5313
                  %v5315 = vld [vmem:[%s5077 + $0x1d8] sm:$0xf]
                  %5316 = vst [vmem:[%s5078 + $0x2d8] sm:$0xf] %v5315
                  %v5317 = vld [vmem:[%s5077 + $0x1dc] sm:$0xf]
                  %5318 = vst [vmem:[%s5078 + $0x2dc] sm:$0xf] %v5317
                  %v5319 = vld [vmem:[%s5077 + $0x1e0] sm:$0xf]
                  %5320 = vst [vmem:[%s5078 + $0x2e0] sm:$0xf] %v5319
                  %v5321 = vld [vmem:[%s5077 + $0x1e4] sm:$0xf]
                  %5322 = vst [vmem:[%s5078 + $0x2e4] sm:$0xf] %v5321
                  %v5323 = vld [vmem:[%s5077 + $0x1e8] sm:$0xf]
                  %5324 = vst [vmem:[%s5078 + $0x2e8] sm:$0xf] %v5323
                  %v5325 = vld [vmem:[%s5077 + $0x1ec] sm:$0xf]
                  %5326 = vst [vmem:[%s5078 + $0x2ec] sm:$0xf] %v5325
                  %v5327 = vld [vmem:[%s5077 + $0x1f0] sm:$0xf]
                  %5328 = vst [vmem:[%s5078 + $0x2f0] sm:$0xf] %v5327
                  %v5329 = vld [vmem:[%s5077 + $0x1f4] sm:$0xf]
                  %5330 = vst [vmem:[%s5078 + $0x2f4] sm:$0xf] %v5329
                  %v5331 = vld [vmem:[%s5077 + $0x1f8] sm:$0xf]
                  %5332 = vst [vmem:[%s5078 + $0x2f8] sm:$0xf] %v5331
                  %v5333 = vld [vmem:[%s5077 + $0x1fc] sm:$0xf]
                  %5334 = vst [vmem:[%s5078 + $0x2fc] sm:$0xf] %v5333
                  %v5335 = vld [vmem:[%s5077 + $0x200] sm:$0xf]
                  %5336 = vst [vmem:[%s5078 + $0x400] sm:$0xf] %v5335
                  %v5337 = vld [vmem:[%s5077 + $0x204] sm:$0xf]
                  %5338 = vst [vmem:[%s5078 + $0x404] sm:$0xf] %v5337
                  %v5339 = vld [vmem:[%s5077 + $0x208] sm:$0xf]
                  %5340 = vst [vmem:[%s5078 + $0x408] sm:$0xf] %v5339
                  %v5341 = vld [vmem:[%s5077 + $0x20c] sm:$0xf]
                  %5342 = vst [vmem:[%s5078 + $0x40c] sm:$0xf] %v5341
                  %v5343 = vld [vmem:[%s5077 + $0x210] sm:$0xf]
                  %5344 = vst [vmem:[%s5078 + $0x410] sm:$0xf] %v5343
                  %v5345 = vld [vmem:[%s5077 + $0x214] sm:$0xf]
                  %5346 = vst [vmem:[%s5078 + $0x414] sm:$0xf] %v5345
                  %v5347 = vld [vmem:[%s5077 + $0x218] sm:$0xf]
                  %5348 = vst [vmem:[%s5078 + $0x418] sm:$0xf] %v5347
                  %v5349 = vld [vmem:[%s5077 + $0x21c] sm:$0xf]
                  %5350 = vst [vmem:[%s5078 + $0x41c] sm:$0xf] %v5349
                  %v5351 = vld [vmem:[%s5077 + $0x220] sm:$0xf]
                  %5352 = vst [vmem:[%s5078 + $0x420] sm:$0xf] %v5351
                  %v5353 = vld [vmem:[%s5077 + $0x224] sm:$0xf]
                  %5354 = vst [vmem:[%s5078 + $0x424] sm:$0xf] %v5353
                  %v5355 = vld [vmem:[%s5077 + $0x228] sm:$0xf]
                  %5356 = vst [vmem:[%s5078 + $0x428] sm:$0xf] %v5355
                  %v5357 = vld [vmem:[%s5077 + $0x22c] sm:$0xf]
                  %5358 = vst [vmem:[%s5078 + $0x42c] sm:$0xf] %v5357
                  %v5359 = vld [vmem:[%s5077 + $0x230] sm:$0xf]
                  %5360 = vst [vmem:[%s5078 + $0x430] sm:$0xf] %v5359
                  %v5361 = vld [vmem:[%s5077 + $0x234] sm:$0xf]
                  %5362 = vst [vmem:[%s5078 + $0x434] sm:$0xf] %v5361
                  %v5363 = vld [vmem:[%s5077 + $0x238] sm:$0xf]
                  %5364 = vst [vmem:[%s5078 + $0x438] sm:$0xf] %v5363
                  %v5365 = vld [vmem:[%s5077 + $0x23c] sm:$0xf]
                  %5366 = vst [vmem:[%s5078 + $0x43c] sm:$0xf] %v5365
                  %v5367 = vld [vmem:[%s5077 + $0x240] sm:$0xf]
                  %5368 = vst [vmem:[%s5078 + $0x440] sm:$0xf] %v5367
                  %v5369 = vld [vmem:[%s5077 + $0x244] sm:$0xf]
                  %5370 = vst [vmem:[%s5078 + $0x444] sm:$0xf] %v5369
                  %v5371 = vld [vmem:[%s5077 + $0x248] sm:$0xf]
                  %5372 = vst [vmem:[%s5078 + $0x448] sm:$0xf] %v5371
                  %v5373 = vld [vmem:[%s5077 + $0x24c] sm:$0xf]
                  %5374 = vst [vmem:[%s5078 + $0x44c] sm:$0xf] %v5373
                  %v5375 = vld [vmem:[%s5077 + $0x250] sm:$0xf]
                  %5376 = vst [vmem:[%s5078 + $0x450] sm:$0xf] %v5375
                  %v5377 = vld [vmem:[%s5077 + $0x254] sm:$0xf]
                  %5378 = vst [vmem:[%s5078 + $0x454] sm:$0xf] %v5377
                  %v5379 = vld [vmem:[%s5077 + $0x258] sm:$0xf]
                  %5380 = vst [vmem:[%s5078 + $0x458] sm:$0xf] %v5379
                  %v5381 = vld [vmem:[%s5077 + $0x25c] sm:$0xf]
                  %5382 = vst [vmem:[%s5078 + $0x45c] sm:$0xf] %v5381
                  %v5383 = vld [vmem:[%s5077 + $0x260] sm:$0xf]
                  %5384 = vst [vmem:[%s5078 + $0x460] sm:$0xf] %v5383
                  %v5385 = vld [vmem:[%s5077 + $0x264] sm:$0xf]
                  %5386 = vst [vmem:[%s5078 + $0x464] sm:$0xf] %v5385
                  %v5387 = vld [vmem:[%s5077 + $0x268] sm:$0xf]
                  %5388 = vst [vmem:[%s5078 + $0x468] sm:$0xf] %v5387
                  %v5389 = vld [vmem:[%s5077 + $0x26c] sm:$0xf]
                  %5390 = vst [vmem:[%s5078 + $0x46c] sm:$0xf] %v5389
                  %v5391 = vld [vmem:[%s5077 + $0x270] sm:$0xf]
                  %5392 = vst [vmem:[%s5078 + $0x470] sm:$0xf] %v5391
                  %v5393 = vld [vmem:[%s5077 + $0x274] sm:$0xf]
                  %5394 = vst [vmem:[%s5078 + $0x474] sm:$0xf] %v5393
                  %v5395 = vld [vmem:[%s5077 + $0x278] sm:$0xf]
                  %5396 = vst [vmem:[%s5078 + $0x478] sm:$0xf] %v5395
                  %v5397 = vld [vmem:[%s5077 + $0x27c] sm:$0xf]
                  %5398 = vst [vmem:[%s5078 + $0x47c] sm:$0xf] %v5397
                  %v5399 = vld [vmem:[%s5077 + $0x280] sm:$0xf]
                  %5400 = vst [vmem:[%s5078 + $0x480] sm:$0xf] %v5399
                  %v5401 = vld [vmem:[%s5077 + $0x284] sm:$0xf]
                  %5402 = vst [vmem:[%s5078 + $0x484] sm:$0xf] %v5401
                  %v5403 = vld [vmem:[%s5077 + $0x288] sm:$0xf]
                  %5404 = vst [vmem:[%s5078 + $0x488] sm:$0xf] %v5403
                  %v5405 = vld [vmem:[%s5077 + $0x28c] sm:$0xf]
                  %5406 = vst [vmem:[%s5078 + $0x48c] sm:$0xf] %v5405
                  %v5407 = vld [vmem:[%s5077 + $0x290] sm:$0xf]
                  %5408 = vst [vmem:[%s5078 + $0x490] sm:$0xf] %v5407
                  %v5409 = vld [vmem:[%s5077 + $0x294] sm:$0xf]
                  %5410 = vst [vmem:[%s5078 + $0x494] sm:$0xf] %v5409
                  %v5411 = vld [vmem:[%s5077 + $0x298] sm:$0xf]
                  %5412 = vst [vmem:[%s5078 + $0x498] sm:$0xf] %v5411
                  %v5413 = vld [vmem:[%s5077 + $0x29c] sm:$0xf]
                  %5414 = vst [vmem:[%s5078 + $0x49c] sm:$0xf] %v5413
                  %v5415 = vld [vmem:[%s5077 + $0x2a0] sm:$0xf]
                  %5416 = vst [vmem:[%s5078 + $0x4a0] sm:$0xf] %v5415
                  %v5417 = vld [vmem:[%s5077 + $0x2a4] sm:$0xf]
                  %5418 = vst [vmem:[%s5078 + $0x4a4] sm:$0xf] %v5417
                  %v5419 = vld [vmem:[%s5077 + $0x2a8] sm:$0xf]
                  %5420 = vst [vmem:[%s5078 + $0x4a8] sm:$0xf] %v5419
                  %v5421 = vld [vmem:[%s5077 + $0x2ac] sm:$0xf]
                  %5422 = vst [vmem:[%s5078 + $0x4ac] sm:$0xf] %v5421
                  %v5423 = vld [vmem:[%s5077 + $0x2b0] sm:$0xf]
                  %5424 = vst [vmem:[%s5078 + $0x4b0] sm:$0xf] %v5423
                  %v5425 = vld [vmem:[%s5077 + $0x2b4] sm:$0xf]
                  %5426 = vst [vmem:[%s5078 + $0x4b4] sm:$0xf] %v5425
                  %v5427 = vld [vmem:[%s5077 + $0x2b8] sm:$0xf]
                  %5428 = vst [vmem:[%s5078 + $0x4b8] sm:$0xf] %v5427
                  %v5429 = vld [vmem:[%s5077 + $0x2bc] sm:$0xf]
                  %5430 = vst [vmem:[%s5078 + $0x4bc] sm:$0xf] %v5429
                  %v5431 = vld [vmem:[%s5077 + $0x2c0] sm:$0xf]
                  %5432 = vst [vmem:[%s5078 + $0x4c0] sm:$0xf] %v5431
                  %v5433 = vld [vmem:[%s5077 + $0x2c4] sm:$0xf]
                  %5434 = vst [vmem:[%s5078 + $0x4c4] sm:$0xf] %v5433
                  %v5435 = vld [vmem:[%s5077 + $0x2c8] sm:$0xf]
                  %5436 = vst [vmem:[%s5078 + $0x4c8] sm:$0xf] %v5435
                  %v5437 = vld [vmem:[%s5077 + $0x2cc] sm:$0xf]
                  %5438 = vst [vmem:[%s5078 + $0x4cc] sm:$0xf] %v5437
                  %v5439 = vld [vmem:[%s5077 + $0x2d0] sm:$0xf]
                  %5440 = vst [vmem:[%s5078 + $0x4d0] sm:$0xf] %v5439
                  %v5441 = vld [vmem:[%s5077 + $0x2d4] sm:$0xf]
                  %5442 = vst [vmem:[%s5078 + $0x4d4] sm:$0xf] %v5441
                  %v5443 = vld [vmem:[%s5077 + $0x2d8] sm:$0xf]
                  %5444 = vst [vmem:[%s5078 + $0x4d8] sm:$0xf] %v5443
                  %v5445 = vld [vmem:[%s5077 + $0x2dc] sm:$0xf]
                  %5446 = vst [vmem:[%s5078 + $0x4dc] sm:$0xf] %v5445
                  %v5447 = vld [vmem:[%s5077 + $0x2e0] sm:$0xf]
                  %5448 = vst [vmem:[%s5078 + $0x4e0] sm:$0xf] %v5447
                  %v5449 = vld [vmem:[%s5077 + $0x2e4] sm:$0xf]
                  %5450 = vst [vmem:[%s5078 + $0x4e4] sm:$0xf] %v5449
                  %v5451 = vld [vmem:[%s5077 + $0x2e8] sm:$0xf]
                  %5452 = vst [vmem:[%s5078 + $0x4e8] sm:$0xf] %v5451
                  %v5453 = vld [vmem:[%s5077 + $0x2ec] sm:$0xf]
                  %5454 = vst [vmem:[%s5078 + $0x4ec] sm:$0xf] %v5453
                  %v5455 = vld [vmem:[%s5077 + $0x2f0] sm:$0xf]
                  %5456 = vst [vmem:[%s5078 + $0x4f0] sm:$0xf] %v5455
                  %v5457 = vld [vmem:[%s5077 + $0x2f4] sm:$0xf]
                  %5458 = vst [vmem:[%s5078 + $0x4f4] sm:$0xf] %v5457
                  %v5459 = vld [vmem:[%s5077 + $0x2f8] sm:$0xf]
                  %5460 = vst [vmem:[%s5078 + $0x4f8] sm:$0xf] %v5459
                  %v5461 = vld [vmem:[%s5077 + $0x2fc] sm:$0xf]
                  %5462 = vst [vmem:[%s5078 + $0x4fc] sm:$0xf] %v5461
                  %v5463 = vld [vmem:[%s5077 + $0x300] sm:$0xf]
                  %5464 = vst [vmem:[%s5078 + $0x600] sm:$0xf] %v5463
                  %v5465 = vld [vmem:[%s5077 + $0x304] sm:$0xf]
                  %5466 = vst [vmem:[%s5078 + $0x604] sm:$0xf] %v5465
                  %v5467 = vld [vmem:[%s5077 + $0x308] sm:$0xf]
                  %5468 = vst [vmem:[%s5078 + $0x608] sm:$0xf] %v5467
                  %v5469 = vld [vmem:[%s5077 + $0x30c] sm:$0xf]
                  %5470 = vst [vmem:[%s5078 + $0x60c] sm:$0xf] %v5469
                  %v5471 = vld [vmem:[%s5077 + $0x310] sm:$0xf]
                  %5472 = vst [vmem:[%s5078 + $0x610] sm:$0xf] %v5471
                  %v5473 = vld [vmem:[%s5077 + $0x314] sm:$0xf]
                  %5474 = vst [vmem:[%s5078 + $0x614] sm:$0xf] %v5473
                  %v5475 = vld [vmem:[%s5077 + $0x318] sm:$0xf]
                  %5476 = vst [vmem:[%s5078 + $0x618] sm:$0xf] %v5475
                  %v5477 = vld [vmem:[%s5077 + $0x31c] sm:$0xf]
                  %5478 = vst [vmem:[%s5078 + $0x61c] sm:$0xf] %v5477
                  %v5479 = vld [vmem:[%s5077 + $0x320] sm:$0xf]
                  %5480 = vst [vmem:[%s5078 + $0x620] sm:$0xf] %v5479
                  %v5481 = vld [vmem:[%s5077 + $0x324] sm:$0xf]
                  %5482 = vst [vmem:[%s5078 + $0x624] sm:$0xf] %v5481
                  %v5483 = vld [vmem:[%s5077 + $0x328] sm:$0xf]
                  %5484 = vst [vmem:[%s5078 + $0x628] sm:$0xf] %v5483
                  %v5485 = vld [vmem:[%s5077 + $0x32c] sm:$0xf]
                  %5486 = vst [vmem:[%s5078 + $0x62c] sm:$0xf] %v5485
                  %v5487 = vld [vmem:[%s5077 + $0x330] sm:$0xf]
                  %5488 = vst [vmem:[%s5078 + $0x630] sm:$0xf] %v5487
                  %v5489 = vld [vmem:[%s5077 + $0x334] sm:$0xf]
                  %5490 = vst [vmem:[%s5078 + $0x634] sm:$0xf] %v5489
                  %v5491 = vld [vmem:[%s5077 + $0x338] sm:$0xf]
                  %5492 = vst [vmem:[%s5078 + $0x638] sm:$0xf] %v5491
                  %v5493 = vld [vmem:[%s5077 + $0x33c] sm:$0xf]
                  %5494 = vst [vmem:[%s5078 + $0x63c] sm:$0xf] %v5493
                  %v5495 = vld [vmem:[%s5077 + $0x340] sm:$0xf]
                  %5496 = vst [vmem:[%s5078 + $0x640] sm:$0xf] %v5495
                  %v5497 = vld [vmem:[%s5077 + $0x344] sm:$0xf]
                  %5498 = vst [vmem:[%s5078 + $0x644] sm:$0xf] %v5497
                  %v5499 = vld [vmem:[%s5077 + $0x348] sm:$0xf]
                  %5500 = vst [vmem:[%s5078 + $0x648] sm:$0xf] %v5499
                  %v5501 = vld [vmem:[%s5077 + $0x34c] sm:$0xf]
                  %5502 = vst [vmem:[%s5078 + $0x64c] sm:$0xf] %v5501
                  %v5503 = vld [vmem:[%s5077 + $0x350] sm:$0xf]
                  %5504 = vst [vmem:[%s5078 + $0x650] sm:$0xf] %v5503
                  %v5505 = vld [vmem:[%s5077 + $0x354] sm:$0xf]
                  %5506 = vst [vmem:[%s5078 + $0x654] sm:$0xf] %v5505
                  %v5507 = vld [vmem:[%s5077 + $0x358] sm:$0xf]
                  %5508 = vst [vmem:[%s5078 + $0x658] sm:$0xf] %v5507
                  %v5509 = vld [vmem:[%s5077 + $0x35c] sm:$0xf]
                  %5510 = vst [vmem:[%s5078 + $0x65c] sm:$0xf] %v5509
                  %v5511 = vld [vmem:[%s5077 + $0x360] sm:$0xf]
                  %5512 = vst [vmem:[%s5078 + $0x660] sm:$0xf] %v5511
                  %v5513 = vld [vmem:[%s5077 + $0x364] sm:$0xf]
                  %5514 = vst [vmem:[%s5078 + $0x664] sm:$0xf] %v5513
                  %v5515 = vld [vmem:[%s5077 + $0x368] sm:$0xf]
                  %5516 = vst [vmem:[%s5078 + $0x668] sm:$0xf] %v5515
                  %v5517 = vld [vmem:[%s5077 + $0x36c] sm:$0xf]
                  %5518 = vst [vmem:[%s5078 + $0x66c] sm:$0xf] %v5517
                  %v5519 = vld [vmem:[%s5077 + $0x370] sm:$0xf]
                  %5520 = vst [vmem:[%s5078 + $0x670] sm:$0xf] %v5519
                  %v5521 = vld [vmem:[%s5077 + $0x374] sm:$0xf]
                  %5522 = vst [vmem:[%s5078 + $0x674] sm:$0xf] %v5521
                  %v5523 = vld [vmem:[%s5077 + $0x378] sm:$0xf]
                  %5524 = vst [vmem:[%s5078 + $0x678] sm:$0xf] %v5523
                  %v5525 = vld [vmem:[%s5077 + $0x37c] sm:$0xf]
                  %5526 = vst [vmem:[%s5078 + $0x67c] sm:$0xf] %v5525
                  %v5527 = vld [vmem:[%s5077 + $0x380] sm:$0xf]
                  %5528 = vst [vmem:[%s5078 + $0x680] sm:$0xf] %v5527
                  %v5529 = vld [vmem:[%s5077 + $0x384] sm:$0xf]
                  %5530 = vst [vmem:[%s5078 + $0x684] sm:$0xf] %v5529
                  %v5531 = vld [vmem:[%s5077 + $0x388] sm:$0xf]
                  %5532 = vst [vmem:[%s5078 + $0x688] sm:$0xf] %v5531
                  %v5533 = vld [vmem:[%s5077 + $0x38c] sm:$0xf]
                  %5534 = vst [vmem:[%s5078 + $0x68c] sm:$0xf] %v5533
                  %v5535 = vld [vmem:[%s5077 + $0x390] sm:$0xf]
                  %5536 = vst [vmem:[%s5078 + $0x690] sm:$0xf] %v5535
                  %v5537 = vld [vmem:[%s5077 + $0x394] sm:$0xf]
                  %5538 = vst [vmem:[%s5078 + $0x694] sm:$0xf] %v5537
                  %v5539 = vld [vmem:[%s5077 + $0x398] sm:$0xf]
                  %5540 = vst [vmem:[%s5078 + $0x698] sm:$0xf] %v5539
                  %v5541 = vld [vmem:[%s5077 + $0x39c] sm:$0xf]
                  %5542 = vst [vmem:[%s5078 + $0x69c] sm:$0xf] %v5541
                  %v5543 = vld [vmem:[%s5077 + $0x3a0] sm:$0xf]
                  %5544 = vst [vmem:[%s5078 + $0x6a0] sm:$0xf] %v5543
                  %v5545 = vld [vmem:[%s5077 + $0x3a4] sm:$0xf]
                  %5546 = vst [vmem:[%s5078 + $0x6a4] sm:$0xf] %v5545
                  %v5547 = vld [vmem:[%s5077 + $0x3a8] sm:$0xf]
                  %5548 = vst [vmem:[%s5078 + $0x6a8] sm:$0xf] %v5547
                  %v5549 = vld [vmem:[%s5077 + $0x3ac] sm:$0xf]
                  %5550 = vst [vmem:[%s5078 + $0x6ac] sm:$0xf] %v5549
                  %v5551 = vld [vmem:[%s5077 + $0x3b0] sm:$0xf]
                  %5552 = vst [vmem:[%s5078 + $0x6b0] sm:$0xf] %v5551
                  %v5553 = vld [vmem:[%s5077 + $0x3b4] sm:$0xf]
                  %5554 = vst [vmem:[%s5078 + $0x6b4] sm:$0xf] %v5553
                  %v5555 = vld [vmem:[%s5077 + $0x3b8] sm:$0xf]
                  %5556 = vst [vmem:[%s5078 + $0x6b8] sm:$0xf] %v5555
                  %v5557 = vld [vmem:[%s5077 + $0x3bc] sm:$0xf]
                  %5558 = vst [vmem:[%s5078 + $0x6bc] sm:$0xf] %v5557
                  %v5559 = vld [vmem:[%s5077 + $0x3c0] sm:$0xf]
                  %5560 = vst [vmem:[%s5078 + $0x6c0] sm:$0xf] %v5559
                  %v5561 = vld [vmem:[%s5077 + $0x3c4] sm:$0xf]
                  %5562 = vst [vmem:[%s5078 + $0x6c4] sm:$0xf] %v5561
                  %v5563 = vld [vmem:[%s5077 + $0x3c8] sm:$0xf]
                  %5564 = vst [vmem:[%s5078 + $0x6c8] sm:$0xf] %v5563
                  %v5565 = vld [vmem:[%s5077 + $0x3cc] sm:$0xf]
                  %5566 = vst [vmem:[%s5078 + $0x6cc] sm:$0xf] %v5565
                  %v5567 = vld [vmem:[%s5077 + $0x3d0] sm:$0xf]
                  %5568 = vst [vmem:[%s5078 + $0x6d0] sm:$0xf] %v5567
                  %v5569 = vld [vmem:[%s5077 + $0x3d4] sm:$0xf]
                  %5570 = vst [vmem:[%s5078 + $0x6d4] sm:$0xf] %v5569
                  %v5571 = vld [vmem:[%s5077 + $0x3d8] sm:$0xf]
                  %5572 = vst [vmem:[%s5078 + $0x6d8] sm:$0xf] %v5571
                  %v5573 = vld [vmem:[%s5077 + $0x3dc] sm:$0xf]
                  %5574 = vst [vmem:[%s5078 + $0x6dc] sm:$0xf] %v5573
                  %v5575 = vld [vmem:[%s5077 + $0x3e0] sm:$0xf]
                  %5576 = vst [vmem:[%s5078 + $0x6e0] sm:$0xf] %v5575
                  %v5577 = vld [vmem:[%s5077 + $0x3e4] sm:$0xf]
                  %5578 = vst [vmem:[%s5078 + $0x6e4] sm:$0xf] %v5577
                  %v5579 = vld [vmem:[%s5077 + $0x3e8] sm:$0xf]
                  %5580 = vst [vmem:[%s5078 + $0x6e8] sm:$0xf] %v5579
                  %v5581 = vld [vmem:[%s5077 + $0x3ec] sm:$0xf]
                  %5582 = vst [vmem:[%s5078 + $0x6ec] sm:$0xf] %v5581
                  %v5583 = vld [vmem:[%s5077 + $0x3f0] sm:$0xf]
                  %5584 = vst [vmem:[%s5078 + $0x6f0] sm:$0xf] %v5583
                  %v5585 = vld [vmem:[%s5077 + $0x3f4] sm:$0xf]
                  %5586 = vst [vmem:[%s5078 + $0x6f4] sm:$0xf] %v5585
                  %v5587 = vld [vmem:[%s5077 + $0x3f8] sm:$0xf]
                  %5588 = vst [vmem:[%s5078 + $0x6f8] sm:$0xf] %v5587
                  %v5589 = vld [vmem:[%s5077 + $0x3fc] sm:$0xf]
                  %5590 = vst [vmem:[%s5078 + $0x6fc] sm:$0xf] %v5589
                $region71: #{tpu_custom_call.1} parent=58 // loop_footer
                  %s5076 = sadd.s32 1, %s5072
                $region72: #{tpu_custom_call.1} parent=58 // loop_footer_branch
                  %5071 = sbr.rel target = $region68
                $region73: #{tpu_custom_call.1} parent=58 // loop_exit
                  _
              $region59: #{tpu_custom_call.1} parent=43 // pred_fallthru
                _
            $region44: #{tpu_custom_call.1} parent=39 // pred_fallthru
              _
            // Predicated region
            $region45: #{tpu_custom_call.1} parent=39 // pred_check
              _
            $region46: #{tpu_custom_call.1} parent=39 // pred_check_branch
              %4538 = sbr.rel (0) target = $region48
            $region47: #{tpu_custom_call.1} parent=39 // pred_region
              loop: start=0, step=1, limit=1
              $region49: #{tpu_custom_call.1} parent=47 // loop_pre_header
                _
              $region50: #{tpu_custom_call.1} parent=47 // loop_header
                %s4541 = sphi 0, %s4545
                %p4542 = scmp.ge.s32.totalorder %s4541, 1
                %s4546 = sphi %s4516, %s4516
                %s4547 = sphi %s4532, %s4532
              $region51: #{tpu_custom_call.1} parent=47 // loop_header_branch
                %4544 = sbr.rel (%p4542) target = $region55
              $region52: #{tpu_custom_call.1} parent=47 // loop_body
                %v4548 = vld [vmem:[%s4546] sm:$0xf]
                %4549 = vst [vmem:[%s4547] sm:$0xf] %v4548
                %v4550 = vld [vmem:[%s4546 + $0x4] sm:$0xf]
                %4551 = vst [vmem:[%s4547 + $0x4] sm:$0xf] %v4550
                %v4552 = vld [vmem:[%s4546 + $0x8] sm:$0xf]
                %4553 = vst [vmem:[%s4547 + $0x8] sm:$0xf] %v4552
                %v4554 = vld [vmem:[%s4546 + $0xc] sm:$0xf]
                %4555 = vst [vmem:[%s4547 + $0xc] sm:$0xf] %v4554
                %v4556 = vld [vmem:[%s4546 + $0x10] sm:$0xf]
                %4557 = vst [vmem:[%s4547 + $0x10] sm:$0xf] %v4556
                %v4558 = vld [vmem:[%s4546 + $0x14] sm:$0xf]
                %4559 = vst [vmem:[%s4547 + $0x14] sm:$0xf] %v4558
                %v4560 = vld [vmem:[%s4546 + $0x18] sm:$0xf]
                %4561 = vst [vmem:[%s4547 + $0x18] sm:$0xf] %v4560
                %v4562 = vld [vmem:[%s4546 + $0x1c] sm:$0xf]
                %4563 = vst [vmem:[%s4547 + $0x1c] sm:$0xf] %v4562
                %v4564 = vld [vmem:[%s4546 + $0x20] sm:$0xf]
                %4565 = vst [vmem:[%s4547 + $0x20] sm:$0xf] %v4564
                %v4566 = vld [vmem:[%s4546 + $0x24] sm:$0xf]
                %4567 = vst [vmem:[%s4547 + $0x24] sm:$0xf] %v4566
                %v4568 = vld [vmem:[%s4546 + $0x28] sm:$0xf]
                %4569 = vst [vmem:[%s4547 + $0x28] sm:$0xf] %v4568
                %v4570 = vld [vmem:[%s4546 + $0x2c] sm:$0xf]
                %4571 = vst [vmem:[%s4547 + $0x2c] sm:$0xf] %v4570
                %v4572 = vld [vmem:[%s4546 + $0x30] sm:$0xf]
                %4573 = vst [vmem:[%s4547 + $0x30] sm:$0xf] %v4572
                %v4574 = vld [vmem:[%s4546 + $0x34] sm:$0xf]
                %4575 = vst [vmem:[%s4547 + $0x34] sm:$0xf] %v4574
                %v4576 = vld [vmem:[%s4546 + $0x38] sm:$0xf]
                %4577 = vst [vmem:[%s4547 + $0x38] sm:$0xf] %v4576
                %v4578 = vld [vmem:[%s4546 + $0x3c] sm:$0xf]
                %4579 = vst [vmem:[%s4547 + $0x3c] sm:$0xf] %v4578
                %v4580 = vld [vmem:[%s4546 + $0x40] sm:$0xf]
                %4581 = vst [vmem:[%s4547 + $0x40] sm:$0xf] %v4580
                %v4582 = vld [vmem:[%s4546 + $0x44] sm:$0xf]
                %4583 = vst [vmem:[%s4547 + $0x44] sm:$0xf] %v4582
                %v4584 = vld [vmem:[%s4546 + $0x48] sm:$0xf]
                %4585 = vst [vmem:[%s4547 + $0x48] sm:$0xf] %v4584
                %v4586 = vld [vmem:[%s4546 + $0x4c] sm:$0xf]
                %4587 = vst [vmem:[%s4547 + $0x4c] sm:$0xf] %v4586
                %v4588 = vld [vmem:[%s4546 + $0x50] sm:$0xf]
                %4589 = vst [vmem:[%s4547 + $0x50] sm:$0xf] %v4588
                %v4590 = vld [vmem:[%s4546 + $0x54] sm:$0xf]
                %4591 = vst [vmem:[%s4547 + $0x54] sm:$0xf] %v4590
                %v4592 = vld [vmem:[%s4546 + $0x58] sm:$0xf]
                %4593 = vst [vmem:[%s4547 + $0x58] sm:$0xf] %v4592
                %v4594 = vld [vmem:[%s4546 + $0x5c] sm:$0xf]
                %4595 = vst [vmem:[%s4547 + $0x5c] sm:$0xf] %v4594
                %v4596 = vld [vmem:[%s4546 + $0x60] sm:$0xf]
                %4597 = vst [vmem:[%s4547 + $0x60] sm:$0xf] %v4596
                %v4598 = vld [vmem:[%s4546 + $0x64] sm:$0xf]
                %4599 = vst [vmem:[%s4547 + $0x64] sm:$0xf] %v4598
                %v4600 = vld [vmem:[%s4546 + $0x68] sm:$0xf]
                %4601 = vst [vmem:[%s4547 + $0x68] sm:$0xf] %v4600
                %v4602 = vld [vmem:[%s4546 + $0x6c] sm:$0xf]
                %4603 = vst [vmem:[%s4547 + $0x6c] sm:$0xf] %v4602
                %v4604 = vld [vmem:[%s4546 + $0x70] sm:$0xf]
                %4605 = vst [vmem:[%s4547 + $0x70] sm:$0xf] %v4604
                %v4606 = vld [vmem:[%s4546 + $0x74] sm:$0xf]
                %4607 = vst [vmem:[%s4547 + $0x74] sm:$0xf] %v4606
                %v4608 = vld [vmem:[%s4546 + $0x78] sm:$0xf]
                %4609 = vst [vmem:[%s4547 + $0x78] sm:$0xf] %v4608
                %v4610 = vld [vmem:[%s4546 + $0x7c] sm:$0xf]
                %4611 = vst [vmem:[%s4547 + $0x7c] sm:$0xf] %v4610
                %v4612 = vld [vmem:[%s4546 + $0x80] sm:$0xf]
                %4613 = vst [vmem:[%s4547 + $0x80] sm:$0xf] %v4612
                %v4614 = vld [vmem:[%s4546 + $0x84] sm:$0xf]
                %4615 = vst [vmem:[%s4547 + $0x84] sm:$0xf] %v4614
                %v4616 = vld [vmem:[%s4546 + $0x88] sm:$0xf]
                %4617 = vst [vmem:[%s4547 + $0x88] sm:$0xf] %v4616
                %v4618 = vld [vmem:[%s4546 + $0x8c] sm:$0xf]
                %4619 = vst [vmem:[%s4547 + $0x8c] sm:$0xf] %v4618
                %v4620 = vld [vmem:[%s4546 + $0x90] sm:$0xf]
                %4621 = vst [vmem:[%s4547 + $0x90] sm:$0xf] %v4620
                %v4622 = vld [vmem:[%s4546 + $0x94] sm:$0xf]
                %4623 = vst [vmem:[%s4547 + $0x94] sm:$0xf] %v4622
                %v4624 = vld [vmem:[%s4546 + $0x98] sm:$0xf]
                %4625 = vst [vmem:[%s4547 + $0x98] sm:$0xf] %v4624
                %v4626 = vld [vmem:[%s4546 + $0x9c] sm:$0xf]
                %4627 = vst [vmem:[%s4547 + $0x9c] sm:$0xf] %v4626
                %v4628 = vld [vmem:[%s4546 + $0xa0] sm:$0xf]
                %4629 = vst [vmem:[%s4547 + $0xa0] sm:$0xf] %v4628
                %v4630 = vld [vmem:[%s4546 + $0xa4] sm:$0xf]
                %4631 = vst [vmem:[%s4547 + $0xa4] sm:$0xf] %v4630
                %v4632 = vld [vmem:[%s4546 + $0xa8] sm:$0xf]
                %4633 = vst [vmem:[%s4547 + $0xa8] sm:$0xf] %v4632
                %v4634 = vld [vmem:[%s4546 + $0xac] sm:$0xf]
                %4635 = vst [vmem:[%s4547 + $0xac] sm:$0xf] %v4634
                %v4636 = vld [vmem:[%s4546 + $0xb0] sm:$0xf]
                %4637 = vst [vmem:[%s4547 + $0xb0] sm:$0xf] %v4636
                %v4638 = vld [vmem:[%s4546 + $0xb4] sm:$0xf]
                %4639 = vst [vmem:[%s4547 + $0xb4] sm:$0xf] %v4638
                %v4640 = vld [vmem:[%s4546 + $0xb8] sm:$0xf]
                %4641 = vst [vmem:[%s4547 + $0xb8] sm:$0xf] %v4640
                %v4642 = vld [vmem:[%s4546 + $0xbc] sm:$0xf]
                %4643 = vst [vmem:[%s4547 + $0xbc] sm:$0xf] %v4642
                %v4644 = vld [vmem:[%s4546 + $0xc0] sm:$0xf]
                %4645 = vst [vmem:[%s4547 + $0xc0] sm:$0xf] %v4644
                %v4646 = vld [vmem:[%s4546 + $0xc4] sm:$0xf]
                %4647 = vst [vmem:[%s4547 + $0xc4] sm:$0xf] %v4646
                %v4648 = vld [vmem:[%s4546 + $0xc8] sm:$0xf]
                %4649 = vst [vmem:[%s4547 + $0xc8] sm:$0xf] %v4648
                %v4650 = vld [vmem:[%s4546 + $0xcc] sm:$0xf]
                %4651 = vst [vmem:[%s4547 + $0xcc] sm:$0xf] %v4650
                %v4652 = vld [vmem:[%s4546 + $0xd0] sm:$0xf]
                %4653 = vst [vmem:[%s4547 + $0xd0] sm:$0xf] %v4652
                %v4654 = vld [vmem:[%s4546 + $0xd4] sm:$0xf]
                %4655 = vst [vmem:[%s4547 + $0xd4] sm:$0xf] %v4654
                %v4656 = vld [vmem:[%s4546 + $0xd8] sm:$0xf]
                %4657 = vst [vmem:[%s4547 + $0xd8] sm:$0xf] %v4656
                %v4658 = vld [vmem:[%s4546 + $0xdc] sm:$0xf]
                %4659 = vst [vmem:[%s4547 + $0xdc] sm:$0xf] %v4658
                %v4660 = vld [vmem:[%s4546 + $0xe0] sm:$0xf]
                %4661 = vst [vmem:[%s4547 + $0xe0] sm:$0xf] %v4660
                %v4662 = vld [vmem:[%s4546 + $0xe4] sm:$0xf]
                %4663 = vst [vmem:[%s4547 + $0xe4] sm:$0xf] %v4662
                %v4664 = vld [vmem:[%s4546 + $0xe8] sm:$0xf]
                %4665 = vst [vmem:[%s4547 + $0xe8] sm:$0xf] %v4664
                %v4666 = vld [vmem:[%s4546 + $0xec] sm:$0xf]
                %4667 = vst [vmem:[%s4547 + $0xec] sm:$0xf] %v4666
                %v4668 = vld [vmem:[%s4546 + $0xf0] sm:$0xf]
                %4669 = vst [vmem:[%s4547 + $0xf0] sm:$0xf] %v4668
                %v4670 = vld [vmem:[%s4546 + $0xf4] sm:$0xf]
                %4671 = vst [vmem:[%s4547 + $0xf4] sm:$0xf] %v4670
                %v4672 = vld [vmem:[%s4546 + $0xf8] sm:$0xf]
                %4673 = vst [vmem:[%s4547 + $0xf8] sm:$0xf] %v4672
                %v4674 = vld [vmem:[%s4546 + $0xfc] sm:$0xf]
                %4675 = vst [vmem:[%s4547 + $0xfc] sm:$0xf] %v4674
                %v4676 = vld [vmem:[%s4546 + $0x100] sm:$0xf]
                %4677 = vst [vmem:[%s4547 + $0x200] sm:$0xf] %v4676
                %v4678 = vld [vmem:[%s4546 + $0x104] sm:$0xf]
                %4679 = vst [vmem:[%s4547 + $0x204] sm:$0xf] %v4678
                %v4680 = vld [vmem:[%s4546 + $0x108] sm:$0xf]
                %4681 = vst [vmem:[%s4547 + $0x208] sm:$0xf] %v4680
                %v4682 = vld [vmem:[%s4546 + $0x10c] sm:$0xf]
                %4683 = vst [vmem:[%s4547 + $0x20c] sm:$0xf] %v4682
                %v4684 = vld [vmem:[%s4546 + $0x110] sm:$0xf]
                %4685 = vst [vmem:[%s4547 + $0x210] sm:$0xf] %v4684
                %v4686 = vld [vmem:[%s4546 + $0x114] sm:$0xf]
                %4687 = vst [vmem:[%s4547 + $0x214] sm:$0xf] %v4686
                %v4688 = vld [vmem:[%s4546 + $0x118] sm:$0xf]
                %4689 = vst [vmem:[%s4547 + $0x218] sm:$0xf] %v4688
                %v4690 = vld [vmem:[%s4546 + $0x11c] sm:$0xf]
                %4691 = vst [vmem:[%s4547 + $0x21c] sm:$0xf] %v4690
                %v4692 = vld [vmem:[%s4546 + $0x120] sm:$0xf]
                %4693 = vst [vmem:[%s4547 + $0x220] sm:$0xf] %v4692
                %v4694 = vld [vmem:[%s4546 + $0x124] sm:$0xf]
                %4695 = vst [vmem:[%s4547 + $0x224] sm:$0xf] %v4694
                %v4696 = vld [vmem:[%s4546 + $0x128] sm:$0xf]
                %4697 = vst [vmem:[%s4547 + $0x228] sm:$0xf] %v4696
                %v4698 = vld [vmem:[%s4546 + $0x12c] sm:$0xf]
                %4699 = vst [vmem:[%s4547 + $0x22c] sm:$0xf] %v4698
                %v4700 = vld [vmem:[%s4546 + $0x130] sm:$0xf]
                %4701 = vst [vmem:[%s4547 + $0x230] sm:$0xf] %v4700
                %v4702 = vld [vmem:[%s4546 + $0x134] sm:$0xf]
                %4703 = vst [vmem:[%s4547 + $0x234] sm:$0xf] %v4702
                %v4704 = vld [vmem:[%s4546 + $0x138] sm:$0xf]
                %4705 = vst [vmem:[%s4547 + $0x238] sm:$0xf] %v4704
                %v4706 = vld [vmem:[%s4546 + $0x13c] sm:$0xf]
                %4707 = vst [vmem:[%s4547 + $0x23c] sm:$0xf] %v4706
                %v4708 = vld [vmem:[%s4546 + $0x140] sm:$0xf]
                %4709 = vst [vmem:[%s4547 + $0x240] sm:$0xf] %v4708
                %v4710 = vld [vmem:[%s4546 + $0x144] sm:$0xf]
                %4711 = vst [vmem:[%s4547 + $0x244] sm:$0xf] %v4710
                %v4712 = vld [vmem:[%s4546 + $0x148] sm:$0xf]
                %4713 = vst [vmem:[%s4547 + $0x248] sm:$0xf] %v4712
                %v4714 = vld [vmem:[%s4546 + $0x14c] sm:$0xf]
                %4715 = vst [vmem:[%s4547 + $0x24c] sm:$0xf] %v4714
                %v4716 = vld [vmem:[%s4546 + $0x150] sm:$0xf]
                %4717 = vst [vmem:[%s4547 + $0x250] sm:$0xf] %v4716
                %v4718 = vld [vmem:[%s4546 + $0x154] sm:$0xf]
                %4719 = vst [vmem:[%s4547 + $0x254] sm:$0xf] %v4718
                %v4720 = vld [vmem:[%s4546 + $0x158] sm:$0xf]
                %4721 = vst [vmem:[%s4547 + $0x258] sm:$0xf] %v4720
                %v4722 = vld [vmem:[%s4546 + $0x15c] sm:$0xf]
                %4723 = vst [vmem:[%s4547 + $0x25c] sm:$0xf] %v4722
                %v4724 = vld [vmem:[%s4546 + $0x160] sm:$0xf]
                %4725 = vst [vmem:[%s4547 + $0x260] sm:$0xf] %v4724
                %v4726 = vld [vmem:[%s4546 + $0x164] sm:$0xf]
                %4727 = vst [vmem:[%s4547 + $0x264] sm:$0xf] %v4726
                %v4728 = vld [vmem:[%s4546 + $0x168] sm:$0xf]
                %4729 = vst [vmem:[%s4547 + $0x268] sm:$0xf] %v4728
                %v4730 = vld [vmem:[%s4546 + $0x16c] sm:$0xf]
                %4731 = vst [vmem:[%s4547 + $0x26c] sm:$0xf] %v4730
                %v4732 = vld [vmem:[%s4546 + $0x170] sm:$0xf]
                %4733 = vst [vmem:[%s4547 + $0x270] sm:$0xf] %v4732
                %v4734 = vld [vmem:[%s4546 + $0x174] sm:$0xf]
                %4735 = vst [vmem:[%s4547 + $0x274] sm:$0xf] %v4734
                %v4736 = vld [vmem:[%s4546 + $0x178] sm:$0xf]
                %4737 = vst [vmem:[%s4547 + $0x278] sm:$0xf] %v4736
                %v4738 = vld [vmem:[%s4546 + $0x17c] sm:$0xf]
                %4739 = vst [vmem:[%s4547 + $0x27c] sm:$0xf] %v4738
                %v4740 = vld [vmem:[%s4546 + $0x180] sm:$0xf]
                %4741 = vst [vmem:[%s4547 + $0x280] sm:$0xf] %v4740
                %v4742 = vld [vmem:[%s4546 + $0x184] sm:$0xf]
                %4743 = vst [vmem:[%s4547 + $0x284] sm:$0xf] %v4742
                %v4744 = vld [vmem:[%s4546 + $0x188] sm:$0xf]
                %4745 = vst [vmem:[%s4547 + $0x288] sm:$0xf] %v4744
                %v4746 = vld [vmem:[%s4546 + $0x18c] sm:$0xf]
                %4747 = vst [vmem:[%s4547 + $0x28c] sm:$0xf] %v4746
                %v4748 = vld [vmem:[%s4546 + $0x190] sm:$0xf]
                %4749 = vst [vmem:[%s4547 + $0x290] sm:$0xf] %v4748
                %v4750 = vld [vmem:[%s4546 + $0x194] sm:$0xf]
                %4751 = vst [vmem:[%s4547 + $0x294] sm:$0xf] %v4750
                %v4752 = vld [vmem:[%s4546 + $0x198] sm:$0xf]
                %4753 = vst [vmem:[%s4547 + $0x298] sm:$0xf] %v4752
                %v4754 = vld [vmem:[%s4546 + $0x19c] sm:$0xf]
                %4755 = vst [vmem:[%s4547 + $0x29c] sm:$0xf] %v4754
                %v4756 = vld [vmem:[%s4546 + $0x1a0] sm:$0xf]
                %4757 = vst [vmem:[%s4547 + $0x2a0] sm:$0xf] %v4756
                %v4758 = vld [vmem:[%s4546 + $0x1a4] sm:$0xf]
                %4759 = vst [vmem:[%s4547 + $0x2a4] sm:$0xf] %v4758
                %v4760 = vld [vmem:[%s4546 + $0x1a8] sm:$0xf]
                %4761 = vst [vmem:[%s4547 + $0x2a8] sm:$0xf] %v4760
                %v4762 = vld [vmem:[%s4546 + $0x1ac] sm:$0xf]
                %4763 = vst [vmem:[%s4547 + $0x2ac] sm:$0xf] %v4762
                %v4764 = vld [vmem:[%s4546 + $0x1b0] sm:$0xf]
                %4765 = vst [vmem:[%s4547 + $0x2b0] sm:$0xf] %v4764
                %v4766 = vld [vmem:[%s4546 + $0x1b4] sm:$0xf]
                %4767 = vst [vmem:[%s4547 + $0x2b4] sm:$0xf] %v4766
                %v4768 = vld [vmem:[%s4546 + $0x1b8] sm:$0xf]
                %4769 = vst [vmem:[%s4547 + $0x2b8] sm:$0xf] %v4768
                %v4770 = vld [vmem:[%s4546 + $0x1bc] sm:$0xf]
                %4771 = vst [vmem:[%s4547 + $0x2bc] sm:$0xf] %v4770
                %v4772 = vld [vmem:[%s4546 + $0x1c0] sm:$0xf]
                %4773 = vst [vmem:[%s4547 + $0x2c0] sm:$0xf] %v4772
                %v4774 = vld [vmem:[%s4546 + $0x1c4] sm:$0xf]
                %4775 = vst [vmem:[%s4547 + $0x2c4] sm:$0xf] %v4774
                %v4776 = vld [vmem:[%s4546 + $0x1c8] sm:$0xf]
                %4777 = vst [vmem:[%s4547 + $0x2c8] sm:$0xf] %v4776
                %v4778 = vld [vmem:[%s4546 + $0x1cc] sm:$0xf]
                %4779 = vst [vmem:[%s4547 + $0x2cc] sm:$0xf] %v4778
                %v4780 = vld [vmem:[%s4546 + $0x1d0] sm:$0xf]
                %4781 = vst [vmem:[%s4547 + $0x2d0] sm:$0xf] %v4780
                %v4782 = vld [vmem:[%s4546 + $0x1d4] sm:$0xf]
                %4783 = vst [vmem:[%s4547 + $0x2d4] sm:$0xf] %v4782
                %v4784 = vld [vmem:[%s4546 + $0x1d8] sm:$0xf]
                %4785 = vst [vmem:[%s4547 + $0x2d8] sm:$0xf] %v4784
                %v4786 = vld [vmem:[%s4546 + $0x1dc] sm:$0xf]
                %4787 = vst [vmem:[%s4547 + $0x2dc] sm:$0xf] %v4786
                %v4788 = vld [vmem:[%s4546 + $0x1e0] sm:$0xf]
                %4789 = vst [vmem:[%s4547 + $0x2e0] sm:$0xf] %v4788
                %v4790 = vld [vmem:[%s4546 + $0x1e4] sm:$0xf]
                %4791 = vst [vmem:[%s4547 + $0x2e4] sm:$0xf] %v4790
                %v4792 = vld [vmem:[%s4546 + $0x1e8] sm:$0xf]
                %4793 = vst [vmem:[%s4547 + $0x2e8] sm:$0xf] %v4792
                %v4794 = vld [vmem:[%s4546 + $0x1ec] sm:$0xf]
                %4795 = vst [vmem:[%s4547 + $0x2ec] sm:$0xf] %v4794
                %v4796 = vld [vmem:[%s4546 + $0x1f0] sm:$0xf]
                %4797 = vst [vmem:[%s4547 + $0x2f0] sm:$0xf] %v4796
                %v4798 = vld [vmem:[%s4546 + $0x1f4] sm:$0xf]
                %4799 = vst [vmem:[%s4547 + $0x2f4] sm:$0xf] %v4798
                %v4800 = vld [vmem:[%s4546 + $0x1f8] sm:$0xf]
                %4801 = vst [vmem:[%s4547 + $0x2f8] sm:$0xf] %v4800
                %v4802 = vld [vmem:[%s4546 + $0x1fc] sm:$0xf]
                %4803 = vst [vmem:[%s4547 + $0x2fc] sm:$0xf] %v4802
                %v4804 = vld [vmem:[%s4546 + $0x200] sm:$0xf]
                %4805 = vst [vmem:[%s4547 + $0x400] sm:$0xf] %v4804
                %v4806 = vld [vmem:[%s4546 + $0x204] sm:$0xf]
                %4807 = vst [vmem:[%s4547 + $0x404] sm:$0xf] %v4806
                %v4808 = vld [vmem:[%s4546 + $0x208] sm:$0xf]
                %4809 = vst [vmem:[%s4547 + $0x408] sm:$0xf] %v4808
                %v4810 = vld [vmem:[%s4546 + $0x20c] sm:$0xf]
                %4811 = vst [vmem:[%s4547 + $0x40c] sm:$0xf] %v4810
                %v4812 = vld [vmem:[%s4546 + $0x210] sm:$0xf]
                %4813 = vst [vmem:[%s4547 + $0x410] sm:$0xf] %v4812
                %v4814 = vld [vmem:[%s4546 + $0x214] sm:$0xf]
                %4815 = vst [vmem:[%s4547 + $0x414] sm:$0xf] %v4814
                %v4816 = vld [vmem:[%s4546 + $0x218] sm:$0xf]
                %4817 = vst [vmem:[%s4547 + $0x418] sm:$0xf] %v4816
                %v4818 = vld [vmem:[%s4546 + $0x21c] sm:$0xf]
                %4819 = vst [vmem:[%s4547 + $0x41c] sm:$0xf] %v4818
                %v4820 = vld [vmem:[%s4546 + $0x220] sm:$0xf]
                %4821 = vst [vmem:[%s4547 + $0x420] sm:$0xf] %v4820
                %v4822 = vld [vmem:[%s4546 + $0x224] sm:$0xf]
                %4823 = vst [vmem:[%s4547 + $0x424] sm:$0xf] %v4822
                %v4824 = vld [vmem:[%s4546 + $0x228] sm:$0xf]
                %4825 = vst [vmem:[%s4547 + $0x428] sm:$0xf] %v4824
                %v4826 = vld [vmem:[%s4546 + $0x22c] sm:$0xf]
                %4827 = vst [vmem:[%s4547 + $0x42c] sm:$0xf] %v4826
                %v4828 = vld [vmem:[%s4546 + $0x230] sm:$0xf]
                %4829 = vst [vmem:[%s4547 + $0x430] sm:$0xf] %v4828
                %v4830 = vld [vmem:[%s4546 + $0x234] sm:$0xf]
                %4831 = vst [vmem:[%s4547 + $0x434] sm:$0xf] %v4830
                %v4832 = vld [vmem:[%s4546 + $0x238] sm:$0xf]
                %4833 = vst [vmem:[%s4547 + $0x438] sm:$0xf] %v4832
                %v4834 = vld [vmem:[%s4546 + $0x23c] sm:$0xf]
                %4835 = vst [vmem:[%s4547 + $0x43c] sm:$0xf] %v4834
                %v4836 = vld [vmem:[%s4546 + $0x240] sm:$0xf]
                %4837 = vst [vmem:[%s4547 + $0x440] sm:$0xf] %v4836
                %v4838 = vld [vmem:[%s4546 + $0x244] sm:$0xf]
                %4839 = vst [vmem:[%s4547 + $0x444] sm:$0xf] %v4838
                %v4840 = vld [vmem:[%s4546 + $0x248] sm:$0xf]
                %4841 = vst [vmem:[%s4547 + $0x448] sm:$0xf] %v4840
                %v4842 = vld [vmem:[%s4546 + $0x24c] sm:$0xf]
                %4843 = vst [vmem:[%s4547 + $0x44c] sm:$0xf] %v4842
                %v4844 = vld [vmem:[%s4546 + $0x250] sm:$0xf]
                %4845 = vst [vmem:[%s4547 + $0x450] sm:$0xf] %v4844
                %v4846 = vld [vmem:[%s4546 + $0x254] sm:$0xf]
                %4847 = vst [vmem:[%s4547 + $0x454] sm:$0xf] %v4846
                %v4848 = vld [vmem:[%s4546 + $0x258] sm:$0xf]
                %4849 = vst [vmem:[%s4547 + $0x458] sm:$0xf] %v4848
                %v4850 = vld [vmem:[%s4546 + $0x25c] sm:$0xf]
                %4851 = vst [vmem:[%s4547 + $0x45c] sm:$0xf] %v4850
                %v4852 = vld [vmem:[%s4546 + $0x260] sm:$0xf]
                %4853 = vst [vmem:[%s4547 + $0x460] sm:$0xf] %v4852
                %v4854 = vld [vmem:[%s4546 + $0x264] sm:$0xf]
                %4855 = vst [vmem:[%s4547 + $0x464] sm:$0xf] %v4854
                %v4856 = vld [vmem:[%s4546 + $0x268] sm:$0xf]
                %4857 = vst [vmem:[%s4547 + $0x468] sm:$0xf] %v4856
                %v4858 = vld [vmem:[%s4546 + $0x26c] sm:$0xf]
                %4859 = vst [vmem:[%s4547 + $0x46c] sm:$0xf] %v4858
                %v4860 = vld [vmem:[%s4546 + $0x270] sm:$0xf]
                %4861 = vst [vmem:[%s4547 + $0x470] sm:$0xf] %v4860
                %v4862 = vld [vmem:[%s4546 + $0x274] sm:$0xf]
                %4863 = vst [vmem:[%s4547 + $0x474] sm:$0xf] %v4862
                %v4864 = vld [vmem:[%s4546 + $0x278] sm:$0xf]
                %4865 = vst [vmem:[%s4547 + $0x478] sm:$0xf] %v4864
                %v4866 = vld [vmem:[%s4546 + $0x27c] sm:$0xf]
                %4867 = vst [vmem:[%s4547 + $0x47c] sm:$0xf] %v4866
                %v4868 = vld [vmem:[%s4546 + $0x280] sm:$0xf]
                %4869 = vst [vmem:[%s4547 + $0x480] sm:$0xf] %v4868
                %v4870 = vld [vmem:[%s4546 + $0x284] sm:$0xf]
                %4871 = vst [vmem:[%s4547 + $0x484] sm:$0xf] %v4870
                %v4872 = vld [vmem:[%s4546 + $0x288] sm:$0xf]
                %4873 = vst [vmem:[%s4547 + $0x488] sm:$0xf] %v4872
                %v4874 = vld [vmem:[%s4546 + $0x28c] sm:$0xf]
                %4875 = vst [vmem:[%s4547 + $0x48c] sm:$0xf] %v4874
                %v4876 = vld [vmem:[%s4546 + $0x290] sm:$0xf]
                %4877 = vst [vmem:[%s4547 + $0x490] sm:$0xf] %v4876
                %v4878 = vld [vmem:[%s4546 + $0x294] sm:$0xf]
                %4879 = vst [vmem:[%s4547 + $0x494] sm:$0xf] %v4878
                %v4880 = vld [vmem:[%s4546 + $0x298] sm:$0xf]
                %4881 = vst [vmem:[%s4547 + $0x498] sm:$0xf] %v4880
                %v4882 = vld [vmem:[%s4546 + $0x29c] sm:$0xf]
                %4883 = vst [vmem:[%s4547 + $0x49c] sm:$0xf] %v4882
                %v4884 = vld [vmem:[%s4546 + $0x2a0] sm:$0xf]
                %4885 = vst [vmem:[%s4547 + $0x4a0] sm:$0xf] %v4884
                %v4886 = vld [vmem:[%s4546 + $0x2a4] sm:$0xf]
                %4887 = vst [vmem:[%s4547 + $0x4a4] sm:$0xf] %v4886
                %v4888 = vld [vmem:[%s4546 + $0x2a8] sm:$0xf]
                %4889 = vst [vmem:[%s4547 + $0x4a8] sm:$0xf] %v4888
                %v4890 = vld [vmem:[%s4546 + $0x2ac] sm:$0xf]
                %4891 = vst [vmem:[%s4547 + $0x4ac] sm:$0xf] %v4890
                %v4892 = vld [vmem:[%s4546 + $0x2b0] sm:$0xf]
                %4893 = vst [vmem:[%s4547 + $0x4b0] sm:$0xf] %v4892
                %v4894 = vld [vmem:[%s4546 + $0x2b4] sm:$0xf]
                %4895 = vst [vmem:[%s4547 + $0x4b4] sm:$0xf] %v4894
                %v4896 = vld [vmem:[%s4546 + $0x2b8] sm:$0xf]
                %4897 = vst [vmem:[%s4547 + $0x4b8] sm:$0xf] %v4896
                %v4898 = vld [vmem:[%s4546 + $0x2bc] sm:$0xf]
                %4899 = vst [vmem:[%s4547 + $0x4bc] sm:$0xf] %v4898
                %v4900 = vld [vmem:[%s4546 + $0x2c0] sm:$0xf]
                %4901 = vst [vmem:[%s4547 + $0x4c0] sm:$0xf] %v4900
                %v4902 = vld [vmem:[%s4546 + $0x2c4] sm:$0xf]
                %4903 = vst [vmem:[%s4547 + $0x4c4] sm:$0xf] %v4902
                %v4904 = vld [vmem:[%s4546 + $0x2c8] sm:$0xf]
                %4905 = vst [vmem:[%s4547 + $0x4c8] sm:$0xf] %v4904
                %v4906 = vld [vmem:[%s4546 + $0x2cc] sm:$0xf]
                %4907 = vst [vmem:[%s4547 + $0x4cc] sm:$0xf] %v4906
                %v4908 = vld [vmem:[%s4546 + $0x2d0] sm:$0xf]
                %4909 = vst [vmem:[%s4547 + $0x4d0] sm:$0xf] %v4908
                %v4910 = vld [vmem:[%s4546 + $0x2d4] sm:$0xf]
                %4911 = vst [vmem:[%s4547 + $0x4d4] sm:$0xf] %v4910
                %v4912 = vld [vmem:[%s4546 + $0x2d8] sm:$0xf]
                %4913 = vst [vmem:[%s4547 + $0x4d8] sm:$0xf] %v4912
                %v4914 = vld [vmem:[%s4546 + $0x2dc] sm:$0xf]
                %4915 = vst [vmem:[%s4547 + $0x4dc] sm:$0xf] %v4914
                %v4916 = vld [vmem:[%s4546 + $0x2e0] sm:$0xf]
                %4917 = vst [vmem:[%s4547 + $0x4e0] sm:$0xf] %v4916
                %v4918 = vld [vmem:[%s4546 + $0x2e4] sm:$0xf]
                %4919 = vst [vmem:[%s4547 + $0x4e4] sm:$0xf] %v4918
                %v4920 = vld [vmem:[%s4546 + $0x2e8] sm:$0xf]
                %4921 = vst [vmem:[%s4547 + $0x4e8] sm:$0xf] %v4920
                %v4922 = vld [vmem:[%s4546 + $0x2ec] sm:$0xf]
                %4923 = vst [vmem:[%s4547 + $0x4ec] sm:$0xf] %v4922
                %v4924 = vld [vmem:[%s4546 + $0x2f0] sm:$0xf]
                %4925 = vst [vmem:[%s4547 + $0x4f0] sm:$0xf] %v4924
                %v4926 = vld [vmem:[%s4546 + $0x2f4] sm:$0xf]
                %4927 = vst [vmem:[%s4547 + $0x4f4] sm:$0xf] %v4926
                %v4928 = vld [vmem:[%s4546 + $0x2f8] sm:$0xf]
                %4929 = vst [vmem:[%s4547 + $0x4f8] sm:$0xf] %v4928
                %v4930 = vld [vmem:[%s4546 + $0x2fc] sm:$0xf]
                %4931 = vst [vmem:[%s4547 + $0x4fc] sm:$0xf] %v4930
                %v4932 = vld [vmem:[%s4546 + $0x300] sm:$0xf]
                %4933 = vst [vmem:[%s4547 + $0x600] sm:$0xf] %v4932
                %v4934 = vld [vmem:[%s4546 + $0x304] sm:$0xf]
                %4935 = vst [vmem:[%s4547 + $0x604] sm:$0xf] %v4934
                %v4936 = vld [vmem:[%s4546 + $0x308] sm:$0xf]
                %4937 = vst [vmem:[%s4547 + $0x608] sm:$0xf] %v4936
                %v4938 = vld [vmem:[%s4546 + $0x30c] sm:$0xf]
                %4939 = vst [vmem:[%s4547 + $0x60c] sm:$0xf] %v4938
                %v4940 = vld [vmem:[%s4546 + $0x310] sm:$0xf]
                %4941 = vst [vmem:[%s4547 + $0x610] sm:$0xf] %v4940
                %v4942 = vld [vmem:[%s4546 + $0x314] sm:$0xf]
                %4943 = vst [vmem:[%s4547 + $0x614] sm:$0xf] %v4942
                %v4944 = vld [vmem:[%s4546 + $0x318] sm:$0xf]
                %4945 = vst [vmem:[%s4547 + $0x618] sm:$0xf] %v4944
                %v4946 = vld [vmem:[%s4546 + $0x31c] sm:$0xf]
                %4947 = vst [vmem:[%s4547 + $0x61c] sm:$0xf] %v4946
                %v4948 = vld [vmem:[%s4546 + $0x320] sm:$0xf]
                %4949 = vst [vmem:[%s4547 + $0x620] sm:$0xf] %v4948
                %v4950 = vld [vmem:[%s4546 + $0x324] sm:$0xf]
                %4951 = vst [vmem:[%s4547 + $0x624] sm:$0xf] %v4950
                %v4952 = vld [vmem:[%s4546 + $0x328] sm:$0xf]
                %4953 = vst [vmem:[%s4547 + $0x628] sm:$0xf] %v4952
                %v4954 = vld [vmem:[%s4546 + $0x32c] sm:$0xf]
                %4955 = vst [vmem:[%s4547 + $0x62c] sm:$0xf] %v4954
                %v4956 = vld [vmem:[%s4546 + $0x330] sm:$0xf]
                %4957 = vst [vmem:[%s4547 + $0x630] sm:$0xf] %v4956
                %v4958 = vld [vmem:[%s4546 + $0x334] sm:$0xf]
                %4959 = vst [vmem:[%s4547 + $0x634] sm:$0xf] %v4958
                %v4960 = vld [vmem:[%s4546 + $0x338] sm:$0xf]
                %4961 = vst [vmem:[%s4547 + $0x638] sm:$0xf] %v4960
                %v4962 = vld [vmem:[%s4546 + $0x33c] sm:$0xf]
                %4963 = vst [vmem:[%s4547 + $0x63c] sm:$0xf] %v4962
                %v4964 = vld [vmem:[%s4546 + $0x340] sm:$0xf]
                %4965 = vst [vmem:[%s4547 + $0x640] sm:$0xf] %v4964
                %v4966 = vld [vmem:[%s4546 + $0x344] sm:$0xf]
                %4967 = vst [vmem:[%s4547 + $0x644] sm:$0xf] %v4966
                %v4968 = vld [vmem:[%s4546 + $0x348] sm:$0xf]
                %4969 = vst [vmem:[%s4547 + $0x648] sm:$0xf] %v4968
                %v4970 = vld [vmem:[%s4546 + $0x34c] sm:$0xf]
                %4971 = vst [vmem:[%s4547 + $0x64c] sm:$0xf] %v4970
                %v4972 = vld [vmem:[%s4546 + $0x350] sm:$0xf]
                %4973 = vst [vmem:[%s4547 + $0x650] sm:$0xf] %v4972
                %v4974 = vld [vmem:[%s4546 + $0x354] sm:$0xf]
                %4975 = vst [vmem:[%s4547 + $0x654] sm:$0xf] %v4974
                %v4976 = vld [vmem:[%s4546 + $0x358] sm:$0xf]
                %4977 = vst [vmem:[%s4547 + $0x658] sm:$0xf] %v4976
                %v4978 = vld [vmem:[%s4546 + $0x35c] sm:$0xf]
                %4979 = vst [vmem:[%s4547 + $0x65c] sm:$0xf] %v4978
                %v4980 = vld [vmem:[%s4546 + $0x360] sm:$0xf]
                %4981 = vst [vmem:[%s4547 + $0x660] sm:$0xf] %v4980
                %v4982 = vld [vmem:[%s4546 + $0x364] sm:$0xf]
                %4983 = vst [vmem:[%s4547 + $0x664] sm:$0xf] %v4982
                %v4984 = vld [vmem:[%s4546 + $0x368] sm:$0xf]
                %4985 = vst [vmem:[%s4547 + $0x668] sm:$0xf] %v4984
                %v4986 = vld [vmem:[%s4546 + $0x36c] sm:$0xf]
                %4987 = vst [vmem:[%s4547 + $0x66c] sm:$0xf] %v4986
                %v4988 = vld [vmem:[%s4546 + $0x370] sm:$0xf]
                %4989 = vst [vmem:[%s4547 + $0x670] sm:$0xf] %v4988
                %v4990 = vld [vmem:[%s4546 + $0x374] sm:$0xf]
                %4991 = vst [vmem:[%s4547 + $0x674] sm:$0xf] %v4990
                %v4992 = vld [vmem:[%s4546 + $0x378] sm:$0xf]
                %4993 = vst [vmem:[%s4547 + $0x678] sm:$0xf] %v4992
                %v4994 = vld [vmem:[%s4546 + $0x37c] sm:$0xf]
                %4995 = vst [vmem:[%s4547 + $0x67c] sm:$0xf] %v4994
                %v4996 = vld [vmem:[%s4546 + $0x380] sm:$0xf]
                %4997 = vst [vmem:[%s4547 + $0x680] sm:$0xf] %v4996
                %v4998 = vld [vmem:[%s4546 + $0x384] sm:$0xf]
                %4999 = vst [vmem:[%s4547 + $0x684] sm:$0xf] %v4998
                %v5000 = vld [vmem:[%s4546 + $0x388] sm:$0xf]
                %5001 = vst [vmem:[%s4547 + $0x688] sm:$0xf] %v5000
                %v5002 = vld [vmem:[%s4546 + $0x38c] sm:$0xf]
                %5003 = vst [vmem:[%s4547 + $0x68c] sm:$0xf] %v5002
                %v5004 = vld [vmem:[%s4546 + $0x390] sm:$0xf]
                %5005 = vst [vmem:[%s4547 + $0x690] sm:$0xf] %v5004
                %v5006 = vld [vmem:[%s4546 + $0x394] sm:$0xf]
                %5007 = vst [vmem:[%s4547 + $0x694] sm:$0xf] %v5006
                %v5008 = vld [vmem:[%s4546 + $0x398] sm:$0xf]
                %5009 = vst [vmem:[%s4547 + $0x698] sm:$0xf] %v5008
                %v5010 = vld [vmem:[%s4546 + $0x39c] sm:$0xf]
                %5011 = vst [vmem:[%s4547 + $0x69c] sm:$0xf] %v5010
                %v5012 = vld [vmem:[%s4546 + $0x3a0] sm:$0xf]
                %5013 = vst [vmem:[%s4547 + $0x6a0] sm:$0xf] %v5012
                %v5014 = vld [vmem:[%s4546 + $0x3a4] sm:$0xf]
                %5015 = vst [vmem:[%s4547 + $0x6a4] sm:$0xf] %v5014
                %v5016 = vld [vmem:[%s4546 + $0x3a8] sm:$0xf]
                %5017 = vst [vmem:[%s4547 + $0x6a8] sm:$0xf] %v5016
                %v5018 = vld [vmem:[%s4546 + $0x3ac] sm:$0xf]
                %5019 = vst [vmem:[%s4547 + $0x6ac] sm:$0xf] %v5018
                %v5020 = vld [vmem:[%s4546 + $0x3b0] sm:$0xf]
                %5021 = vst [vmem:[%s4547 + $0x6b0] sm:$0xf] %v5020
                %v5022 = vld [vmem:[%s4546 + $0x3b4] sm:$0xf]
                %5023 = vst [vmem:[%s4547 + $0x6b4] sm:$0xf] %v5022
                %v5024 = vld [vmem:[%s4546 + $0x3b8] sm:$0xf]
                %5025 = vst [vmem:[%s4547 + $0x6b8] sm:$0xf] %v5024
                %v5026 = vld [vmem:[%s4546 + $0x3bc] sm:$0xf]
                %5027 = vst [vmem:[%s4547 + $0x6bc] sm:$0xf] %v5026
                %v5028 = vld [vmem:[%s4546 + $0x3c0] sm:$0xf]
                %5029 = vst [vmem:[%s4547 + $0x6c0] sm:$0xf] %v5028
                %v5030 = vld [vmem:[%s4546 + $0x3c4] sm:$0xf]
                %5031 = vst [vmem:[%s4547 + $0x6c4] sm:$0xf] %v5030
                %v5032 = vld [vmem:[%s4546 + $0x3c8] sm:$0xf]
                %5033 = vst [vmem:[%s4547 + $0x6c8] sm:$0xf] %v5032
                %v5034 = vld [vmem:[%s4546 + $0x3cc] sm:$0xf]
                %5035 = vst [vmem:[%s4547 + $0x6cc] sm:$0xf] %v5034
                %v5036 = vld [vmem:[%s4546 + $0x3d0] sm:$0xf]
                %5037 = vst [vmem:[%s4547 + $0x6d0] sm:$0xf] %v5036
                %v5038 = vld [vmem:[%s4546 + $0x3d4] sm:$0xf]
                %5039 = vst [vmem:[%s4547 + $0x6d4] sm:$0xf] %v5038
                %v5040 = vld [vmem:[%s4546 + $0x3d8] sm:$0xf]
                %5041 = vst [vmem:[%s4547 + $0x6d8] sm:$0xf] %v5040
                %v5042 = vld [vmem:[%s4546 + $0x3dc] sm:$0xf]
                %5043 = vst [vmem:[%s4547 + $0x6dc] sm:$0xf] %v5042
                %v5044 = vld [vmem:[%s4546 + $0x3e0] sm:$0xf]
                %5045 = vst [vmem:[%s4547 + $0x6e0] sm:$0xf] %v5044
                %v5046 = vld [vmem:[%s4546 + $0x3e4] sm:$0xf]
                %5047 = vst [vmem:[%s4547 + $0x6e4] sm:$0xf] %v5046
                %v5048 = vld [vmem:[%s4546 + $0x3e8] sm:$0xf]
                %5049 = vst [vmem:[%s4547 + $0x6e8] sm:$0xf] %v5048
                %v5050 = vld [vmem:[%s4546 + $0x3ec] sm:$0xf]
                %5051 = vst [vmem:[%s4547 + $0x6ec] sm:$0xf] %v5050
                %v5052 = vld [vmem:[%s4546 + $0x3f0] sm:$0xf]
                %5053 = vst [vmem:[%s4547 + $0x6f0] sm:$0xf] %v5052
                %v5054 = vld [vmem:[%s4546 + $0x3f4] sm:$0xf]
                %5055 = vst [vmem:[%s4547 + $0x6f4] sm:$0xf] %v5054
                %v5056 = vld [vmem:[%s4546 + $0x3f8] sm:$0xf]
                %5057 = vst [vmem:[%s4547 + $0x6f8] sm:$0xf] %v5056
                %v5058 = vld [vmem:[%s4546 + $0x3fc] sm:$0xf]
                %5059 = vst [vmem:[%s4547 + $0x6fc] sm:$0xf] %v5058
              $region53: #{tpu_custom_call.1} parent=47 // loop_footer
                %s4545 = sadd.s32 1, %s4541
              $region54: #{tpu_custom_call.1} parent=47 // loop_footer_branch
                %4540 = sbr.rel target = $region50
              $region55: #{tpu_custom_call.1} parent=47 // loop_exit
                _
            $region48: #{tpu_custom_call.1} parent=39 // pred_fallthru
              _
          $region40: #{tpu_custom_call.1} parent=35 // pred_fallthru
            _
          %5591 = vnop
        $region36: #{tpu_custom_call.1} parent=27 // pred_fallthru
          _
        // Predicated region
        $region74: #{tpu_custom_call.1} parent=27 // pred_check
          %p5592 = pneg %p126
        $region75: #{tpu_custom_call.1} parent=27 // pred_check_branch
          %5594 = sbr.rel (%p5592) target = $region77
        $region76: #{tpu_custom_call.1} parent=27 // pred_region
          %s5595 = smul.u32 64, %s22
          %s5596 = smul.addr %s21, 512
          %s5597 = sadd.s32 %s5595, %s5596
          %s5598 = smul.addr %s5597, 4
          %s5599 = scalar_lea.vmem %s3, %s5598
          // Predicated region
          $region78: #{tpu_custom_call.1} parent=76 // pred_check
            _
          $region79: #{tpu_custom_call.1} parent=76 // pred_check_branch
            %5601 = sbr.rel (0) target = $region81
          $region80: #{tpu_custom_call.1} parent=76 // pred_region
            // Predicated region
            $region82: #{tpu_custom_call.1} parent=80 // pred_check
              _
            $region83: #{tpu_custom_call.1} parent=80 // pred_check_branch
              %5603 = sbr.rel target = $region85
            $region84: #{tpu_custom_call.1} parent=80 // pred_region
              // Predicated region
              $region97: #{tpu_custom_call.1} parent=84 // pred_check
                _
              $region98: #{tpu_custom_call.1} parent=84 // pred_check_branch
                %6128 = sbr.rel (0) target = $region100
              $region99: #{tpu_custom_call.1} parent=84 // pred_region
                loop: start=0, step=1, limit=1
                $region101: #{tpu_custom_call.1} parent=99 // loop_pre_header
                  _
                $region102: #{tpu_custom_call.1} parent=99 // loop_header
                  %s6130 = sphi 0, %s6134
                  %p6131 = scmp.ge.s32.totalorder %s6130, 1
                  %s6135 = sphi %s4520, %s4520
                  %s6136 = sphi %s5599, %s5599
                $region103: #{tpu_custom_call.1} parent=99 // loop_header_branch
                  %6133 = sbr.rel (%p6131) target = $region107
                $region104: #{tpu_custom_call.1} parent=99 // loop_body
                  _
                $region105: #{tpu_custom_call.1} parent=99 // loop_footer
                  %s6134 = sadd.s32 1, %s6130
                $region106: #{tpu_custom_call.1} parent=99 // loop_footer_branch
                  %6129 = sbr.rel target = $region102
                $region107: #{tpu_custom_call.1} parent=99 // loop_exit
                  _
                loop: start=0, step=1, limit=1
                $region108: #{tpu_custom_call.1} parent=99 // loop_pre_header
                  _
                $region109: #{tpu_custom_call.1} parent=99 // loop_header
                  %s6139 = sphi 0, %s6143
                  %p6140 = scmp.ge.s32.totalorder %s6139, 1
                  %s6144 = sphi %s4520, %s4520
                  %s6145 = sphi %s5599, %s5599
                $region110: #{tpu_custom_call.1} parent=99 // loop_header_branch
                  %6142 = sbr.rel (%p6140) target = $region114
                $region111: #{tpu_custom_call.1} parent=99 // loop_body
                  %v6146 = vld [vmem:[%s6144] sm:$0xf]
                  %6147 = vst [vmem:[%s6145] sm:$0xf] %v6146
                  %v6148 = vld [vmem:[%s6144 + $0x4] sm:$0xf]
                  %6149 = vst [vmem:[%s6145 + $0x4] sm:$0xf] %v6148
                  %v6150 = vld [vmem:[%s6144 + $0x8] sm:$0xf]
                  %6151 = vst [vmem:[%s6145 + $0x8] sm:$0xf] %v6150
                  %v6152 = vld [vmem:[%s6144 + $0xc] sm:$0xf]
                  %6153 = vst [vmem:[%s6145 + $0xc] sm:$0xf] %v6152
                  %v6154 = vld [vmem:[%s6144 + $0x10] sm:$0xf]
                  %6155 = vst [vmem:[%s6145 + $0x10] sm:$0xf] %v6154
                  %v6156 = vld [vmem:[%s6144 + $0x14] sm:$0xf]
                  %6157 = vst [vmem:[%s6145 + $0x14] sm:$0xf] %v6156
                  %v6158 = vld [vmem:[%s6144 + $0x18] sm:$0xf]
                  %6159 = vst [vmem:[%s6145 + $0x18] sm:$0xf] %v6158
                  %v6160 = vld [vmem:[%s6144 + $0x1c] sm:$0xf]
                  %6161 = vst [vmem:[%s6145 + $0x1c] sm:$0xf] %v6160
                  %v6162 = vld [vmem:[%s6144 + $0x20] sm:$0xf]
                  %6163 = vst [vmem:[%s6145 + $0x20] sm:$0xf] %v6162
                  %v6164 = vld [vmem:[%s6144 + $0x24] sm:$0xf]
                  %6165 = vst [vmem:[%s6145 + $0x24] sm:$0xf] %v6164
                  %v6166 = vld [vmem:[%s6144 + $0x28] sm:$0xf]
                  %6167 = vst [vmem:[%s6145 + $0x28] sm:$0xf] %v6166
                  %v6168 = vld [vmem:[%s6144 + $0x2c] sm:$0xf]
                  %6169 = vst [vmem:[%s6145 + $0x2c] sm:$0xf] %v6168
                  %v6170 = vld [vmem:[%s6144 + $0x30] sm:$0xf]
                  %6171 = vst [vmem:[%s6145 + $0x30] sm:$0xf] %v6170
                  %v6172 = vld [vmem:[%s6144 + $0x34] sm:$0xf]
                  %6173 = vst [vmem:[%s6145 + $0x34] sm:$0xf] %v6172
                  %v6174 = vld [vmem:[%s6144 + $0x38] sm:$0xf]
                  %6175 = vst [vmem:[%s6145 + $0x38] sm:$0xf] %v6174
                  %v6176 = vld [vmem:[%s6144 + $0x3c] sm:$0xf]
                  %6177 = vst [vmem:[%s6145 + $0x3c] sm:$0xf] %v6176
                  %v6178 = vld [vmem:[%s6144 + $0x40] sm:$0xf]
                  %6179 = vst [vmem:[%s6145 + $0x40] sm:$0xf] %v6178
                  %v6180 = vld [vmem:[%s6144 + $0x44] sm:$0xf]
                  %6181 = vst [vmem:[%s6145 + $0x44] sm:$0xf] %v6180
                  %v6182 = vld [vmem:[%s6144 + $0x48] sm:$0xf]
                  %6183 = vst [vmem:[%s6145 + $0x48] sm:$0xf] %v6182
                  %v6184 = vld [vmem:[%s6144 + $0x4c] sm:$0xf]
                  %6185 = vst [vmem:[%s6145 + $0x4c] sm:$0xf] %v6184
                  %v6186 = vld [vmem:[%s6144 + $0x50] sm:$0xf]
                  %6187 = vst [vmem:[%s6145 + $0x50] sm:$0xf] %v6186
                  %v6188 = vld [vmem:[%s6144 + $0x54] sm:$0xf]
                  %6189 = vst [vmem:[%s6145 + $0x54] sm:$0xf] %v6188
                  %v6190 = vld [vmem:[%s6144 + $0x58] sm:$0xf]
                  %6191 = vst [vmem:[%s6145 + $0x58] sm:$0xf] %v6190
                  %v6192 = vld [vmem:[%s6144 + $0x5c] sm:$0xf]
                  %6193 = vst [vmem:[%s6145 + $0x5c] sm:$0xf] %v6192
                  %v6194 = vld [vmem:[%s6144 + $0x60] sm:$0xf]
                  %6195 = vst [vmem:[%s6145 + $0x60] sm:$0xf] %v6194
                  %v6196 = vld [vmem:[%s6144 + $0x64] sm:$0xf]
                  %6197 = vst [vmem:[%s6145 + $0x64] sm:$0xf] %v6196
                  %v6198 = vld [vmem:[%s6144 + $0x68] sm:$0xf]
                  %6199 = vst [vmem:[%s6145 + $0x68] sm:$0xf] %v6198
                  %v6200 = vld [vmem:[%s6144 + $0x6c] sm:$0xf]
                  %6201 = vst [vmem:[%s6145 + $0x6c] sm:$0xf] %v6200
                  %v6202 = vld [vmem:[%s6144 + $0x70] sm:$0xf]
                  %6203 = vst [vmem:[%s6145 + $0x70] sm:$0xf] %v6202
                  %v6204 = vld [vmem:[%s6144 + $0x74] sm:$0xf]
                  %6205 = vst [vmem:[%s6145 + $0x74] sm:$0xf] %v6204
                  %v6206 = vld [vmem:[%s6144 + $0x78] sm:$0xf]
                  %6207 = vst [vmem:[%s6145 + $0x78] sm:$0xf] %v6206
                  %v6208 = vld [vmem:[%s6144 + $0x7c] sm:$0xf]
                  %6209 = vst [vmem:[%s6145 + $0x7c] sm:$0xf] %v6208
                  %v6210 = vld [vmem:[%s6144 + $0x80] sm:$0xf]
                  %6211 = vst [vmem:[%s6145 + $0x80] sm:$0xf] %v6210
                  %v6212 = vld [vmem:[%s6144 + $0x84] sm:$0xf]
                  %6213 = vst [vmem:[%s6145 + $0x84] sm:$0xf] %v6212
                  %v6214 = vld [vmem:[%s6144 + $0x88] sm:$0xf]
                  %6215 = vst [vmem:[%s6145 + $0x88] sm:$0xf] %v6214
                  %v6216 = vld [vmem:[%s6144 + $0x8c] sm:$0xf]
                  %6217 = vst [vmem:[%s6145 + $0x8c] sm:$0xf] %v6216
                  %v6218 = vld [vmem:[%s6144 + $0x90] sm:$0xf]
                  %6219 = vst [vmem:[%s6145 + $0x90] sm:$0xf] %v6218
                  %v6220 = vld [vmem:[%s6144 + $0x94] sm:$0xf]
                  %6221 = vst [vmem:[%s6145 + $0x94] sm:$0xf] %v6220
                  %v6222 = vld [vmem:[%s6144 + $0x98] sm:$0xf]
                  %6223 = vst [vmem:[%s6145 + $0x98] sm:$0xf] %v6222
                  %v6224 = vld [vmem:[%s6144 + $0x9c] sm:$0xf]
                  %6225 = vst [vmem:[%s6145 + $0x9c] sm:$0xf] %v6224
                  %v6226 = vld [vmem:[%s6144 + $0xa0] sm:$0xf]
                  %6227 = vst [vmem:[%s6145 + $0xa0] sm:$0xf] %v6226
                  %v6228 = vld [vmem:[%s6144 + $0xa4] sm:$0xf]
                  %6229 = vst [vmem:[%s6145 + $0xa4] sm:$0xf] %v6228
                  %v6230 = vld [vmem:[%s6144 + $0xa8] sm:$0xf]
                  %6231 = vst [vmem:[%s6145 + $0xa8] sm:$0xf] %v6230
                  %v6232 = vld [vmem:[%s6144 + $0xac] sm:$0xf]
                  %6233 = vst [vmem:[%s6145 + $0xac] sm:$0xf] %v6232
                  %v6234 = vld [vmem:[%s6144 + $0xb0] sm:$0xf]
                  %6235 = vst [vmem:[%s6145 + $0xb0] sm:$0xf] %v6234
                  %v6236 = vld [vmem:[%s6144 + $0xb4] sm:$0xf]
                  %6237 = vst [vmem:[%s6145 + $0xb4] sm:$0xf] %v6236
                  %v6238 = vld [vmem:[%s6144 + $0xb8] sm:$0xf]
                  %6239 = vst [vmem:[%s6145 + $0xb8] sm:$0xf] %v6238
                  %v6240 = vld [vmem:[%s6144 + $0xbc] sm:$0xf]
                  %6241 = vst [vmem:[%s6145 + $0xbc] sm:$0xf] %v6240
                  %v6242 = vld [vmem:[%s6144 + $0xc0] sm:$0xf]
                  %6243 = vst [vmem:[%s6145 + $0xc0] sm:$0xf] %v6242
                  %v6244 = vld [vmem:[%s6144 + $0xc4] sm:$0xf]
                  %6245 = vst [vmem:[%s6145 + $0xc4] sm:$0xf] %v6244
                  %v6246 = vld [vmem:[%s6144 + $0xc8] sm:$0xf]
                  %6247 = vst [vmem:[%s6145 + $0xc8] sm:$0xf] %v6246
                  %v6248 = vld [vmem:[%s6144 + $0xcc] sm:$0xf]
                  %6249 = vst [vmem:[%s6145 + $0xcc] sm:$0xf] %v6248
                  %v6250 = vld [vmem:[%s6144 + $0xd0] sm:$0xf]
                  %6251 = vst [vmem:[%s6145 + $0xd0] sm:$0xf] %v6250
                  %v6252 = vld [vmem:[%s6144 + $0xd4] sm:$0xf]
                  %6253 = vst [vmem:[%s6145 + $0xd4] sm:$0xf] %v6252
                  %v6254 = vld [vmem:[%s6144 + $0xd8] sm:$0xf]
                  %6255 = vst [vmem:[%s6145 + $0xd8] sm:$0xf] %v6254
                  %v6256 = vld [vmem:[%s6144 + $0xdc] sm:$0xf]
                  %6257 = vst [vmem:[%s6145 + $0xdc] sm:$0xf] %v6256
                  %v6258 = vld [vmem:[%s6144 + $0xe0] sm:$0xf]
                  %6259 = vst [vmem:[%s6145 + $0xe0] sm:$0xf] %v6258
                  %v6260 = vld [vmem:[%s6144 + $0xe4] sm:$0xf]
                  %6261 = vst [vmem:[%s6145 + $0xe4] sm:$0xf] %v6260
                  %v6262 = vld [vmem:[%s6144 + $0xe8] sm:$0xf]
                  %6263 = vst [vmem:[%s6145 + $0xe8] sm:$0xf] %v6262
                  %v6264 = vld [vmem:[%s6144 + $0xec] sm:$0xf]
                  %6265 = vst [vmem:[%s6145 + $0xec] sm:$0xf] %v6264
                  %v6266 = vld [vmem:[%s6144 + $0xf0] sm:$0xf]
                  %6267 = vst [vmem:[%s6145 + $0xf0] sm:$0xf] %v6266
                  %v6268 = vld [vmem:[%s6144 + $0xf4] sm:$0xf]
                  %6269 = vst [vmem:[%s6145 + $0xf4] sm:$0xf] %v6268
                  %v6270 = vld [vmem:[%s6144 + $0xf8] sm:$0xf]
                  %6271 = vst [vmem:[%s6145 + $0xf8] sm:$0xf] %v6270
                  %v6272 = vld [vmem:[%s6144 + $0xfc] sm:$0xf]
                  %6273 = vst [vmem:[%s6145 + $0xfc] sm:$0xf] %v6272
                  %v6274 = vld [vmem:[%s6144 + $0x100] sm:$0xf]
                  %6275 = vst [vmem:[%s6145 + $0x200] sm:$0xf] %v6274
                  %v6276 = vld [vmem:[%s6144 + $0x104] sm:$0xf]
                  %6277 = vst [vmem:[%s6145 + $0x204] sm:$0xf] %v6276
                  %v6278 = vld [vmem:[%s6144 + $0x108] sm:$0xf]
                  %6279 = vst [vmem:[%s6145 + $0x208] sm:$0xf] %v6278
                  %v6280 = vld [vmem:[%s6144 + $0x10c] sm:$0xf]
                  %6281 = vst [vmem:[%s6145 + $0x20c] sm:$0xf] %v6280
                  %v6282 = vld [vmem:[%s6144 + $0x110] sm:$0xf]
                  %6283 = vst [vmem:[%s6145 + $0x210] sm:$0xf] %v6282
                  %v6284 = vld [vmem:[%s6144 + $0x114] sm:$0xf]
                  %6285 = vst [vmem:[%s6145 + $0x214] sm:$0xf] %v6284
                  %v6286 = vld [vmem:[%s6144 + $0x118] sm:$0xf]
                  %6287 = vst [vmem:[%s6145 + $0x218] sm:$0xf] %v6286
                  %v6288 = vld [vmem:[%s6144 + $0x11c] sm:$0xf]
                  %6289 = vst [vmem:[%s6145 + $0x21c] sm:$0xf] %v6288
                  %v6290 = vld [vmem:[%s6144 + $0x120] sm:$0xf]
                  %6291 = vst [vmem:[%s6145 + $0x220] sm:$0xf] %v6290
                  %v6292 = vld [vmem:[%s6144 + $0x124] sm:$0xf]
                  %6293 = vst [vmem:[%s6145 + $0x224] sm:$0xf] %v6292
                  %v6294 = vld [vmem:[%s6144 + $0x128] sm:$0xf]
                  %6295 = vst [vmem:[%s6145 + $0x228] sm:$0xf] %v6294
                  %v6296 = vld [vmem:[%s6144 + $0x12c] sm:$0xf]
                  %6297 = vst [vmem:[%s6145 + $0x22c] sm:$0xf] %v6296
                  %v6298 = vld [vmem:[%s6144 + $0x130] sm:$0xf]
                  %6299 = vst [vmem:[%s6145 + $0x230] sm:$0xf] %v6298
                  %v6300 = vld [vmem:[%s6144 + $0x134] sm:$0xf]
                  %6301 = vst [vmem:[%s6145 + $0x234] sm:$0xf] %v6300
                  %v6302 = vld [vmem:[%s6144 + $0x138] sm:$0xf]
                  %6303 = vst [vmem:[%s6145 + $0x238] sm:$0xf] %v6302
                  %v6304 = vld [vmem:[%s6144 + $0x13c] sm:$0xf]
                  %6305 = vst [vmem:[%s6145 + $0x23c] sm:$0xf] %v6304
                  %v6306 = vld [vmem:[%s6144 + $0x140] sm:$0xf]
                  %6307 = vst [vmem:[%s6145 + $0x240] sm:$0xf] %v6306
                  %v6308 = vld [vmem:[%s6144 + $0x144] sm:$0xf]
                  %6309 = vst [vmem:[%s6145 + $0x244] sm:$0xf] %v6308
                  %v6310 = vld [vmem:[%s6144 + $0x148] sm:$0xf]
                  %6311 = vst [vmem:[%s6145 + $0x248] sm:$0xf] %v6310
                  %v6312 = vld [vmem:[%s6144 + $0x14c] sm:$0xf]
                  %6313 = vst [vmem:[%s6145 + $0x24c] sm:$0xf] %v6312
                  %v6314 = vld [vmem:[%s6144 + $0x150] sm:$0xf]
                  %6315 = vst [vmem:[%s6145 + $0x250] sm:$0xf] %v6314
                  %v6316 = vld [vmem:[%s6144 + $0x154] sm:$0xf]
                  %6317 = vst [vmem:[%s6145 + $0x254] sm:$0xf] %v6316
                  %v6318 = vld [vmem:[%s6144 + $0x158] sm:$0xf]
                  %6319 = vst [vmem:[%s6145 + $0x258] sm:$0xf] %v6318
                  %v6320 = vld [vmem:[%s6144 + $0x15c] sm:$0xf]
                  %6321 = vst [vmem:[%s6145 + $0x25c] sm:$0xf] %v6320
                  %v6322 = vld [vmem:[%s6144 + $0x160] sm:$0xf]
                  %6323 = vst [vmem:[%s6145 + $0x260] sm:$0xf] %v6322
                  %v6324 = vld [vmem:[%s6144 + $0x164] sm:$0xf]
                  %6325 = vst [vmem:[%s6145 + $0x264] sm:$0xf] %v6324
                  %v6326 = vld [vmem:[%s6144 + $0x168] sm:$0xf]
                  %6327 = vst [vmem:[%s6145 + $0x268] sm:$0xf] %v6326
                  %v6328 = vld [vmem:[%s6144 + $0x16c] sm:$0xf]
                  %6329 = vst [vmem:[%s6145 + $0x26c] sm:$0xf] %v6328
                  %v6330 = vld [vmem:[%s6144 + $0x170] sm:$0xf]
                  %6331 = vst [vmem:[%s6145 + $0x270] sm:$0xf] %v6330
                  %v6332 = vld [vmem:[%s6144 + $0x174] sm:$0xf]
                  %6333 = vst [vmem:[%s6145 + $0x274] sm:$0xf] %v6332
                  %v6334 = vld [vmem:[%s6144 + $0x178] sm:$0xf]
                  %6335 = vst [vmem:[%s6145 + $0x278] sm:$0xf] %v6334
                  %v6336 = vld [vmem:[%s6144 + $0x17c] sm:$0xf]
                  %6337 = vst [vmem:[%s6145 + $0x27c] sm:$0xf] %v6336
                  %v6338 = vld [vmem:[%s6144 + $0x180] sm:$0xf]
                  %6339 = vst [vmem:[%s6145 + $0x280] sm:$0xf] %v6338
                  %v6340 = vld [vmem:[%s6144 + $0x184] sm:$0xf]
                  %6341 = vst [vmem:[%s6145 + $0x284] sm:$0xf] %v6340
                  %v6342 = vld [vmem:[%s6144 + $0x188] sm:$0xf]
                  %6343 = vst [vmem:[%s6145 + $0x288] sm:$0xf] %v6342
                  %v6344 = vld [vmem:[%s6144 + $0x18c] sm:$0xf]
                  %6345 = vst [vmem:[%s6145 + $0x28c] sm:$0xf] %v6344
                  %v6346 = vld [vmem:[%s6144 + $0x190] sm:$0xf]
                  %6347 = vst [vmem:[%s6145 + $0x290] sm:$0xf] %v6346
                  %v6348 = vld [vmem:[%s6144 + $0x194] sm:$0xf]
                  %6349 = vst [vmem:[%s6145 + $0x294] sm:$0xf] %v6348
                  %v6350 = vld [vmem:[%s6144 + $0x198] sm:$0xf]
                  %6351 = vst [vmem:[%s6145 + $0x298] sm:$0xf] %v6350
                  %v6352 = vld [vmem:[%s6144 + $0x19c] sm:$0xf]
                  %6353 = vst [vmem:[%s6145 + $0x29c] sm:$0xf] %v6352
                  %v6354 = vld [vmem:[%s6144 + $0x1a0] sm:$0xf]
                  %6355 = vst [vmem:[%s6145 + $0x2a0] sm:$0xf] %v6354
                  %v6356 = vld [vmem:[%s6144 + $0x1a4] sm:$0xf]
                  %6357 = vst [vmem:[%s6145 + $0x2a4] sm:$0xf] %v6356
                  %v6358 = vld [vmem:[%s6144 + $0x1a8] sm:$0xf]
                  %6359 = vst [vmem:[%s6145 + $0x2a8] sm:$0xf] %v6358
                  %v6360 = vld [vmem:[%s6144 + $0x1ac] sm:$0xf]
                  %6361 = vst [vmem:[%s6145 + $0x2ac] sm:$0xf] %v6360
                  %v6362 = vld [vmem:[%s6144 + $0x1b0] sm:$0xf]
                  %6363 = vst [vmem:[%s6145 + $0x2b0] sm:$0xf] %v6362
                  %v6364 = vld [vmem:[%s6144 + $0x1b4] sm:$0xf]
                  %6365 = vst [vmem:[%s6145 + $0x2b4] sm:$0xf] %v6364
                  %v6366 = vld [vmem:[%s6144 + $0x1b8] sm:$0xf]
                  %6367 = vst [vmem:[%s6145 + $0x2b8] sm:$0xf] %v6366
                  %v6368 = vld [vmem:[%s6144 + $0x1bc] sm:$0xf]
                  %6369 = vst [vmem:[%s6145 + $0x2bc] sm:$0xf] %v6368
                  %v6370 = vld [vmem:[%s6144 + $0x1c0] sm:$0xf]
                  %6371 = vst [vmem:[%s6145 + $0x2c0] sm:$0xf] %v6370
                  %v6372 = vld [vmem:[%s6144 + $0x1c4] sm:$0xf]
                  %6373 = vst [vmem:[%s6145 + $0x2c4] sm:$0xf] %v6372
                  %v6374 = vld [vmem:[%s6144 + $0x1c8] sm:$0xf]
                  %6375 = vst [vmem:[%s6145 + $0x2c8] sm:$0xf] %v6374
                  %v6376 = vld [vmem:[%s6144 + $0x1cc] sm:$0xf]
                  %6377 = vst [vmem:[%s6145 + $0x2cc] sm:$0xf] %v6376
                  %v6378 = vld [vmem:[%s6144 + $0x1d0] sm:$0xf]
                  %6379 = vst [vmem:[%s6145 + $0x2d0] sm:$0xf] %v6378
                  %v6380 = vld [vmem:[%s6144 + $0x1d4] sm:$0xf]
                  %6381 = vst [vmem:[%s6145 + $0x2d4] sm:$0xf] %v6380
                  %v6382 = vld [vmem:[%s6144 + $0x1d8] sm:$0xf]
                  %6383 = vst [vmem:[%s6145 + $0x2d8] sm:$0xf] %v6382
                  %v6384 = vld [vmem:[%s6144 + $0x1dc] sm:$0xf]
                  %6385 = vst [vmem:[%s6145 + $0x2dc] sm:$0xf] %v6384
                  %v6386 = vld [vmem:[%s6144 + $0x1e0] sm:$0xf]
                  %6387 = vst [vmem:[%s6145 + $0x2e0] sm:$0xf] %v6386
                  %v6388 = vld [vmem:[%s6144 + $0x1e4] sm:$0xf]
                  %6389 = vst [vmem:[%s6145 + $0x2e4] sm:$0xf] %v6388
                  %v6390 = vld [vmem:[%s6144 + $0x1e8] sm:$0xf]
                  %6391 = vst [vmem:[%s6145 + $0x2e8] sm:$0xf] %v6390
                  %v6392 = vld [vmem:[%s6144 + $0x1ec] sm:$0xf]
                  %6393 = vst [vmem:[%s6145 + $0x2ec] sm:$0xf] %v6392
                  %v6394 = vld [vmem:[%s6144 + $0x1f0] sm:$0xf]
                  %6395 = vst [vmem:[%s6145 + $0x2f0] sm:$0xf] %v6394
                  %v6396 = vld [vmem:[%s6144 + $0x1f4] sm:$0xf]
                  %6397 = vst [vmem:[%s6145 + $0x2f4] sm:$0xf] %v6396
                  %v6398 = vld [vmem:[%s6144 + $0x1f8] sm:$0xf]
                  %6399 = vst [vmem:[%s6145 + $0x2f8] sm:$0xf] %v6398
                  %v6400 = vld [vmem:[%s6144 + $0x1fc] sm:$0xf]
                  %6401 = vst [vmem:[%s6145 + $0x2fc] sm:$0xf] %v6400
                  %v6402 = vld [vmem:[%s6144 + $0x200] sm:$0xf]
                  %6403 = vst [vmem:[%s6145 + $0x400] sm:$0xf] %v6402
                  %v6404 = vld [vmem:[%s6144 + $0x204] sm:$0xf]
                  %6405 = vst [vmem:[%s6145 + $0x404] sm:$0xf] %v6404
                  %v6406 = vld [vmem:[%s6144 + $0x208] sm:$0xf]
                  %6407 = vst [vmem:[%s6145 + $0x408] sm:$0xf] %v6406
                  %v6408 = vld [vmem:[%s6144 + $0x20c] sm:$0xf]
                  %6409 = vst [vmem:[%s6145 + $0x40c] sm:$0xf] %v6408
                  %v6410 = vld [vmem:[%s6144 + $0x210] sm:$0xf]
                  %6411 = vst [vmem:[%s6145 + $0x410] sm:$0xf] %v6410
                  %v6412 = vld [vmem:[%s6144 + $0x214] sm:$0xf]
                  %6413 = vst [vmem:[%s6145 + $0x414] sm:$0xf] %v6412
                  %v6414 = vld [vmem:[%s6144 + $0x218] sm:$0xf]
                  %6415 = vst [vmem:[%s6145 + $0x418] sm:$0xf] %v6414
                  %v6416 = vld [vmem:[%s6144 + $0x21c] sm:$0xf]
                  %6417 = vst [vmem:[%s6145 + $0x41c] sm:$0xf] %v6416
                  %v6418 = vld [vmem:[%s6144 + $0x220] sm:$0xf]
                  %6419 = vst [vmem:[%s6145 + $0x420] sm:$0xf] %v6418
                  %v6420 = vld [vmem:[%s6144 + $0x224] sm:$0xf]
                  %6421 = vst [vmem:[%s6145 + $0x424] sm:$0xf] %v6420
                  %v6422 = vld [vmem:[%s6144 + $0x228] sm:$0xf]
                  %6423 = vst [vmem:[%s6145 + $0x428] sm:$0xf] %v6422
                  %v6424 = vld [vmem:[%s6144 + $0x22c] sm:$0xf]
                  %6425 = vst [vmem:[%s6145 + $0x42c] sm:$0xf] %v6424
                  %v6426 = vld [vmem:[%s6144 + $0x230] sm:$0xf]
                  %6427 = vst [vmem:[%s6145 + $0x430] sm:$0xf] %v6426
                  %v6428 = vld [vmem:[%s6144 + $0x234] sm:$0xf]
                  %6429 = vst [vmem:[%s6145 + $0x434] sm:$0xf] %v6428
                  %v6430 = vld [vmem:[%s6144 + $0x238] sm:$0xf]
                  %6431 = vst [vmem:[%s6145 + $0x438] sm:$0xf] %v6430
                  %v6432 = vld [vmem:[%s6144 + $0x23c] sm:$0xf]
                  %6433 = vst [vmem:[%s6145 + $0x43c] sm:$0xf] %v6432
                  %v6434 = vld [vmem:[%s6144 + $0x240] sm:$0xf]
                  %6435 = vst [vmem:[%s6145 + $0x440] sm:$0xf] %v6434
                  %v6436 = vld [vmem:[%s6144 + $0x244] sm:$0xf]
                  %6437 = vst [vmem:[%s6145 + $0x444] sm:$0xf] %v6436
                  %v6438 = vld [vmem:[%s6144 + $0x248] sm:$0xf]
                  %6439 = vst [vmem:[%s6145 + $0x448] sm:$0xf] %v6438
                  %v6440 = vld [vmem:[%s6144 + $0x24c] sm:$0xf]
                  %6441 = vst [vmem:[%s6145 + $0x44c] sm:$0xf] %v6440
                  %v6442 = vld [vmem:[%s6144 + $0x250] sm:$0xf]
                  %6443 = vst [vmem:[%s6145 + $0x450] sm:$0xf] %v6442
                  %v6444 = vld [vmem:[%s6144 + $0x254] sm:$0xf]
                  %6445 = vst [vmem:[%s6145 + $0x454] sm:$0xf] %v6444
                  %v6446 = vld [vmem:[%s6144 + $0x258] sm:$0xf]
                  %6447 = vst [vmem:[%s6145 + $0x458] sm:$0xf] %v6446
                  %v6448 = vld [vmem:[%s6144 + $0x25c] sm:$0xf]
                  %6449 = vst [vmem:[%s6145 + $0x45c] sm:$0xf] %v6448
                  %v6450 = vld [vmem:[%s6144 + $0x260] sm:$0xf]
                  %6451 = vst [vmem:[%s6145 + $0x460] sm:$0xf] %v6450
                  %v6452 = vld [vmem:[%s6144 + $0x264] sm:$0xf]
                  %6453 = vst [vmem:[%s6145 + $0x464] sm:$0xf] %v6452
                  %v6454 = vld [vmem:[%s6144 + $0x268] sm:$0xf]
                  %6455 = vst [vmem:[%s6145 + $0x468] sm:$0xf] %v6454
                  %v6456 = vld [vmem:[%s6144 + $0x26c] sm:$0xf]
                  %6457 = vst [vmem:[%s6145 + $0x46c] sm:$0xf] %v6456
                  %v6458 = vld [vmem:[%s6144 + $0x270] sm:$0xf]
                  %6459 = vst [vmem:[%s6145 + $0x470] sm:$0xf] %v6458
                  %v6460 = vld [vmem:[%s6144 + $0x274] sm:$0xf]
                  %6461 = vst [vmem:[%s6145 + $0x474] sm:$0xf] %v6460
                  %v6462 = vld [vmem:[%s6144 + $0x278] sm:$0xf]
                  %6463 = vst [vmem:[%s6145 + $0x478] sm:$0xf] %v6462
                  %v6464 = vld [vmem:[%s6144 + $0x27c] sm:$0xf]
                  %6465 = vst [vmem:[%s6145 + $0x47c] sm:$0xf] %v6464
                  %v6466 = vld [vmem:[%s6144 + $0x280] sm:$0xf]
                  %6467 = vst [vmem:[%s6145 + $0x480] sm:$0xf] %v6466
                  %v6468 = vld [vmem:[%s6144 + $0x284] sm:$0xf]
                  %6469 = vst [vmem:[%s6145 + $0x484] sm:$0xf] %v6468
                  %v6470 = vld [vmem:[%s6144 + $0x288] sm:$0xf]
                  %6471 = vst [vmem:[%s6145 + $0x488] sm:$0xf] %v6470
                  %v6472 = vld [vmem:[%s6144 + $0x28c] sm:$0xf]
                  %6473 = vst [vmem:[%s6145 + $0x48c] sm:$0xf] %v6472
                  %v6474 = vld [vmem:[%s6144 + $0x290] sm:$0xf]
                  %6475 = vst [vmem:[%s6145 + $0x490] sm:$0xf] %v6474
                  %v6476 = vld [vmem:[%s6144 + $0x294] sm:$0xf]
                  %6477 = vst [vmem:[%s6145 + $0x494] sm:$0xf] %v6476
                  %v6478 = vld [vmem:[%s6144 + $0x298] sm:$0xf]
                  %6479 = vst [vmem:[%s6145 + $0x498] sm:$0xf] %v6478
                  %v6480 = vld [vmem:[%s6144 + $0x29c] sm:$0xf]
                  %6481 = vst [vmem:[%s6145 + $0x49c] sm:$0xf] %v6480
                  %v6482 = vld [vmem:[%s6144 + $0x2a0] sm:$0xf]
                  %6483 = vst [vmem:[%s6145 + $0x4a0] sm:$0xf] %v6482
                  %v6484 = vld [vmem:[%s6144 + $0x2a4] sm:$0xf]
                  %6485 = vst [vmem:[%s6145 + $0x4a4] sm:$0xf] %v6484
                  %v6486 = vld [vmem:[%s6144 + $0x2a8] sm:$0xf]
                  %6487 = vst [vmem:[%s6145 + $0x4a8] sm:$0xf] %v6486
                  %v6488 = vld [vmem:[%s6144 + $0x2ac] sm:$0xf]
                  %6489 = vst [vmem:[%s6145 + $0x4ac] sm:$0xf] %v6488
                  %v6490 = vld [vmem:[%s6144 + $0x2b0] sm:$0xf]
                  %6491 = vst [vmem:[%s6145 + $0x4b0] sm:$0xf] %v6490
                  %v6492 = vld [vmem:[%s6144 + $0x2b4] sm:$0xf]
                  %6493 = vst [vmem:[%s6145 + $0x4b4] sm:$0xf] %v6492
                  %v6494 = vld [vmem:[%s6144 + $0x2b8] sm:$0xf]
                  %6495 = vst [vmem:[%s6145 + $0x4b8] sm:$0xf] %v6494
                  %v6496 = vld [vmem:[%s6144 + $0x2bc] sm:$0xf]
                  %6497 = vst [vmem:[%s6145 + $0x4bc] sm:$0xf] %v6496
                  %v6498 = vld [vmem:[%s6144 + $0x2c0] sm:$0xf]
                  %6499 = vst [vmem:[%s6145 + $0x4c0] sm:$0xf] %v6498
                  %v6500 = vld [vmem:[%s6144 + $0x2c4] sm:$0xf]
                  %6501 = vst [vmem:[%s6145 + $0x4c4] sm:$0xf] %v6500
                  %v6502 = vld [vmem:[%s6144 + $0x2c8] sm:$0xf]
                  %6503 = vst [vmem:[%s6145 + $0x4c8] sm:$0xf] %v6502
                  %v6504 = vld [vmem:[%s6144 + $0x2cc] sm:$0xf]
                  %6505 = vst [vmem:[%s6145 + $0x4cc] sm:$0xf] %v6504
                  %v6506 = vld [vmem:[%s6144 + $0x2d0] sm:$0xf]
                  %6507 = vst [vmem:[%s6145 + $0x4d0] sm:$0xf] %v6506
                  %v6508 = vld [vmem:[%s6144 + $0x2d4] sm:$0xf]
                  %6509 = vst [vmem:[%s6145 + $0x4d4] sm:$0xf] %v6508
                  %v6510 = vld [vmem:[%s6144 + $0x2d8] sm:$0xf]
                  %6511 = vst [vmem:[%s6145 + $0x4d8] sm:$0xf] %v6510
                  %v6512 = vld [vmem:[%s6144 + $0x2dc] sm:$0xf]
                  %6513 = vst [vmem:[%s6145 + $0x4dc] sm:$0xf] %v6512
                  %v6514 = vld [vmem:[%s6144 + $0x2e0] sm:$0xf]
                  %6515 = vst [vmem:[%s6145 + $0x4e0] sm:$0xf] %v6514
                  %v6516 = vld [vmem:[%s6144 + $0x2e4] sm:$0xf]
                  %6517 = vst [vmem:[%s6145 + $0x4e4] sm:$0xf] %v6516
                  %v6518 = vld [vmem:[%s6144 + $0x2e8] sm:$0xf]
                  %6519 = vst [vmem:[%s6145 + $0x4e8] sm:$0xf] %v6518
                  %v6520 = vld [vmem:[%s6144 + $0x2ec] sm:$0xf]
                  %6521 = vst [vmem:[%s6145 + $0x4ec] sm:$0xf] %v6520
                  %v6522 = vld [vmem:[%s6144 + $0x2f0] sm:$0xf]
                  %6523 = vst [vmem:[%s6145 + $0x4f0] sm:$0xf] %v6522
                  %v6524 = vld [vmem:[%s6144 + $0x2f4] sm:$0xf]
                  %6525 = vst [vmem:[%s6145 + $0x4f4] sm:$0xf] %v6524
                  %v6526 = vld [vmem:[%s6144 + $0x2f8] sm:$0xf]
                  %6527 = vst [vmem:[%s6145 + $0x4f8] sm:$0xf] %v6526
                  %v6528 = vld [vmem:[%s6144 + $0x2fc] sm:$0xf]
                  %6529 = vst [vmem:[%s6145 + $0x4fc] sm:$0xf] %v6528
                  %v6530 = vld [vmem:[%s6144 + $0x300] sm:$0xf]
                  %6531 = vst [vmem:[%s6145 + $0x600] sm:$0xf] %v6530
                  %v6532 = vld [vmem:[%s6144 + $0x304] sm:$0xf]
                  %6533 = vst [vmem:[%s6145 + $0x604] sm:$0xf] %v6532
                  %v6534 = vld [vmem:[%s6144 + $0x308] sm:$0xf]
                  %6535 = vst [vmem:[%s6145 + $0x608] sm:$0xf] %v6534
                  %v6536 = vld [vmem:[%s6144 + $0x30c] sm:$0xf]
                  %6537 = vst [vmem:[%s6145 + $0x60c] sm:$0xf] %v6536
                  %v6538 = vld [vmem:[%s6144 + $0x310] sm:$0xf]
                  %6539 = vst [vmem:[%s6145 + $0x610] sm:$0xf] %v6538
                  %v6540 = vld [vmem:[%s6144 + $0x314] sm:$0xf]
                  %6541 = vst [vmem:[%s6145 + $0x614] sm:$0xf] %v6540
                  %v6542 = vld [vmem:[%s6144 + $0x318] sm:$0xf]
                  %6543 = vst [vmem:[%s6145 + $0x618] sm:$0xf] %v6542
                  %v6544 = vld [vmem:[%s6144 + $0x31c] sm:$0xf]
                  %6545 = vst [vmem:[%s6145 + $0x61c] sm:$0xf] %v6544
                  %v6546 = vld [vmem:[%s6144 + $0x320] sm:$0xf]
                  %6547 = vst [vmem:[%s6145 + $0x620] sm:$0xf] %v6546
                  %v6548 = vld [vmem:[%s6144 + $0x324] sm:$0xf]
                  %6549 = vst [vmem:[%s6145 + $0x624] sm:$0xf] %v6548
                  %v6550 = vld [vmem:[%s6144 + $0x328] sm:$0xf]
                  %6551 = vst [vmem:[%s6145 + $0x628] sm:$0xf] %v6550
                  %v6552 = vld [vmem:[%s6144 + $0x32c] sm:$0xf]
                  %6553 = vst [vmem:[%s6145 + $0x62c] sm:$0xf] %v6552
                  %v6554 = vld [vmem:[%s6144 + $0x330] sm:$0xf]
                  %6555 = vst [vmem:[%s6145 + $0x630] sm:$0xf] %v6554
                  %v6556 = vld [vmem:[%s6144 + $0x334] sm:$0xf]
                  %6557 = vst [vmem:[%s6145 + $0x634] sm:$0xf] %v6556
                  %v6558 = vld [vmem:[%s6144 + $0x338] sm:$0xf]
                  %6559 = vst [vmem:[%s6145 + $0x638] sm:$0xf] %v6558
                  %v6560 = vld [vmem:[%s6144 + $0x33c] sm:$0xf]
                  %6561 = vst [vmem:[%s6145 + $0x63c] sm:$0xf] %v6560
                  %v6562 = vld [vmem:[%s6144 + $0x340] sm:$0xf]
                  %6563 = vst [vmem:[%s6145 + $0x640] sm:$0xf] %v6562
                  %v6564 = vld [vmem:[%s6144 + $0x344] sm:$0xf]
                  %6565 = vst [vmem:[%s6145 + $0x644] sm:$0xf] %v6564
                  %v6566 = vld [vmem:[%s6144 + $0x348] sm:$0xf]
                  %6567 = vst [vmem:[%s6145 + $0x648] sm:$0xf] %v6566
                  %v6568 = vld [vmem:[%s6144 + $0x34c] sm:$0xf]
                  %6569 = vst [vmem:[%s6145 + $0x64c] sm:$0xf] %v6568
                  %v6570 = vld [vmem:[%s6144 + $0x350] sm:$0xf]
                  %6571 = vst [vmem:[%s6145 + $0x650] sm:$0xf] %v6570
                  %v6572 = vld [vmem:[%s6144 + $0x354] sm:$0xf]
                  %6573 = vst [vmem:[%s6145 + $0x654] sm:$0xf] %v6572
                  %v6574 = vld [vmem:[%s6144 + $0x358] sm:$0xf]
                  %6575 = vst [vmem:[%s6145 + $0x658] sm:$0xf] %v6574
                  %v6576 = vld [vmem:[%s6144 + $0x35c] sm:$0xf]
                  %6577 = vst [vmem:[%s6145 + $0x65c] sm:$0xf] %v6576
                  %v6578 = vld [vmem:[%s6144 + $0x360] sm:$0xf]
                  %6579 = vst [vmem:[%s6145 + $0x660] sm:$0xf] %v6578
                  %v6580 = vld [vmem:[%s6144 + $0x364] sm:$0xf]
                  %6581 = vst [vmem:[%s6145 + $0x664] sm:$0xf] %v6580
                  %v6582 = vld [vmem:[%s6144 + $0x368] sm:$0xf]
                  %6583 = vst [vmem:[%s6145 + $0x668] sm:$0xf] %v6582
                  %v6584 = vld [vmem:[%s6144 + $0x36c] sm:$0xf]
                  %6585 = vst [vmem:[%s6145 + $0x66c] sm:$0xf] %v6584
                  %v6586 = vld [vmem:[%s6144 + $0x370] sm:$0xf]
                  %6587 = vst [vmem:[%s6145 + $0x670] sm:$0xf] %v6586
                  %v6588 = vld [vmem:[%s6144 + $0x374] sm:$0xf]
                  %6589 = vst [vmem:[%s6145 + $0x674] sm:$0xf] %v6588
                  %v6590 = vld [vmem:[%s6144 + $0x378] sm:$0xf]
                  %6591 = vst [vmem:[%s6145 + $0x678] sm:$0xf] %v6590
                  %v6592 = vld [vmem:[%s6144 + $0x37c] sm:$0xf]
                  %6593 = vst [vmem:[%s6145 + $0x67c] sm:$0xf] %v6592
                  %v6594 = vld [vmem:[%s6144 + $0x380] sm:$0xf]
                  %6595 = vst [vmem:[%s6145 + $0x680] sm:$0xf] %v6594
                  %v6596 = vld [vmem:[%s6144 + $0x384] sm:$0xf]
                  %6597 = vst [vmem:[%s6145 + $0x684] sm:$0xf] %v6596
                  %v6598 = vld [vmem:[%s6144 + $0x388] sm:$0xf]
                  %6599 = vst [vmem:[%s6145 + $0x688] sm:$0xf] %v6598
                  %v6600 = vld [vmem:[%s6144 + $0x38c] sm:$0xf]
                  %6601 = vst [vmem:[%s6145 + $0x68c] sm:$0xf] %v6600
                  %v6602 = vld [vmem:[%s6144 + $0x390] sm:$0xf]
                  %6603 = vst [vmem:[%s6145 + $0x690] sm:$0xf] %v6602
                  %v6604 = vld [vmem:[%s6144 + $0x394] sm:$0xf]
                  %6605 = vst [vmem:[%s6145 + $0x694] sm:$0xf] %v6604
                  %v6606 = vld [vmem:[%s6144 + $0x398] sm:$0xf]
                  %6607 = vst [vmem:[%s6145 + $0x698] sm:$0xf] %v6606
                  %v6608 = vld [vmem:[%s6144 + $0x39c] sm:$0xf]
                  %6609 = vst [vmem:[%s6145 + $0x69c] sm:$0xf] %v6608
                  %v6610 = vld [vmem:[%s6144 + $0x3a0] sm:$0xf]
                  %6611 = vst [vmem:[%s6145 + $0x6a0] sm:$0xf] %v6610
                  %v6612 = vld [vmem:[%s6144 + $0x3a4] sm:$0xf]
                  %6613 = vst [vmem:[%s6145 + $0x6a4] sm:$0xf] %v6612
                  %v6614 = vld [vmem:[%s6144 + $0x3a8] sm:$0xf]
                  %6615 = vst [vmem:[%s6145 + $0x6a8] sm:$0xf] %v6614
                  %v6616 = vld [vmem:[%s6144 + $0x3ac] sm:$0xf]
                  %6617 = vst [vmem:[%s6145 + $0x6ac] sm:$0xf] %v6616
                  %v6618 = vld [vmem:[%s6144 + $0x3b0] sm:$0xf]
                  %6619 = vst [vmem:[%s6145 + $0x6b0] sm:$0xf] %v6618
                  %v6620 = vld [vmem:[%s6144 + $0x3b4] sm:$0xf]
                  %6621 = vst [vmem:[%s6145 + $0x6b4] sm:$0xf] %v6620
                  %v6622 = vld [vmem:[%s6144 + $0x3b8] sm:$0xf]
                  %6623 = vst [vmem:[%s6145 + $0x6b8] sm:$0xf] %v6622
                  %v6624 = vld [vmem:[%s6144 + $0x3bc] sm:$0xf]
                  %6625 = vst [vmem:[%s6145 + $0x6bc] sm:$0xf] %v6624
                  %v6626 = vld [vmem:[%s6144 + $0x3c0] sm:$0xf]
                  %6627 = vst [vmem:[%s6145 + $0x6c0] sm:$0xf] %v6626
                  %v6628 = vld [vmem:[%s6144 + $0x3c4] sm:$0xf]
                  %6629 = vst [vmem:[%s6145 + $0x6c4] sm:$0xf] %v6628
                  %v6630 = vld [vmem:[%s6144 + $0x3c8] sm:$0xf]
                  %6631 = vst [vmem:[%s6145 + $0x6c8] sm:$0xf] %v6630
                  %v6632 = vld [vmem:[%s6144 + $0x3cc] sm:$0xf]
                  %6633 = vst [vmem:[%s6145 + $0x6cc] sm:$0xf] %v6632
                  %v6634 = vld [vmem:[%s6144 + $0x3d0] sm:$0xf]
                  %6635 = vst [vmem:[%s6145 + $0x6d0] sm:$0xf] %v6634
                  %v6636 = vld [vmem:[%s6144 + $0x3d4] sm:$0xf]
                  %6637 = vst [vmem:[%s6145 + $0x6d4] sm:$0xf] %v6636
                  %v6638 = vld [vmem:[%s6144 + $0x3d8] sm:$0xf]
                  %6639 = vst [vmem:[%s6145 + $0x6d8] sm:$0xf] %v6638
                  %v6640 = vld [vmem:[%s6144 + $0x3dc] sm:$0xf]
                  %6641 = vst [vmem:[%s6145 + $0x6dc] sm:$0xf] %v6640
                  %v6642 = vld [vmem:[%s6144 + $0x3e0] sm:$0xf]
                  %6643 = vst [vmem:[%s6145 + $0x6e0] sm:$0xf] %v6642
                  %v6644 = vld [vmem:[%s6144 + $0x3e4] sm:$0xf]
                  %6645 = vst [vmem:[%s6145 + $0x6e4] sm:$0xf] %v6644
                  %v6646 = vld [vmem:[%s6144 + $0x3e8] sm:$0xf]
                  %6647 = vst [vmem:[%s6145 + $0x6e8] sm:$0xf] %v6646
                  %v6648 = vld [vmem:[%s6144 + $0x3ec] sm:$0xf]
                  %6649 = vst [vmem:[%s6145 + $0x6ec] sm:$0xf] %v6648
                  %v6650 = vld [vmem:[%s6144 + $0x3f0] sm:$0xf]
                  %6651 = vst [vmem:[%s6145 + $0x6f0] sm:$0xf] %v6650
                  %v6652 = vld [vmem:[%s6144 + $0x3f4] sm:$0xf]
                  %6653 = vst [vmem:[%s6145 + $0x6f4] sm:$0xf] %v6652
                  %v6654 = vld [vmem:[%s6144 + $0x3f8] sm:$0xf]
                  %6655 = vst [vmem:[%s6145 + $0x6f8] sm:$0xf] %v6654
                  %v6656 = vld [vmem:[%s6144 + $0x3fc] sm:$0xf]
                  %6657 = vst [vmem:[%s6145 + $0x6fc] sm:$0xf] %v6656
                $region112: #{tpu_custom_call.1} parent=99 // loop_footer
                  %s6143 = sadd.s32 1, %s6139
                $region113: #{tpu_custom_call.1} parent=99 // loop_footer_branch
                  %6138 = sbr.rel target = $region109
                $region114: #{tpu_custom_call.1} parent=99 // loop_exit
                  _
              $region100: #{tpu_custom_call.1} parent=84 // pred_fallthru
                _
            $region85: #{tpu_custom_call.1} parent=80 // pred_fallthru
              _
            // Predicated region
            $region86: #{tpu_custom_call.1} parent=80 // pred_check
              _
            $region87: #{tpu_custom_call.1} parent=80 // pred_check_branch
              %5605 = sbr.rel (0) target = $region89
            $region88: #{tpu_custom_call.1} parent=80 // pred_region
              loop: start=0, step=1, limit=1
              $region90: #{tpu_custom_call.1} parent=88 // loop_pre_header
                _
              $region91: #{tpu_custom_call.1} parent=88 // loop_header
                %s5608 = sphi 0, %s5612
                %p5609 = scmp.ge.s32.totalorder %s5608, 1
                %s5613 = sphi %s4520, %s4520
                %s5614 = sphi %s5599, %s5599
              $region92: #{tpu_custom_call.1} parent=88 // loop_header_branch
                %5611 = sbr.rel (%p5609) target = $region96
              $region93: #{tpu_custom_call.1} parent=88 // loop_body
                %v5615 = vld [vmem:[%s5613] sm:$0xf]
                %5616 = vst [vmem:[%s5614] sm:$0xf] %v5615
                %v5617 = vld [vmem:[%s5613 + $0x4] sm:$0xf]
                %5618 = vst [vmem:[%s5614 + $0x4] sm:$0xf] %v5617
                %v5619 = vld [vmem:[%s5613 + $0x8] sm:$0xf]
                %5620 = vst [vmem:[%s5614 + $0x8] sm:$0xf] %v5619
                %v5621 = vld [vmem:[%s5613 + $0xc] sm:$0xf]
                %5622 = vst [vmem:[%s5614 + $0xc] sm:$0xf] %v5621
                %v5623 = vld [vmem:[%s5613 + $0x10] sm:$0xf]
                %5624 = vst [vmem:[%s5614 + $0x10] sm:$0xf] %v5623
                %v5625 = vld [vmem:[%s5613 + $0x14] sm:$0xf]
                %5626 = vst [vmem:[%s5614 + $0x14] sm:$0xf] %v5625
                %v5627 = vld [vmem:[%s5613 + $0x18] sm:$0xf]
                %5628 = vst [vmem:[%s5614 + $0x18] sm:$0xf] %v5627
                %v5629 = vld [vmem:[%s5613 + $0x1c] sm:$0xf]
                %5630 = vst [vmem:[%s5614 + $0x1c] sm:$0xf] %v5629
                %v5631 = vld [vmem:[%s5613 + $0x20] sm:$0xf]
                %5632 = vst [vmem:[%s5614 + $0x20] sm:$0xf] %v5631
                %v5633 = vld [vmem:[%s5613 + $0x24] sm:$0xf]
                %5634 = vst [vmem:[%s5614 + $0x24] sm:$0xf] %v5633
                %v5635 = vld [vmem:[%s5613 + $0x28] sm:$0xf]
                %5636 = vst [vmem:[%s5614 + $0x28] sm:$0xf] %v5635
                %v5637 = vld [vmem:[%s5613 + $0x2c] sm:$0xf]
                %5638 = vst [vmem:[%s5614 + $0x2c] sm:$0xf] %v5637
                %v5639 = vld [vmem:[%s5613 + $0x30] sm:$0xf]
                %5640 = vst [vmem:[%s5614 + $0x30] sm:$0xf] %v5639
                %v5641 = vld [vmem:[%s5613 + $0x34] sm:$0xf]
                %5642 = vst [vmem:[%s5614 + $0x34] sm:$0xf] %v5641
                %v5643 = vld [vmem:[%s5613 + $0x38] sm:$0xf]
                %5644 = vst [vmem:[%s5614 + $0x38] sm:$0xf] %v5643
                %v5645 = vld [vmem:[%s5613 + $0x3c] sm:$0xf]
                %5646 = vst [vmem:[%s5614 + $0x3c] sm:$0xf] %v5645
                %v5647 = vld [vmem:[%s5613 + $0x40] sm:$0xf]
                %5648 = vst [vmem:[%s5614 + $0x40] sm:$0xf] %v5647
                %v5649 = vld [vmem:[%s5613 + $0x44] sm:$0xf]
                %5650 = vst [vmem:[%s5614 + $0x44] sm:$0xf] %v5649
                %v5651 = vld [vmem:[%s5613 + $0x48] sm:$0xf]
                %5652 = vst [vmem:[%s5614 + $0x48] sm:$0xf] %v5651
                %v5653 = vld [vmem:[%s5613 + $0x4c] sm:$0xf]
                %5654 = vst [vmem:[%s5614 + $0x4c] sm:$0xf] %v5653
                %v5655 = vld [vmem:[%s5613 + $0x50] sm:$0xf]
                %5656 = vst [vmem:[%s5614 + $0x50] sm:$0xf] %v5655
                %v5657 = vld [vmem:[%s5613 + $0x54] sm:$0xf]
                %5658 = vst [vmem:[%s5614 + $0x54] sm:$0xf] %v5657
                %v5659 = vld [vmem:[%s5613 + $0x58] sm:$0xf]
                %5660 = vst [vmem:[%s5614 + $0x58] sm:$0xf] %v5659
                %v5661 = vld [vmem:[%s5613 + $0x5c] sm:$0xf]
                %5662 = vst [vmem:[%s5614 + $0x5c] sm:$0xf] %v5661
                %v5663 = vld [vmem:[%s5613 + $0x60] sm:$0xf]
                %5664 = vst [vmem:[%s5614 + $0x60] sm:$0xf] %v5663
                %v5665 = vld [vmem:[%s5613 + $0x64] sm:$0xf]
                %5666 = vst [vmem:[%s5614 + $0x64] sm:$0xf] %v5665
                %v5667 = vld [vmem:[%s5613 + $0x68] sm:$0xf]
                %5668 = vst [vmem:[%s5614 + $0x68] sm:$0xf] %v5667
                %v5669 = vld [vmem:[%s5613 + $0x6c] sm:$0xf]
                %5670 = vst [vmem:[%s5614 + $0x6c] sm:$0xf] %v5669
                %v5671 = vld [vmem:[%s5613 + $0x70] sm:$0xf]
                %5672 = vst [vmem:[%s5614 + $0x70] sm:$0xf] %v5671
                %v5673 = vld [vmem:[%s5613 + $0x74] sm:$0xf]
                %5674 = vst [vmem:[%s5614 + $0x74] sm:$0xf] %v5673
                %v5675 = vld [vmem:[%s5613 + $0x78] sm:$0xf]
                %5676 = vst [vmem:[%s5614 + $0x78] sm:$0xf] %v5675
                %v5677 = vld [vmem:[%s5613 + $0x7c] sm:$0xf]
                %5678 = vst [vmem:[%s5614 + $0x7c] sm:$0xf] %v5677
                %v5679 = vld [vmem:[%s5613 + $0x80] sm:$0xf]
                %5680 = vst [vmem:[%s5614 + $0x80] sm:$0xf] %v5679
                %v5681 = vld [vmem:[%s5613 + $0x84] sm:$0xf]
                %5682 = vst [vmem:[%s5614 + $0x84] sm:$0xf] %v5681
                %v5683 = vld [vmem:[%s5613 + $0x88] sm:$0xf]
                %5684 = vst [vmem:[%s5614 + $0x88] sm:$0xf] %v5683
                %v5685 = vld [vmem:[%s5613 + $0x8c] sm:$0xf]
                %5686 = vst [vmem:[%s5614 + $0x8c] sm:$0xf] %v5685
                %v5687 = vld [vmem:[%s5613 + $0x90] sm:$0xf]
                %5688 = vst [vmem:[%s5614 + $0x90] sm:$0xf] %v5687
                %v5689 = vld [vmem:[%s5613 + $0x94] sm:$0xf]
                %5690 = vst [vmem:[%s5614 + $0x94] sm:$0xf] %v5689
                %v5691 = vld [vmem:[%s5613 + $0x98] sm:$0xf]
                %5692 = vst [vmem:[%s5614 + $0x98] sm:$0xf] %v5691
                %v5693 = vld [vmem:[%s5613 + $0x9c] sm:$0xf]
                %5694 = vst [vmem:[%s5614 + $0x9c] sm:$0xf] %v5693
                %v5695 = vld [vmem:[%s5613 + $0xa0] sm:$0xf]
                %5696 = vst [vmem:[%s5614 + $0xa0] sm:$0xf] %v5695
                %v5697 = vld [vmem:[%s5613 + $0xa4] sm:$0xf]
                %5698 = vst [vmem:[%s5614 + $0xa4] sm:$0xf] %v5697
                %v5699 = vld [vmem:[%s5613 + $0xa8] sm:$0xf]
                %5700 = vst [vmem:[%s5614 + $0xa8] sm:$0xf] %v5699
                %v5701 = vld [vmem:[%s5613 + $0xac] sm:$0xf]
                %5702 = vst [vmem:[%s5614 + $0xac] sm:$0xf] %v5701
                %v5703 = vld [vmem:[%s5613 + $0xb0] sm:$0xf]
                %5704 = vst [vmem:[%s5614 + $0xb0] sm:$0xf] %v5703
                %v5705 = vld [vmem:[%s5613 + $0xb4] sm:$0xf]
                %5706 = vst [vmem:[%s5614 + $0xb4] sm:$0xf] %v5705
                %v5707 = vld [vmem:[%s5613 + $0xb8] sm:$0xf]
                %5708 = vst [vmem:[%s5614 + $0xb8] sm:$0xf] %v5707
                %v5709 = vld [vmem:[%s5613 + $0xbc] sm:$0xf]
                %5710 = vst [vmem:[%s5614 + $0xbc] sm:$0xf] %v5709
                %v5711 = vld [vmem:[%s5613 + $0xc0] sm:$0xf]
                %5712 = vst [vmem:[%s5614 + $0xc0] sm:$0xf] %v5711
                %v5713 = vld [vmem:[%s5613 + $0xc4] sm:$0xf]
                %5714 = vst [vmem:[%s5614 + $0xc4] sm:$0xf] %v5713
                %v5715 = vld [vmem:[%s5613 + $0xc8] sm:$0xf]
                %5716 = vst [vmem:[%s5614 + $0xc8] sm:$0xf] %v5715
                %v5717 = vld [vmem:[%s5613 + $0xcc] sm:$0xf]
                %5718 = vst [vmem:[%s5614 + $0xcc] sm:$0xf] %v5717
                %v5719 = vld [vmem:[%s5613 + $0xd0] sm:$0xf]
                %5720 = vst [vmem:[%s5614 + $0xd0] sm:$0xf] %v5719
                %v5721 = vld [vmem:[%s5613 + $0xd4] sm:$0xf]
                %5722 = vst [vmem:[%s5614 + $0xd4] sm:$0xf] %v5721
                %v5723 = vld [vmem:[%s5613 + $0xd8] sm:$0xf]
                %5724 = vst [vmem:[%s5614 + $0xd8] sm:$0xf] %v5723
                %v5725 = vld [vmem:[%s5613 + $0xdc] sm:$0xf]
                %5726 = vst [vmem:[%s5614 + $0xdc] sm:$0xf] %v5725
                %v5727 = vld [vmem:[%s5613 + $0xe0] sm:$0xf]
                %5728 = vst [vmem:[%s5614 + $0xe0] sm:$0xf] %v5727
                %v5729 = vld [vmem:[%s5613 + $0xe4] sm:$0xf]
                %5730 = vst [vmem:[%s5614 + $0xe4] sm:$0xf] %v5729
                %v5731 = vld [vmem:[%s5613 + $0xe8] sm:$0xf]
                %5732 = vst [vmem:[%s5614 + $0xe8] sm:$0xf] %v5731
                %v5733 = vld [vmem:[%s5613 + $0xec] sm:$0xf]
                %5734 = vst [vmem:[%s5614 + $0xec] sm:$0xf] %v5733
                %v5735 = vld [vmem:[%s5613 + $0xf0] sm:$0xf]
                %5736 = vst [vmem:[%s5614 + $0xf0] sm:$0xf] %v5735
                %v5737 = vld [vmem:[%s5613 + $0xf4] sm:$0xf]
                %5738 = vst [vmem:[%s5614 + $0xf4] sm:$0xf] %v5737
                %v5739 = vld [vmem:[%s5613 + $0xf8] sm:$0xf]
                %5740 = vst [vmem:[%s5614 + $0xf8] sm:$0xf] %v5739
                %v5741 = vld [vmem:[%s5613 + $0xfc] sm:$0xf]
                %5742 = vst [vmem:[%s5614 + $0xfc] sm:$0xf] %v5741
                %v5743 = vld [vmem:[%s5613 + $0x100] sm:$0xf]
                %5744 = vst [vmem:[%s5614 + $0x200] sm:$0xf] %v5743
                %v5745 = vld [vmem:[%s5613 + $0x104] sm:$0xf]
                %5746 = vst [vmem:[%s5614 + $0x204] sm:$0xf] %v5745
                %v5747 = vld [vmem:[%s5613 + $0x108] sm:$0xf]
                %5748 = vst [vmem:[%s5614 + $0x208] sm:$0xf] %v5747
                %v5749 = vld [vmem:[%s5613 + $0x10c] sm:$0xf]
                %5750 = vst [vmem:[%s5614 + $0x20c] sm:$0xf] %v5749
                %v5751 = vld [vmem:[%s5613 + $0x110] sm:$0xf]
                %5752 = vst [vmem:[%s5614 + $0x210] sm:$0xf] %v5751
                %v5753 = vld [vmem:[%s5613 + $0x114] sm:$0xf]
                %5754 = vst [vmem:[%s5614 + $0x214] sm:$0xf] %v5753
                %v5755 = vld [vmem:[%s5613 + $0x118] sm:$0xf]
                %5756 = vst [vmem:[%s5614 + $0x218] sm:$0xf] %v5755
                %v5757 = vld [vmem:[%s5613 + $0x11c] sm:$0xf]
                %5758 = vst [vmem:[%s5614 + $0x21c] sm:$0xf] %v5757
                %v5759 = vld [vmem:[%s5613 + $0x120] sm:$0xf]
                %5760 = vst [vmem:[%s5614 + $0x220] sm:$0xf] %v5759
                %v5761 = vld [vmem:[%s5613 + $0x124] sm:$0xf]
                %5762 = vst [vmem:[%s5614 + $0x224] sm:$0xf] %v5761
                %v5763 = vld [vmem:[%s5613 + $0x128] sm:$0xf]
                %5764 = vst [vmem:[%s5614 + $0x228] sm:$0xf] %v5763
                %v5765 = vld [vmem:[%s5613 + $0x12c] sm:$0xf]
                %5766 = vst [vmem:[%s5614 + $0x22c] sm:$0xf] %v5765
                %v5767 = vld [vmem:[%s5613 + $0x130] sm:$0xf]
                %5768 = vst [vmem:[%s5614 + $0x230] sm:$0xf] %v5767
                %v5769 = vld [vmem:[%s5613 + $0x134] sm:$0xf]
                %5770 = vst [vmem:[%s5614 + $0x234] sm:$0xf] %v5769
                %v5771 = vld [vmem:[%s5613 + $0x138] sm:$0xf]
                %5772 = vst [vmem:[%s5614 + $0x238] sm:$0xf] %v5771
                %v5773 = vld [vmem:[%s5613 + $0x13c] sm:$0xf]
                %5774 = vst [vmem:[%s5614 + $0x23c] sm:$0xf] %v5773
                %v5775 = vld [vmem:[%s5613 + $0x140] sm:$0xf]
                %5776 = vst [vmem:[%s5614 + $0x240] sm:$0xf] %v5775
                %v5777 = vld [vmem:[%s5613 + $0x144] sm:$0xf]
                %5778 = vst [vmem:[%s5614 + $0x244] sm:$0xf] %v5777
                %v5779 = vld [vmem:[%s5613 + $0x148] sm:$0xf]
                %5780 = vst [vmem:[%s5614 + $0x248] sm:$0xf] %v5779
                %v5781 = vld [vmem:[%s5613 + $0x14c] sm:$0xf]
                %5782 = vst [vmem:[%s5614 + $0x24c] sm:$0xf] %v5781
                %v5783 = vld [vmem:[%s5613 + $0x150] sm:$0xf]
                %5784 = vst [vmem:[%s5614 + $0x250] sm:$0xf] %v5783
                %v5785 = vld [vmem:[%s5613 + $0x154] sm:$0xf]
                %5786 = vst [vmem:[%s5614 + $0x254] sm:$0xf] %v5785
                %v5787 = vld [vmem:[%s5613 + $0x158] sm:$0xf]
                %5788 = vst [vmem:[%s5614 + $0x258] sm:$0xf] %v5787
                %v5789 = vld [vmem:[%s5613 + $0x15c] sm:$0xf]
                %5790 = vst [vmem:[%s5614 + $0x25c] sm:$0xf] %v5789
                %v5791 = vld [vmem:[%s5613 + $0x160] sm:$0xf]
                %5792 = vst [vmem:[%s5614 + $0x260] sm:$0xf] %v5791
                %v5793 = vld [vmem:[%s5613 + $0x164] sm:$0xf]
                %5794 = vst [vmem:[%s5614 + $0x264] sm:$0xf] %v5793
                %v5795 = vld [vmem:[%s5613 + $0x168] sm:$0xf]
                %5796 = vst [vmem:[%s5614 + $0x268] sm:$0xf] %v5795
                %v5797 = vld [vmem:[%s5613 + $0x16c] sm:$0xf]
                %5798 = vst [vmem:[%s5614 + $0x26c] sm:$0xf] %v5797
                %v5799 = vld [vmem:[%s5613 + $0x170] sm:$0xf]
                %5800 = vst [vmem:[%s5614 + $0x270] sm:$0xf] %v5799
                %v5801 = vld [vmem:[%s5613 + $0x174] sm:$0xf]
                %5802 = vst [vmem:[%s5614 + $0x274] sm:$0xf] %v5801
                %v5803 = vld [vmem:[%s5613 + $0x178] sm:$0xf]
                %5804 = vst [vmem:[%s5614 + $0x278] sm:$0xf] %v5803
                %v5805 = vld [vmem:[%s5613 + $0x17c] sm:$0xf]
                %5806 = vst [vmem:[%s5614 + $0x27c] sm:$0xf] %v5805
                %v5807 = vld [vmem:[%s5613 + $0x180] sm:$0xf]
                %5808 = vst [vmem:[%s5614 + $0x280] sm:$0xf] %v5807
                %v5809 = vld [vmem:[%s5613 + $0x184] sm:$0xf]
                %5810 = vst [vmem:[%s5614 + $0x284] sm:$0xf] %v5809
                %v5811 = vld [vmem:[%s5613 + $0x188] sm:$0xf]
                %5812 = vst [vmem:[%s5614 + $0x288] sm:$0xf] %v5811
                %v5813 = vld [vmem:[%s5613 + $0x18c] sm:$0xf]
                %5814 = vst [vmem:[%s5614 + $0x28c] sm:$0xf] %v5813
                %v5815 = vld [vmem:[%s5613 + $0x190] sm:$0xf]
                %5816 = vst [vmem:[%s5614 + $0x290] sm:$0xf] %v5815
                %v5817 = vld [vmem:[%s5613 + $0x194] sm:$0xf]
                %5818 = vst [vmem:[%s5614 + $0x294] sm:$0xf] %v5817
                %v5819 = vld [vmem:[%s5613 + $0x198] sm:$0xf]
                %5820 = vst [vmem:[%s5614 + $0x298] sm:$0xf] %v5819
                %v5821 = vld [vmem:[%s5613 + $0x19c] sm:$0xf]
                %5822 = vst [vmem:[%s5614 + $0x29c] sm:$0xf] %v5821
                %v5823 = vld [vmem:[%s5613 + $0x1a0] sm:$0xf]
                %5824 = vst [vmem:[%s5614 + $0x2a0] sm:$0xf] %v5823
                %v5825 = vld [vmem:[%s5613 + $0x1a4] sm:$0xf]
                %5826 = vst [vmem:[%s5614 + $0x2a4] sm:$0xf] %v5825
                %v5827 = vld [vmem:[%s5613 + $0x1a8] sm:$0xf]
                %5828 = vst [vmem:[%s5614 + $0x2a8] sm:$0xf] %v5827
                %v5829 = vld [vmem:[%s5613 + $0x1ac] sm:$0xf]
                %5830 = vst [vmem:[%s5614 + $0x2ac] sm:$0xf] %v5829
                %v5831 = vld [vmem:[%s5613 + $0x1b0] sm:$0xf]
                %5832 = vst [vmem:[%s5614 + $0x2b0] sm:$0xf] %v5831
                %v5833 = vld [vmem:[%s5613 + $0x1b4] sm:$0xf]
                %5834 = vst [vmem:[%s5614 + $0x2b4] sm:$0xf] %v5833
                %v5835 = vld [vmem:[%s5613 + $0x1b8] sm:$0xf]
                %5836 = vst [vmem:[%s5614 + $0x2b8] sm:$0xf] %v5835
                %v5837 = vld [vmem:[%s5613 + $0x1bc] sm:$0xf]
                %5838 = vst [vmem:[%s5614 + $0x2bc] sm:$0xf] %v5837
                %v5839 = vld [vmem:[%s5613 + $0x1c0] sm:$0xf]
                %5840 = vst [vmem:[%s5614 + $0x2c0] sm:$0xf] %v5839
                %v5841 = vld [vmem:[%s5613 + $0x1c4] sm:$0xf]
                %5842 = vst [vmem:[%s5614 + $0x2c4] sm:$0xf] %v5841
                %v5843 = vld [vmem:[%s5613 + $0x1c8] sm:$0xf]
                %5844 = vst [vmem:[%s5614 + $0x2c8] sm:$0xf] %v5843
                %v5845 = vld [vmem:[%s5613 + $0x1cc] sm:$0xf]
                %5846 = vst [vmem:[%s5614 + $0x2cc] sm:$0xf] %v5845
                %v5847 = vld [vmem:[%s5613 + $0x1d0] sm:$0xf]
                %5848 = vst [vmem:[%s5614 + $0x2d0] sm:$0xf] %v5847
                %v5849 = vld [vmem:[%s5613 + $0x1d4] sm:$0xf]
                %5850 = vst [vmem:[%s5614 + $0x2d4] sm:$0xf] %v5849
                %v5851 = vld [vmem:[%s5613 + $0x1d8] sm:$0xf]
                %5852 = vst [vmem:[%s5614 + $0x2d8] sm:$0xf] %v5851
                %v5853 = vld [vmem:[%s5613 + $0x1dc] sm:$0xf]
                %5854 = vst [vmem:[%s5614 + $0x2dc] sm:$0xf] %v5853
                %v5855 = vld [vmem:[%s5613 + $0x1e0] sm:$0xf]
                %5856 = vst [vmem:[%s5614 + $0x2e0] sm:$0xf] %v5855
                %v5857 = vld [vmem:[%s5613 + $0x1e4] sm:$0xf]
                %5858 = vst [vmem:[%s5614 + $0x2e4] sm:$0xf] %v5857
                %v5859 = vld [vmem:[%s5613 + $0x1e8] sm:$0xf]
                %5860 = vst [vmem:[%s5614 + $0x2e8] sm:$0xf] %v5859
                %v5861 = vld [vmem:[%s5613 + $0x1ec] sm:$0xf]
                %5862 = vst [vmem:[%s5614 + $0x2ec] sm:$0xf] %v5861
                %v5863 = vld [vmem:[%s5613 + $0x1f0] sm:$0xf]
                %5864 = vst [vmem:[%s5614 + $0x2f0] sm:$0xf] %v5863
                %v5865 = vld [vmem:[%s5613 + $0x1f4] sm:$0xf]
                %5866 = vst [vmem:[%s5614 + $0x2f4] sm:$0xf] %v5865
                %v5867 = vld [vmem:[%s5613 + $0x1f8] sm:$0xf]
                %5868 = vst [vmem:[%s5614 + $0x2f8] sm:$0xf] %v5867
                %v5869 = vld [vmem:[%s5613 + $0x1fc] sm:$0xf]
                %5870 = vst [vmem:[%s5614 + $0x2fc] sm:$0xf] %v5869
                %v5871 = vld [vmem:[%s5613 + $0x200] sm:$0xf]
                %5872 = vst [vmem:[%s5614 + $0x400] sm:$0xf] %v5871
                %v5873 = vld [vmem:[%s5613 + $0x204] sm:$0xf]
                %5874 = vst [vmem:[%s5614 + $0x404] sm:$0xf] %v5873
                %v5875 = vld [vmem:[%s5613 + $0x208] sm:$0xf]
                %5876 = vst [vmem:[%s5614 + $0x408] sm:$0xf] %v5875
                %v5877 = vld [vmem:[%s5613 + $0x20c] sm:$0xf]
                %5878 = vst [vmem:[%s5614 + $0x40c] sm:$0xf] %v5877
                %v5879 = vld [vmem:[%s5613 + $0x210] sm:$0xf]
                %5880 = vst [vmem:[%s5614 + $0x410] sm:$0xf] %v5879
                %v5881 = vld [vmem:[%s5613 + $0x214] sm:$0xf]
                %5882 = vst [vmem:[%s5614 + $0x414] sm:$0xf] %v5881
                %v5883 = vld [vmem:[%s5613 + $0x218] sm:$0xf]
                %5884 = vst [vmem:[%s5614 + $0x418] sm:$0xf] %v5883
                %v5885 = vld [vmem:[%s5613 + $0x21c] sm:$0xf]
                %5886 = vst [vmem:[%s5614 + $0x41c] sm:$0xf] %v5885
                %v5887 = vld [vmem:[%s5613 + $0x220] sm:$0xf]
                %5888 = vst [vmem:[%s5614 + $0x420] sm:$0xf] %v5887
                %v5889 = vld [vmem:[%s5613 + $0x224] sm:$0xf]
                %5890 = vst [vmem:[%s5614 + $0x424] sm:$0xf] %v5889
                %v5891 = vld [vmem:[%s5613 + $0x228] sm:$0xf]
                %5892 = vst [vmem:[%s5614 + $0x428] sm:$0xf] %v5891
                %v5893 = vld [vmem:[%s5613 + $0x22c] sm:$0xf]
                %5894 = vst [vmem:[%s5614 + $0x42c] sm:$0xf] %v5893
                %v5895 = vld [vmem:[%s5613 + $0x230] sm:$0xf]
                %5896 = vst [vmem:[%s5614 + $0x430] sm:$0xf] %v5895
                %v5897 = vld [vmem:[%s5613 + $0x234] sm:$0xf]
                %5898 = vst [vmem:[%s5614 + $0x434] sm:$0xf] %v5897
                %v5899 = vld [vmem:[%s5613 + $0x238] sm:$0xf]
                %5900 = vst [vmem:[%s5614 + $0x438] sm:$0xf] %v5899
                %v5901 = vld [vmem:[%s5613 + $0x23c] sm:$0xf]
                %5902 = vst [vmem:[%s5614 + $0x43c] sm:$0xf] %v5901
                %v5903 = vld [vmem:[%s5613 + $0x240] sm:$0xf]
                %5904 = vst [vmem:[%s5614 + $0x440] sm:$0xf] %v5903
                %v5905 = vld [vmem:[%s5613 + $0x244] sm:$0xf]
                %5906 = vst [vmem:[%s5614 + $0x444] sm:$0xf] %v5905
                %v5907 = vld [vmem:[%s5613 + $0x248] sm:$0xf]
                %5908 = vst [vmem:[%s5614 + $0x448] sm:$0xf] %v5907
                %v5909 = vld [vmem:[%s5613 + $0x24c] sm:$0xf]
                %5910 = vst [vmem:[%s5614 + $0x44c] sm:$0xf] %v5909
                %v5911 = vld [vmem:[%s5613 + $0x250] sm:$0xf]
                %5912 = vst [vmem:[%s5614 + $0x450] sm:$0xf] %v5911
                %v5913 = vld [vmem:[%s5613 + $0x254] sm:$0xf]
                %5914 = vst [vmem:[%s5614 + $0x454] sm:$0xf] %v5913
                %v5915 = vld [vmem:[%s5613 + $0x258] sm:$0xf]
                %5916 = vst [vmem:[%s5614 + $0x458] sm:$0xf] %v5915
                %v5917 = vld [vmem:[%s5613 + $0x25c] sm:$0xf]
                %5918 = vst [vmem:[%s5614 + $0x45c] sm:$0xf] %v5917
                %v5919 = vld [vmem:[%s5613 + $0x260] sm:$0xf]
                %5920 = vst [vmem:[%s5614 + $0x460] sm:$0xf] %v5919
                %v5921 = vld [vmem:[%s5613 + $0x264] sm:$0xf]
                %5922 = vst [vmem:[%s5614 + $0x464] sm:$0xf] %v5921
                %v5923 = vld [vmem:[%s5613 + $0x268] sm:$0xf]
                %5924 = vst [vmem:[%s5614 + $0x468] sm:$0xf] %v5923
                %v5925 = vld [vmem:[%s5613 + $0x26c] sm:$0xf]
                %5926 = vst [vmem:[%s5614 + $0x46c] sm:$0xf] %v5925
                %v5927 = vld [vmem:[%s5613 + $0x270] sm:$0xf]
                %5928 = vst [vmem:[%s5614 + $0x470] sm:$0xf] %v5927
                %v5929 = vld [vmem:[%s5613 + $0x274] sm:$0xf]
                %5930 = vst [vmem:[%s5614 + $0x474] sm:$0xf] %v5929
                %v5931 = vld [vmem:[%s5613 + $0x278] sm:$0xf]
                %5932 = vst [vmem:[%s5614 + $0x478] sm:$0xf] %v5931
                %v5933 = vld [vmem:[%s5613 + $0x27c] sm:$0xf]
                %5934 = vst [vmem:[%s5614 + $0x47c] sm:$0xf] %v5933
                %v5935 = vld [vmem:[%s5613 + $0x280] sm:$0xf]
                %5936 = vst [vmem:[%s5614 + $0x480] sm:$0xf] %v5935
                %v5937 = vld [vmem:[%s5613 + $0x284] sm:$0xf]
                %5938 = vst [vmem:[%s5614 + $0x484] sm:$0xf] %v5937
                %v5939 = vld [vmem:[%s5613 + $0x288] sm:$0xf]
                %5940 = vst [vmem:[%s5614 + $0x488] sm:$0xf] %v5939
                %v5941 = vld [vmem:[%s5613 + $0x28c] sm:$0xf]
                %5942 = vst [vmem:[%s5614 + $0x48c] sm:$0xf] %v5941
                %v5943 = vld [vmem:[%s5613 + $0x290] sm:$0xf]
                %5944 = vst [vmem:[%s5614 + $0x490] sm:$0xf] %v5943
                %v5945 = vld [vmem:[%s5613 + $0x294] sm:$0xf]
                %5946 = vst [vmem:[%s5614 + $0x494] sm:$0xf] %v5945
                %v5947 = vld [vmem:[%s5613 + $0x298] sm:$0xf]
                %5948 = vst [vmem:[%s5614 + $0x498] sm:$0xf] %v5947
                %v5949 = vld [vmem:[%s5613 + $0x29c] sm:$0xf]
                %5950 = vst [vmem:[%s5614 + $0x49c] sm:$0xf] %v5949
                %v5951 = vld [vmem:[%s5613 + $0x2a0] sm:$0xf]
                %5952 = vst [vmem:[%s5614 + $0x4a0] sm:$0xf] %v5951
                %v5953 = vld [vmem:[%s5613 + $0x2a4] sm:$0xf]
                %5954 = vst [vmem:[%s5614 + $0x4a4] sm:$0xf] %v5953
                %v5955 = vld [vmem:[%s5613 + $0x2a8] sm:$0xf]
                %5956 = vst [vmem:[%s5614 + $0x4a8] sm:$0xf] %v5955
                %v5957 = vld [vmem:[%s5613 + $0x2ac] sm:$0xf]
                %5958 = vst [vmem:[%s5614 + $0x4ac] sm:$0xf] %v5957
                %v5959 = vld [vmem:[%s5613 + $0x2b0] sm:$0xf]
                %5960 = vst [vmem:[%s5614 + $0x4b0] sm:$0xf] %v5959
                %v5961 = vld [vmem:[%s5613 + $0x2b4] sm:$0xf]
                %5962 = vst [vmem:[%s5614 + $0x4b4] sm:$0xf] %v5961
                %v5963 = vld [vmem:[%s5613 + $0x2b8] sm:$0xf]
                %5964 = vst [vmem:[%s5614 + $0x4b8] sm:$0xf] %v5963
                %v5965 = vld [vmem:[%s5613 + $0x2bc] sm:$0xf]
                %5966 = vst [vmem:[%s5614 + $0x4bc] sm:$0xf] %v5965
                %v5967 = vld [vmem:[%s5613 + $0x2c0] sm:$0xf]
                %5968 = vst [vmem:[%s5614 + $0x4c0] sm:$0xf] %v5967
                %v5969 = vld [vmem:[%s5613 + $0x2c4] sm:$0xf]
                %5970 = vst [vmem:[%s5614 + $0x4c4] sm:$0xf] %v5969
                %v5971 = vld [vmem:[%s5613 + $0x2c8] sm:$0xf]
                %5972 = vst [vmem:[%s5614 + $0x4c8] sm:$0xf] %v5971
                %v5973 = vld [vmem:[%s5613 + $0x2cc] sm:$0xf]
                %5974 = vst [vmem:[%s5614 + $0x4cc] sm:$0xf] %v5973
                %v5975 = vld [vmem:[%s5613 + $0x2d0] sm:$0xf]
                %5976 = vst [vmem:[%s5614 + $0x4d0] sm:$0xf] %v5975
                %v5977 = vld [vmem:[%s5613 + $0x2d4] sm:$0xf]
                %5978 = vst [vmem:[%s5614 + $0x4d4] sm:$0xf] %v5977
                %v5979 = vld [vmem:[%s5613 + $0x2d8] sm:$0xf]
                %5980 = vst [vmem:[%s5614 + $0x4d8] sm:$0xf] %v5979
                %v5981 = vld [vmem:[%s5613 + $0x2dc] sm:$0xf]
                %5982 = vst [vmem:[%s5614 + $0x4dc] sm:$0xf] %v5981
                %v5983 = vld [vmem:[%s5613 + $0x2e0] sm:$0xf]
                %5984 = vst [vmem:[%s5614 + $0x4e0] sm:$0xf] %v5983
                %v5985 = vld [vmem:[%s5613 + $0x2e4] sm:$0xf]
                %5986 = vst [vmem:[%s5614 + $0x4e4] sm:$0xf] %v5985
                %v5987 = vld [vmem:[%s5613 + $0x2e8] sm:$0xf]
                %5988 = vst [vmem:[%s5614 + $0x4e8] sm:$0xf] %v5987
                %v5989 = vld [vmem:[%s5613 + $0x2ec] sm:$0xf]
                %5990 = vst [vmem:[%s5614 + $0x4ec] sm:$0xf] %v5989
                %v5991 = vld [vmem:[%s5613 + $0x2f0] sm:$0xf]
                %5992 = vst [vmem:[%s5614 + $0x4f0] sm:$0xf] %v5991
                %v5993 = vld [vmem:[%s5613 + $0x2f4] sm:$0xf]
                %5994 = vst [vmem:[%s5614 + $0x4f4] sm:$0xf] %v5993
                %v5995 = vld [vmem:[%s5613 + $0x2f8] sm:$0xf]
                %5996 = vst [vmem:[%s5614 + $0x4f8] sm:$0xf] %v5995
                %v5997 = vld [vmem:[%s5613 + $0x2fc] sm:$0xf]
                %5998 = vst [vmem:[%s5614 + $0x4fc] sm:$0xf] %v5997
                %v5999 = vld [vmem:[%s5613 + $0x300] sm:$0xf]
                %6000 = vst [vmem:[%s5614 + $0x600] sm:$0xf] %v5999
                %v6001 = vld [vmem:[%s5613 + $0x304] sm:$0xf]
                %6002 = vst [vmem:[%s5614 + $0x604] sm:$0xf] %v6001
                %v6003 = vld [vmem:[%s5613 + $0x308] sm:$0xf]
                %6004 = vst [vmem:[%s5614 + $0x608] sm:$0xf] %v6003
                %v6005 = vld [vmem:[%s5613 + $0x30c] sm:$0xf]
                %6006 = vst [vmem:[%s5614 + $0x60c] sm:$0xf] %v6005
                %v6007 = vld [vmem:[%s5613 + $0x310] sm:$0xf]
                %6008 = vst [vmem:[%s5614 + $0x610] sm:$0xf] %v6007
                %v6009 = vld [vmem:[%s5613 + $0x314] sm:$0xf]
                %6010 = vst [vmem:[%s5614 + $0x614] sm:$0xf] %v6009
                %v6011 = vld [vmem:[%s5613 + $0x318] sm:$0xf]
                %6012 = vst [vmem:[%s5614 + $0x618] sm:$0xf] %v6011
                %v6013 = vld [vmem:[%s5613 + $0x31c] sm:$0xf]
                %6014 = vst [vmem:[%s5614 + $0x61c] sm:$0xf] %v6013
                %v6015 = vld [vmem:[%s5613 + $0x320] sm:$0xf]
                %6016 = vst [vmem:[%s5614 + $0x620] sm:$0xf] %v6015
                %v6017 = vld [vmem:[%s5613 + $0x324] sm:$0xf]
                %6018 = vst [vmem:[%s5614 + $0x624] sm:$0xf] %v6017
                %v6019 = vld [vmem:[%s5613 + $0x328] sm:$0xf]
                %6020 = vst [vmem:[%s5614 + $0x628] sm:$0xf] %v6019
                %v6021 = vld [vmem:[%s5613 + $0x32c] sm:$0xf]
                %6022 = vst [vmem:[%s5614 + $0x62c] sm:$0xf] %v6021
                %v6023 = vld [vmem:[%s5613 + $0x330] sm:$0xf]
                %6024 = vst [vmem:[%s5614 + $0x630] sm:$0xf] %v6023
                %v6025 = vld [vmem:[%s5613 + $0x334] sm:$0xf]
                %6026 = vst [vmem:[%s5614 + $0x634] sm:$0xf] %v6025
                %v6027 = vld [vmem:[%s5613 + $0x338] sm:$0xf]
                %6028 = vst [vmem:[%s5614 + $0x638] sm:$0xf] %v6027
                %v6029 = vld [vmem:[%s5613 + $0x33c] sm:$0xf]
                %6030 = vst [vmem:[%s5614 + $0x63c] sm:$0xf] %v6029
                %v6031 = vld [vmem:[%s5613 + $0x340] sm:$0xf]
                %6032 = vst [vmem:[%s5614 + $0x640] sm:$0xf] %v6031
                %v6033 = vld [vmem:[%s5613 + $0x344] sm:$0xf]
                %6034 = vst [vmem:[%s5614 + $0x644] sm:$0xf] %v6033
                %v6035 = vld [vmem:[%s5613 + $0x348] sm:$0xf]
                %6036 = vst [vmem:[%s5614 + $0x648] sm:$0xf] %v6035
                %v6037 = vld [vmem:[%s5613 + $0x34c] sm:$0xf]
                %6038 = vst [vmem:[%s5614 + $0x64c] sm:$0xf] %v6037
                %v6039 = vld [vmem:[%s5613 + $0x350] sm:$0xf]
                %6040 = vst [vmem:[%s5614 + $0x650] sm:$0xf] %v6039
                %v6041 = vld [vmem:[%s5613 + $0x354] sm:$0xf]
                %6042 = vst [vmem:[%s5614 + $0x654] sm:$0xf] %v6041
                %v6043 = vld [vmem:[%s5613 + $0x358] sm:$0xf]
                %6044 = vst [vmem:[%s5614 + $0x658] sm:$0xf] %v6043
                %v6045 = vld [vmem:[%s5613 + $0x35c] sm:$0xf]
                %6046 = vst [vmem:[%s5614 + $0x65c] sm:$0xf] %v6045
                %v6047 = vld [vmem:[%s5613 + $0x360] sm:$0xf]
                %6048 = vst [vmem:[%s5614 + $0x660] sm:$0xf] %v6047
                %v6049 = vld [vmem:[%s5613 + $0x364] sm:$0xf]
                %6050 = vst [vmem:[%s5614 + $0x664] sm:$0xf] %v6049
                %v6051 = vld [vmem:[%s5613 + $0x368] sm:$0xf]
                %6052 = vst [vmem:[%s5614 + $0x668] sm:$0xf] %v6051
                %v6053 = vld [vmem:[%s5613 + $0x36c] sm:$0xf]
                %6054 = vst [vmem:[%s5614 + $0x66c] sm:$0xf] %v6053
                %v6055 = vld [vmem:[%s5613 + $0x370] sm:$0xf]
                %6056 = vst [vmem:[%s5614 + $0x670] sm:$0xf] %v6055
                %v6057 = vld [vmem:[%s5613 + $0x374] sm:$0xf]
                %6058 = vst [vmem:[%s5614 + $0x674] sm:$0xf] %v6057
                %v6059 = vld [vmem:[%s5613 + $0x378] sm:$0xf]
                %6060 = vst [vmem:[%s5614 + $0x678] sm:$0xf] %v6059
                %v6061 = vld [vmem:[%s5613 + $0x37c] sm:$0xf]
                %6062 = vst [vmem:[%s5614 + $0x67c] sm:$0xf] %v6061
                %v6063 = vld [vmem:[%s5613 + $0x380] sm:$0xf]
                %6064 = vst [vmem:[%s5614 + $0x680] sm:$0xf] %v6063
                %v6065 = vld [vmem:[%s5613 + $0x384] sm:$0xf]
                %6066 = vst [vmem:[%s5614 + $0x684] sm:$0xf] %v6065
                %v6067 = vld [vmem:[%s5613 + $0x388] sm:$0xf]
                %6068 = vst [vmem:[%s5614 + $0x688] sm:$0xf] %v6067
                %v6069 = vld [vmem:[%s5613 + $0x38c] sm:$0xf]
                %6070 = vst [vmem:[%s5614 + $0x68c] sm:$0xf] %v6069
                %v6071 = vld [vmem:[%s5613 + $0x390] sm:$0xf]
                %6072 = vst [vmem:[%s5614 + $0x690] sm:$0xf] %v6071
                %v6073 = vld [vmem:[%s5613 + $0x394] sm:$0xf]
                %6074 = vst [vmem:[%s5614 + $0x694] sm:$0xf] %v6073
                %v6075 = vld [vmem:[%s5613 + $0x398] sm:$0xf]
                %6076 = vst [vmem:[%s5614 + $0x698] sm:$0xf] %v6075
                %v6077 = vld [vmem:[%s5613 + $0x39c] sm:$0xf]
                %6078 = vst [vmem:[%s5614 + $0x69c] sm:$0xf] %v6077
                %v6079 = vld [vmem:[%s5613 + $0x3a0] sm:$0xf]
                %6080 = vst [vmem:[%s5614 + $0x6a0] sm:$0xf] %v6079
                %v6081 = vld [vmem:[%s5613 + $0x3a4] sm:$0xf]
                %6082 = vst [vmem:[%s5614 + $0x6a4] sm:$0xf] %v6081
                %v6083 = vld [vmem:[%s5613 + $0x3a8] sm:$0xf]
                %6084 = vst [vmem:[%s5614 + $0x6a8] sm:$0xf] %v6083
                %v6085 = vld [vmem:[%s5613 + $0x3ac] sm:$0xf]
                %6086 = vst [vmem:[%s5614 + $0x6ac] sm:$0xf] %v6085
                %v6087 = vld [vmem:[%s5613 + $0x3b0] sm:$0xf]
                %6088 = vst [vmem:[%s5614 + $0x6b0] sm:$0xf] %v6087
                %v6089 = vld [vmem:[%s5613 + $0x3b4] sm:$0xf]
                %6090 = vst [vmem:[%s5614 + $0x6b4] sm:$0xf] %v6089
                %v6091 = vld [vmem:[%s5613 + $0x3b8] sm:$0xf]
                %6092 = vst [vmem:[%s5614 + $0x6b8] sm:$0xf] %v6091
                %v6093 = vld [vmem:[%s5613 + $0x3bc] sm:$0xf]
                %6094 = vst [vmem:[%s5614 + $0x6bc] sm:$0xf] %v6093
                %v6095 = vld [vmem:[%s5613 + $0x3c0] sm:$0xf]
                %6096 = vst [vmem:[%s5614 + $0x6c0] sm:$0xf] %v6095
                %v6097 = vld [vmem:[%s5613 + $0x3c4] sm:$0xf]
                %6098 = vst [vmem:[%s5614 + $0x6c4] sm:$0xf] %v6097
                %v6099 = vld [vmem:[%s5613 + $0x3c8] sm:$0xf]
                %6100 = vst [vmem:[%s5614 + $0x6c8] sm:$0xf] %v6099
                %v6101 = vld [vmem:[%s5613 + $0x3cc] sm:$0xf]
                %6102 = vst [vmem:[%s5614 + $0x6cc] sm:$0xf] %v6101
                %v6103 = vld [vmem:[%s5613 + $0x3d0] sm:$0xf]
                %6104 = vst [vmem:[%s5614 + $0x6d0] sm:$0xf] %v6103
                %v6105 = vld [vmem:[%s5613 + $0x3d4] sm:$0xf]
                %6106 = vst [vmem:[%s5614 + $0x6d4] sm:$0xf] %v6105
                %v6107 = vld [vmem:[%s5613 + $0x3d8] sm:$0xf]
                %6108 = vst [vmem:[%s5614 + $0x6d8] sm:$0xf] %v6107
                %v6109 = vld [vmem:[%s5613 + $0x3dc] sm:$0xf]
                %6110 = vst [vmem:[%s5614 + $0x6dc] sm:$0xf] %v6109
                %v6111 = vld [vmem:[%s5613 + $0x3e0] sm:$0xf]
                %6112 = vst [vmem:[%s5614 + $0x6e0] sm:$0xf] %v6111
                %v6113 = vld [vmem:[%s5613 + $0x3e4] sm:$0xf]
                %6114 = vst [vmem:[%s5614 + $0x6e4] sm:$0xf] %v6113
                %v6115 = vld [vmem:[%s5613 + $0x3e8] sm:$0xf]
                %6116 = vst [vmem:[%s5614 + $0x6e8] sm:$0xf] %v6115
                %v6117 = vld [vmem:[%s5613 + $0x3ec] sm:$0xf]
                %6118 = vst [vmem:[%s5614 + $0x6ec] sm:$0xf] %v6117
                %v6119 = vld [vmem:[%s5613 + $0x3f0] sm:$0xf]
                %6120 = vst [vmem:[%s5614 + $0x6f0] sm:$0xf] %v6119
                %v6121 = vld [vmem:[%s5613 + $0x3f4] sm:$0xf]
                %6122 = vst [vmem:[%s5614 + $0x6f4] sm:$0xf] %v6121
                %v6123 = vld [vmem:[%s5613 + $0x3f8] sm:$0xf]
                %6124 = vst [vmem:[%s5614 + $0x6f8] sm:$0xf] %v6123
                %v6125 = vld [vmem:[%s5613 + $0x3fc] sm:$0xf]
                %6126 = vst [vmem:[%s5614 + $0x6fc] sm:$0xf] %v6125
              $region94: #{tpu_custom_call.1} parent=88 // loop_footer
                %s5612 = sadd.s32 1, %s5608
              $region95: #{tpu_custom_call.1} parent=88 // loop_footer_branch
                %5607 = sbr.rel target = $region91
              $region96: #{tpu_custom_call.1} parent=88 // loop_exit
                _
            $region89: #{tpu_custom_call.1} parent=80 // pred_fallthru
              _
          $region81: #{tpu_custom_call.1} parent=76 // pred_fallthru
            _
          %6658 = vnop
        $region77: #{tpu_custom_call.1} parent=27 // pred_fallthru
          _
        // Predicated region
        $region115: #{tpu_custom_call.1} parent=27 // pred_check
          %p6659 = pneg %p154
        $region116: #{tpu_custom_call.1} parent=27 // pred_check_branch
          %6661 = sbr.rel (%p6659) target = $region118
        $region117: #{tpu_custom_call.1} parent=27 // pred_region
          %s6662 = smul.u32 64, %s22
          %s6663 = smul.addr %s21, 512
          %s6664 = sadd.s32 %s6662, %s6663
          %s6665 = smul.addr %s6664, 4
          %s6666 = scalar_lea.vmem %s4, %s6665
          // Predicated region
          $region119: #{tpu_custom_call.1} parent=117 // pred_check
            _
          $region120: #{tpu_custom_call.1} parent=117 // pred_check_branch
            %6668 = sbr.rel (0) target = $region122
          $region121: #{tpu_custom_call.1} parent=117 // pred_region
            // Predicated region
            $region123: #{tpu_custom_call.1} parent=121 // pred_check
              _
            $region124: #{tpu_custom_call.1} parent=121 // pred_check_branch
              %6670 = sbr.rel target = $region126
            $region125: #{tpu_custom_call.1} parent=121 // pred_region
              // Predicated region
              $region138: #{tpu_custom_call.1} parent=125 // pred_check
                _
              $region139: #{tpu_custom_call.1} parent=125 // pred_check_branch
                %7195 = sbr.rel (0) target = $region141
              $region140: #{tpu_custom_call.1} parent=125 // pred_region
                loop: start=0, step=1, limit=1
                $region142: #{tpu_custom_call.1} parent=140 // loop_pre_header
                  _
                $region143: #{tpu_custom_call.1} parent=140 // loop_header
                  %s7197 = sphi 0, %s7201
                  %p7198 = scmp.ge.s32.totalorder %s7197, 1
                  %s7202 = sphi %s4524, %s4524
                  %s7203 = sphi %s6666, %s6666
                $region144: #{tpu_custom_call.1} parent=140 // loop_header_branch
                  %7200 = sbr.rel (%p7198) target = $region148
                $region145: #{tpu_custom_call.1} parent=140 // loop_body
                  _
                $region146: #{tpu_custom_call.1} parent=140 // loop_footer
                  %s7201 = sadd.s32 1, %s7197
                $region147: #{tpu_custom_call.1} parent=140 // loop_footer_branch
                  %7196 = sbr.rel target = $region143
                $region148: #{tpu_custom_call.1} parent=140 // loop_exit
                  _
                loop: start=0, step=1, limit=1
                $region149: #{tpu_custom_call.1} parent=140 // loop_pre_header
                  _
                $region150: #{tpu_custom_call.1} parent=140 // loop_header
                  %s7206 = sphi 0, %s7210
                  %p7207 = scmp.ge.s32.totalorder %s7206, 1
                  %s7211 = sphi %s4524, %s4524
                  %s7212 = sphi %s6666, %s6666
                $region151: #{tpu_custom_call.1} parent=140 // loop_header_branch
                  %7209 = sbr.rel (%p7207) target = $region155
                $region152: #{tpu_custom_call.1} parent=140 // loop_body
                  %v7213 = vld [vmem:[%s7211] sm:$0xf]
                  %7214 = vst [vmem:[%s7212] sm:$0xf] %v7213
                  %v7215 = vld [vmem:[%s7211 + $0x4] sm:$0xf]
                  %7216 = vst [vmem:[%s7212 + $0x4] sm:$0xf] %v7215
                  %v7217 = vld [vmem:[%s7211 + $0x8] sm:$0xf]
                  %7218 = vst [vmem:[%s7212 + $0x8] sm:$0xf] %v7217
                  %v7219 = vld [vmem:[%s7211 + $0xc] sm:$0xf]
                  %7220 = vst [vmem:[%s7212 + $0xc] sm:$0xf] %v7219
                  %v7221 = vld [vmem:[%s7211 + $0x10] sm:$0xf]
                  %7222 = vst [vmem:[%s7212 + $0x10] sm:$0xf] %v7221
                  %v7223 = vld [vmem:[%s7211 + $0x14] sm:$0xf]
                  %7224 = vst [vmem:[%s7212 + $0x14] sm:$0xf] %v7223
                  %v7225 = vld [vmem:[%s7211 + $0x18] sm:$0xf]
                  %7226 = vst [vmem:[%s7212 + $0x18] sm:$0xf] %v7225
                  %v7227 = vld [vmem:[%s7211 + $0x1c] sm:$0xf]
                  %7228 = vst [vmem:[%s7212 + $0x1c] sm:$0xf] %v7227
                  %v7229 = vld [vmem:[%s7211 + $0x20] sm:$0xf]
                  %7230 = vst [vmem:[%s7212 + $0x20] sm:$0xf] %v7229
                  %v7231 = vld [vmem:[%s7211 + $0x24] sm:$0xf]
                  %7232 = vst [vmem:[%s7212 + $0x24] sm:$0xf] %v7231
                  %v7233 = vld [vmem:[%s7211 + $0x28] sm:$0xf]
                  %7234 = vst [vmem:[%s7212 + $0x28] sm:$0xf] %v7233
                  %v7235 = vld [vmem:[%s7211 + $0x2c] sm:$0xf]
                  %7236 = vst [vmem:[%s7212 + $0x2c] sm:$0xf] %v7235
                  %v7237 = vld [vmem:[%s7211 + $0x30] sm:$0xf]
                  %7238 = vst [vmem:[%s7212 + $0x30] sm:$0xf] %v7237
                  %v7239 = vld [vmem:[%s7211 + $0x34] sm:$0xf]
                  %7240 = vst [vmem:[%s7212 + $0x34] sm:$0xf] %v7239
                  %v7241 = vld [vmem:[%s7211 + $0x38] sm:$0xf]
                  %7242 = vst [vmem:[%s7212 + $0x38] sm:$0xf] %v7241
                  %v7243 = vld [vmem:[%s7211 + $0x3c] sm:$0xf]
                  %7244 = vst [vmem:[%s7212 + $0x3c] sm:$0xf] %v7243
                  %v7245 = vld [vmem:[%s7211 + $0x40] sm:$0xf]
                  %7246 = vst [vmem:[%s7212 + $0x40] sm:$0xf] %v7245
                  %v7247 = vld [vmem:[%s7211 + $0x44] sm:$0xf]
                  %7248 = vst [vmem:[%s7212 + $0x44] sm:$0xf] %v7247
                  %v7249 = vld [vmem:[%s7211 + $0x48] sm:$0xf]
                  %7250 = vst [vmem:[%s7212 + $0x48] sm:$0xf] %v7249
                  %v7251 = vld [vmem:[%s7211 + $0x4c] sm:$0xf]
                  %7252 = vst [vmem:[%s7212 + $0x4c] sm:$0xf] %v7251
                  %v7253 = vld [vmem:[%s7211 + $0x50] sm:$0xf]
                  %7254 = vst [vmem:[%s7212 + $0x50] sm:$0xf] %v7253
                  %v7255 = vld [vmem:[%s7211 + $0x54] sm:$0xf]
                  %7256 = vst [vmem:[%s7212 + $0x54] sm:$0xf] %v7255
                  %v7257 = vld [vmem:[%s7211 + $0x58] sm:$0xf]
                  %7258 = vst [vmem:[%s7212 + $0x58] sm:$0xf] %v7257
                  %v7259 = vld [vmem:[%s7211 + $0x5c] sm:$0xf]
                  %7260 = vst [vmem:[%s7212 + $0x5c] sm:$0xf] %v7259
                  %v7261 = vld [vmem:[%s7211 + $0x60] sm:$0xf]
                  %7262 = vst [vmem:[%s7212 + $0x60] sm:$0xf] %v7261
                  %v7263 = vld [vmem:[%s7211 + $0x64] sm:$0xf]
                  %7264 = vst [vmem:[%s7212 + $0x64] sm:$0xf] %v7263
                  %v7265 = vld [vmem:[%s7211 + $0x68] sm:$0xf]
                  %7266 = vst [vmem:[%s7212 + $0x68] sm:$0xf] %v7265
                  %v7267 = vld [vmem:[%s7211 + $0x6c] sm:$0xf]
                  %7268 = vst [vmem:[%s7212 + $0x6c] sm:$0xf] %v7267
                  %v7269 = vld [vmem:[%s7211 + $0x70] sm:$0xf]
                  %7270 = vst [vmem:[%s7212 + $0x70] sm:$0xf] %v7269
                  %v7271 = vld [vmem:[%s7211 + $0x74] sm:$0xf]
                  %7272 = vst [vmem:[%s7212 + $0x74] sm:$0xf] %v7271
                  %v7273 = vld [vmem:[%s7211 + $0x78] sm:$0xf]
                  %7274 = vst [vmem:[%s7212 + $0x78] sm:$0xf] %v7273
                  %v7275 = vld [vmem:[%s7211 + $0x7c] sm:$0xf]
                  %7276 = vst [vmem:[%s7212 + $0x7c] sm:$0xf] %v7275
                  %v7277 = vld [vmem:[%s7211 + $0x80] sm:$0xf]
                  %7278 = vst [vmem:[%s7212 + $0x80] sm:$0xf] %v7277
                  %v7279 = vld [vmem:[%s7211 + $0x84] sm:$0xf]
                  %7280 = vst [vmem:[%s7212 + $0x84] sm:$0xf] %v7279
                  %v7281 = vld [vmem:[%s7211 + $0x88] sm:$0xf]
                  %7282 = vst [vmem:[%s7212 + $0x88] sm:$0xf] %v7281
                  %v7283 = vld [vmem:[%s7211 + $0x8c] sm:$0xf]
                  %7284 = vst [vmem:[%s7212 + $0x8c] sm:$0xf] %v7283
                  %v7285 = vld [vmem:[%s7211 + $0x90] sm:$0xf]
                  %7286 = vst [vmem:[%s7212 + $0x90] sm:$0xf] %v7285
                  %v7287 = vld [vmem:[%s7211 + $0x94] sm:$0xf]
                  %7288 = vst [vmem:[%s7212 + $0x94] sm:$0xf] %v7287
                  %v7289 = vld [vmem:[%s7211 + $0x98] sm:$0xf]
                  %7290 = vst [vmem:[%s7212 + $0x98] sm:$0xf] %v7289
                  %v7291 = vld [vmem:[%s7211 + $0x9c] sm:$0xf]
                  %7292 = vst [vmem:[%s7212 + $0x9c] sm:$0xf] %v7291
                  %v7293 = vld [vmem:[%s7211 + $0xa0] sm:$0xf]
                  %7294 = vst [vmem:[%s7212 + $0xa0] sm:$0xf] %v7293
                  %v7295 = vld [vmem:[%s7211 + $0xa4] sm:$0xf]
                  %7296 = vst [vmem:[%s7212 + $0xa4] sm:$0xf] %v7295
                  %v7297 = vld [vmem:[%s7211 + $0xa8] sm:$0xf]
                  %7298 = vst [vmem:[%s7212 + $0xa8] sm:$0xf] %v7297
                  %v7299 = vld [vmem:[%s7211 + $0xac] sm:$0xf]
                  %7300 = vst [vmem:[%s7212 + $0xac] sm:$0xf] %v7299
                  %v7301 = vld [vmem:[%s7211 + $0xb0] sm:$0xf]
                  %7302 = vst [vmem:[%s7212 + $0xb0] sm:$0xf] %v7301
                  %v7303 = vld [vmem:[%s7211 + $0xb4] sm:$0xf]
                  %7304 = vst [vmem:[%s7212 + $0xb4] sm:$0xf] %v7303
                  %v7305 = vld [vmem:[%s7211 + $0xb8] sm:$0xf]
                  %7306 = vst [vmem:[%s7212 + $0xb8] sm:$0xf] %v7305
                  %v7307 = vld [vmem:[%s7211 + $0xbc] sm:$0xf]
                  %7308 = vst [vmem:[%s7212 + $0xbc] sm:$0xf] %v7307
                  %v7309 = vld [vmem:[%s7211 + $0xc0] sm:$0xf]
                  %7310 = vst [vmem:[%s7212 + $0xc0] sm:$0xf] %v7309
                  %v7311 = vld [vmem:[%s7211 + $0xc4] sm:$0xf]
                  %7312 = vst [vmem:[%s7212 + $0xc4] sm:$0xf] %v7311
                  %v7313 = vld [vmem:[%s7211 + $0xc8] sm:$0xf]
                  %7314 = vst [vmem:[%s7212 + $0xc8] sm:$0xf] %v7313
                  %v7315 = vld [vmem:[%s7211 + $0xcc] sm:$0xf]
                  %7316 = vst [vmem:[%s7212 + $0xcc] sm:$0xf] %v7315
                  %v7317 = vld [vmem:[%s7211 + $0xd0] sm:$0xf]
                  %7318 = vst [vmem:[%s7212 + $0xd0] sm:$0xf] %v7317
                  %v7319 = vld [vmem:[%s7211 + $0xd4] sm:$0xf]
                  %7320 = vst [vmem:[%s7212 + $0xd4] sm:$0xf] %v7319
                  %v7321 = vld [vmem:[%s7211 + $0xd8] sm:$0xf]
                  %7322 = vst [vmem:[%s7212 + $0xd8] sm:$0xf] %v7321
                  %v7323 = vld [vmem:[%s7211 + $0xdc] sm:$0xf]
                  %7324 = vst [vmem:[%s7212 + $0xdc] sm:$0xf] %v7323
                  %v7325 = vld [vmem:[%s7211 + $0xe0] sm:$0xf]
                  %7326 = vst [vmem:[%s7212 + $0xe0] sm:$0xf] %v7325
                  %v7327 = vld [vmem:[%s7211 + $0xe4] sm:$0xf]
                  %7328 = vst [vmem:[%s7212 + $0xe4] sm:$0xf] %v7327
                  %v7329 = vld [vmem:[%s7211 + $0xe8] sm:$0xf]
                  %7330 = vst [vmem:[%s7212 + $0xe8] sm:$0xf] %v7329
                  %v7331 = vld [vmem:[%s7211 + $0xec] sm:$0xf]
                  %7332 = vst [vmem:[%s7212 + $0xec] sm:$0xf] %v7331
                  %v7333 = vld [vmem:[%s7211 + $0xf0] sm:$0xf]
                  %7334 = vst [vmem:[%s7212 + $0xf0] sm:$0xf] %v7333
                  %v7335 = vld [vmem:[%s7211 + $0xf4] sm:$0xf]
                  %7336 = vst [vmem:[%s7212 + $0xf4] sm:$0xf] %v7335
                  %v7337 = vld [vmem:[%s7211 + $0xf8] sm:$0xf]
                  %7338 = vst [vmem:[%s7212 + $0xf8] sm:$0xf] %v7337
                  %v7339 = vld [vmem:[%s7211 + $0xfc] sm:$0xf]
                  %7340 = vst [vmem:[%s7212 + $0xfc] sm:$0xf] %v7339
                  %v7341 = vld [vmem:[%s7211 + $0x100] sm:$0xf]
                  %7342 = vst [vmem:[%s7212 + $0x200] sm:$0xf] %v7341
                  %v7343 = vld [vmem:[%s7211 + $0x104] sm:$0xf]
                  %7344 = vst [vmem:[%s7212 + $0x204] sm:$0xf] %v7343
                  %v7345 = vld [vmem:[%s7211 + $0x108] sm:$0xf]
                  %7346 = vst [vmem:[%s7212 + $0x208] sm:$0xf] %v7345
                  %v7347 = vld [vmem:[%s7211 + $0x10c] sm:$0xf]
                  %7348 = vst [vmem:[%s7212 + $0x20c] sm:$0xf] %v7347
                  %v7349 = vld [vmem:[%s7211 + $0x110] sm:$0xf]
                  %7350 = vst [vmem:[%s7212 + $0x210] sm:$0xf] %v7349
                  %v7351 = vld [vmem:[%s7211 + $0x114] sm:$0xf]
                  %7352 = vst [vmem:[%s7212 + $0x214] sm:$0xf] %v7351
                  %v7353 = vld [vmem:[%s7211 + $0x118] sm:$0xf]
                  %7354 = vst [vmem:[%s7212 + $0x218] sm:$0xf] %v7353
                  %v7355 = vld [vmem:[%s7211 + $0x11c] sm:$0xf]
                  %7356 = vst [vmem:[%s7212 + $0x21c] sm:$0xf] %v7355
                  %v7357 = vld [vmem:[%s7211 + $0x120] sm:$0xf]
                  %7358 = vst [vmem:[%s7212 + $0x220] sm:$0xf] %v7357
                  %v7359 = vld [vmem:[%s7211 + $0x124] sm:$0xf]
                  %7360 = vst [vmem:[%s7212 + $0x224] sm:$0xf] %v7359
                  %v7361 = vld [vmem:[%s7211 + $0x128] sm:$0xf]
                  %7362 = vst [vmem:[%s7212 + $0x228] sm:$0xf] %v7361
                  %v7363 = vld [vmem:[%s7211 + $0x12c] sm:$0xf]
                  %7364 = vst [vmem:[%s7212 + $0x22c] sm:$0xf] %v7363
                  %v7365 = vld [vmem:[%s7211 + $0x130] sm:$0xf]
                  %7366 = vst [vmem:[%s7212 + $0x230] sm:$0xf] %v7365
                  %v7367 = vld [vmem:[%s7211 + $0x134] sm:$0xf]
                  %7368 = vst [vmem:[%s7212 + $0x234] sm:$0xf] %v7367
                  %v7369 = vld [vmem:[%s7211 + $0x138] sm:$0xf]
                  %7370 = vst [vmem:[%s7212 + $0x238] sm:$0xf] %v7369
                  %v7371 = vld [vmem:[%s7211 + $0x13c] sm:$0xf]
                  %7372 = vst [vmem:[%s7212 + $0x23c] sm:$0xf] %v7371
                  %v7373 = vld [vmem:[%s7211 + $0x140] sm:$0xf]
                  %7374 = vst [vmem:[%s7212 + $0x240] sm:$0xf] %v7373
                  %v7375 = vld [vmem:[%s7211 + $0x144] sm:$0xf]
                  %7376 = vst [vmem:[%s7212 + $0x244] sm:$0xf] %v7375
                  %v7377 = vld [vmem:[%s7211 + $0x148] sm:$0xf]
                  %7378 = vst [vmem:[%s7212 + $0x248] sm:$0xf] %v7377
                  %v7379 = vld [vmem:[%s7211 + $0x14c] sm:$0xf]
                  %7380 = vst [vmem:[%s7212 + $0x24c] sm:$0xf] %v7379
                  %v7381 = vld [vmem:[%s7211 + $0x150] sm:$0xf]
                  %7382 = vst [vmem:[%s7212 + $0x250] sm:$0xf] %v7381
                  %v7383 = vld [vmem:[%s7211 + $0x154] sm:$0xf]
                  %7384 = vst [vmem:[%s7212 + $0x254] sm:$0xf] %v7383
                  %v7385 = vld [vmem:[%s7211 + $0x158] sm:$0xf]
                  %7386 = vst [vmem:[%s7212 + $0x258] sm:$0xf] %v7385
                  %v7387 = vld [vmem:[%s7211 + $0x15c] sm:$0xf]
                  %7388 = vst [vmem:[%s7212 + $0x25c] sm:$0xf] %v7387
                  %v7389 = vld [vmem:[%s7211 + $0x160] sm:$0xf]
                  %7390 = vst [vmem:[%s7212 + $0x260] sm:$0xf] %v7389
                  %v7391 = vld [vmem:[%s7211 + $0x164] sm:$0xf]
                  %7392 = vst [vmem:[%s7212 + $0x264] sm:$0xf] %v7391
                  %v7393 = vld [vmem:[%s7211 + $0x168] sm:$0xf]
                  %7394 = vst [vmem:[%s7212 + $0x268] sm:$0xf] %v7393
                  %v7395 = vld [vmem:[%s7211 + $0x16c] sm:$0xf]
                  %7396 = vst [vmem:[%s7212 + $0x26c] sm:$0xf] %v7395
                  %v7397 = vld [vmem:[%s7211 + $0x170] sm:$0xf]
                  %7398 = vst [vmem:[%s7212 + $0x270] sm:$0xf] %v7397
                  %v7399 = vld [vmem:[%s7211 + $0x174] sm:$0xf]
                  %7400 = vst [vmem:[%s7212 + $0x274] sm:$0xf] %v7399
                  %v7401 = vld [vmem:[%s7211 + $0x178] sm:$0xf]
                  %7402 = vst [vmem:[%s7212 + $0x278] sm:$0xf] %v7401
                  %v7403 = vld [vmem:[%s7211 + $0x17c] sm:$0xf]
                  %7404 = vst [vmem:[%s7212 + $0x27c] sm:$0xf] %v7403
                  %v7405 = vld [vmem:[%s7211 + $0x180] sm:$0xf]
                  %7406 = vst [vmem:[%s7212 + $0x280] sm:$0xf] %v7405
                  %v7407 = vld [vmem:[%s7211 + $0x184] sm:$0xf]
                  %7408 = vst [vmem:[%s7212 + $0x284] sm:$0xf] %v7407
                  %v7409 = vld [vmem:[%s7211 + $0x188] sm:$0xf]
                  %7410 = vst [vmem:[%s7212 + $0x288] sm:$0xf] %v7409
                  %v7411 = vld [vmem:[%s7211 + $0x18c] sm:$0xf]
                  %7412 = vst [vmem:[%s7212 + $0x28c] sm:$0xf] %v7411
                  %v7413 = vld [vmem:[%s7211 + $0x190] sm:$0xf]
                  %7414 = vst [vmem:[%s7212 + $0x290] sm:$0xf] %v7413
                  %v7415 = vld [vmem:[%s7211 + $0x194] sm:$0xf]
                  %7416 = vst [vmem:[%s7212 + $0x294] sm:$0xf] %v7415
                  %v7417 = vld [vmem:[%s7211 + $0x198] sm:$0xf]
                  %7418 = vst [vmem:[%s7212 + $0x298] sm:$0xf] %v7417
                  %v7419 = vld [vmem:[%s7211 + $0x19c] sm:$0xf]
                  %7420 = vst [vmem:[%s7212 + $0x29c] sm:$0xf] %v7419
                  %v7421 = vld [vmem:[%s7211 + $0x1a0] sm:$0xf]
                  %7422 = vst [vmem:[%s7212 + $0x2a0] sm:$0xf] %v7421
                  %v7423 = vld [vmem:[%s7211 + $0x1a4] sm:$0xf]
                  %7424 = vst [vmem:[%s7212 + $0x2a4] sm:$0xf] %v7423
                  %v7425 = vld [vmem:[%s7211 + $0x1a8] sm:$0xf]
                  %7426 = vst [vmem:[%s7212 + $0x2a8] sm:$0xf] %v7425
                  %v7427 = vld [vmem:[%s7211 + $0x1ac] sm:$0xf]
                  %7428 = vst [vmem:[%s7212 + $0x2ac] sm:$0xf] %v7427
                  %v7429 = vld [vmem:[%s7211 + $0x1b0] sm:$0xf]
                  %7430 = vst [vmem:[%s7212 + $0x2b0] sm:$0xf] %v7429
                  %v7431 = vld [vmem:[%s7211 + $0x1b4] sm:$0xf]
                  %7432 = vst [vmem:[%s7212 + $0x2b4] sm:$0xf] %v7431
                  %v7433 = vld [vmem:[%s7211 + $0x1b8] sm:$0xf]
                  %7434 = vst [vmem:[%s7212 + $0x2b8] sm:$0xf] %v7433
                  %v7435 = vld [vmem:[%s7211 + $0x1bc] sm:$0xf]
                  %7436 = vst [vmem:[%s7212 + $0x2bc] sm:$0xf] %v7435
                  %v7437 = vld [vmem:[%s7211 + $0x1c0] sm:$0xf]
                  %7438 = vst [vmem:[%s7212 + $0x2c0] sm:$0xf] %v7437
                  %v7439 = vld [vmem:[%s7211 + $0x1c4] sm:$0xf]
                  %7440 = vst [vmem:[%s7212 + $0x2c4] sm:$0xf] %v7439
                  %v7441 = vld [vmem:[%s7211 + $0x1c8] sm:$0xf]
                  %7442 = vst [vmem:[%s7212 + $0x2c8] sm:$0xf] %v7441
                  %v7443 = vld [vmem:[%s7211 + $0x1cc] sm:$0xf]
                  %7444 = vst [vmem:[%s7212 + $0x2cc] sm:$0xf] %v7443
                  %v7445 = vld [vmem:[%s7211 + $0x1d0] sm:$0xf]
                  %7446 = vst [vmem:[%s7212 + $0x2d0] sm:$0xf] %v7445
                  %v7447 = vld [vmem:[%s7211 + $0x1d4] sm:$0xf]
                  %7448 = vst [vmem:[%s7212 + $0x2d4] sm:$0xf] %v7447
                  %v7449 = vld [vmem:[%s7211 + $0x1d8] sm:$0xf]
                  %7450 = vst [vmem:[%s7212 + $0x2d8] sm:$0xf] %v7449
                  %v7451 = vld [vmem:[%s7211 + $0x1dc] sm:$0xf]
                  %7452 = vst [vmem:[%s7212 + $0x2dc] sm:$0xf] %v7451
                  %v7453 = vld [vmem:[%s7211 + $0x1e0] sm:$0xf]
                  %7454 = vst [vmem:[%s7212 + $0x2e0] sm:$0xf] %v7453
                  %v7455 = vld [vmem:[%s7211 + $0x1e4] sm:$0xf]
                  %7456 = vst [vmem:[%s7212 + $0x2e4] sm:$0xf] %v7455
                  %v7457 = vld [vmem:[%s7211 + $0x1e8] sm:$0xf]
                  %7458 = vst [vmem:[%s7212 + $0x2e8] sm:$0xf] %v7457
                  %v7459 = vld [vmem:[%s7211 + $0x1ec] sm:$0xf]
                  %7460 = vst [vmem:[%s7212 + $0x2ec] sm:$0xf] %v7459
                  %v7461 = vld [vmem:[%s7211 + $0x1f0] sm:$0xf]
                  %7462 = vst [vmem:[%s7212 + $0x2f0] sm:$0xf] %v7461
                  %v7463 = vld [vmem:[%s7211 + $0x1f4] sm:$0xf]
                  %7464 = vst [vmem:[%s7212 + $0x2f4] sm:$0xf] %v7463
                  %v7465 = vld [vmem:[%s7211 + $0x1f8] sm:$0xf]
                  %7466 = vst [vmem:[%s7212 + $0x2f8] sm:$0xf] %v7465
                  %v7467 = vld [vmem:[%s7211 + $0x1fc] sm:$0xf]
                  %7468 = vst [vmem:[%s7212 + $0x2fc] sm:$0xf] %v7467
                  %v7469 = vld [vmem:[%s7211 + $0x200] sm:$0xf]
                  %7470 = vst [vmem:[%s7212 + $0x400] sm:$0xf] %v7469
                  %v7471 = vld [vmem:[%s7211 + $0x204] sm:$0xf]
                  %7472 = vst [vmem:[%s7212 + $0x404] sm:$0xf] %v7471
                  %v7473 = vld [vmem:[%s7211 + $0x208] sm:$0xf]
                  %7474 = vst [vmem:[%s7212 + $0x408] sm:$0xf] %v7473
                  %v7475 = vld [vmem:[%s7211 + $0x20c] sm:$0xf]
                  %7476 = vst [vmem:[%s7212 + $0x40c] sm:$0xf] %v7475
                  %v7477 = vld [vmem:[%s7211 + $0x210] sm:$0xf]
                  %7478 = vst [vmem:[%s7212 + $0x410] sm:$0xf] %v7477
                  %v7479 = vld [vmem:[%s7211 + $0x214] sm:$0xf]
                  %7480 = vst [vmem:[%s7212 + $0x414] sm:$0xf] %v7479
                  %v7481 = vld [vmem:[%s7211 + $0x218] sm:$0xf]
                  %7482 = vst [vmem:[%s7212 + $0x418] sm:$0xf] %v7481
                  %v7483 = vld [vmem:[%s7211 + $0x21c] sm:$0xf]
                  %7484 = vst [vmem:[%s7212 + $0x41c] sm:$0xf] %v7483
                  %v7485 = vld [vmem:[%s7211 + $0x220] sm:$0xf]
                  %7486 = vst [vmem:[%s7212 + $0x420] sm:$0xf] %v7485
                  %v7487 = vld [vmem:[%s7211 + $0x224] sm:$0xf]
                  %7488 = vst [vmem:[%s7212 + $0x424] sm:$0xf] %v7487
                  %v7489 = vld [vmem:[%s7211 + $0x228] sm:$0xf]
                  %7490 = vst [vmem:[%s7212 + $0x428] sm:$0xf] %v7489
                  %v7491 = vld [vmem:[%s7211 + $0x22c] sm:$0xf]
                  %7492 = vst [vmem:[%s7212 + $0x42c] sm:$0xf] %v7491
                  %v7493 = vld [vmem:[%s7211 + $0x230] sm:$0xf]
                  %7494 = vst [vmem:[%s7212 + $0x430] sm:$0xf] %v7493
                  %v7495 = vld [vmem:[%s7211 + $0x234] sm:$0xf]
                  %7496 = vst [vmem:[%s7212 + $0x434] sm:$0xf] %v7495
                  %v7497 = vld [vmem:[%s7211 + $0x238] sm:$0xf]
                  %7498 = vst [vmem:[%s7212 + $0x438] sm:$0xf] %v7497
                  %v7499 = vld [vmem:[%s7211 + $0x23c] sm:$0xf]
                  %7500 = vst [vmem:[%s7212 + $0x43c] sm:$0xf] %v7499
                  %v7501 = vld [vmem:[%s7211 + $0x240] sm:$0xf]
                  %7502 = vst [vmem:[%s7212 + $0x440] sm:$0xf] %v7501
                  %v7503 = vld [vmem:[%s7211 + $0x244] sm:$0xf]
                  %7504 = vst [vmem:[%s7212 + $0x444] sm:$0xf] %v7503
                  %v7505 = vld [vmem:[%s7211 + $0x248] sm:$0xf]
                  %7506 = vst [vmem:[%s7212 + $0x448] sm:$0xf] %v7505
                  %v7507 = vld [vmem:[%s7211 + $0x24c] sm:$0xf]
                  %7508 = vst [vmem:[%s7212 + $0x44c] sm:$0xf] %v7507
                  %v7509 = vld [vmem:[%s7211 + $0x250] sm:$0xf]
                  %7510 = vst [vmem:[%s7212 + $0x450] sm:$0xf] %v7509
                  %v7511 = vld [vmem:[%s7211 + $0x254] sm:$0xf]
                  %7512 = vst [vmem:[%s7212 + $0x454] sm:$0xf] %v7511
                  %v7513 = vld [vmem:[%s7211 + $0x258] sm:$0xf]
                  %7514 = vst [vmem:[%s7212 + $0x458] sm:$0xf] %v7513
                  %v7515 = vld [vmem:[%s7211 + $0x25c] sm:$0xf]
                  %7516 = vst [vmem:[%s7212 + $0x45c] sm:$0xf] %v7515
                  %v7517 = vld [vmem:[%s7211 + $0x260] sm:$0xf]
                  %7518 = vst [vmem:[%s7212 + $0x460] sm:$0xf] %v7517
                  %v7519 = vld [vmem:[%s7211 + $0x264] sm:$0xf]
                  %7520 = vst [vmem:[%s7212 + $0x464] sm:$0xf] %v7519
                  %v7521 = vld [vmem:[%s7211 + $0x268] sm:$0xf]
                  %7522 = vst [vmem:[%s7212 + $0x468] sm:$0xf] %v7521
                  %v7523 = vld [vmem:[%s7211 + $0x26c] sm:$0xf]
                  %7524 = vst [vmem:[%s7212 + $0x46c] sm:$0xf] %v7523
                  %v7525 = vld [vmem:[%s7211 + $0x270] sm:$0xf]
                  %7526 = vst [vmem:[%s7212 + $0x470] sm:$0xf] %v7525
                  %v7527 = vld [vmem:[%s7211 + $0x274] sm:$0xf]
                  %7528 = vst [vmem:[%s7212 + $0x474] sm:$0xf] %v7527
                  %v7529 = vld [vmem:[%s7211 + $0x278] sm:$0xf]
                  %7530 = vst [vmem:[%s7212 + $0x478] sm:$0xf] %v7529
                  %v7531 = vld [vmem:[%s7211 + $0x27c] sm:$0xf]
                  %7532 = vst [vmem:[%s7212 + $0x47c] sm:$0xf] %v7531
                  %v7533 = vld [vmem:[%s7211 + $0x280] sm:$0xf]
                  %7534 = vst [vmem:[%s7212 + $0x480] sm:$0xf] %v7533
                  %v7535 = vld [vmem:[%s7211 + $0x284] sm:$0xf]
                  %7536 = vst [vmem:[%s7212 + $0x484] sm:$0xf] %v7535
                  %v7537 = vld [vmem:[%s7211 + $0x288] sm:$0xf]
                  %7538 = vst [vmem:[%s7212 + $0x488] sm:$0xf] %v7537
                  %v7539 = vld [vmem:[%s7211 + $0x28c] sm:$0xf]
                  %7540 = vst [vmem:[%s7212 + $0x48c] sm:$0xf] %v7539
                  %v7541 = vld [vmem:[%s7211 + $0x290] sm:$0xf]
                  %7542 = vst [vmem:[%s7212 + $0x490] sm:$0xf] %v7541
                  %v7543 = vld [vmem:[%s7211 + $0x294] sm:$0xf]
                  %7544 = vst [vmem:[%s7212 + $0x494] sm:$0xf] %v7543
                  %v7545 = vld [vmem:[%s7211 + $0x298] sm:$0xf]
                  %7546 = vst [vmem:[%s7212 + $0x498] sm:$0xf] %v7545
                  %v7547 = vld [vmem:[%s7211 + $0x29c] sm:$0xf]
                  %7548 = vst [vmem:[%s7212 + $0x49c] sm:$0xf] %v7547
                  %v7549 = vld [vmem:[%s7211 + $0x2a0] sm:$0xf]
                  %7550 = vst [vmem:[%s7212 + $0x4a0] sm:$0xf] %v7549
                  %v7551 = vld [vmem:[%s7211 + $0x2a4] sm:$0xf]
                  %7552 = vst [vmem:[%s7212 + $0x4a4] sm:$0xf] %v7551
                  %v7553 = vld [vmem:[%s7211 + $0x2a8] sm:$0xf]
                  %7554 = vst [vmem:[%s7212 + $0x4a8] sm:$0xf] %v7553
                  %v7555 = vld [vmem:[%s7211 + $0x2ac] sm:$0xf]
                  %7556 = vst [vmem:[%s7212 + $0x4ac] sm:$0xf] %v7555
                  %v7557 = vld [vmem:[%s7211 + $0x2b0] sm:$0xf]
                  %7558 = vst [vmem:[%s7212 + $0x4b0] sm:$0xf] %v7557
                  %v7559 = vld [vmem:[%s7211 + $0x2b4] sm:$0xf]
                  %7560 = vst [vmem:[%s7212 + $0x4b4] sm:$0xf] %v7559
                  %v7561 = vld [vmem:[%s7211 + $0x2b8] sm:$0xf]
                  %7562 = vst [vmem:[%s7212 + $0x4b8] sm:$0xf] %v7561
                  %v7563 = vld [vmem:[%s7211 + $0x2bc] sm:$0xf]
                  %7564 = vst [vmem:[%s7212 + $0x4bc] sm:$0xf] %v7563
                  %v7565 = vld [vmem:[%s7211 + $0x2c0] sm:$0xf]
                  %7566 = vst [vmem:[%s7212 + $0x4c0] sm:$0xf] %v7565
                  %v7567 = vld [vmem:[%s7211 + $0x2c4] sm:$0xf]
                  %7568 = vst [vmem:[%s7212 + $0x4c4] sm:$0xf] %v7567
                  %v7569 = vld [vmem:[%s7211 + $0x2c8] sm:$0xf]
                  %7570 = vst [vmem:[%s7212 + $0x4c8] sm:$0xf] %v7569
                  %v7571 = vld [vmem:[%s7211 + $0x2cc] sm:$0xf]
                  %7572 = vst [vmem:[%s7212 + $0x4cc] sm:$0xf] %v7571
                  %v7573 = vld [vmem:[%s7211 + $0x2d0] sm:$0xf]
                  %7574 = vst [vmem:[%s7212 + $0x4d0] sm:$0xf] %v7573
                  %v7575 = vld [vmem:[%s7211 + $0x2d4] sm:$0xf]
                  %7576 = vst [vmem:[%s7212 + $0x4d4] sm:$0xf] %v7575
                  %v7577 = vld [vmem:[%s7211 + $0x2d8] sm:$0xf]
                  %7578 = vst [vmem:[%s7212 + $0x4d8] sm:$0xf] %v7577
                  %v7579 = vld [vmem:[%s7211 + $0x2dc] sm:$0xf]
                  %7580 = vst [vmem:[%s7212 + $0x4dc] sm:$0xf] %v7579
                  %v7581 = vld [vmem:[%s7211 + $0x2e0] sm:$0xf]
                  %7582 = vst [vmem:[%s7212 + $0x4e0] sm:$0xf] %v7581
                  %v7583 = vld [vmem:[%s7211 + $0x2e4] sm:$0xf]
                  %7584 = vst [vmem:[%s7212 + $0x4e4] sm:$0xf] %v7583
                  %v7585 = vld [vmem:[%s7211 + $0x2e8] sm:$0xf]
                  %7586 = vst [vmem:[%s7212 + $0x4e8] sm:$0xf] %v7585
                  %v7587 = vld [vmem:[%s7211 + $0x2ec] sm:$0xf]
                  %7588 = vst [vmem:[%s7212 + $0x4ec] sm:$0xf] %v7587
                  %v7589 = vld [vmem:[%s7211 + $0x2f0] sm:$0xf]
                  %7590 = vst [vmem:[%s7212 + $0x4f0] sm:$0xf] %v7589
                  %v7591 = vld [vmem:[%s7211 + $0x2f4] sm:$0xf]
                  %7592 = vst [vmem:[%s7212 + $0x4f4] sm:$0xf] %v7591
                  %v7593 = vld [vmem:[%s7211 + $0x2f8] sm:$0xf]
                  %7594 = vst [vmem:[%s7212 + $0x4f8] sm:$0xf] %v7593
                  %v7595 = vld [vmem:[%s7211 + $0x2fc] sm:$0xf]
                  %7596 = vst [vmem:[%s7212 + $0x4fc] sm:$0xf] %v7595
                  %v7597 = vld [vmem:[%s7211 + $0x300] sm:$0xf]
                  %7598 = vst [vmem:[%s7212 + $0x600] sm:$0xf] %v7597
                  %v7599 = vld [vmem:[%s7211 + $0x304] sm:$0xf]
                  %7600 = vst [vmem:[%s7212 + $0x604] sm:$0xf] %v7599
                  %v7601 = vld [vmem:[%s7211 + $0x308] sm:$0xf]
                  %7602 = vst [vmem:[%s7212 + $0x608] sm:$0xf] %v7601
                  %v7603 = vld [vmem:[%s7211 + $0x30c] sm:$0xf]
                  %7604 = vst [vmem:[%s7212 + $0x60c] sm:$0xf] %v7603
                  %v7605 = vld [vmem:[%s7211 + $0x310] sm:$0xf]
                  %7606 = vst [vmem:[%s7212 + $0x610] sm:$0xf] %v7605
                  %v7607 = vld [vmem:[%s7211 + $0x314] sm:$0xf]
                  %7608 = vst [vmem:[%s7212 + $0x614] sm:$0xf] %v7607
                  %v7609 = vld [vmem:[%s7211 + $0x318] sm:$0xf]
                  %7610 = vst [vmem:[%s7212 + $0x618] sm:$0xf] %v7609
                  %v7611 = vld [vmem:[%s7211 + $0x31c] sm:$0xf]
                  %7612 = vst [vmem:[%s7212 + $0x61c] sm:$0xf] %v7611
                  %v7613 = vld [vmem:[%s7211 + $0x320] sm:$0xf]
                  %7614 = vst [vmem:[%s7212 + $0x620] sm:$0xf] %v7613
                  %v7615 = vld [vmem:[%s7211 + $0x324] sm:$0xf]
                  %7616 = vst [vmem:[%s7212 + $0x624] sm:$0xf] %v7615
                  %v7617 = vld [vmem:[%s7211 + $0x328] sm:$0xf]
                  %7618 = vst [vmem:[%s7212 + $0x628] sm:$0xf] %v7617
                  %v7619 = vld [vmem:[%s7211 + $0x32c] sm:$0xf]
                  %7620 = vst [vmem:[%s7212 + $0x62c] sm:$0xf] %v7619
                  %v7621 = vld [vmem:[%s7211 + $0x330] sm:$0xf]
                  %7622 = vst [vmem:[%s7212 + $0x630] sm:$0xf] %v7621
                  %v7623 = vld [vmem:[%s7211 + $0x334] sm:$0xf]
                  %7624 = vst [vmem:[%s7212 + $0x634] sm:$0xf] %v7623
                  %v7625 = vld [vmem:[%s7211 + $0x338] sm:$0xf]
                  %7626 = vst [vmem:[%s7212 + $0x638] sm:$0xf] %v7625
                  %v7627 = vld [vmem:[%s7211 + $0x33c] sm:$0xf]
                  %7628 = vst [vmem:[%s7212 + $0x63c] sm:$0xf] %v7627
                  %v7629 = vld [vmem:[%s7211 + $0x340] sm:$0xf]
                  %7630 = vst [vmem:[%s7212 + $0x640] sm:$0xf] %v7629
                  %v7631 = vld [vmem:[%s7211 + $0x344] sm:$0xf]
                  %7632 = vst [vmem:[%s7212 + $0x644] sm:$0xf] %v7631
                  %v7633 = vld [vmem:[%s7211 + $0x348] sm:$0xf]
                  %7634 = vst [vmem:[%s7212 + $0x648] sm:$0xf] %v7633
                  %v7635 = vld [vmem:[%s7211 + $0x34c] sm:$0xf]
                  %7636 = vst [vmem:[%s7212 + $0x64c] sm:$0xf] %v7635
                  %v7637 = vld [vmem:[%s7211 + $0x350] sm:$0xf]
                  %7638 = vst [vmem:[%s7212 + $0x650] sm:$0xf] %v7637
                  %v7639 = vld [vmem:[%s7211 + $0x354] sm:$0xf]
                  %7640 = vst [vmem:[%s7212 + $0x654] sm:$0xf] %v7639
                  %v7641 = vld [vmem:[%s7211 + $0x358] sm:$0xf]
                  %7642 = vst [vmem:[%s7212 + $0x658] sm:$0xf] %v7641
                  %v7643 = vld [vmem:[%s7211 + $0x35c] sm:$0xf]
                  %7644 = vst [vmem:[%s7212 + $0x65c] sm:$0xf] %v7643
                  %v7645 = vld [vmem:[%s7211 + $0x360] sm:$0xf]
                  %7646 = vst [vmem:[%s7212 + $0x660] sm:$0xf] %v7645
                  %v7647 = vld [vmem:[%s7211 + $0x364] sm:$0xf]
                  %7648 = vst [vmem:[%s7212 + $0x664] sm:$0xf] %v7647
                  %v7649 = vld [vmem:[%s7211 + $0x368] sm:$0xf]
                  %7650 = vst [vmem:[%s7212 + $0x668] sm:$0xf] %v7649
                  %v7651 = vld [vmem:[%s7211 + $0x36c] sm:$0xf]
                  %7652 = vst [vmem:[%s7212 + $0x66c] sm:$0xf] %v7651
                  %v7653 = vld [vmem:[%s7211 + $0x370] sm:$0xf]
                  %7654 = vst [vmem:[%s7212 + $0x670] sm:$0xf] %v7653
                  %v7655 = vld [vmem:[%s7211 + $0x374] sm:$0xf]
                  %7656 = vst [vmem:[%s7212 + $0x674] sm:$0xf] %v7655
                  %v7657 = vld [vmem:[%s7211 + $0x378] sm:$0xf]
                  %7658 = vst [vmem:[%s7212 + $0x678] sm:$0xf] %v7657
                  %v7659 = vld [vmem:[%s7211 + $0x37c] sm:$0xf]
                  %7660 = vst [vmem:[%s7212 + $0x67c] sm:$0xf] %v7659
                  %v7661 = vld [vmem:[%s7211 + $0x380] sm:$0xf]
                  %7662 = vst [vmem:[%s7212 + $0x680] sm:$0xf] %v7661
                  %v7663 = vld [vmem:[%s7211 + $0x384] sm:$0xf]
                  %7664 = vst [vmem:[%s7212 + $0x684] sm:$0xf] %v7663
                  %v7665 = vld [vmem:[%s7211 + $0x388] sm:$0xf]
                  %7666 = vst [vmem:[%s7212 + $0x688] sm:$0xf] %v7665
                  %v7667 = vld [vmem:[%s7211 + $0x38c] sm:$0xf]
                  %7668 = vst [vmem:[%s7212 + $0x68c] sm:$0xf] %v7667
                  %v7669 = vld [vmem:[%s7211 + $0x390] sm:$0xf]
                  %7670 = vst [vmem:[%s7212 + $0x690] sm:$0xf] %v7669
                  %v7671 = vld [vmem:[%s7211 + $0x394] sm:$0xf]
                  %7672 = vst [vmem:[%s7212 + $0x694] sm:$0xf] %v7671
                  %v7673 = vld [vmem:[%s7211 + $0x398] sm:$0xf]
                  %7674 = vst [vmem:[%s7212 + $0x698] sm:$0xf] %v7673
                  %v7675 = vld [vmem:[%s7211 + $0x39c] sm:$0xf]
                  %7676 = vst [vmem:[%s7212 + $0x69c] sm:$0xf] %v7675
                  %v7677 = vld [vmem:[%s7211 + $0x3a0] sm:$0xf]
                  %7678 = vst [vmem:[%s7212 + $0x6a0] sm:$0xf] %v7677
                  %v7679 = vld [vmem:[%s7211 + $0x3a4] sm:$0xf]
                  %7680 = vst [vmem:[%s7212 + $0x6a4] sm:$0xf] %v7679
                  %v7681 = vld [vmem:[%s7211 + $0x3a8] sm:$0xf]
                  %7682 = vst [vmem:[%s7212 + $0x6a8] sm:$0xf] %v7681
                  %v7683 = vld [vmem:[%s7211 + $0x3ac] sm:$0xf]
                  %7684 = vst [vmem:[%s7212 + $0x6ac] sm:$0xf] %v7683
                  %v7685 = vld [vmem:[%s7211 + $0x3b0] sm:$0xf]
                  %7686 = vst [vmem:[%s7212 + $0x6b0] sm:$0xf] %v7685
                  %v7687 = vld [vmem:[%s7211 + $0x3b4] sm:$0xf]
                  %7688 = vst [vmem:[%s7212 + $0x6b4] sm:$0xf] %v7687
                  %v7689 = vld [vmem:[%s7211 + $0x3b8] sm:$0xf]
                  %7690 = vst [vmem:[%s7212 + $0x6b8] sm:$0xf] %v7689
                  %v7691 = vld [vmem:[%s7211 + $0x3bc] sm:$0xf]
                  %7692 = vst [vmem:[%s7212 + $0x6bc] sm:$0xf] %v7691
                  %v7693 = vld [vmem:[%s7211 + $0x3c0] sm:$0xf]
                  %7694 = vst [vmem:[%s7212 + $0x6c0] sm:$0xf] %v7693
                  %v7695 = vld [vmem:[%s7211 + $0x3c4] sm:$0xf]
                  %7696 = vst [vmem:[%s7212 + $0x6c4] sm:$0xf] %v7695
                  %v7697 = vld [vmem:[%s7211 + $0x3c8] sm:$0xf]
                  %7698 = vst [vmem:[%s7212 + $0x6c8] sm:$0xf] %v7697
                  %v7699 = vld [vmem:[%s7211 + $0x3cc] sm:$0xf]
                  %7700 = vst [vmem:[%s7212 + $0x6cc] sm:$0xf] %v7699
                  %v7701 = vld [vmem:[%s7211 + $0x3d0] sm:$0xf]
                  %7702 = vst [vmem:[%s7212 + $0x6d0] sm:$0xf] %v7701
                  %v7703 = vld [vmem:[%s7211 + $0x3d4] sm:$0xf]
                  %7704 = vst [vmem:[%s7212 + $0x6d4] sm:$0xf] %v7703
                  %v7705 = vld [vmem:[%s7211 + $0x3d8] sm:$0xf]
                  %7706 = vst [vmem:[%s7212 + $0x6d8] sm:$0xf] %v7705
                  %v7707 = vld [vmem:[%s7211 + $0x3dc] sm:$0xf]
                  %7708 = vst [vmem:[%s7212 + $0x6dc] sm:$0xf] %v7707
                  %v7709 = vld [vmem:[%s7211 + $0x3e0] sm:$0xf]
                  %7710 = vst [vmem:[%s7212 + $0x6e0] sm:$0xf] %v7709
                  %v7711 = vld [vmem:[%s7211 + $0x3e4] sm:$0xf]
                  %7712 = vst [vmem:[%s7212 + $0x6e4] sm:$0xf] %v7711
                  %v7713 = vld [vmem:[%s7211 + $0x3e8] sm:$0xf]
                  %7714 = vst [vmem:[%s7212 + $0x6e8] sm:$0xf] %v7713
                  %v7715 = vld [vmem:[%s7211 + $0x3ec] sm:$0xf]
                  %7716 = vst [vmem:[%s7212 + $0x6ec] sm:$0xf] %v7715
                  %v7717 = vld [vmem:[%s7211 + $0x3f0] sm:$0xf]
                  %7718 = vst [vmem:[%s7212 + $0x6f0] sm:$0xf] %v7717
                  %v7719 = vld [vmem:[%s7211 + $0x3f4] sm:$0xf]
                  %7720 = vst [vmem:[%s7212 + $0x6f4] sm:$0xf] %v7719
                  %v7721 = vld [vmem:[%s7211 + $0x3f8] sm:$0xf]
                  %7722 = vst [vmem:[%s7212 + $0x6f8] sm:$0xf] %v7721
                  %v7723 = vld [vmem:[%s7211 + $0x3fc] sm:$0xf]
                  %7724 = vst [vmem:[%s7212 + $0x6fc] sm:$0xf] %v7723
                $region153: #{tpu_custom_call.1} parent=140 // loop_footer
                  %s7210 = sadd.s32 1, %s7206
                $region154: #{tpu_custom_call.1} parent=140 // loop_footer_branch
                  %7205 = sbr.rel target = $region150
                $region155: #{tpu_custom_call.1} parent=140 // loop_exit
                  _
              $region141: #{tpu_custom_call.1} parent=125 // pred_fallthru
                _
            $region126: #{tpu_custom_call.1} parent=121 // pred_fallthru
              _
            // Predicated region
            $region127: #{tpu_custom_call.1} parent=121 // pred_check
              _
            $region128: #{tpu_custom_call.1} parent=121 // pred_check_branch
              %6672 = sbr.rel (0) target = $region130
            $region129: #{tpu_custom_call.1} parent=121 // pred_region
              loop: start=0, step=1, limit=1
              $region131: #{tpu_custom_call.1} parent=129 // loop_pre_header
                _
              $region132: #{tpu_custom_call.1} parent=129 // loop_header
                %s6675 = sphi 0, %s6679
                %p6676 = scmp.ge.s32.totalorder %s6675, 1
                %s6680 = sphi %s4524, %s4524
                %s6681 = sphi %s6666, %s6666
              $region133: #{tpu_custom_call.1} parent=129 // loop_header_branch
                %6678 = sbr.rel (%p6676) target = $region137
              $region134: #{tpu_custom_call.1} parent=129 // loop_body
                %v6682 = vld [vmem:[%s6680] sm:$0xf]
                %6683 = vst [vmem:[%s6681] sm:$0xf] %v6682
                %v6684 = vld [vmem:[%s6680 + $0x4] sm:$0xf]
                %6685 = vst [vmem:[%s6681 + $0x4] sm:$0xf] %v6684
                %v6686 = vld [vmem:[%s6680 + $0x8] sm:$0xf]
                %6687 = vst [vmem:[%s6681 + $0x8] sm:$0xf] %v6686
                %v6688 = vld [vmem:[%s6680 + $0xc] sm:$0xf]
                %6689 = vst [vmem:[%s6681 + $0xc] sm:$0xf] %v6688
                %v6690 = vld [vmem:[%s6680 + $0x10] sm:$0xf]
                %6691 = vst [vmem:[%s6681 + $0x10] sm:$0xf] %v6690
                %v6692 = vld [vmem:[%s6680 + $0x14] sm:$0xf]
                %6693 = vst [vmem:[%s6681 + $0x14] sm:$0xf] %v6692
                %v6694 = vld [vmem:[%s6680 + $0x18] sm:$0xf]
                %6695 = vst [vmem:[%s6681 + $0x18] sm:$0xf] %v6694
                %v6696 = vld [vmem:[%s6680 + $0x1c] sm:$0xf]
                %6697 = vst [vmem:[%s6681 + $0x1c] sm:$0xf] %v6696
                %v6698 = vld [vmem:[%s6680 + $0x20] sm:$0xf]
                %6699 = vst [vmem:[%s6681 + $0x20] sm:$0xf] %v6698
                %v6700 = vld [vmem:[%s6680 + $0x24] sm:$0xf]
                %6701 = vst [vmem:[%s6681 + $0x24] sm:$0xf] %v6700
                %v6702 = vld [vmem:[%s6680 + $0x28] sm:$0xf]
                %6703 = vst [vmem:[%s6681 + $0x28] sm:$0xf] %v6702
                %v6704 = vld [vmem:[%s6680 + $0x2c] sm:$0xf]
                %6705 = vst [vmem:[%s6681 + $0x2c] sm:$0xf] %v6704
                %v6706 = vld [vmem:[%s6680 + $0x30] sm:$0xf]
                %6707 = vst [vmem:[%s6681 + $0x30] sm:$0xf] %v6706
                %v6708 = vld [vmem:[%s6680 + $0x34] sm:$0xf]
                %6709 = vst [vmem:[%s6681 + $0x34] sm:$0xf] %v6708
                %v6710 = vld [vmem:[%s6680 + $0x38] sm:$0xf]
                %6711 = vst [vmem:[%s6681 + $0x38] sm:$0xf] %v6710
                %v6712 = vld [vmem:[%s6680 + $0x3c] sm:$0xf]
                %6713 = vst [vmem:[%s6681 + $0x3c] sm:$0xf] %v6712
                %v6714 = vld [vmem:[%s6680 + $0x40] sm:$0xf]
                %6715 = vst [vmem:[%s6681 + $0x40] sm:$0xf] %v6714
                %v6716 = vld [vmem:[%s6680 + $0x44] sm:$0xf]
                %6717 = vst [vmem:[%s6681 + $0x44] sm:$0xf] %v6716
                %v6718 = vld [vmem:[%s6680 + $0x48] sm:$0xf]
                %6719 = vst [vmem:[%s6681 + $0x48] sm:$0xf] %v6718
                %v6720 = vld [vmem:[%s6680 + $0x4c] sm:$0xf]
                %6721 = vst [vmem:[%s6681 + $0x4c] sm:$0xf] %v6720
                %v6722 = vld [vmem:[%s6680 + $0x50] sm:$0xf]
                %6723 = vst [vmem:[%s6681 + $0x50] sm:$0xf] %v6722
                %v6724 = vld [vmem:[%s6680 + $0x54] sm:$0xf]
                %6725 = vst [vmem:[%s6681 + $0x54] sm:$0xf] %v6724
                %v6726 = vld [vmem:[%s6680 + $0x58] sm:$0xf]
                %6727 = vst [vmem:[%s6681 + $0x58] sm:$0xf] %v6726
                %v6728 = vld [vmem:[%s6680 + $0x5c] sm:$0xf]
                %6729 = vst [vmem:[%s6681 + $0x5c] sm:$0xf] %v6728
                %v6730 = vld [vmem:[%s6680 + $0x60] sm:$0xf]
                %6731 = vst [vmem:[%s6681 + $0x60] sm:$0xf] %v6730
                %v6732 = vld [vmem:[%s6680 + $0x64] sm:$0xf]
                %6733 = vst [vmem:[%s6681 + $0x64] sm:$0xf] %v6732
                %v6734 = vld [vmem:[%s6680 + $0x68] sm:$0xf]
                %6735 = vst [vmem:[%s6681 + $0x68] sm:$0xf] %v6734
                %v6736 = vld [vmem:[%s6680 + $0x6c] sm:$0xf]
                %6737 = vst [vmem:[%s6681 + $0x6c] sm:$0xf] %v6736
                %v6738 = vld [vmem:[%s6680 + $0x70] sm:$0xf]
                %6739 = vst [vmem:[%s6681 + $0x70] sm:$0xf] %v6738
                %v6740 = vld [vmem:[%s6680 + $0x74] sm:$0xf]
                %6741 = vst [vmem:[%s6681 + $0x74] sm:$0xf] %v6740
                %v6742 = vld [vmem:[%s6680 + $0x78] sm:$0xf]
                %6743 = vst [vmem:[%s6681 + $0x78] sm:$0xf] %v6742
                %v6744 = vld [vmem:[%s6680 + $0x7c] sm:$0xf]
                %6745 = vst [vmem:[%s6681 + $0x7c] sm:$0xf] %v6744
                %v6746 = vld [vmem:[%s6680 + $0x80] sm:$0xf]
                %6747 = vst [vmem:[%s6681 + $0x80] sm:$0xf] %v6746
                %v6748 = vld [vmem:[%s6680 + $0x84] sm:$0xf]
                %6749 = vst [vmem:[%s6681 + $0x84] sm:$0xf] %v6748
                %v6750 = vld [vmem:[%s6680 + $0x88] sm:$0xf]
                %6751 = vst [vmem:[%s6681 + $0x88] sm:$0xf] %v6750
                %v6752 = vld [vmem:[%s6680 + $0x8c] sm:$0xf]
                %6753 = vst [vmem:[%s6681 + $0x8c] sm:$0xf] %v6752
                %v6754 = vld [vmem:[%s6680 + $0x90] sm:$0xf]
                %6755 = vst [vmem:[%s6681 + $0x90] sm:$0xf] %v6754
                %v6756 = vld [vmem:[%s6680 + $0x94] sm:$0xf]
                %6757 = vst [vmem:[%s6681 + $0x94] sm:$0xf] %v6756
                %v6758 = vld [vmem:[%s6680 + $0x98] sm:$0xf]
                %6759 = vst [vmem:[%s6681 + $0x98] sm:$0xf] %v6758
                %v6760 = vld [vmem:[%s6680 + $0x9c] sm:$0xf]
                %6761 = vst [vmem:[%s6681 + $0x9c] sm:$0xf] %v6760
                %v6762 = vld [vmem:[%s6680 + $0xa0] sm:$0xf]
                %6763 = vst [vmem:[%s6681 + $0xa0] sm:$0xf] %v6762
                %v6764 = vld [vmem:[%s6680 + $0xa4] sm:$0xf]
                %6765 = vst [vmem:[%s6681 + $0xa4] sm:$0xf] %v6764
                %v6766 = vld [vmem:[%s6680 + $0xa8] sm:$0xf]
                %6767 = vst [vmem:[%s6681 + $0xa8] sm:$0xf] %v6766
                %v6768 = vld [vmem:[%s6680 + $0xac] sm:$0xf]
                %6769 = vst [vmem:[%s6681 + $0xac] sm:$0xf] %v6768
                %v6770 = vld [vmem:[%s6680 + $0xb0] sm:$0xf]
                %6771 = vst [vmem:[%s6681 + $0xb0] sm:$0xf] %v6770
                %v6772 = vld [vmem:[%s6680 + $0xb4] sm:$0xf]
                %6773 = vst [vmem:[%s6681 + $0xb4] sm:$0xf] %v6772
                %v6774 = vld [vmem:[%s6680 + $0xb8] sm:$0xf]
                %6775 = vst [vmem:[%s6681 + $0xb8] sm:$0xf] %v6774
                %v6776 = vld [vmem:[%s6680 + $0xbc] sm:$0xf]
                %6777 = vst [vmem:[%s6681 + $0xbc] sm:$0xf] %v6776
                %v6778 = vld [vmem:[%s6680 + $0xc0] sm:$0xf]
                %6779 = vst [vmem:[%s6681 + $0xc0] sm:$0xf] %v6778
                %v6780 = vld [vmem:[%s6680 + $0xc4] sm:$0xf]
                %6781 = vst [vmem:[%s6681 + $0xc4] sm:$0xf] %v6780
                %v6782 = vld [vmem:[%s6680 + $0xc8] sm:$0xf]
                %6783 = vst [vmem:[%s6681 + $0xc8] sm:$0xf] %v6782
                %v6784 = vld [vmem:[%s6680 + $0xcc] sm:$0xf]
                %6785 = vst [vmem:[%s6681 + $0xcc] sm:$0xf] %v6784
                %v6786 = vld [vmem:[%s6680 + $0xd0] sm:$0xf]
                %6787 = vst [vmem:[%s6681 + $0xd0] sm:$0xf] %v6786
                %v6788 = vld [vmem:[%s6680 + $0xd4] sm:$0xf]
                %6789 = vst [vmem:[%s6681 + $0xd4] sm:$0xf] %v6788
                %v6790 = vld [vmem:[%s6680 + $0xd8] sm:$0xf]
                %6791 = vst [vmem:[%s6681 + $0xd8] sm:$0xf] %v6790
                %v6792 = vld [vmem:[%s6680 + $0xdc] sm:$0xf]
                %6793 = vst [vmem:[%s6681 + $0xdc] sm:$0xf] %v6792
                %v6794 = vld [vmem:[%s6680 + $0xe0] sm:$0xf]
                %6795 = vst [vmem:[%s6681 + $0xe0] sm:$0xf] %v6794
                %v6796 = vld [vmem:[%s6680 + $0xe4] sm:$0xf]
                %6797 = vst [vmem:[%s6681 + $0xe4] sm:$0xf] %v6796
                %v6798 = vld [vmem:[%s6680 + $0xe8] sm:$0xf]
                %6799 = vst [vmem:[%s6681 + $0xe8] sm:$0xf] %v6798
                %v6800 = vld [vmem:[%s6680 + $0xec] sm:$0xf]
                %6801 = vst [vmem:[%s6681 + $0xec] sm:$0xf] %v6800
                %v6802 = vld [vmem:[%s6680 + $0xf0] sm:$0xf]
                %6803 = vst [vmem:[%s6681 + $0xf0] sm:$0xf] %v6802
                %v6804 = vld [vmem:[%s6680 + $0xf4] sm:$0xf]
                %6805 = vst [vmem:[%s6681 + $0xf4] sm:$0xf] %v6804
                %v6806 = vld [vmem:[%s6680 + $0xf8] sm:$0xf]
                %6807 = vst [vmem:[%s6681 + $0xf8] sm:$0xf] %v6806
                %v6808 = vld [vmem:[%s6680 + $0xfc] sm:$0xf]
                %6809 = vst [vmem:[%s6681 + $0xfc] sm:$0xf] %v6808
                %v6810 = vld [vmem:[%s6680 + $0x100] sm:$0xf]
                %6811 = vst [vmem:[%s6681 + $0x200] sm:$0xf] %v6810
                %v6812 = vld [vmem:[%s6680 + $0x104] sm:$0xf]
                %6813 = vst [vmem:[%s6681 + $0x204] sm:$0xf] %v6812
                %v6814 = vld [vmem:[%s6680 + $0x108] sm:$0xf]
                %6815 = vst [vmem:[%s6681 + $0x208] sm:$0xf] %v6814
                %v6816 = vld [vmem:[%s6680 + $0x10c] sm:$0xf]
                %6817 = vst [vmem:[%s6681 + $0x20c] sm:$0xf] %v6816
                %v6818 = vld [vmem:[%s6680 + $0x110] sm:$0xf]
                %6819 = vst [vmem:[%s6681 + $0x210] sm:$0xf] %v6818
                %v6820 = vld [vmem:[%s6680 + $0x114] sm:$0xf]
                %6821 = vst [vmem:[%s6681 + $0x214] sm:$0xf] %v6820
                %v6822 = vld [vmem:[%s6680 + $0x118] sm:$0xf]
                %6823 = vst [vmem:[%s6681 + $0x218] sm:$0xf] %v6822
                %v6824 = vld [vmem:[%s6680 + $0x11c] sm:$0xf]
                %6825 = vst [vmem:[%s6681 + $0x21c] sm:$0xf] %v6824
                %v6826 = vld [vmem:[%s6680 + $0x120] sm:$0xf]
                %6827 = vst [vmem:[%s6681 + $0x220] sm:$0xf] %v6826
                %v6828 = vld [vmem:[%s6680 + $0x124] sm:$0xf]
                %6829 = vst [vmem:[%s6681 + $0x224] sm:$0xf] %v6828
                %v6830 = vld [vmem:[%s6680 + $0x128] sm:$0xf]
                %6831 = vst [vmem:[%s6681 + $0x228] sm:$0xf] %v6830
                %v6832 = vld [vmem:[%s6680 + $0x12c] sm:$0xf]
                %6833 = vst [vmem:[%s6681 + $0x22c] sm:$0xf] %v6832
                %v6834 = vld [vmem:[%s6680 + $0x130] sm:$0xf]
                %6835 = vst [vmem:[%s6681 + $0x230] sm:$0xf] %v6834
                %v6836 = vld [vmem:[%s6680 + $0x134] sm:$0xf]
                %6837 = vst [vmem:[%s6681 + $0x234] sm:$0xf] %v6836
                %v6838 = vld [vmem:[%s6680 + $0x138] sm:$0xf]
                %6839 = vst [vmem:[%s6681 + $0x238] sm:$0xf] %v6838
                %v6840 = vld [vmem:[%s6680 + $0x13c] sm:$0xf]
                %6841 = vst [vmem:[%s6681 + $0x23c] sm:$0xf] %v6840
                %v6842 = vld [vmem:[%s6680 + $0x140] sm:$0xf]
                %6843 = vst [vmem:[%s6681 + $0x240] sm:$0xf] %v6842
                %v6844 = vld [vmem:[%s6680 + $0x144] sm:$0xf]
                %6845 = vst [vmem:[%s6681 + $0x244] sm:$0xf] %v6844
                %v6846 = vld [vmem:[%s6680 + $0x148] sm:$0xf]
                %6847 = vst [vmem:[%s6681 + $0x248] sm:$0xf] %v6846
                %v6848 = vld [vmem:[%s6680 + $0x14c] sm:$0xf]
                %6849 = vst [vmem:[%s6681 + $0x24c] sm:$0xf] %v6848
                %v6850 = vld [vmem:[%s6680 + $0x150] sm:$0xf]
                %6851 = vst [vmem:[%s6681 + $0x250] sm:$0xf] %v6850
                %v6852 = vld [vmem:[%s6680 + $0x154] sm:$0xf]
                %6853 = vst [vmem:[%s6681 + $0x254] sm:$0xf] %v6852
                %v6854 = vld [vmem:[%s6680 + $0x158] sm:$0xf]
                %6855 = vst [vmem:[%s6681 + $0x258] sm:$0xf] %v6854
                %v6856 = vld [vmem:[%s6680 + $0x15c] sm:$0xf]
                %6857 = vst [vmem:[%s6681 + $0x25c] sm:$0xf] %v6856
                %v6858 = vld [vmem:[%s6680 + $0x160] sm:$0xf]
                %6859 = vst [vmem:[%s6681 + $0x260] sm:$0xf] %v6858
                %v6860 = vld [vmem:[%s6680 + $0x164] sm:$0xf]
                %6861 = vst [vmem:[%s6681 + $0x264] sm:$0xf] %v6860
                %v6862 = vld [vmem:[%s6680 + $0x168] sm:$0xf]
                %6863 = vst [vmem:[%s6681 + $0x268] sm:$0xf] %v6862
                %v6864 = vld [vmem:[%s6680 + $0x16c] sm:$0xf]
                %6865 = vst [vmem:[%s6681 + $0x26c] sm:$0xf] %v6864
                %v6866 = vld [vmem:[%s6680 + $0x170] sm:$0xf]
                %6867 = vst [vmem:[%s6681 + $0x270] sm:$0xf] %v6866
                %v6868 = vld [vmem:[%s6680 + $0x174] sm:$0xf]
                %6869 = vst [vmem:[%s6681 + $0x274] sm:$0xf] %v6868
                %v6870 = vld [vmem:[%s6680 + $0x178] sm:$0xf]
                %6871 = vst [vmem:[%s6681 + $0x278] sm:$0xf] %v6870
                %v6872 = vld [vmem:[%s6680 + $0x17c] sm:$0xf]
                %6873 = vst [vmem:[%s6681 + $0x27c] sm:$0xf] %v6872
                %v6874 = vld [vmem:[%s6680 + $0x180] sm:$0xf]
                %6875 = vst [vmem:[%s6681 + $0x280] sm:$0xf] %v6874
                %v6876 = vld [vmem:[%s6680 + $0x184] sm:$0xf]
                %6877 = vst [vmem:[%s6681 + $0x284] sm:$0xf] %v6876
                %v6878 = vld [vmem:[%s6680 + $0x188] sm:$0xf]
                %6879 = vst [vmem:[%s6681 + $0x288] sm:$0xf] %v6878
                %v6880 = vld [vmem:[%s6680 + $0x18c] sm:$0xf]
                %6881 = vst [vmem:[%s6681 + $0x28c] sm:$0xf] %v6880
                %v6882 = vld [vmem:[%s6680 + $0x190] sm:$0xf]
                %6883 = vst [vmem:[%s6681 + $0x290] sm:$0xf] %v6882
                %v6884 = vld [vmem:[%s6680 + $0x194] sm:$0xf]
                %6885 = vst [vmem:[%s6681 + $0x294] sm:$0xf] %v6884
                %v6886 = vld [vmem:[%s6680 + $0x198] sm:$0xf]
                %6887 = vst [vmem:[%s6681 + $0x298] sm:$0xf] %v6886
                %v6888 = vld [vmem:[%s6680 + $0x19c] sm:$0xf]
                %6889 = vst [vmem:[%s6681 + $0x29c] sm:$0xf] %v6888
                %v6890 = vld [vmem:[%s6680 + $0x1a0] sm:$0xf]
                %6891 = vst [vmem:[%s6681 + $0x2a0] sm:$0xf] %v6890
                %v6892 = vld [vmem:[%s6680 + $0x1a4] sm:$0xf]
                %6893 = vst [vmem:[%s6681 + $0x2a4] sm:$0xf] %v6892
                %v6894 = vld [vmem:[%s6680 + $0x1a8] sm:$0xf]
                %6895 = vst [vmem:[%s6681 + $0x2a8] sm:$0xf] %v6894
                %v6896 = vld [vmem:[%s6680 + $0x1ac] sm:$0xf]
                %6897 = vst [vmem:[%s6681 + $0x2ac] sm:$0xf] %v6896
                %v6898 = vld [vmem:[%s6680 + $0x1b0] sm:$0xf]
                %6899 = vst [vmem:[%s6681 + $0x2b0] sm:$0xf] %v6898
                %v6900 = vld [vmem:[%s6680 + $0x1b4] sm:$0xf]
                %6901 = vst [vmem:[%s6681 + $0x2b4] sm:$0xf] %v6900
                %v6902 = vld [vmem:[%s6680 + $0x1b8] sm:$0xf]
                %6903 = vst [vmem:[%s6681 + $0x2b8] sm:$0xf] %v6902
                %v6904 = vld [vmem:[%s6680 + $0x1bc] sm:$0xf]
                %6905 = vst [vmem:[%s6681 + $0x2bc] sm:$0xf] %v6904
                %v6906 = vld [vmem:[%s6680 + $0x1c0] sm:$0xf]
                %6907 = vst [vmem:[%s6681 + $0x2c0] sm:$0xf] %v6906
                %v6908 = vld [vmem:[%s6680 + $0x1c4] sm:$0xf]
                %6909 = vst [vmem:[%s6681 + $0x2c4] sm:$0xf] %v6908
                %v6910 = vld [vmem:[%s6680 + $0x1c8] sm:$0xf]
                %6911 = vst [vmem:[%s6681 + $0x2c8] sm:$0xf] %v6910
                %v6912 = vld [vmem:[%s6680 + $0x1cc] sm:$0xf]
                %6913 = vst [vmem:[%s6681 + $0x2cc] sm:$0xf] %v6912
                %v6914 = vld [vmem:[%s6680 + $0x1d0] sm:$0xf]
                %6915 = vst [vmem:[%s6681 + $0x2d0] sm:$0xf] %v6914
                %v6916 = vld [vmem:[%s6680 + $0x1d4] sm:$0xf]
                %6917 = vst [vmem:[%s6681 + $0x2d4] sm:$0xf] %v6916
                %v6918 = vld [vmem:[%s6680 + $0x1d8] sm:$0xf]
                %6919 = vst [vmem:[%s6681 + $0x2d8] sm:$0xf] %v6918
                %v6920 = vld [vmem:[%s6680 + $0x1dc] sm:$0xf]
                %6921 = vst [vmem:[%s6681 + $0x2dc] sm:$0xf] %v6920
                %v6922 = vld [vmem:[%s6680 + $0x1e0] sm:$0xf]
                %6923 = vst [vmem:[%s6681 + $0x2e0] sm:$0xf] %v6922
                %v6924 = vld [vmem:[%s6680 + $0x1e4] sm:$0xf]
                %6925 = vst [vmem:[%s6681 + $0x2e4] sm:$0xf] %v6924
                %v6926 = vld [vmem:[%s6680 + $0x1e8] sm:$0xf]
                %6927 = vst [vmem:[%s6681 + $0x2e8] sm:$0xf] %v6926
                %v6928 = vld [vmem:[%s6680 + $0x1ec] sm:$0xf]
                %6929 = vst [vmem:[%s6681 + $0x2ec] sm:$0xf] %v6928
                %v6930 = vld [vmem:[%s6680 + $0x1f0] sm:$0xf]
                %6931 = vst [vmem:[%s6681 + $0x2f0] sm:$0xf] %v6930
                %v6932 = vld [vmem:[%s6680 + $0x1f4] sm:$0xf]
                %6933 = vst [vmem:[%s6681 + $0x2f4] sm:$0xf] %v6932
                %v6934 = vld [vmem:[%s6680 + $0x1f8] sm:$0xf]
                %6935 = vst [vmem:[%s6681 + $0x2f8] sm:$0xf] %v6934
                %v6936 = vld [vmem:[%s6680 + $0x1fc] sm:$0xf]
                %6937 = vst [vmem:[%s6681 + $0x2fc] sm:$0xf] %v6936
                %v6938 = vld [vmem:[%s6680 + $0x200] sm:$0xf]
                %6939 = vst [vmem:[%s6681 + $0x400] sm:$0xf] %v6938
                %v6940 = vld [vmem:[%s6680 + $0x204] sm:$0xf]
                %6941 = vst [vmem:[%s6681 + $0x404] sm:$0xf] %v6940
                %v6942 = vld [vmem:[%s6680 + $0x208] sm:$0xf]
                %6943 = vst [vmem:[%s6681 + $0x408] sm:$0xf] %v6942
                %v6944 = vld [vmem:[%s6680 + $0x20c] sm:$0xf]
                %6945 = vst [vmem:[%s6681 + $0x40c] sm:$0xf] %v6944
                %v6946 = vld [vmem:[%s6680 + $0x210] sm:$0xf]
                %6947 = vst [vmem:[%s6681 + $0x410] sm:$0xf] %v6946
                %v6948 = vld [vmem:[%s6680 + $0x214] sm:$0xf]
                %6949 = vst [vmem:[%s6681 + $0x414] sm:$0xf] %v6948
                %v6950 = vld [vmem:[%s6680 + $0x218] sm:$0xf]
                %6951 = vst [vmem:[%s6681 + $0x418] sm:$0xf] %v6950
                %v6952 = vld [vmem:[%s6680 + $0x21c] sm:$0xf]
                %6953 = vst [vmem:[%s6681 + $0x41c] sm:$0xf] %v6952
                %v6954 = vld [vmem:[%s6680 + $0x220] sm:$0xf]
                %6955 = vst [vmem:[%s6681 + $0x420] sm:$0xf] %v6954
                %v6956 = vld [vmem:[%s6680 + $0x224] sm:$0xf]
                %6957 = vst [vmem:[%s6681 + $0x424] sm:$0xf] %v6956
                %v6958 = vld [vmem:[%s6680 + $0x228] sm:$0xf]
                %6959 = vst [vmem:[%s6681 + $0x428] sm:$0xf] %v6958
                %v6960 = vld [vmem:[%s6680 + $0x22c] sm:$0xf]
                %6961 = vst [vmem:[%s6681 + $0x42c] sm:$0xf] %v6960
                %v6962 = vld [vmem:[%s6680 + $0x230] sm:$0xf]
                %6963 = vst [vmem:[%s6681 + $0x430] sm:$0xf] %v6962
                %v6964 = vld [vmem:[%s6680 + $0x234] sm:$0xf]
                %6965 = vst [vmem:[%s6681 + $0x434] sm:$0xf] %v6964
                %v6966 = vld [vmem:[%s6680 + $0x238] sm:$0xf]
                %6967 = vst [vmem:[%s6681 + $0x438] sm:$0xf] %v6966
                %v6968 = vld [vmem:[%s6680 + $0x23c] sm:$0xf]
                %6969 = vst [vmem:[%s6681 + $0x43c] sm:$0xf] %v6968
                %v6970 = vld [vmem:[%s6680 + $0x240] sm:$0xf]
                %6971 = vst [vmem:[%s6681 + $0x440] sm:$0xf] %v6970
                %v6972 = vld [vmem:[%s6680 + $0x244] sm:$0xf]
                %6973 = vst [vmem:[%s6681 + $0x444] sm:$0xf] %v6972
                %v6974 = vld [vmem:[%s6680 + $0x248] sm:$0xf]
                %6975 = vst [vmem:[%s6681 + $0x448] sm:$0xf] %v6974
                %v6976 = vld [vmem:[%s6680 + $0x24c] sm:$0xf]
                %6977 = vst [vmem:[%s6681 + $0x44c] sm:$0xf] %v6976
                %v6978 = vld [vmem:[%s6680 + $0x250] sm:$0xf]
                %6979 = vst [vmem:[%s6681 + $0x450] sm:$0xf] %v6978
                %v6980 = vld [vmem:[%s6680 + $0x254] sm:$0xf]
                %6981 = vst [vmem:[%s6681 + $0x454] sm:$0xf] %v6980
                %v6982 = vld [vmem:[%s6680 + $0x258] sm:$0xf]
                %6983 = vst [vmem:[%s6681 + $0x458] sm:$0xf] %v6982
                %v6984 = vld [vmem:[%s6680 + $0x25c] sm:$0xf]
                %6985 = vst [vmem:[%s6681 + $0x45c] sm:$0xf] %v6984
                %v6986 = vld [vmem:[%s6680 + $0x260] sm:$0xf]
                %6987 = vst [vmem:[%s6681 + $0x460] sm:$0xf] %v6986
                %v6988 = vld [vmem:[%s6680 + $0x264] sm:$0xf]
                %6989 = vst [vmem:[%s6681 + $0x464] sm:$0xf] %v6988
                %v6990 = vld [vmem:[%s6680 + $0x268] sm:$0xf]
                %6991 = vst [vmem:[%s6681 + $0x468] sm:$0xf] %v6990
                %v6992 = vld [vmem:[%s6680 + $0x26c] sm:$0xf]
                %6993 = vst [vmem:[%s6681 + $0x46c] sm:$0xf] %v6992
                %v6994 = vld [vmem:[%s6680 + $0x270] sm:$0xf]
                %6995 = vst [vmem:[%s6681 + $0x470] sm:$0xf] %v6994
                %v6996 = vld [vmem:[%s6680 + $0x274] sm:$0xf]
                %6997 = vst [vmem:[%s6681 + $0x474] sm:$0xf] %v6996
                %v6998 = vld [vmem:[%s6680 + $0x278] sm:$0xf]
                %6999 = vst [vmem:[%s6681 + $0x478] sm:$0xf] %v6998
                %v7000 = vld [vmem:[%s6680 + $0x27c] sm:$0xf]
                %7001 = vst [vmem:[%s6681 + $0x47c] sm:$0xf] %v7000
                %v7002 = vld [vmem:[%s6680 + $0x280] sm:$0xf]
                %7003 = vst [vmem:[%s6681 + $0x480] sm:$0xf] %v7002
                %v7004 = vld [vmem:[%s6680 + $0x284] sm:$0xf]
                %7005 = vst [vmem:[%s6681 + $0x484] sm:$0xf] %v7004
                %v7006 = vld [vmem:[%s6680 + $0x288] sm:$0xf]
                %7007 = vst [vmem:[%s6681 + $0x488] sm:$0xf] %v7006
                %v7008 = vld [vmem:[%s6680 + $0x28c] sm:$0xf]
                %7009 = vst [vmem:[%s6681 + $0x48c] sm:$0xf] %v7008
                %v7010 = vld [vmem:[%s6680 + $0x290] sm:$0xf]
                %7011 = vst [vmem:[%s6681 + $0x490] sm:$0xf] %v7010
                %v7012 = vld [vmem:[%s6680 + $0x294] sm:$0xf]
                %7013 = vst [vmem:[%s6681 + $0x494] sm:$0xf] %v7012
                %v7014 = vld [vmem:[%s6680 + $0x298] sm:$0xf]
                %7015 = vst [vmem:[%s6681 + $0x498] sm:$0xf] %v7014
                %v7016 = vld [vmem:[%s6680 + $0x29c] sm:$0xf]
                %7017 = vst [vmem:[%s6681 + $0x49c] sm:$0xf] %v7016
                %v7018 = vld [vmem:[%s6680 + $0x2a0] sm:$0xf]
                %7019 = vst [vmem:[%s6681 + $0x4a0] sm:$0xf] %v7018
                %v7020 = vld [vmem:[%s6680 + $0x2a4] sm:$0xf]
                %7021 = vst [vmem:[%s6681 + $0x4a4] sm:$0xf] %v7020
                %v7022 = vld [vmem:[%s6680 + $0x2a8] sm:$0xf]
                %7023 = vst [vmem:[%s6681 + $0x4a8] sm:$0xf] %v7022
                %v7024 = vld [vmem:[%s6680 + $0x2ac] sm:$0xf]
                %7025 = vst [vmem:[%s6681 + $0x4ac] sm:$0xf] %v7024
                %v7026 = vld [vmem:[%s6680 + $0x2b0] sm:$0xf]
                %7027 = vst [vmem:[%s6681 + $0x4b0] sm:$0xf] %v7026
                %v7028 = vld [vmem:[%s6680 + $0x2b4] sm:$0xf]
                %7029 = vst [vmem:[%s6681 + $0x4b4] sm:$0xf] %v7028
                %v7030 = vld [vmem:[%s6680 + $0x2b8] sm:$0xf]
                %7031 = vst [vmem:[%s6681 + $0x4b8] sm:$0xf] %v7030
                %v7032 = vld [vmem:[%s6680 + $0x2bc] sm:$0xf]
                %7033 = vst [vmem:[%s6681 + $0x4bc] sm:$0xf] %v7032
                %v7034 = vld [vmem:[%s6680 + $0x2c0] sm:$0xf]
                %7035 = vst [vmem:[%s6681 + $0x4c0] sm:$0xf] %v7034
                %v7036 = vld [vmem:[%s6680 + $0x2c4] sm:$0xf]
                %7037 = vst [vmem:[%s6681 + $0x4c4] sm:$0xf] %v7036
                %v7038 = vld [vmem:[%s6680 + $0x2c8] sm:$0xf]
                %7039 = vst [vmem:[%s6681 + $0x4c8] sm:$0xf] %v7038
                %v7040 = vld [vmem:[%s6680 + $0x2cc] sm:$0xf]
                %7041 = vst [vmem:[%s6681 + $0x4cc] sm:$0xf] %v7040
                %v7042 = vld [vmem:[%s6680 + $0x2d0] sm:$0xf]
                %7043 = vst [vmem:[%s6681 + $0x4d0] sm:$0xf] %v7042
                %v7044 = vld [vmem:[%s6680 + $0x2d4] sm:$0xf]
                %7045 = vst [vmem:[%s6681 + $0x4d4] sm:$0xf] %v7044
                %v7046 = vld [vmem:[%s6680 + $0x2d8] sm:$0xf]
                %7047 = vst [vmem:[%s6681 + $0x4d8] sm:$0xf] %v7046
                %v7048 = vld [vmem:[%s6680 + $0x2dc] sm:$0xf]
                %7049 = vst [vmem:[%s6681 + $0x4dc] sm:$0xf] %v7048
                %v7050 = vld [vmem:[%s6680 + $0x2e0] sm:$0xf]
                %7051 = vst [vmem:[%s6681 + $0x4e0] sm:$0xf] %v7050
                %v7052 = vld [vmem:[%s6680 + $0x2e4] sm:$0xf]
                %7053 = vst [vmem:[%s6681 + $0x4e4] sm:$0xf] %v7052
                %v7054 = vld [vmem:[%s6680 + $0x2e8] sm:$0xf]
                %7055 = vst [vmem:[%s6681 + $0x4e8] sm:$0xf] %v7054
                %v7056 = vld [vmem:[%s6680 + $0x2ec] sm:$0xf]
                %7057 = vst [vmem:[%s6681 + $0x4ec] sm:$0xf] %v7056
                %v7058 = vld [vmem:[%s6680 + $0x2f0] sm:$0xf]
                %7059 = vst [vmem:[%s6681 + $0x4f0] sm:$0xf] %v7058
                %v7060 = vld [vmem:[%s6680 + $0x2f4] sm:$0xf]
                %7061 = vst [vmem:[%s6681 + $0x4f4] sm:$0xf] %v7060
                %v7062 = vld [vmem:[%s6680 + $0x2f8] sm:$0xf]
                %7063 = vst [vmem:[%s6681 + $0x4f8] sm:$0xf] %v7062
                %v7064 = vld [vmem:[%s6680 + $0x2fc] sm:$0xf]
                %7065 = vst [vmem:[%s6681 + $0x4fc] sm:$0xf] %v7064
                %v7066 = vld [vmem:[%s6680 + $0x300] sm:$0xf]
                %7067 = vst [vmem:[%s6681 + $0x600] sm:$0xf] %v7066
                %v7068 = vld [vmem:[%s6680 + $0x304] sm:$0xf]
                %7069 = vst [vmem:[%s6681 + $0x604] sm:$0xf] %v7068
                %v7070 = vld [vmem:[%s6680 + $0x308] sm:$0xf]
                %7071 = vst [vmem:[%s6681 + $0x608] sm:$0xf] %v7070
                %v7072 = vld [vmem:[%s6680 + $0x30c] sm:$0xf]
                %7073 = vst [vmem:[%s6681 + $0x60c] sm:$0xf] %v7072
                %v7074 = vld [vmem:[%s6680 + $0x310] sm:$0xf]
                %7075 = vst [vmem:[%s6681 + $0x610] sm:$0xf] %v7074
                %v7076 = vld [vmem:[%s6680 + $0x314] sm:$0xf]
                %7077 = vst [vmem:[%s6681 + $0x614] sm:$0xf] %v7076
                %v7078 = vld [vmem:[%s6680 + $0x318] sm:$0xf]
                %7079 = vst [vmem:[%s6681 + $0x618] sm:$0xf] %v7078
                %v7080 = vld [vmem:[%s6680 + $0x31c] sm:$0xf]
                %7081 = vst [vmem:[%s6681 + $0x61c] sm:$0xf] %v7080
                %v7082 = vld [vmem:[%s6680 + $0x320] sm:$0xf]
                %7083 = vst [vmem:[%s6681 + $0x620] sm:$0xf] %v7082
                %v7084 = vld [vmem:[%s6680 + $0x324] sm:$0xf]
                %7085 = vst [vmem:[%s6681 + $0x624] sm:$0xf] %v7084
                %v7086 = vld [vmem:[%s6680 + $0x328] sm:$0xf]
                %7087 = vst [vmem:[%s6681 + $0x628] sm:$0xf] %v7086
                %v7088 = vld [vmem:[%s6680 + $0x32c] sm:$0xf]
                %7089 = vst [vmem:[%s6681 + $0x62c] sm:$0xf] %v7088
                %v7090 = vld [vmem:[%s6680 + $0x330] sm:$0xf]
                %7091 = vst [vmem:[%s6681 + $0x630] sm:$0xf] %v7090
                %v7092 = vld [vmem:[%s6680 + $0x334] sm:$0xf]
                %7093 = vst [vmem:[%s6681 + $0x634] sm:$0xf] %v7092
                %v7094 = vld [vmem:[%s6680 + $0x338] sm:$0xf]
                %7095 = vst [vmem:[%s6681 + $0x638] sm:$0xf] %v7094
                %v7096 = vld [vmem:[%s6680 + $0x33c] sm:$0xf]
                %7097 = vst [vmem:[%s6681 + $0x63c] sm:$0xf] %v7096
                %v7098 = vld [vmem:[%s6680 + $0x340] sm:$0xf]
                %7099 = vst [vmem:[%s6681 + $0x640] sm:$0xf] %v7098
                %v7100 = vld [vmem:[%s6680 + $0x344] sm:$0xf]
                %7101 = vst [vmem:[%s6681 + $0x644] sm:$0xf] %v7100
                %v7102 = vld [vmem:[%s6680 + $0x348] sm:$0xf]
                %7103 = vst [vmem:[%s6681 + $0x648] sm:$0xf] %v7102
                %v7104 = vld [vmem:[%s6680 + $0x34c] sm:$0xf]
                %7105 = vst [vmem:[%s6681 + $0x64c] sm:$0xf] %v7104
                %v7106 = vld [vmem:[%s6680 + $0x350] sm:$0xf]
                %7107 = vst [vmem:[%s6681 + $0x650] sm:$0xf] %v7106
                %v7108 = vld [vmem:[%s6680 + $0x354] sm:$0xf]
                %7109 = vst [vmem:[%s6681 + $0x654] sm:$0xf] %v7108
                %v7110 = vld [vmem:[%s6680 + $0x358] sm:$0xf]
                %7111 = vst [vmem:[%s6681 + $0x658] sm:$0xf] %v7110
                %v7112 = vld [vmem:[%s6680 + $0x35c] sm:$0xf]
                %7113 = vst [vmem:[%s6681 + $0x65c] sm:$0xf] %v7112
                %v7114 = vld [vmem:[%s6680 + $0x360] sm:$0xf]
                %7115 = vst [vmem:[%s6681 + $0x660] sm:$0xf] %v7114
                %v7116 = vld [vmem:[%s6680 + $0x364] sm:$0xf]
                %7117 = vst [vmem:[%s6681 + $0x664] sm:$0xf] %v7116
                %v7118 = vld [vmem:[%s6680 + $0x368] sm:$0xf]
                %7119 = vst [vmem:[%s6681 + $0x668] sm:$0xf] %v7118
                %v7120 = vld [vmem:[%s6680 + $0x36c] sm:$0xf]
                %7121 = vst [vmem:[%s6681 + $0x66c] sm:$0xf] %v7120
                %v7122 = vld [vmem:[%s6680 + $0x370] sm:$0xf]
                %7123 = vst [vmem:[%s6681 + $0x670] sm:$0xf] %v7122
                %v7124 = vld [vmem:[%s6680 + $0x374] sm:$0xf]
                %7125 = vst [vmem:[%s6681 + $0x674] sm:$0xf] %v7124
                %v7126 = vld [vmem:[%s6680 + $0x378] sm:$0xf]
                %7127 = vst [vmem:[%s6681 + $0x678] sm:$0xf] %v7126
                %v7128 = vld [vmem:[%s6680 + $0x37c] sm:$0xf]
                %7129 = vst [vmem:[%s6681 + $0x67c] sm:$0xf] %v7128
                %v7130 = vld [vmem:[%s6680 + $0x380] sm:$0xf]
                %7131 = vst [vmem:[%s6681 + $0x680] sm:$0xf] %v7130
                %v7132 = vld [vmem:[%s6680 + $0x384] sm:$0xf]
                %7133 = vst [vmem:[%s6681 + $0x684] sm:$0xf] %v7132
                %v7134 = vld [vmem:[%s6680 + $0x388] sm:$0xf]
                %7135 = vst [vmem:[%s6681 + $0x688] sm:$0xf] %v7134
                %v7136 = vld [vmem:[%s6680 + $0x38c] sm:$0xf]
                %7137 = vst [vmem:[%s6681 + $0x68c] sm:$0xf] %v7136
                %v7138 = vld [vmem:[%s6680 + $0x390] sm:$0xf]
                %7139 = vst [vmem:[%s6681 + $0x690] sm:$0xf] %v7138
                %v7140 = vld [vmem:[%s6680 + $0x394] sm:$0xf]
                %7141 = vst [vmem:[%s6681 + $0x694] sm:$0xf] %v7140
                %v7142 = vld [vmem:[%s6680 + $0x398] sm:$0xf]
                %7143 = vst [vmem:[%s6681 + $0x698] sm:$0xf] %v7142
                %v7144 = vld [vmem:[%s6680 + $0x39c] sm:$0xf]
                %7145 = vst [vmem:[%s6681 + $0x69c] sm:$0xf] %v7144
                %v7146 = vld [vmem:[%s6680 + $0x3a0] sm:$0xf]
                %7147 = vst [vmem:[%s6681 + $0x6a0] sm:$0xf] %v7146
                %v7148 = vld [vmem:[%s6680 + $0x3a4] sm:$0xf]
                %7149 = vst [vmem:[%s6681 + $0x6a4] sm:$0xf] %v7148
                %v7150 = vld [vmem:[%s6680 + $0x3a8] sm:$0xf]
                %7151 = vst [vmem:[%s6681 + $0x6a8] sm:$0xf] %v7150
                %v7152 = vld [vmem:[%s6680 + $0x3ac] sm:$0xf]
                %7153 = vst [vmem:[%s6681 + $0x6ac] sm:$0xf] %v7152
                %v7154 = vld [vmem:[%s6680 + $0x3b0] sm:$0xf]
                %7155 = vst [vmem:[%s6681 + $0x6b0] sm:$0xf] %v7154
                %v7156 = vld [vmem:[%s6680 + $0x3b4] sm:$0xf]
                %7157 = vst [vmem:[%s6681 + $0x6b4] sm:$0xf] %v7156
                %v7158 = vld [vmem:[%s6680 + $0x3b8] sm:$0xf]
                %7159 = vst [vmem:[%s6681 + $0x6b8] sm:$0xf] %v7158
                %v7160 = vld [vmem:[%s6680 + $0x3bc] sm:$0xf]
                %7161 = vst [vmem:[%s6681 + $0x6bc] sm:$0xf] %v7160
                %v7162 = vld [vmem:[%s6680 + $0x3c0] sm:$0xf]
                %7163 = vst [vmem:[%s6681 + $0x6c0] sm:$0xf] %v7162
                %v7164 = vld [vmem:[%s6680 + $0x3c4] sm:$0xf]
                %7165 = vst [vmem:[%s6681 + $0x6c4] sm:$0xf] %v7164
                %v7166 = vld [vmem:[%s6680 + $0x3c8] sm:$0xf]
                %7167 = vst [vmem:[%s6681 + $0x6c8] sm:$0xf] %v7166
                %v7168 = vld [vmem:[%s6680 + $0x3cc] sm:$0xf]
                %7169 = vst [vmem:[%s6681 + $0x6cc] sm:$0xf] %v7168
                %v7170 = vld [vmem:[%s6680 + $0x3d0] sm:$0xf]
                %7171 = vst [vmem:[%s6681 + $0x6d0] sm:$0xf] %v7170
                %v7172 = vld [vmem:[%s6680 + $0x3d4] sm:$0xf]
                %7173 = vst [vmem:[%s6681 + $0x6d4] sm:$0xf] %v7172
                %v7174 = vld [vmem:[%s6680 + $0x3d8] sm:$0xf]
                %7175 = vst [vmem:[%s6681 + $0x6d8] sm:$0xf] %v7174
                %v7176 = vld [vmem:[%s6680 + $0x3dc] sm:$0xf]
                %7177 = vst [vmem:[%s6681 + $0x6dc] sm:$0xf] %v7176
                %v7178 = vld [vmem:[%s6680 + $0x3e0] sm:$0xf]
                %7179 = vst [vmem:[%s6681 + $0x6e0] sm:$0xf] %v7178
                %v7180 = vld [vmem:[%s6680 + $0x3e4] sm:$0xf]
                %7181 = vst [vmem:[%s6681 + $0x6e4] sm:$0xf] %v7180
                %v7182 = vld [vmem:[%s6680 + $0x3e8] sm:$0xf]
                %7183 = vst [vmem:[%s6681 + $0x6e8] sm:$0xf] %v7182
                %v7184 = vld [vmem:[%s6680 + $0x3ec] sm:$0xf]
                %7185 = vst [vmem:[%s6681 + $0x6ec] sm:$0xf] %v7184
                %v7186 = vld [vmem:[%s6680 + $0x3f0] sm:$0xf]
                %7187 = vst [vmem:[%s6681 + $0x6f0] sm:$0xf] %v7186
                %v7188 = vld [vmem:[%s6680 + $0x3f4] sm:$0xf]
                %7189 = vst [vmem:[%s6681 + $0x6f4] sm:$0xf] %v7188
                %v7190 = vld [vmem:[%s6680 + $0x3f8] sm:$0xf]
                %7191 = vst [vmem:[%s6681 + $0x6f8] sm:$0xf] %v7190
                %v7192 = vld [vmem:[%s6680 + $0x3fc] sm:$0xf]
                %7193 = vst [vmem:[%s6681 + $0x6fc] sm:$0xf] %v7192
              $region135: #{tpu_custom_call.1} parent=129 // loop_footer
                %s6679 = sadd.s32 1, %s6675
              $region136: #{tpu_custom_call.1} parent=129 // loop_footer_branch
                %6674 = sbr.rel target = $region132
              $region137: #{tpu_custom_call.1} parent=129 // loop_exit
                _
            $region130: #{tpu_custom_call.1} parent=121 // pred_fallthru
              _
          $region122: #{tpu_custom_call.1} parent=117 // pred_fallthru
            _
          %7725 = vnop
        $region118: #{tpu_custom_call.1} parent=27 // pred_fallthru
          _
      $region28: #{tpu_custom_call.1} parent=5 // pred_fallthru
        _
      %p7726 = scmp.le.s32.totalorder 2, %s12
      // Predicated region
      $region156: #{tpu_custom_call.1} parent=5 // pred_check
        %p7727 = pneg %p7726
      $region157: #{tpu_custom_call.1} parent=5 // pred_check_branch
        %7729 = sbr.rel (%p7727) target = $region159
      $region158: #{tpu_custom_call.1} parent=5 // pred_region
        %s7730 = ssub.s32 %s12, 2
        // Predicated region
        $region160: #{tpu_custom_call.1} parent=158 // pred_check
          %p7731 = pneg %p104
        $region161: #{tpu_custom_call.1} parent=158 // pred_check_branch
          %7733 = sbr.rel (%p7731) target = $region163
        $region162: #{tpu_custom_call.1} parent=158 // pred_region
          %s7734 = sand.u32 %s89, 1
          %s7735 = sand.u32 %s89, 1
          %s7736 = smul.addr %s7735, 1024
          %s7737 = scalar_lea.vmem [#allocation4], %s7736
        $region163: #{tpu_custom_call.1} parent=158 // pred_fallthru
          _
        // Predicated region
        $region164: #{tpu_custom_call.1} parent=158 // pred_check
          %p7738 = pneg %p132
        $region165: #{tpu_custom_call.1} parent=158 // pred_check_branch
          %7740 = sbr.rel (%p7738) target = $region167
        $region166: #{tpu_custom_call.1} parent=158 // pred_region
          %s7741 = sand.u32 %s117, 1
          %s7742 = sand.u32 %s117, 1
          %s7743 = smul.addr %s7742, 1024
          %s7744 = scalar_lea.vmem [#allocation5], %s7743
        $region167: #{tpu_custom_call.1} parent=158 // pred_fallthru
          _
        // Predicated region
        $region168: #{tpu_custom_call.1} parent=158 // pred_check
          %p7745 = pneg %p160
        $region169: #{tpu_custom_call.1} parent=158 // pred_check_branch
          %7747 = sbr.rel (%p7745) target = $region171
        $region170: #{tpu_custom_call.1} parent=158 // pred_region
          %s7748 = sand.u32 %s145, 1
          %s7749 = sand.u32 %s145, 1
          %s7750 = smul.addr %s7749, 1024
          %s7751 = scalar_lea.vmem [#allocation6], %s7750
        $region171: #{tpu_custom_call.1} parent=158 // pred_fallthru
          _
      $region159: #{tpu_custom_call.1} parent=5 // pred_fallthru
        _
    $region6: #{tpu_custom_call.1} parent=1 // loop_footer
      %s16 = sadd.s32 1, %s12
    $region7: #{tpu_custom_call.1} parent=1 // loop_footer_branch
      %11 = sbr.rel target = $region3
    $region8: #{tpu_custom_call.1} parent=1 // loop_exit
      _
    %7752 = vsyncpa [#allocation3], 1
    %s7753 = scalar_lea.sflag [#allocation3], 1
    %7754 = vsyncpa %s7753, 1

</llo_original>
